<compile_context>
chip_gen: v7x
topology: tpu7x:2x2x1
jax: 0.10.0
libtpu: 0.0.40
codegen_flags: <defaults>
</compile_context>

<pallas_src>
import numpy as np

import jax
import jax.numpy as jnp
from jax.experimental import pallas as pl
from jax.experimental.pallas import tpu as pltpu

EPS = 1e-5


# --------------------------------------------------------------------------- parameters
def init_bn(key, c):
    k1, k2, k3, k4 = jax.random.split(key, 4)
    gamma = 1.0 + 0.1 * jax.random.normal(k1, (c,), jnp.float32)
    beta = 0.1 * jax.random.normal(k2, (c,), jnp.float32)
    mean = 0.1 * jax.random.normal(k3, (c,), jnp.float32)
    var = 0.5 + jax.random.uniform(k4, (c,), jnp.float32)
    return gamma, beta, mean, var


def init_conv(key, cout, cin, k):
    return 0.1 * jax.random.normal(key, (cout, cin, k, k), jnp.float32)


def init_basic_block(key, cin, cout, stride):
    ks = jax.random.split(key, 6)
    blk = {
        "stride": stride,
        "conv1_w": init_conv(ks[0], cout, cin, 3),
        "bn1": init_bn(ks[1], cout),
        "conv2_w": init_conv(ks[2], cout, cout, 3),
        "bn2": init_bn(ks[3], cout),
    }
    if stride != 1 or cin != cout:
        blk["sc_w"] = init_conv(ks[4], cout, cin, 1)
        blk["sc_bn"] = init_bn(ks[5], cout)
    return blk


def init_wideresnet(key, depth=10, width_factor=1, num_classes=11, in_channels=9):
    assert (depth - 4) % 6 == 0, "Depth must be 6n+4"
    n = (depth - 4) // 6
    k = width_factor
    n_stages = [16, 16 * k, 32 * k, 64 * k]
    keys = jax.random.split(key, 8)
    params = {"conv1_w": init_conv(keys[0], n_stages[0], in_channels, 3)}

    def make_stage(skey, cin, cout, n_blocks, stride):
        bkeys = jax.random.split(skey, n_blocks)
        blocks = [init_basic_block(bkeys[0], cin, cout, stride)]
        for i in range(1, n_blocks):
            blocks.append(init_basic_block(bkeys[i], cout, cout, 1))
        return blocks

    params["stage1"] = make_stage(keys[1], n_stages[0], n_stages[1], n, 1)
    params["stage2"] = make_stage(keys[2], n_stages[1], n_stages[2], n, 2)
    params["stage3"] = make_stage(keys[3], n_stages[2], n_stages[3], n, 2)
    # self.bn of the PyTorch reference is never used in forward() -> intentionally omitted.
    params["fc_w"] = 0.1 * jax.random.normal(keys[4], (num_classes, n_stages[3]), jnp.float32)
    params["fc_b"] = 0.1 * jax.random.normal(keys[5], (num_classes,), jnp.float32)
    return params


# --------------------------------------------------------------------------- weight prep
def _fold_bn(bn):
    gamma, beta, mean, var = bn
    scale = gamma * jax.lax.rsqrt(var + EPS)
    bias = beta - mean * scale
    return scale, bias


def _row_select(n_batch, h_in, h_out, stride, offset):
    """S[n*h_out+ho, n*h_in+r] = 1 where r = ho*stride + offset (0 if padded / OOB)."""
    s = np.zeros((n_batch * h_out, n_batch * h_in), np.float32)
    for n in range(n_batch):
        for ho in range(h_out):
            r = ho * stride + offset
            if 0 <= r < h_in:
                s[n * h_out + ho, n * h_in + r] = 1.0
    return s


def _conv3_tap_matrix(wconv, kh, w_in, w_out, stride):
    """B[w*Cin+ci, wo*Cout+co] = wconv[co,ci,kh,kw] where w = wo*stride + kw - 1."""
    mask = np.zeros((3, w_in, w_out), np.float32)
    for wo in range(w_out):
        for kw in range(3):
            w = wo * stride + kw - 1
            if 0 <= w < w_in:
                mask[kw, w, wo] = 1.0
    taps = jnp.transpose(wconv[:, :, kh, :], (2, 1, 0))          # (kw, Cin, Cout)
    b = jnp.einsum("kwv,kio->wivo", jnp.asarray(mask), taps)     # (Win, Cin, Wout, Cout)
    cout, cin = wconv.shape[0], wconv.shape[1]
    return b.reshape(w_in * cin, w_out * cout)


def _conv1_matrix(wconv, w_in, w_out, stride):
    """1x1 conv (stride s) as B[w*Cin+ci, wo*Cout+co] = wconv[co,ci] where w = wo*stride."""
    cout, cin = wconv.shape[0], wconv.shape[1]
    mask = np.zeros((w_in, w_out), np.float32)
    for wo in range(w_out):
        if wo * stride < w_in:
            mask[wo * stride, wo] = 1.0
    wmat = wconv.reshape(cout, cin).T                            # (Cin, Cout)
    b = jnp.einsum("wv,io->wivo", jnp.asarray(mask), wmat)
    return b.reshape(w_in * cin, w_out * cout)


class _ArgList:
    def __init__(self):
        self.arrays = []

    def add(self, arr):
        self.arrays.append(arr)
        return len(self.arrays) - 1


def _prep_conv3(args, wconv, scale, bias, n_batch, h_in, w_in, stride, cin_pad=None):
    """3x3 conv; BN scale is folded into the tap matrices, bias stays as a lane row."""
    wconv = jnp.asarray(wconv, jnp.float32)
    if scale is not None:
        wconv = wconv * scale[:, None, None, None]
    cout, cin = wconv.shape[0], wconv.shape[1]
    if cin_pad is not None and cin_pad > cin:
        wconv = jnp.pad(wconv, ((0, 0), (0, cin_pad - cin), (0, 0), (0, 0)))
        cin = cin_pad
    h_out = (h_in - 1) // stride + 1
    w_out = (w_in - 1) // stride + 1
    s_idx = []
    for kh in range(3):
        if stride == 1 and kh == 1:          # identity row selection -> skip the matmul
            s_idx.append(None)
        else:
            s_idx.append(args.add(jnp.asarray(
                _row_select(n_batch, h_in, h_out, stride, kh - 1), jnp.bfloat16)))
    b_idx = [args.add(_conv3_tap_matrix(wconv, kh, w_in, w_out, stride).astype(jnp.bfloat16))
             for kh in range(3)]
    bi_i = (None if bias is None else
            args.add(jnp.tile(bias, w_out).reshape(1, -1).astype(jnp.float32)))
    return {"S": tuple(s_idx), "B": tuple(b_idx), "bias": bi_i}, h_out, w_out, cout


def _prep_shortcut(args, wconv, scale, n_batch, h_in, w_in, stride):
    """1x1 projection shortcut; BN scale folded into B, BN bias merged into conv2's bias."""
    wconv = jnp.asarray(wconv, jnp.float32) * scale[:, None, None, None]
    h_out = (h_in - 1) // stride + 1
    w_out = (w_in - 1) // stride + 1
    s_i = (None if stride == 1 else
           args.add(jnp.asarray(_row_select(n_batch, h_in, h_out, stride, 0), jnp.bfloat16)))
    b_i = args.add(_conv1_matrix(wconv, w_in, w_out, stride).astype(jnp.bfloat16))
    return {"S": s_i, "B": b_i}


def _prep_head(args, fc_w, fc_b, n_batch, h, w, c):
    """Global-avg-pool + FC folded into: logits = (PL @ A) @ M + b_padded (lane-dense)."""
    num_classes = fc_w.shape[0]
    out_cols = max(128, -(-num_classes // 128) * 128)            # lane-dense padded logits
    pool_rows = np.zeros((n_batch, n_batch * h), np.float32)
    for n in range(n_batch):
        pool_rows[n, n * h:(n + 1) * h] = 1.0 / h
    pool_cols = np.zeros((w * c, c), np.float32)
    for wi in range(w):
        for ci in range(c):
            pool_cols[wi * c + ci, ci] = 1.0 / w
    wmat = jnp.zeros((c, out_cols), jnp.float32).at[:, :num_classes].set(fc_w.T)
    fused = jnp.asarray(pool_cols) @ wmat                        # (W*C, out_cols)
    bias = jnp.zeros((1, out_cols), jnp.float32).at[0, :num_classes].set(fc_b)
    return {"PL": args.add(jnp.asarray(pool_rows, jnp.bfloat16)),
            "M": args.add(fused.astype(jnp.bfloat16)),
            "b": args.add(bias),
            "out_cols": out_cols, "num_classes": num_classes}


def prepare_wideresnet(params, *, batch, height, width, in_channels):
    """One-time weight transformation (runs eagerly, outside the jitted forward)."""
    args = _ArgList()
    cin_pad = -(-in_channels // 16) * 16     # 9 -> 16 so the input lane dim is a 128-multiple
    prog = {"batch": batch, "height": height, "width": width,
            "in_channels": in_channels, "cin_pad": cin_pad}
    stem, h, w, c = _prep_conv3(args, params["conv1_w"], None, None, batch, height, width, 1,
                                cin_pad=cin_pad)
    prog["stem"] = stem
    blocks = []
    for stage in ("stage1", "stage2", "stage3"):
        for blk in params[stage]:
            stride = blk["stride"]                               # plain Python int (static)
            s1, b1 = _fold_bn(blk["bn1"])
            s2, b2 = _fold_bn(blk["bn2"])
            has_sc = "sc_w" in blk
            if has_sc:
                ssc, bsc = _fold_bn(blk["sc_bn"])
                b2 = b2 + bsc                    # one combined bias add before the ReLU
            da, ho, wo, cout = _prep_conv3(args, blk["conv1_w"], s1, b1, batch, h, w, stride)
            db, _, _, _ = _prep_conv3(args, blk["conv2_w"], s2, b2, batch, ho, wo, 1)
            dsc = (_prep_shortcut(args, blk["sc_w"], ssc, batch, h, w, stride)
                   if has_sc else None)
            blocks.append({"a": da, "b": db, "sc": dsc})
            h, w, c = ho, wo, cout
    prog["blocks"] = tuple(blocks)
    prog["head"] = _prep_head(args, params["fc_w"], params["fc_b"], batch, h, w, c)
    return args.arrays, prog


# --------------------------------------------------------------------------- fused kernel
def _make_kernel(prog):
    def kernel(*refs):
        x_ref = refs[0]
        out_ref = refs[-1]

        def p(i):                       # prepared array i (offset by 1 for the input)
            return refs[1 + i][...]

        def bf(v):
            return v.astype(jnp.bfloat16)

        def rowsel(si, a_b):
            if si is None:              # identity selection -> free
                return a_b
            # S is 0/1 -> result is exact bf16 values; cast back is lossless.
            return bf(jnp.dot(p(si), a_b, preferred_element_type=jnp.float32))

        def conv3(a_b, d, relu):
            acc = None
            for si, bi in zip(d["S"], d["B"]):
                t = jnp.dot(rowsel(si, a_b), p(bi), preferred_element_type=jnp.float32)
                acc = t if acc is None else acc + t
            if d["bias"] is not None:
                acc = acc + p(d["bias"])
            if relu:
                acc = jnp.maximum(acc, 0.0)
            return acc

        # stem: F.relu(conv1(x))  (no BN, per the reference forward)
        act = conv3(x_ref[...], prog["stem"], relu=True)          # f32
        for blk in prog["blocks"]:
            a_b = bf(act)
            out = conv3(bf(conv3(a_b, blk["a"], True)), blk["b"], False)   # bn2(conv2(relu(bn1(conv1 x))))
            if blk["sc"] is None:
                sc = act                                          # identity shortcut (f32)
            else:
                d = blk["sc"]
                sc = jnp.dot(rowsel(d["S"], a_b), p(d["B"]),
                             preferred_element_type=jnp.float32)  # bn(conv1x1(x)), scale folded
            act = jnp.maximum(out + sc, 0.0)                      # out += shortcut; relu

        head = prog["head"]
        pooled = jnp.dot(p(head["PL"]), bf(act), preferred_element_type=jnp.float32)
        out_ref[...] = (jnp.dot(bf(pooled), p(head["M"]),
                                preferred_element_type=jnp.float32) + p(head["b"]))

    return kernel


def build_forward(prog):
    n, h0, w0 = prog["batch"], prog["height"], prog["width"]
    cin, cin_pad = prog["in_channels"], prog["cin_pad"]
    out_cols = prog["head"]["out_cols"]
    num_classes = prog["head"]["num_classes"]
    kernel = _make_kernel(prog)

    def forward(arrays, x_nchw):
        x = jnp.transpose(x_nchw, (0, 2, 3, 1)).astype(jnp.float32)      # NCHW -> NHWC
        x = jnp.pad(x, ((0, 0), (0, 0), (0, 0), (0, cin_pad - cin)))     # pad Cin to 16
        x2d = x.reshape(n * h0, w0 * cin_pad).astype(jnp.bfloat16)       # (N*H, W*Cpad) bf16
        inputs = [x2d] + list(arrays)
        out = pl.pallas_call(
            kernel,
            out_shape=jax.ShapeDtypeStruct((n, out_cols), jnp.float32),
            grid=(1,),
            in_specs=[pl.BlockSpec(a.shape, lambda i, nd=a.ndim: (0,) * nd) for a in inputs],
            out_specs=pl.BlockSpec((n, out_cols), lambda i: (0, 0)),
            compiler_params=pltpu.CompilerParams(dimension_semantics=("arbitrary",)),
        )(*inputs)
        return out[:, :num_classes]

    return forward


# --------------------------------------------------------------------------- pure-JAX reference
def _conv2d_ref(x, w, stride, padding):
    return jax.lax.conv_general_dilated(
        x, w, window_strides=(stride, stride),
        padding=((padding, padding), (padding, padding)),
        dimension_numbers=("NCHW", "OIHW", "NCHW"))


def _bn_eval_ref(x, bn):
    gamma, beta, mean, var = bn
    scale = gamma * jax.lax.rsqrt(var + EPS)
    bias = beta - mean * scale
    return x * scale[None, :, None, None] + bias[None, :, None, None]


def reference_forward(params, x):
    out = jax.nn.relu(_conv2d_ref(x, params["conv1_w"], 1, 1))
    for stage in ("stage1", "stage2", "stage3"):
        for blk in params[stage]:
            s = blk["stride"]
            o = jax.nn.relu(_bn_eval_ref(_conv2d_ref(out, blk["conv1_w"], s, 1), blk["bn1"]))
            o = _bn_eval_ref(_conv2d_ref(o, blk["conv2_w"], 1, 1), blk["bn2"])
            sc = (_bn_eval_ref(_conv2d_ref(out, blk["sc_w"], s, 0), blk["sc_bn"])
                  if "sc_w" in blk else out)
            out = jax.nn.relu(o + sc)
    pooled = jnp.mean(out, axis=(2, 3))
    return pooled @ params["fc_w"].T + params["fc_b"]


# --------------------------------------------------------------------------- main
if __name__ == "__main__":
    key = jax.random.PRNGKey(0)
    pkey, xkey = jax.random.split(key)

    # WideResNet(configs=None, depth=10, width_factor=1, num_classes=11)
    params = init_wideresnet(pkey, depth=10, width_factor=1, num_classes=11, in_channels=9)

    # Input matches nn.Conv2d(9, 16, ...): NCHW = (batch=2, channels=9, H=16, W=16)
    x = jax.random.normal(xkey, (2, 9, 16, 16), jnp.float32)

    arrays, prog = prepare_wideresnet(params, batch=2, height=16, width=16, in_channels=9)
    forward = jax.jit(build_forward(prog))

    logits = forward(arrays, x)
    jax.block_until_ready(logits)
    assert logits.shape == (2, 11), logits.shape

    # Loose numerical check vs. an f32 lax.conv reference (kernel matmuls are bf16 on MXU).
    ref = reference_forward(params, x)
    err = float(jnp.max(jnp.abs(logits - ref)))
    tol = 8e-2 * (1.0 + float(jnp.max(jnp.abs(ref))))
    assert err < tol, f"max abs error {err} exceeds tolerance {tol}"

    print("KERNEL_OK")
</pallas_src>

<mosaic_0001>
module attributes {stable_mosaic.version = 11 : i64} {
  func.func @kernel(%arg0: i32, %arg1: memref<32x256xbf16, #tpu.memory_space<vmem>>, %arg2: memref<32x32xbf16, #tpu.memory_space<vmem>>, %arg3: memref<32x32xbf16, #tpu.memory_space<vmem>>, %arg4: memref<256x256xbf16, #tpu.memory_space<vmem>>, %arg5: memref<256x256xbf16, #tpu.memory_space<vmem>>, %arg6: memref<256x256xbf16, #tpu.memory_space<vmem>>, %arg7: memref<32x32xbf16, #tpu.memory_space<vmem>>, %arg8: memref<32x32xbf16, #tpu.memory_space<vmem>>, %arg9: memref<256x256xbf16, #tpu.memory_space<vmem>>, %arg10: memref<256x256xbf16, #tpu.memory_space<vmem>>, %arg11: memref<256x256xbf16, #tpu.memory_space<vmem>>, %arg12: memref<1x256xf32, #tpu.memory_space<vmem>>, %arg13: memref<32x32xbf16, #tpu.memory_space<vmem>>, %arg14: memref<32x32xbf16, #tpu.memory_space<vmem>>, %arg15: memref<256x256xbf16, #tpu.memory_space<vmem>>, %arg16: memref<256x256xbf16, #tpu.memory_space<vmem>>, %arg17: memref<256x256xbf16, #tpu.memory_space<vmem>>, %arg18: memref<1x256xf32, #tpu.memory_space<vmem>>, %arg19: memref<16x32xbf16, #tpu.memory_space<vmem>>, %arg20: memref<16x32xbf16, #tpu.memory_space<vmem>>, %arg21: memref<16x32xbf16, #tpu.memory_space<vmem>>, %arg22: memref<256x256xbf16, #tpu.memory_space<vmem>>, %arg23: memref<256x256xbf16, #tpu.memory_space<vmem>>, %arg24: memref<256x256xbf16, #tpu.memory_space<vmem>>, %arg25: memref<1x256xf32, #tpu.memory_space<vmem>>, %arg26: memref<16x16xbf16, #tpu.memory_space<vmem>>, %arg27: memref<16x16xbf16, #tpu.memory_space<vmem>>, %arg28: memref<256x256xbf16, #tpu.memory_space<vmem>>, %arg29: memref<256x256xbf16, #tpu.memory_space<vmem>>, %arg30: memref<256x256xbf16, #tpu.memory_space<vmem>>, %arg31: memref<1x256xf32, #tpu.memory_space<vmem>>, %arg32: memref<16x32xbf16, #tpu.memory_space<vmem>>, %arg33: memref<256x256xbf16, #tpu.memory_space<vmem>>, %arg34: memref<8x16xbf16, #tpu.memory_space<vmem>>, %arg35: memref<8x16xbf16, #tpu.memory_space<vmem>>, %arg36: memref<8x16xbf16, #tpu.memory_space<vmem>>, %arg37: memref<256x256xbf16, #tpu.memory_space<vmem>>, %arg38: memref<256x256xbf16, #tpu.memory_space<vmem>>, %arg39: memref<256x256xbf16, #tpu.memory_space<vmem>>, %arg40: memref<1x256xf32, #tpu.memory_space<vmem>>, %arg41: memref<8x8xbf16, #tpu.memory_space<vmem>>, %arg42: memref<8x8xbf16, #tpu.memory_space<vmem>>, %arg43: memref<256x256xbf16, #tpu.memory_space<vmem>>, %arg44: memref<256x256xbf16, #tpu.memory_space<vmem>>, %arg45: memref<256x256xbf16, #tpu.memory_space<vmem>>, %arg46: memref<1x256xf32, #tpu.memory_space<vmem>>, %arg47: memref<8x16xbf16, #tpu.memory_space<vmem>>, %arg48: memref<256x256xbf16, #tpu.memory_space<vmem>>, %arg49: memref<2x8xbf16, #tpu.memory_space<vmem>>, %arg50: memref<256x128xbf16, #tpu.memory_space<vmem>>, %arg51: memref<1x128xf32, #tpu.memory_space<vmem>>, %arg52: memref<2x128xf32, #tpu.memory_space<vmem>>) attributes {dimension_semantics = [#tpu.dimension_semantics<arbitrary>], iteration_bounds = array<i64: 1>, scalar_prefetch = 0 : i64, scratch_operands = 0 : i64, tpu.core_type = #tpu.core_type<tc>, window_params = [{pipeline_mode = #tpu.pipeline_mode<synchronous>, transform_indices = @transform_0, window_bounds = array<i64: 32, 256>}, {pipeline_mode = #tpu.pipeline_mode<synchronous>, transform_indices = @transform_1, window_bounds = array<i64: 32, 32>}, {pipeline_mode = #tpu.pipeline_mode<synchronous>, transform_indices = @transform_2, window_bounds = array<i64: 32, 32>}, {pipeline_mode = #tpu.pipeline_mode<synchronous>, transform_indices = @transform_3, window_bounds = array<i64: 256, 256>}, {pipeline_mode = #tpu.pipeline_mode<synchronous>, transform_indices = @transform_4, window_bounds = array<i64: 256, 256>}, {pipeline_mode = #tpu.pipeline_mode<synchronous>, transform_indices = @transform_5, window_bounds = array<i64: 256, 256>}, {pipeline_mode = #tpu.pipeline_mode<synchronous>, transform_indices = @transform_6, window_bounds = array<i64: 32, 32>}, {pipeline_mode = #tpu.pipeline_mode<synchronous>, transform_indices = @transform_7, window_bounds = array<i64: 32, 32>}, {pipeline_mode = #tpu.pipeline_mode<synchronous>, transform_indices = @transform_8, window_bounds = array<i64: 256, 256>}, {pipeline_mode = #tpu.pipeline_mode<synchronous>, transform_indices = @transform_9, window_bounds = array<i64: 256, 256>}, {pipeline_mode = #tpu.pipeline_mode<synchronous>, transform_indices = @transform_10, window_bounds = array<i64: 256, 256>}, {pipeline_mode = #tpu.pipeline_mode<synchronous>, transform_indices = @transform_11, window_bounds = array<i64: 1, 256>}, {pipeline_mode = #tpu.pipeline_mode<synchronous>, transform_indices = @transform_12, window_bounds = array<i64: 32, 32>}, {pipeline_mode = #tpu.pipeline_mode<synchronous>, transform_indices = @transform_13, window_bounds = array<i64: 32, 32>}, {pipeline_mode = #tpu.pipeline_mode<synchronous>, transform_indices = @transform_14, window_bounds = array<i64: 256, 256>}, {pipeline_mode = #tpu.pipeline_mode<synchronous>, transform_indices = @transform_15, window_bounds = array<i64: 256, 256>}, {pipeline_mode = #tpu.pipeline_mode<synchronous>, transform_indices = @transform_16, window_bounds = array<i64: 256, 256>}, {pipeline_mode = #tpu.pipeline_mode<synchronous>, transform_indices = @transform_17, window_bounds = array<i64: 1, 256>}, {pipeline_mode = #tpu.pipeline_mode<synchronous>, transform_indices = @transform_18, window_bounds = array<i64: 16, 32>}, {pipeline_mode = #tpu.pipeline_mode<synchronous>, transform_indices = @transform_19, window_bounds = array<i64: 16, 32>}, {pipeline_mode = #tpu.pipeline_mode<synchronous>, transform_indices = @transform_20, window_bounds = array<i64: 16, 32>}, {pipeline_mode = #tpu.pipeline_mode<synchronous>, transform_indices = @transform_21, window_bounds = array<i64: 256, 256>}, {pipeline_mode = #tpu.pipeline_mode<synchronous>, transform_indices = @transform_22, window_bounds = array<i64: 256, 256>}, {pipeline_mode = #tpu.pipeline_mode<synchronous>, transform_indices = @transform_23, window_bounds = array<i64: 256, 256>}, {pipeline_mode = #tpu.pipeline_mode<synchronous>, transform_indices = @transform_24, window_bounds = array<i64: 1, 256>}, {pipeline_mode = #tpu.pipeline_mode<synchronous>, transform_indices = @transform_25, window_bounds = array<i64: 16, 16>}, {pipeline_mode = #tpu.pipeline_mode<synchronous>, transform_indices = @transform_26, window_bounds = array<i64: 16, 16>}, {pipeline_mode = #tpu.pipeline_mode<synchronous>, transform_indices = @transform_27, window_bounds = array<i64: 256, 256>}, {pipeline_mode = #tpu.pipeline_mode<synchronous>, transform_indices = @transform_28, window_bounds = array<i64: 256, 256>}, {pipeline_mode = #tpu.pipeline_mode<synchronous>, transform_indices = @transform_29, window_bounds = array<i64: 256, 256>}, {pipeline_mode = #tpu.pipeline_mode<synchronous>, transform_indices = @transform_30, window_bounds = array<i64: 1, 256>}, {pipeline_mode = #tpu.pipeline_mode<synchronous>, transform_indices = @transform_31, window_bounds = array<i64: 16, 32>}, {pipeline_mode = #tpu.pipeline_mode<synchronous>, transform_indices = @transform_32, window_bounds = array<i64: 256, 256>}, {pipeline_mode = #tpu.pipeline_mode<synchronous>, transform_indices = @transform_33, window_bounds = array<i64: 8, 16>}, {pipeline_mode = #tpu.pipeline_mode<synchronous>, transform_indices = @transform_34, window_bounds = array<i64: 8, 16>}, {pipeline_mode = #tpu.pipeline_mode<synchronous>, transform_indices = @transform_35, window_bounds = array<i64: 8, 16>}, {pipeline_mode = #tpu.pipeline_mode<synchronous>, transform_indices = @transform_36, window_bounds = array<i64: 256, 256>}, {pipeline_mode = #tpu.pipeline_mode<synchronous>, transform_indices = @transform_37, window_bounds = array<i64: 256, 256>}, {pipeline_mode = #tpu.pipeline_mode<synchronous>, transform_indices = @transform_38, window_bounds = array<i64: 256, 256>}, {pipeline_mode = #tpu.pipeline_mode<synchronous>, transform_indices = @transform_39, window_bounds = array<i64: 1, 256>}, {pipeline_mode = #tpu.pipeline_mode<synchronous>, transform_indices = @transform_40, window_bounds = array<i64: 8, 8>}, {pipeline_mode = #tpu.pipeline_mode<synchronous>, transform_indices = @transform_41, window_bounds = array<i64: 8, 8>}, {pipeline_mode = #tpu.pipeline_mode<synchronous>, transform_indices = @transform_42, window_bounds = array<i64: 256, 256>}, {pipeline_mode = #tpu.pipeline_mode<synchronous>, transform_indices = @transform_43, window_bounds = array<i64: 256, 256>}, {pipeline_mode = #tpu.pipeline_mode<synchronous>, transform_indices = @transform_44, window_bounds = array<i64: 256, 256>}, {pipeline_mode = #tpu.pipeline_mode<synchronous>, transform_indices = @transform_45, window_bounds = array<i64: 1, 256>}, {pipeline_mode = #tpu.pipeline_mode<synchronous>, transform_indices = @transform_46, window_bounds = array<i64: 8, 16>}, {pipeline_mode = #tpu.pipeline_mode<synchronous>, transform_indices = @transform_47, window_bounds = array<i64: 256, 256>}, {pipeline_mode = #tpu.pipeline_mode<synchronous>, transform_indices = @transform_48, window_bounds = array<i64: 2, 8>}, {pipeline_mode = #tpu.pipeline_mode<synchronous>, transform_indices = @transform_49, window_bounds = array<i64: 256, 128>}, {pipeline_mode = #tpu.pipeline_mode<synchronous>, transform_indices = @transform_50, window_bounds = array<i64: 1, 128>}, {pipeline_mode = #tpu.pipeline_mode<synchronous>, transform_indices = @transform_51, window_bounds = array<i64: 2, 128>}]} {
    %c0 = arith.constant 0 : index
    %c0_0 = arith.constant 0 : index
    %0 = vector.load %arg1[%c0, %c0_0] : memref<32x256xbf16, #tpu.memory_space<vmem>>, vector<32x256xbf16>
    %c0_1 = arith.constant 0 : index
    %c0_2 = arith.constant 0 : index
    %1 = vector.load %arg2[%c0_1, %c0_2] : memref<32x32xbf16, #tpu.memory_space<vmem>>, vector<32x32xbf16>
    %cst = arith.constant dense<0.000000e+00> : vector<32x256xf32>
    %2 = tpu.matmul %1, %0, %cst {dimension_numbers = #tpu.dot_dimension_numbers<[1], [0], [0], [1], [0, 0, 1, 1], [], []>} : vector<32x32xbf16>, vector<32x256xbf16>, vector<32x256xf32> -> vector<32x256xf32>
    %3 = arith.truncf %2 : vector<32x256xf32> to vector<32x256xbf16>
    %c0_3 = arith.constant 0 : index
    %c0_4 = arith.constant 0 : index
    %4 = vector.load %arg4[%c0_3, %c0_4] : memref<256x256xbf16, #tpu.memory_space<vmem>>, vector<256x256xbf16>
    %cst_5 = arith.constant dense<0.000000e+00> : vector<32x256xf32>
    %5 = tpu.matmul %3, %4, %cst_5 {dimension_numbers = #tpu.dot_dimension_numbers<[1], [0], [0], [1], [0, 0, 1, 1], [], []>} : vector<32x256xbf16>, vector<256x256xbf16>, vector<32x256xf32> -> vector<32x256xf32>
    %c0_6 = arith.constant 0 : index
    %c0_7 = arith.constant 0 : index
    %6 = vector.load %arg5[%c0_6, %c0_7] : memref<256x256xbf16, #tpu.memory_space<vmem>>, vector<256x256xbf16>
    %cst_8 = arith.constant dense<0.000000e+00> : vector<32x256xf32>
    %7 = tpu.matmul %0, %6, %cst_8 {dimension_numbers = #tpu.dot_dimension_numbers<[1], [0], [0], [1], [0, 0, 1, 1], [], []>} : vector<32x256xbf16>, vector<256x256xbf16>, vector<32x256xf32> -> vector<32x256xf32>
    %8 = arith.addf %5, %7 : vector<32x256xf32>
    %c0_9 = arith.constant 0 : index
    %c0_10 = arith.constant 0 : index
    %9 = vector.load %arg3[%c0_9, %c0_10] : memref<32x32xbf16, #tpu.memory_space<vmem>>, vector<32x32xbf16>
    %cst_11 = arith.constant dense<0.000000e+00> : vector<32x256xf32>
    %10 = tpu.matmul %9, %0, %cst_11 {dimension_numbers = #tpu.dot_dimension_numbers<[1], [0], [0], [1], [0, 0, 1, 1], [], []>} : vector<32x32xbf16>, vector<32x256xbf16>, vector<32x256xf32> -> vector<32x256xf32>
    %11 = arith.truncf %10 : vector<32x256xf32> to vector<32x256xbf16>
    %c0_12 = arith.constant 0 : index
    %c0_13 = arith.constant 0 : index
    %12 = vector.load %arg6[%c0_12, %c0_13] : memref<256x256xbf16, #tpu.memory_space<vmem>>, vector<256x256xbf16>
    %cst_14 = arith.constant dense<0.000000e+00> : vector<32x256xf32>
    %13 = tpu.matmul %11, %12, %cst_14 {dimension_numbers = #tpu.dot_dimension_numbers<[1], [0], [0], [1], [0, 0, 1, 1], [], []>} : vector<32x256xbf16>, vector<256x256xbf16>, vector<32x256xf32> -> vector<32x256xf32>
    %14 = arith.addf %8, %13 : vector<32x256xf32>
    %cst_15 = arith.constant 0.000000e+00 : f32
    %15 = vector.broadcast %cst_15 : f32 to vector<32x256xf32>
    %16 = arith.maximumf %14, %15 : vector<32x256xf32>
    %17 = arith.truncf %16 : vector<32x256xf32> to vector<32x256xbf16>
    %c0_16 = arith.constant 0 : index
    %c0_17 = arith.constant 0 : index
    %18 = vector.load %arg7[%c0_16, %c0_17] : memref<32x32xbf16, #tpu.memory_space<vmem>>, vector<32x32xbf16>
    %cst_18 = arith.constant dense<0.000000e+00> : vector<32x256xf32>
    %19 = tpu.matmul %18, %17, %cst_18 {dimension_numbers = #tpu.dot_dimension_numbers<[1], [0], [0], [1], [0, 0, 1, 1], [], []>} : vector<32x32xbf16>, vector<32x256xbf16>, vector<32x256xf32> -> vector<32x256xf32>
    %20 = arith.truncf %19 : vector<32x256xf32> to vector<32x256xbf16>
    %c0_19 = arith.constant 0 : index
    %c0_20 = arith.constant 0 : index
    %21 = vector.load %arg9[%c0_19, %c0_20] : memref<256x256xbf16, #tpu.memory_space<vmem>>, vector<256x256xbf16>
    %cst_21 = arith.constant dense<0.000000e+00> : vector<32x256xf32>
    %22 = tpu.matmul %20, %21, %cst_21 {dimension_numbers = #tpu.dot_dimension_numbers<[1], [0], [0], [1], [0, 0, 1, 1], [], []>} : vector<32x256xbf16>, vector<256x256xbf16>, vector<32x256xf32> -> vector<32x256xf32>
    %c0_22 = arith.constant 0 : index
    %c0_23 = arith.constant 0 : index
    %23 = vector.load %arg10[%c0_22, %c0_23] : memref<256x256xbf16, #tpu.memory_space<vmem>>, vector<256x256xbf16>
    %cst_24 = arith.constant dense<0.000000e+00> : vector<32x256xf32>
    %24 = tpu.matmul %17, %23, %cst_24 {dimension_numbers = #tpu.dot_dimension_numbers<[1], [0], [0], [1], [0, 0, 1, 1], [], []>} : vector<32x256xbf16>, vector<256x256xbf16>, vector<32x256xf32> -> vector<32x256xf32>
    %25 = arith.addf %22, %24 : vector<32x256xf32>
    %c0_25 = arith.constant 0 : index
    %c0_26 = arith.constant 0 : index
    %26 = vector.load %arg8[%c0_25, %c0_26] : memref<32x32xbf16, #tpu.memory_space<vmem>>, vector<32x32xbf16>
    %cst_27 = arith.constant dense<0.000000e+00> : vector<32x256xf32>
    %27 = tpu.matmul %26, %17, %cst_27 {dimension_numbers = #tpu.dot_dimension_numbers<[1], [0], [0], [1], [0, 0, 1, 1], [], []>} : vector<32x32xbf16>, vector<32x256xbf16>, vector<32x256xf32> -> vector<32x256xf32>
    %28 = arith.truncf %27 : vector<32x256xf32> to vector<32x256xbf16>
    %c0_28 = arith.constant 0 : index
    %c0_29 = arith.constant 0 : index
    %29 = vector.load %arg11[%c0_28, %c0_29] : memref<256x256xbf16, #tpu.memory_space<vmem>>, vector<256x256xbf16>
    %cst_30 = arith.constant dense<0.000000e+00> : vector<32x256xf32>
    %30 = tpu.matmul %28, %29, %cst_30 {dimension_numbers = #tpu.dot_dimension_numbers<[1], [0], [0], [1], [0, 0, 1, 1], [], []>} : vector<32x256xbf16>, vector<256x256xbf16>, vector<32x256xf32> -> vector<32x256xf32>
    %31 = arith.addf %25, %30 : vector<32x256xf32>
    %c0_31 = arith.constant 0 : index
    %c0_32 = arith.constant 0 : index
    %32 = vector.load %arg12[%c0_31, %c0_32] : memref<1x256xf32, #tpu.memory_space<vmem>>, vector<1x256xf32>
    %33 = vector.broadcast %32 : vector<1x256xf32> to vector<32x256xf32>
    %34 = arith.addf %31, %33 : vector<32x256xf32>
    %cst_33 = arith.constant 0.000000e+00 : f32
    %35 = vector.broadcast %cst_33 : f32 to vector<32x256xf32>
    %36 = arith.maximumf %34, %35 : vector<32x256xf32>
    %37 = arith.truncf %36 : vector<32x256xf32> to vector<32x256xbf16>
    %c0_34 = arith.constant 0 : index
    %c0_35 = arith.constant 0 : index
    %38 = vector.load %arg13[%c0_34, %c0_35] : memref<32x32xbf16, #tpu.memory_space<vmem>>, vector<32x32xbf16>
    %cst_36 = arith.constant dense<0.000000e+00> : vector<32x256xf32>
    %39 = tpu.matmul %38, %37, %cst_36 {dimension_numbers = #tpu.dot_dimension_numbers<[1], [0], [0], [1], [0, 0, 1, 1], [], []>} : vector<32x32xbf16>, vector<32x256xbf16>, vector<32x256xf32> -> vector<32x256xf32>
    %40 = arith.truncf %39 : vector<32x256xf32> to vector<32x256xbf16>
    %c0_37 = arith.constant 0 : index
    %c0_38 = arith.constant 0 : index
    %41 = vector.load %arg15[%c0_37, %c0_38] : memref<256x256xbf16, #tpu.memory_space<vmem>>, vector<256x256xbf16>
    %cst_39 = arith.constant dense<0.000000e+00> : vector<32x256xf32>
    %42 = tpu.matmul %40, %41, %cst_39 {dimension_numbers = #tpu.dot_dimension_numbers<[1], [0], [0], [1], [0, 0, 1, 1], [], []>} : vector<32x256xbf16>, vector<256x256xbf16>, vector<32x256xf32> -> vector<32x256xf32>
    %c0_40 = arith.constant 0 : index
    %c0_41 = arith.constant 0 : index
    %43 = vector.load %arg16[%c0_40, %c0_41] : memref<256x256xbf16, #tpu.memory_space<vmem>>, vector<256x256xbf16>
    %cst_42 = arith.constant dense<0.000000e+00> : vector<32x256xf32>
    %44 = tpu.matmul %37, %43, %cst_42 {dimension_numbers = #tpu.dot_dimension_numbers<[1], [0], [0], [1], [0, 0, 1, 1], [], []>} : vector<32x256xbf16>, vector<256x256xbf16>, vector<32x256xf32> -> vector<32x256xf32>
    %45 = arith.addf %42, %44 : vector<32x256xf32>
    %c0_43 = arith.constant 0 : index
    %c0_44 = arith.constant 0 : index
    %46 = vector.load %arg14[%c0_43, %c0_44] : memref<32x32xbf16, #tpu.memory_space<vmem>>, vector<32x32xbf16>
    %cst_45 = arith.constant dense<0.000000e+00> : vector<32x256xf32>
    %47 = tpu.matmul %46, %37, %cst_45 {dimension_numbers = #tpu.dot_dimension_numbers<[1], [0], [0], [1], [0, 0, 1, 1], [], []>} : vector<32x32xbf16>, vector<32x256xbf16>, vector<32x256xf32> -> vector<32x256xf32>
    %48 = arith.truncf %47 : vector<32x256xf32> to vector<32x256xbf16>
    %c0_46 = arith.constant 0 : index
    %c0_47 = arith.constant 0 : index
    %49 = vector.load %arg17[%c0_46, %c0_47] : memref<256x256xbf16, #tpu.memory_space<vmem>>, vector<256x256xbf16>
    %cst_48 = arith.constant dense<0.000000e+00> : vector<32x256xf32>
    %50 = tpu.matmul %48, %49, %cst_48 {dimension_numbers = #tpu.dot_dimension_numbers<[1], [0], [0], [1], [0, 0, 1, 1], [], []>} : vector<32x256xbf16>, vector<256x256xbf16>, vector<32x256xf32> -> vector<32x256xf32>
    %51 = arith.addf %45, %50 : vector<32x256xf32>
    %c0_49 = arith.constant 0 : index
    %c0_50 = arith.constant 0 : index
    %52 = vector.load %arg18[%c0_49, %c0_50] : memref<1x256xf32, #tpu.memory_space<vmem>>, vector<1x256xf32>
    %53 = vector.broadcast %52 : vector<1x256xf32> to vector<32x256xf32>
    %54 = arith.addf %51, %53 : vector<32x256xf32>
    %55 = arith.addf %54, %16 : vector<32x256xf32>
    %cst_51 = arith.constant 0.000000e+00 : f32
    %56 = vector.broadcast %cst_51 : f32 to vector<32x256xf32>
    %57 = arith.maximumf %55, %56 : vector<32x256xf32>
    %58 = arith.truncf %57 : vector<32x256xf32> to vector<32x256xbf16>
    %c0_52 = arith.constant 0 : index
    %c0_53 = arith.constant 0 : index
    %59 = vector.load %arg19[%c0_52, %c0_53] : memref<16x32xbf16, #tpu.memory_space<vmem>>, vector<16x32xbf16>
    %cst_54 = arith.constant dense<0.000000e+00> : vector<16x256xf32>
    %60 = tpu.matmul %59, %58, %cst_54 {dimension_numbers = #tpu.dot_dimension_numbers<[1], [0], [0], [1], [0, 0, 1, 1], [], []>} : vector<16x32xbf16>, vector<32x256xbf16>, vector<16x256xf32> -> vector<16x256xf32>
    %61 = arith.truncf %60 : vector<16x256xf32> to vector<16x256xbf16>
    %c0_55 = arith.constant 0 : index
    %c0_56 = arith.constant 0 : index
    %62 = vector.load %arg22[%c0_55, %c0_56] : memref<256x256xbf16, #tpu.memory_space<vmem>>, vector<256x256xbf16>
    %cst_57 = arith.constant dense<0.000000e+00> : vector<16x256xf32>
    %63 = tpu.matmul %61, %62, %cst_57 {dimension_numbers = #tpu.dot_dimension_numbers<[1], [0], [0], [1], [0, 0, 1, 1], [], []>} : vector<16x256xbf16>, vector<256x256xbf16>, vector<16x256xf32> -> vector<16x256xf32>
    %c0_58 = arith.constant 0 : index
    %c0_59 = arith.constant 0 : index
    %64 = vector.load %arg20[%c0_58, %c0_59] : memref<16x32xbf16, #tpu.memory_space<vmem>>, vector<16x32xbf16>
    %cst_60 = arith.constant dense<0.000000e+00> : vector<16x256xf32>
    %65 = tpu.matmul %64, %58, %cst_60 {dimension_numbers = #tpu.dot_dimension_numbers<[1], [0], [0], [1], [0, 0, 1, 1], [], []>} : vector<16x32xbf16>, vector<32x256xbf16>, vector<16x256xf32> -> vector<16x256xf32>
    %66 = arith.truncf %65 : vector<16x256xf32> to vector<16x256xbf16>
    %c0_61 = arith.constant 0 : index
    %c0_62 = arith.constant 0 : index
    %67 = vector.load %arg23[%c0_61, %c0_62] : memref<256x256xbf16, #tpu.memory_space<vmem>>, vector<256x256xbf16>
    %cst_63 = arith.constant dense<0.000000e+00> : vector<16x256xf32>
    %68 = tpu.matmul %66, %67, %cst_63 {dimension_numbers = #tpu.dot_dimension_numbers<[1], [0], [0], [1], [0, 0, 1, 1], [], []>} : vector<16x256xbf16>, vector<256x256xbf16>, vector<16x256xf32> -> vector<16x256xf32>
    %69 = arith.addf %63, %68 : vector<16x256xf32>
    %c0_64 = arith.constant 0 : index
    %c0_65 = arith.constant 0 : index
    %70 = vector.load %arg21[%c0_64, %c0_65] : memref<16x32xbf16, #tpu.memory_space<vmem>>, vector<16x32xbf16>
    %cst_66 = arith.constant dense<0.000000e+00> : vector<16x256xf32>
    %71 = tpu.matmul %70, %58, %cst_66 {dimension_numbers = #tpu.dot_dimension_numbers<[1], [0], [0], [1], [0, 0, 1, 1], [], []>} : vector<16x32xbf16>, vector<32x256xbf16>, vector<16x256xf32> -> vector<16x256xf32>
    %72 = arith.truncf %71 : vector<16x256xf32> to vector<16x256xbf16>
    %c0_67 = arith.constant 0 : index
    %c0_68 = arith.constant 0 : index
    %73 = vector.load %arg24[%c0_67, %c0_68] : memref<256x256xbf16, #tpu.memory_space<vmem>>, vector<256x256xbf16>
    %cst_69 = arith.constant dense<0.000000e+00> : vector<16x256xf32>
    %74 = tpu.matmul %72, %73, %cst_69 {dimension_numbers = #tpu.dot_dimension_numbers<[1], [0], [0], [1], [0, 0, 1, 1], [], []>} : vector<16x256xbf16>, vector<256x256xbf16>, vector<16x256xf32> -> vector<16x256xf32>
    %75 = arith.addf %69, %74 : vector<16x256xf32>
    %c0_70 = arith.constant 0 : index
    %c0_71 = arith.constant 0 : index
    %76 = vector.load %arg25[%c0_70, %c0_71] : memref<1x256xf32, #tpu.memory_space<vmem>>, vector<1x256xf32>
    %77 = vector.broadcast %76 : vector<1x256xf32> to vector<16x256xf32>
    %78 = arith.addf %75, %77 : vector<16x256xf32>
    %cst_72 = arith.constant 0.000000e+00 : f32
    %79 = vector.broadcast %cst_72 : f32 to vector<16x256xf32>
    %80 = arith.maximumf %78, %79 : vector<16x256xf32>
    %81 = arith.truncf %80 : vector<16x256xf32> to vector<16x256xbf16>
    %c0_73 = arith.constant 0 : index
    %c0_74 = arith.constant 0 : index
    %82 = vector.load %arg26[%c0_73, %c0_74] : memref<16x16xbf16, #tpu.memory_space<vmem>>, vector<16x16xbf16>
    %cst_75 = arith.constant dense<0.000000e+00> : vector<16x256xf32>
    %83 = tpu.matmul %82, %81, %cst_75 {dimension_numbers = #tpu.dot_dimension_numbers<[1], [0], [0], [1], [0, 0, 1, 1], [], []>} : vector<16x16xbf16>, vector<16x256xbf16>, vector<16x256xf32> -> vector<16x256xf32>
    %84 = arith.truncf %83 : vector<16x256xf32> to vector<16x256xbf16>
    %c0_76 = arith.constant 0 : index
    %c0_77 = arith.constant 0 : index
    %85 = vector.load %arg28[%c0_76, %c0_77] : memref<256x256xbf16, #tpu.memory_space<vmem>>, vector<256x256xbf16>
    %cst_78 = arith.constant dense<0.000000e+00> : vector<16x256xf32>
    %86 = tpu.matmul %84, %85, %cst_78 {dimension_numbers = #tpu.dot_dimension_numbers<[1], [0], [0], [1], [0, 0, 1, 1], [], []>} : vector<16x256xbf16>, vector<256x256xbf16>, vector<16x256xf32> -> vector<16x256xf32>
    %c0_79 = arith.constant 0 : index
    %c0_80 = arith.constant 0 : index
    %87 = vector.load %arg29[%c0_79, %c0_80] : memref<256x256xbf16, #tpu.memory_space<vmem>>, vector<256x256xbf16>
    %cst_81 = arith.constant dense<0.000000e+00> : vector<16x256xf32>
    %88 = tpu.matmul %81, %87, %cst_81 {dimension_numbers = #tpu.dot_dimension_numbers<[1], [0], [0], [1], [0, 0, 1, 1], [], []>} : vector<16x256xbf16>, vector<256x256xbf16>, vector<16x256xf32> -> vector<16x256xf32>
    %89 = arith.addf %86, %88 : vector<16x256xf32>
    %c0_82 = arith.constant 0 : index
    %c0_83 = arith.constant 0 : index
    %90 = vector.load %arg27[%c0_82, %c0_83] : memref<16x16xbf16, #tpu.memory_space<vmem>>, vector<16x16xbf16>
    %cst_84 = arith.constant dense<0.000000e+00> : vector<16x256xf32>
    %91 = tpu.matmul %90, %81, %cst_84 {dimension_numbers = #tpu.dot_dimension_numbers<[1], [0], [0], [1], [0, 0, 1, 1], [], []>} : vector<16x16xbf16>, vector<16x256xbf16>, vector<16x256xf32> -> vector<16x256xf32>
    %92 = arith.truncf %91 : vector<16x256xf32> to vector<16x256xbf16>
    %c0_85 = arith.constant 0 : index
    %c0_86 = arith.constant 0 : index
    %93 = vector.load %arg30[%c0_85, %c0_86] : memref<256x256xbf16, #tpu.memory_space<vmem>>, vector<256x256xbf16>
    %cst_87 = arith.constant dense<0.000000e+00> : vector<16x256xf32>
    %94 = tpu.matmul %92, %93, %cst_87 {dimension_numbers = #tpu.dot_dimension_numbers<[1], [0], [0], [1], [0, 0, 1, 1], [], []>} : vector<16x256xbf16>, vector<256x256xbf16>, vector<16x256xf32> -> vector<16x256xf32>
    %95 = arith.addf %89, %94 : vector<16x256xf32>
    %c0_88 = arith.constant 0 : index
    %c0_89 = arith.constant 0 : index
    %96 = vector.load %arg31[%c0_88, %c0_89] : memref<1x256xf32, #tpu.memory_space<vmem>>, vector<1x256xf32>
    %97 = vector.broadcast %96 : vector<1x256xf32> to vector<16x256xf32>
    %98 = arith.addf %95, %97 : vector<16x256xf32>
    %c0_90 = arith.constant 0 : index
    %c0_91 = arith.constant 0 : index
    %99 = vector.load %arg32[%c0_90, %c0_91] : memref<16x32xbf16, #tpu.memory_space<vmem>>, vector<16x32xbf16>
    %cst_92 = arith.constant dense<0.000000e+00> : vector<16x256xf32>
    %100 = tpu.matmul %99, %58, %cst_92 {dimension_numbers = #tpu.dot_dimension_numbers<[1], [0], [0], [1], [0, 0, 1, 1], [], []>} : vector<16x32xbf16>, vector<32x256xbf16>, vector<16x256xf32> -> vector<16x256xf32>
    %101 = arith.truncf %100 : vector<16x256xf32> to vector<16x256xbf16>
    %c0_93 = arith.constant 0 : index
    %c0_94 = arith.constant 0 : index
    %102 = vector.load %arg33[%c0_93, %c0_94] : memref<256x256xbf16, #tpu.memory_space<vmem>>, vector<256x256xbf16>
    %cst_95 = arith.constant dense<0.000000e+00> : vector<16x256xf32>
    %103 = tpu.matmul %101, %102, %cst_95 {dimension_numbers = #tpu.dot_dimension_numbers<[1], [0], [0], [1], [0, 0, 1, 1], [], []>} : vector<16x256xbf16>, vector<256x256xbf16>, vector<16x256xf32> -> vector<16x256xf32>
    %104 = arith.addf %98, %103 : vector<16x256xf32>
    %cst_96 = arith.constant 0.000000e+00 : f32
    %105 = vector.broadcast %cst_96 : f32 to vector<16x256xf32>
    %106 = arith.maximumf %104, %105 : vector<16x256xf32>
    %107 = arith.truncf %106 : vector<16x256xf32> to vector<16x256xbf16>
    %c0_97 = arith.constant 0 : index
    %c0_98 = arith.constant 0 : index
    %108 = vector.load %arg34[%c0_97, %c0_98] : memref<8x16xbf16, #tpu.memory_space<vmem>>, vector<8x16xbf16>
    %cst_99 = arith.constant dense<0.000000e+00> : vector<8x256xf32>
    %109 = tpu.matmul %108, %107, %cst_99 {dimension_numbers = #tpu.dot_dimension_numbers<[1], [0], [0], [1], [0, 0, 1, 1], [], []>} : vector<8x16xbf16>, vector<16x256xbf16>, vector<8x256xf32> -> vector<8x256xf32>
    %110 = arith.truncf %109 : vector<8x256xf32> to vector<8x256xbf16>
    %c0_100 = arith.constant 0 : index
    %c0_101 = arith.constant 0 : index
    %111 = vector.load %arg37[%c0_100, %c0_101] : memref<256x256xbf16, #tpu.memory_space<vmem>>, vector<256x256xbf16>
    %cst_102 = arith.constant dense<0.000000e+00> : vector<8x256xf32>
    %112 = tpu.matmul %110, %111, %cst_102 {dimension_numbers = #tpu.dot_dimension_numbers<[1], [0], [0], [1], [0, 0, 1, 1], [], []>} : vector<8x256xbf16>, vector<256x256xbf16>, vector<8x256xf32> -> vector<8x256xf32>
    %c0_103 = arith.constant 0 : index
    %c0_104 = arith.constant 0 : index
    %113 = vector.load %arg35[%c0_103, %c0_104] : memref<8x16xbf16, #tpu.memory_space<vmem>>, vector<8x16xbf16>
    %cst_105 = arith.constant dense<0.000000e+00> : vector<8x256xf32>
    %114 = tpu.matmul %113, %107, %cst_105 {dimension_numbers = #tpu.dot_dimension_numbers<[1], [0], [0], [1], [0, 0, 1, 1], [], []>} : vector<8x16xbf16>, vector<16x256xbf16>, vector<8x256xf32> -> vector<8x256xf32>
    %115 = arith.truncf %114 : vector<8x256xf32> to vector<8x256xbf16>
    %c0_106 = arith.constant 0 : index
    %c0_107 = arith.constant 0 : index
    %116 = vector.load %arg38[%c0_106, %c0_107] : memref<256x256xbf16, #tpu.memory_space<vmem>>, vector<256x256xbf16>
    %cst_108 = arith.constant dense<0.000000e+00> : vector<8x256xf32>
    %117 = tpu.matmul %115, %116, %cst_108 {dimension_numbers = #tpu.dot_dimension_numbers<[1], [0], [0], [1], [0, 0, 1, 1], [], []>} : vector<8x256xbf16>, vector<256x256xbf16>, vector<8x256xf32> -> vector<8x256xf32>
    %118 = arith.addf %112, %117 : vector<8x256xf32>
    %c0_109 = arith.constant 0 : index
    %c0_110 = arith.constant 0 : index
    %119 = vector.load %arg36[%c0_109, %c0_110] : memref<8x16xbf16, #tpu.memory_space<vmem>>, vector<8x16xbf16>
    %cst_111 = arith.constant dense<0.000000e+00> : vector<8x256xf32>
    %120 = tpu.matmul %119, %107, %cst_111 {dimension_numbers = #tpu.dot_dimension_numbers<[1], [0], [0], [1], [0, 0, 1, 1], [], []>} : vector<8x16xbf16>, vector<16x256xbf16>, vector<8x256xf32> -> vector<8x256xf32>
    %121 = arith.truncf %120 : vector<8x256xf32> to vector<8x256xbf16>
    %c0_112 = arith.constant 0 : index
    %c0_113 = arith.constant 0 : index
    %122 = vector.load %arg39[%c0_112, %c0_113] : memref<256x256xbf16, #tpu.memory_space<vmem>>, vector<256x256xbf16>
    %cst_114 = arith.constant dense<0.000000e+00> : vector<8x256xf32>
    %123 = tpu.matmul %121, %122, %cst_114 {dimension_numbers = #tpu.dot_dimension_numbers<[1], [0], [0], [1], [0, 0, 1, 1], [], []>} : vector<8x256xbf16>, vector<256x256xbf16>, vector<8x256xf32> -> vector<8x256xf32>
    %124 = arith.addf %118, %123 : vector<8x256xf32>
    %c0_115 = arith.constant 0 : index
    %c0_116 = arith.constant 0 : index
    %125 = vector.load %arg40[%c0_115, %c0_116] : memref<1x256xf32, #tpu.memory_space<vmem>>, vector<1x256xf32>
    %126 = vector.broadcast %125 : vector<1x256xf32> to vector<8x256xf32>
    %127 = arith.addf %124, %126 : vector<8x256xf32>
    %cst_117 = arith.constant 0.000000e+00 : f32
    %128 = vector.broadcast %cst_117 : f32 to vector<8x256xf32>
    %129 = arith.maximumf %127, %128 : vector<8x256xf32>
    %130 = arith.truncf %129 : vector<8x256xf32> to vector<8x256xbf16>
    %c0_118 = arith.constant 0 : index
    %c0_119 = arith.constant 0 : index
    %131 = vector.load %arg41[%c0_118, %c0_119] : memref<8x8xbf16, #tpu.memory_space<vmem>>, vector<8x8xbf16>
    %cst_120 = arith.constant dense<0.000000e+00> : vector<8x256xf32>
    %132 = tpu.matmul %131, %130, %cst_120 {dimension_numbers = #tpu.dot_dimension_numbers<[1], [0], [0], [1], [0, 0, 1, 1], [], []>} : vector<8x8xbf16>, vector<8x256xbf16>, vector<8x256xf32> -> vector<8x256xf32>
    %133 = arith.truncf %132 : vector<8x256xf32> to vector<8x256xbf16>
    %c0_121 = arith.constant 0 : index
    %c0_122 = arith.constant 0 : index
    %134 = vector.load %arg43[%c0_121, %c0_122] : memref<256x256xbf16, #tpu.memory_space<vmem>>, vector<256x256xbf16>
    %cst_123 = arith.constant dense<0.000000e+00> : vector<8x256xf32>
    %135 = tpu.matmul %133, %134, %cst_123 {dimension_numbers = #tpu.dot_dimension_numbers<[1], [0], [0], [1], [0, 0, 1, 1], [], []>} : vector<8x256xbf16>, vector<256x256xbf16>, vector<8x256xf32> -> vector<8x256xf32>
    %c0_124 = arith.constant 0 : index
    %c0_125 = arith.constant 0 : index
    %136 = vector.load %arg44[%c0_124, %c0_125] : memref<256x256xbf16, #tpu.memory_space<vmem>>, vector<256x256xbf16>
    %cst_126 = arith.constant dense<0.000000e+00> : vector<8x256xf32>
    %137 = tpu.matmul %130, %136, %cst_126 {dimension_numbers = #tpu.dot_dimension_numbers<[1], [0], [0], [1], [0, 0, 1, 1], [], []>} : vector<8x256xbf16>, vector<256x256xbf16>, vector<8x256xf32> -> vector<8x256xf32>
    %138 = arith.addf %135, %137 : vector<8x256xf32>
    %c0_127 = arith.constant 0 : index
    %c0_128 = arith.constant 0 : index
    %139 = vector.load %arg42[%c0_127, %c0_128] : memref<8x8xbf16, #tpu.memory_space<vmem>>, vector<8x8xbf16>
    %cst_129 = arith.constant dense<0.000000e+00> : vector<8x256xf32>
    %140 = tpu.matmul %139, %130, %cst_129 {dimension_numbers = #tpu.dot_dimension_numbers<[1], [0], [0], [1], [0, 0, 1, 1], [], []>} : vector<8x8xbf16>, vector<8x256xbf16>, vector<8x256xf32> -> vector<8x256xf32>
    %141 = arith.truncf %140 : vector<8x256xf32> to vector<8x256xbf16>
    %c0_130 = arith.constant 0 : index
    %c0_131 = arith.constant 0 : index
    %142 = vector.load %arg45[%c0_130, %c0_131] : memref<256x256xbf16, #tpu.memory_space<vmem>>, vector<256x256xbf16>
    %cst_132 = arith.constant dense<0.000000e+00> : vector<8x256xf32>
    %143 = tpu.matmul %141, %142, %cst_132 {dimension_numbers = #tpu.dot_dimension_numbers<[1], [0], [0], [1], [0, 0, 1, 1], [], []>} : vector<8x256xbf16>, vector<256x256xbf16>, vector<8x256xf32> -> vector<8x256xf32>
    %144 = arith.addf %138, %143 : vector<8x256xf32>
    %c0_133 = arith.constant 0 : index
    %c0_134 = arith.constant 0 : index
    %145 = vector.load %arg46[%c0_133, %c0_134] : memref<1x256xf32, #tpu.memory_space<vmem>>, vector<1x256xf32>
    %146 = vector.broadcast %145 : vector<1x256xf32> to vector<8x256xf32>
    %147 = arith.addf %144, %146 : vector<8x256xf32>
    %c0_135 = arith.constant 0 : index
    %c0_136 = arith.constant 0 : index
    %148 = vector.load %arg47[%c0_135, %c0_136] : memref<8x16xbf16, #tpu.memory_space<vmem>>, vector<8x16xbf16>
    %cst_137 = arith.constant dense<0.000000e+00> : vector<8x256xf32>
    %149 = tpu.matmul %148, %107, %cst_137 {dimension_numbers = #tpu.dot_dimension_numbers<[1], [0], [0], [1], [0, 0, 1, 1], [], []>} : vector<8x16xbf16>, vector<16x256xbf16>, vector<8x256xf32> -> vector<8x256xf32>
    %150 = arith.truncf %149 : vector<8x256xf32> to vector<8x256xbf16>
    %c0_138 = arith.constant 0 : index
    %c0_139 = arith.constant 0 : index
    %151 = vector.load %arg48[%c0_138, %c0_139] : memref<256x256xbf16, #tpu.memory_space<vmem>>, vector<256x256xbf16>
    %cst_140 = arith.constant dense<0.000000e+00> : vector<8x256xf32>
    %152 = tpu.matmul %150, %151, %cst_140 {dimension_numbers = #tpu.dot_dimension_numbers<[1], [0], [0], [1], [0, 0, 1, 1], [], []>} : vector<8x256xbf16>, vector<256x256xbf16>, vector<8x256xf32> -> vector<8x256xf32>
    %153 = arith.addf %147, %152 : vector<8x256xf32>
    %cst_141 = arith.constant 0.000000e+00 : f32
    %154 = vector.broadcast %cst_141 : f32 to vector<8x256xf32>
    %155 = arith.maximumf %153, %154 : vector<8x256xf32>
    %c0_142 = arith.constant 0 : index
    %c0_143 = arith.constant 0 : index
    %156 = vector.load %arg49[%c0_142, %c0_143] : memref<2x8xbf16, #tpu.memory_space<vmem>>, vector<2x8xbf16>
    %157 = arith.truncf %155 : vector<8x256xf32> to vector<8x256xbf16>
    %cst_144 = arith.constant dense<0.000000e+00> : vector<2x256xf32>
    %158 = tpu.matmul %156, %157, %cst_144 {dimension_numbers = #tpu.dot_dimension_numbers<[1], [0], [0], [1], [0, 0, 1, 1], [], []>} : vector<2x8xbf16>, vector<8x256xbf16>, vector<2x256xf32> -> vector<2x256xf32>
    %159 = arith.truncf %158 : vector<2x256xf32> to vector<2x256xbf16>
    %c0_145 = arith.constant 0 : index
    %c0_146 = arith.constant 0 : index
    %160 = vector.load %arg50[%c0_145, %c0_146] : memref<256x128xbf16, #tpu.memory_space<vmem>>, vector<256x128xbf16>
    %cst_147 = arith.constant dense<0.000000e+00> : vector<2x128xf32>
    %161 = tpu.matmul %159, %160, %cst_147 {dimension_numbers = #tpu.dot_dimension_numbers<[1], [0], [0], [1], [0, 0, 1, 1], [], []>} : vector<2x256xbf16>, vector<256x128xbf16>, vector<2x128xf32> -> vector<2x128xf32>
    %c0_148 = arith.constant 0 : index
    %c0_149 = arith.constant 0 : index
    %162 = vector.load %arg51[%c0_148, %c0_149] : memref<1x128xf32, #tpu.memory_space<vmem>>, vector<1x128xf32>
    %163 = vector.broadcast %162 : vector<1x128xf32> to vector<2x128xf32>
    %164 = arith.addf %161, %163 : vector<2x128xf32>
    %c0_150 = arith.constant 0 : index
    %c0_151 = arith.constant 0 : index
    %165 = vector.load %arg52[%c0_150, %c0_151] : memref<2x128xf32, #tpu.memory_space<vmem>>, vector<2x128xf32>
    tpu.vector_store %arg52[%c0_150, %c0_151], %164 {strides = array<i32>} : memref<2x128xf32, #tpu.memory_space<vmem>>, vector<2x128xf32>,
    return
  }
  func.func @transform_0(%arg0: i32) -> (i32, i32) {
    %c0_i32 = arith.constant 0 : i32
    %c0_i32_0 = arith.constant 0 : i32
    %c0_i32_1 = arith.constant 0 : i32
    return %c0_i32, %c0_i32_0 : i32, i32
  }
  func.func @transform_1(%arg0: i32) -> (i32, i32) {
    %c0_i32 = arith.constant 0 : i32
    %c0_i32_0 = arith.constant 0 : i32
    %c0_i32_1 = arith.constant 0 : i32
    return %c0_i32, %c0_i32_0 : i32, i32
  }
  func.func @transform_2(%arg0: i32) -> (i32, i32) {
    %c0_i32 = arith.constant 0 : i32
    %c0_i32_0 = arith.constant 0 : i32
    %c0_i32_1 = arith.constant 0 : i32
    return %c0_i32, %c0_i32_0 : i32, i32
  }
  func.func @transform_3(%arg0: i32) -> (i32, i32) {
    %c0_i32 = arith.constant 0 : i32
    %c0_i32_0 = arith.constant 0 : i32
    %c0_i32_1 = arith.constant 0 : i32
    return %c0_i32, %c0_i32_0 : i32, i32
  }
  func.func @transform_4(%arg0: i32) -> (i32, i32) {
    %c0_i32 = arith.constant 0 : i32
    %c0_i32_0 = arith.constant 0 : i32
    %c0_i32_1 = arith.constant 0 : i32
    return %c0_i32, %c0_i32_0 : i32, i32
  }
  func.func @transform_5(%arg0: i32) -> (i32, i32) {
    %c0_i32 = arith.constant 0 : i32
    %c0_i32_0 = arith.constant 0 : i32
    %c0_i32_1 = arith.constant 0 : i32
    return %c0_i32, %c0_i32_0 : i32, i32
  }
  func.func @transform_6(%arg0: i32) -> (i32, i32) {
    %c0_i32 = arith.constant 0 : i32
    %c0_i32_0 = arith.constant 0 : i32
    %c0_i32_1 = arith.constant 0 : i32
    return %c0_i32, %c0_i32_0 : i32, i32
  }
  func.func @transform_7(%arg0: i32) -> (i32, i32) {
    %c0_i32 = arith.constant 0 : i32
    %c0_i32_0 = arith.constant 0 : i32
    %c0_i32_1 = arith.constant 0 : i32
    return %c0_i32, %c0_i32_0 : i32, i32
  }
  func.func @transform_8(%arg0: i32) -> (i32, i32) {
    %c0_i32 = arith.constant 0 : i32
    %c0_i32_0 = arith.constant 0 : i32
    %c0_i32_1 = arith.constant 0 : i32
    return %c0_i32, %c0_i32_0 : i32, i32
  }
  func.func @transform_9(%arg0: i32) -> (i32, i32) {
    %c0_i32 = arith.constant 0 : i32
    %c0_i32_0 = arith.constant 0 : i32
    %c0_i32_1 = arith.constant 0 : i32
    return %c0_i32, %c0_i32_0 : i32, i32
  }
  func.func @transform_10(%arg0: i32) -> (i32, i32) {
    %c0_i32 = arith.constant 0 : i32
    %c0_i32_0 = arith.constant 0 : i32
    %c0_i32_1 = arith.constant 0 : i32
    return %c0_i32, %c0_i32_0 : i32, i32
  }
  func.func @transform_11(%arg0: i32) -> (i32, i32) {
    %c0_i32 = arith.constant 0 : i32
    %c0_i32_0 = arith.constant 0 : i32
    %c0_i32_1 = arith.constant 0 : i32
    return %c0_i32, %c0_i32_0 : i32, i32
  }
  func.func @transform_12(%arg0: i32) -> (i32, i32) {
    %c0_i32 = arith.constant 0 : i32
    %c0_i32_0 = arith.constant 0 : i32
    %c0_i32_1 = arith.constant 0 : i32
    return %c0_i32, %c0_i32_0 : i32, i32
  }
  func.func @transform_13(%arg0: i32) -> (i32, i32) {
    %c0_i32 = arith.constant 0 : i32
    %c0_i32_0 = arith.constant 0 : i32
    %c0_i32_1 = arith.constant 0 : i32
    return %c0_i32, %c0_i32_0 : i32, i32
  }
  func.func @transform_14(%arg0: i32) -> (i32, i32) {
    %c0_i32 = arith.constant 0 : i32
    %c0_i32_0 = arith.constant 0 : i32
    %c0_i32_1 = arith.constant 0 : i32
    return %c0_i32, %c0_i32_0 : i32, i32
  }
  func.func @transform_15(%arg0: i32) -> (i32, i32) {
    %c0_i32 = arith.constant 0 : i32
    %c0_i32_0 = arith.constant 0 : i32
    %c0_i32_1 = arith.constant 0 : i32
    return %c0_i32, %c0_i32_0 : i32, i32
  }
  func.func @transform_16(%arg0: i32) -> (i32, i32) {
    %c0_i32 = arith.constant 0 : i32
    %c0_i32_0 = arith.constant 0 : i32
    %c0_i32_1 = arith.constant 0 : i32
    return %c0_i32, %c0_i32_0 : i32, i32
  }
  func.func @transform_17(%arg0: i32) -> (i32, i32) {
    %c0_i32 = arith.constant 0 : i32
    %c0_i32_0 = arith.constant 0 : i32
    %c0_i32_1 = arith.constant 0 : i32
    return %c0_i32, %c0_i32_0 : i32, i32
  }
  func.func @transform_18(%arg0: i32) -> (i32, i32) {
    %c0_i32 = arith.constant 0 : i32
    %c0_i32_0 = arith.constant 0 : i32
    %c0_i32_1 = arith.constant 0 : i32
    return %c0_i32, %c0_i32_0 : i32, i32
  }
  func.func @transform_19(%arg0: i32) -> (i32, i32) {
    %c0_i32 = arith.constant 0 : i32
    %c0_i32_0 = arith.constant 0 : i32
    %c0_i32_1 = arith.constant 0 : i32
    return %c0_i32, %c0_i32_0 : i32, i32
  }
  func.func @transform_20(%arg0: i32) -> (i32, i32) {
    %c0_i32 = arith.constant 0 : i32
    %c0_i32_0 = arith.constant 0 : i32
    %c0_i32_1 = arith.constant 0 : i32
    return %c0_i32, %c0_i32_0 : i32, i32
  }
  func.func @transform_21(%arg0: i32) -> (i32, i32) {
    %c0_i32 = arith.constant 0 : i32
    %c0_i32_0 = arith.constant 0 : i32
    %c0_i32_1 = arith.constant 0 : i32
    return %c0_i32, %c0_i32_0 : i32, i32
  }
  func.func @transform_22(%arg0: i32) -> (i32, i32) {
    %c0_i32 = arith.constant 0 : i32
    %c0_i32_0 = arith.constant 0 : i32
    %c0_i32_1 = arith.constant 0 : i32
    return %c0_i32, %c0_i32_0 : i32, i32
  }
  func.func @transform_23(%arg0: i32) -> (i32, i32) {
    %c0_i32 = arith.constant 0 : i32
    %c0_i32_0 = arith.constant 0 : i32
    %c0_i32_1 = arith.constant 0 : i32
    return %c0_i32, %c0_i32_0 : i32, i32
  }
  func.func @transform_24(%arg0: i32) -> (i32, i32) {
    %c0_i32 = arith.constant 0 : i32
    %c0_i32_0 = arith.constant 0 : i32
    %c0_i32_1 = arith.constant 0 : i32
    return %c0_i32, %c0_i32_0 : i32, i32
  }
  func.func @transform_25(%arg0: i32) -> (i32, i32) {
    %c0_i32 = arith.constant 0 : i32
    %c0_i32_0 = arith.constant 0 : i32
    %c0_i32_1 = arith.constant 0 : i32
    return %c0_i32, %c0_i32_0 : i32, i32
  }
  func.func @transform_26(%arg0: i32) -> (i32, i32) {
    %c0_i32 = arith.constant 0 : i32
    %c0_i32_0 = arith.constant 0 : i32
    %c0_i32_1 = arith.constant 0 : i32
    return %c0_i32, %c0_i32_0 : i32, i32
  }
  func.func @transform_27(%arg0: i32) -> (i32, i32) {
    %c0_i32 = arith.constant 0 : i32
    %c0_i32_0 = arith.constant 0 : i32
    %c0_i32_1 = arith.constant 0 : i32
    return %c0_i32, %c0_i32_0 : i32, i32
  }
  func.func @transform_28(%arg0: i32) -> (i32, i32) {
    %c0_i32 = arith.constant 0 : i32
    %c0_i32_0 = arith.constant 0 : i32
    %c0_i32_1 = arith.constant 0 : i32
    return %c0_i32, %c0_i32_0 : i32, i32
  }
  func.func @transform_29(%arg0: i32) -> (i32, i32) {
    %c0_i32 = arith.constant 0 : i32
    %c0_i32_0 = arith.constant 0 : i32
    %c0_i32_1 = arith.constant 0 : i32
    return %c0_i32, %c0_i32_0 : i32, i32
  }
  func.func @transform_30(%arg0: i32) -> (i32, i32) {
    %c0_i32 = arith.constant 0 : i32
    %c0_i32_0 = arith.constant 0 : i32
    %c0_i32_1 = arith.constant 0 : i32
    return %c0_i32, %c0_i32_0 : i32, i32
  }
  func.func @transform_31(%arg0: i32) -> (i32, i32) {
    %c0_i32 = arith.constant 0 : i32
    %c0_i32_0 = arith.constant 0 : i32
    %c0_i32_1 = arith.constant 0 : i32
    return %c0_i32, %c0_i32_0 : i32, i32
  }
  func.func @transform_32(%arg0: i32) -> (i32, i32) {
    %c0_i32 = arith.constant 0 : i32
    %c0_i32_0 = arith.constant 0 : i32
    %c0_i32_1 = arith.constant 0 : i32
    return %c0_i32, %c0_i32_0 : i32, i32
  }
  func.func @transform_33(%arg0: i32) -> (i32, i32) {
    %c0_i32 = arith.constant 0 : i32
    %c0_i32_0 = arith.constant 0 : i32
    %c0_i32_1 = arith.constant 0 : i32
    return %c0_i32, %c0_i32_0 : i32, i32
  }
  func.func @transform_34(%arg0: i32) -> (i32, i32) {
    %c0_i32 = arith.constant 0 : i32
    %c0_i32_0 = arith.constant 0 : i32
    %c0_i32_1 = arith.constant 0 : i32
    return %c0_i32, %c0_i32_0 : i32, i32
  }
  func.func @transform_35(%arg0: i32) -> (i32, i32) {
    %c0_i32 = arith.constant 0 : i32
    %c0_i32_0 = arith.constant 0 : i32
    %c0_i32_1 = arith.constant 0 : i32
    return %c0_i32, %c0_i32_0 : i32, i32
  }
  func.func @transform_36(%arg0: i32) -> (i32, i32) {
    %c0_i32 = arith.constant 0 : i32
    %c0_i32_0 = arith.constant 0 : i32
    %c0_i32_1 = arith.constant 0 : i32
    return %c0_i32, %c0_i32_0 : i32, i32
  }
  func.func @transform_37(%arg0: i32) -> (i32, i32) {
    %c0_i32 = arith.constant 0 : i32
    %c0_i32_0 = arith.constant 0 : i32
    %c0_i32_1 = arith.constant 0 : i32
    return %c0_i32, %c0_i32_0 : i32, i32
  }
  func.func @transform_38(%arg0: i32) -> (i32, i32) {
    %c0_i32 = arith.constant 0 : i32
    %c0_i32_0 = arith.constant 0 : i32
    %c0_i32_1 = arith.constant 0 : i32
    return %c0_i32, %c0_i32_0 : i32, i32
  }
  func.func @transform_39(%arg0: i32) -> (i32, i32) {
    %c0_i32 = arith.constant 0 : i32
    %c0_i32_0 = arith.constant 0 : i32
    %c0_i32_1 = arith.constant 0 : i32
    return %c0_i32, %c0_i32_0 : i32, i32
  }
  func.func @transform_40(%arg0: i32) -> (i32, i32) {
    %c0_i32 = arith.constant 0 : i32
    %c0_i32_0 = arith.constant 0 : i32
    %c0_i32_1 = arith.constant 0 : i32
    return %c0_i32, %c0_i32_0 : i32, i32
  }
  func.func @transform_41(%arg0: i32) -> (i32, i32) {
    %c0_i32 = arith.constant 0 : i32
    %c0_i32_0 = arith.constant 0 : i32
    %c0_i32_1 = arith.constant 0 : i32
    return %c0_i32, %c0_i32_0 : i32, i32
  }
  func.func @transform_42(%arg0: i32) -> (i32, i32) {
    %c0_i32 = arith.constant 0 : i32
    %c0_i32_0 = arith.constant 0 : i32
    %c0_i32_1 = arith.constant 0 : i32
    return %c0_i32, %c0_i32_0 : i32, i32
  }
  func.func @transform_43(%arg0: i32) -> (i32, i32) {
    %c0_i32 = arith.constant 0 : i32
    %c0_i32_0 = arith.constant 0 : i32
    %c0_i32_1 = arith.constant 0 : i32
    return %c0_i32, %c0_i32_0 : i32, i32
  }
  func.func @transform_44(%arg0: i32) -> (i32, i32) {
    %c0_i32 = arith.constant 0 : i32
    %c0_i32_0 = arith.constant 0 : i32
    %c0_i32_1 = arith.constant 0 : i32
    return %c0_i32, %c0_i32_0 : i32, i32
  }
  func.func @transform_45(%arg0: i32) -> (i32, i32) {
    %c0_i32 = arith.constant 0 : i32
    %c0_i32_0 = arith.constant 0 : i32
    %c0_i32_1 = arith.constant 0 : i32
    return %c0_i32, %c0_i32_0 : i32, i32
  }
  func.func @transform_46(%arg0: i32) -> (i32, i32) {
    %c0_i32 = arith.constant 0 : i32
    %c0_i32_0 = arith.constant 0 : i32
    %c0_i32_1 = arith.constant 0 : i32
    return %c0_i32, %c0_i32_0 : i32, i32
  }
  func.func @transform_47(%arg0: i32) -> (i32, i32) {
    %c0_i32 = arith.constant 0 : i32
    %c0_i32_0 = arith.constant 0 : i32
    %c0_i32_1 = arith.constant 0 : i32
    return %c0_i32, %c0_i32_0 : i32, i32
  }
  func.func @transform_48(%arg0: i32) -> (i32, i32) {
    %c0_i32 = arith.constant 0 : i32
    %c0_i32_0 = arith.constant 0 : i32
    %c0_i32_1 = arith.constant 0 : i32
    return %c0_i32, %c0_i32_0 : i32, i32
  }
  func.func @transform_49(%arg0: i32) -> (i32, i32) {
    %c0_i32 = arith.constant 0 : i32
    %c0_i32_0 = arith.constant 0 : i32
    %c0_i32_1 = arith.constant 0 : i32
    return %c0_i32, %c0_i32_0 : i32, i32
  }
  func.func @transform_50(%arg0: i32) -> (i32, i32) {
    %c0_i32 = arith.constant 0 : i32
    %c0_i32_0 = arith.constant 0 : i32
    %c0_i32_1 = arith.constant 0 : i32
    return %c0_i32, %c0_i32_0 : i32, i32
  }
  func.func @transform_51(%arg0: i32) -> (i32, i32) {
    %c0_i32 = arith.constant 0 : i32
    %c0_i32_0 = arith.constant 0 : i32
    %c0_i32_1 = arith.constant 0 : i32
    return %c0_i32, %c0_i32_0 : i32, i32
  }
}

</mosaic_0001>

<llo_original>
// kernel: forward.1
$region0: #{forward.1}
  #allocation0 [shape = 'u32[]', space=smem, size = 0x4, offset = 0x4, fixed_abs, tag = 'smem constant byte address 0x4 - core index']
  #allocation1 [shape = 'u32[144,128]{1,0:T(1,128)}', space=vmem, size = 0x12000, scoped, tag = 'internal scratch']
  %s0 = inlined_call_operand.smem [shape: u32[52], index: -1, kind: input, shape index: {}]
  %s1 = sld [smem:[%s0]]
  %s2 = scalar_lea.smem %s0, 1
  %s3 = sld [smem:[%s2]]
  %s4 = scalar_lea.smem %s0, 2
  %s5 = sld [smem:[%s4]]
  %s6 = scalar_lea.smem %s0, 3
  %s7 = sld [smem:[%s6]]
  %s8 = scalar_lea.smem %s0, 4
  %s9 = sld [smem:[%s8]]
  %s10 = scalar_lea.smem %s0, 5
  %s11 = sld [smem:[%s10]]
  %s12 = scalar_lea.smem %s0, 6
  %s13 = sld [smem:[%s12]]
  %s14 = scalar_lea.smem %s0, 7
  %s15 = sld [smem:[%s14]]
  %s16 = scalar_lea.smem %s0, 8
  %s17 = sld [smem:[%s16]]
  %s18 = scalar_lea.smem %s0, 9
  %s19 = sld [smem:[%s18]]
  %s20 = scalar_lea.smem %s0, 10
  %s21 = sld [smem:[%s20]]
  %s22 = scalar_lea.smem %s0, 11
  %s23 = sld [smem:[%s22]]
  %s24 = scalar_lea.smem %s0, 12
  %s25 = sld [smem:[%s24]]
  %s26 = scalar_lea.smem %s0, 13
  %s27 = sld [smem:[%s26]]
  %s28 = scalar_lea.smem %s0, 14
  %s29 = sld [smem:[%s28]]
  %s30 = scalar_lea.smem %s0, 15
  %s31 = sld [smem:[%s30]]
  %s32 = scalar_lea.smem %s0, 16
  %s33 = sld [smem:[%s32]]
  %s34 = scalar_lea.smem %s0, 17
  %s35 = sld [smem:[%s34]]
  %s36 = scalar_lea.smem %s0, 18
  %s37 = sld [smem:[%s36]]
  %s38 = scalar_lea.smem %s0, 19
  %s39 = sld [smem:[%s38]]
  %s40 = scalar_lea.smem %s0, 20
  %s41 = sld [smem:[%s40]]
  %s42 = scalar_lea.smem %s0, 21
  %s43 = sld [smem:[%s42]]
  %s44 = scalar_lea.smem %s0, 22
  %s45 = sld [smem:[%s44]]
  %s46 = scalar_lea.smem %s0, 23
  %s47 = sld [smem:[%s46]]
  %s48 = scalar_lea.smem %s0, 24
  %s49 = sld [smem:[%s48]]
  %s50 = scalar_lea.smem %s0, 25
  %s51 = sld [smem:[%s50]]
  %s52 = scalar_lea.smem %s0, 26
  %s53 = sld [smem:[%s52]]
  %s54 = scalar_lea.smem %s0, 27
  %s55 = sld [smem:[%s54]]
  %s56 = scalar_lea.smem %s0, 28
  %s57 = sld [smem:[%s56]]
  %s58 = scalar_lea.smem %s0, 29
  %s59 = sld [smem:[%s58]]
  %s60 = scalar_lea.smem %s0, 30
  %s61 = sld [smem:[%s60]]
  %s62 = scalar_lea.smem %s0, 31
  %s63 = sld [smem:[%s62]]
  %s64 = scalar_lea.smem %s0, 32
  %s65 = sld [smem:[%s64]]
  %s66 = scalar_lea.smem %s0, 33
  %s67 = sld [smem:[%s66]]
  %s68 = scalar_lea.smem %s0, 34
  %s69 = sld [smem:[%s68]]
  %s70 = scalar_lea.smem %s0, 35
  %s71 = sld [smem:[%s70]]
  %s72 = scalar_lea.smem %s0, 36
  %s73 = sld [smem:[%s72]]
  %s74 = scalar_lea.smem %s0, 37
  %s75 = sld [smem:[%s74]]
  %s76 = scalar_lea.smem %s0, 38
  %s77 = sld [smem:[%s76]]
  %s78 = scalar_lea.smem %s0, 39
  %s79 = sld [smem:[%s78]]
  %s80 = scalar_lea.smem %s0, 40
  %s81 = sld [smem:[%s80]]
  %s82 = scalar_lea.smem %s0, 41
  %s83 = sld [smem:[%s82]]
  %s84 = scalar_lea.smem %s0, 42
  %s85 = sld [smem:[%s84]]
  %s86 = scalar_lea.smem %s0, 43
  %s87 = sld [smem:[%s86]]
  %s88 = scalar_lea.smem %s0, 44
  %s89 = sld [smem:[%s88]]
  %s90 = scalar_lea.smem %s0, 45
  %s91 = sld [smem:[%s90]]
  %s92 = scalar_lea.smem %s0, 46
  %s93 = sld [smem:[%s92]]
  %s94 = scalar_lea.smem %s0, 47
  %s95 = sld [smem:[%s94]]
  %s96 = scalar_lea.smem %s0, 48
  %s97 = sld [smem:[%s96]]
  %s98 = scalar_lea.smem %s0, 49
  %s99 = sld [smem:[%s98]]
  %s100 = scalar_lea.smem %s0, 50
  %s101 = sld [smem:[%s100]]
  %s102 = scalar_lea.smem %s0, 51
  %s103 = sld [smem:[%s102]]
  %s104 = sld [smem:[#allocation0]]
  $region374: #{forward.1} parent=0
    _
  %s106 = ssub.s32 1, %s104
  %s107 = scalar_select 0, %s106, %s104
  $region1: #{forward.1} parent=0
    #allocation2 [shape = 'u8[8192]{0}', space=vmem, size = 0x2000, scoped, tag = 'input window, operand 1, single buffered']
    #allocation3 [shape = 's32[1]{0}', space=sflag, size = 0x4, scoped, tag = 'scoped memory for forward.1']
    #allocation4 [shape = 's32[1]{0}', space=sflag, size = 0x4, scoped, tag = 'scoped memory for forward.1']
    #allocation5 [shape = 'u8[8192]{0}', space=vmem, size = 0x2000, scoped, tag = 'input window, operand 2, single buffered']
    #allocation6 [shape = 's32[1]{0}', space=sflag, size = 0x4, scoped, tag = 'scoped memory for forward.1']
    #allocation7 [shape = 'u8[8192]{0}', space=vmem, size = 0x2000, scoped, tag = 'input window, operand 6, single buffered']
    #allocation8 [shape = 'u8[8192]{0}', space=vmem, size = 0x2000, scoped, tag = 'input window, operand 7, single buffered']
    #allocation9 [shape = 's32[1]{0}', space=sflag, size = 0x4, scoped, tag = 'scoped memory for forward.1']
    #allocation10 [shape = 'u8[8192]{0}', space=vmem, size = 0x2000, scoped, tag = 'input window, operand 12, single buffered']
    #allocation11 [shape = 'u8[8192]{0}', space=vmem, size = 0x2000, scoped, tag = 'input window, operand 13, single buffered']
    #allocation12 [shape = 's32[1]{0}', space=sflag, size = 0x4, scoped, tag = 'scoped memory for forward.1']
    #allocation13 [shape = 'u8[131072]{0}', space=vmem, size = 0x20000, scoped, tag = 'input window, operand 14, single buffered']
    #allocation14 [shape = 'u8[131072]{0}', space=vmem, size = 0x20000, scoped, tag = 'input window, operand 15, single buffered']
    #allocation15 [shape = 's32[1]{0}', space=sflag, size = 0x4, scoped, tag = 'scoped memory for forward.1']
    #allocation16 [shape = 'u8[131072]{0}', space=vmem, size = 0x20000, scoped, tag = 'input window, operand 16, single buffered']
    #allocation17 [shape = 'u8[1024]{0}', space=vmem, size = 0x400, scoped, tag = 'input window, operand 17, single buffered']
    #allocation18 [shape = 's32[1]{0}', space=sflag, size = 0x4, scoped, tag = 'scoped memory for forward.1']
    #allocation19 [shape = 'u8[4096]{0}', space=vmem, size = 0x1000, scoped, tag = 'input window, operand 19, single buffered']
    #allocation20 [shape = 'u8[4096]{0}', space=vmem, size = 0x1000, scoped, tag = 'input window, operand 20, single buffered']
    #allocation21 [shape = 's32[1]{0}', space=sflag, size = 0x4, scoped, tag = 'scoped memory for forward.1']
    #allocation22 [shape = 'u8[131072]{0}', space=vmem, size = 0x20000, scoped, tag = 'input window, operand 21, single buffered']
    #allocation23 [shape = 'u8[131072]{0}', space=vmem, size = 0x20000, scoped, tag = 'input window, operand 22, single buffered']
    #allocation24 [shape = 's32[1]{0}', space=sflag, size = 0x4, scoped, tag = 'scoped memory for forward.1']
    #allocation25 [shape = 'u8[131072]{0}', space=vmem, size = 0x20000, scoped, tag = 'input window, operand 23, single buffered']
    #allocation26 [shape = 'u8[1024]{0}', space=vmem, size = 0x400, scoped, tag = 'input window, operand 24, single buffered']
    #allocation27 [shape = 's32[1]{0}', space=sflag, size = 0x4, scoped, tag = 'scoped memory for forward.1']
    #allocation28 [shape = 'u8[4096]{0}', space=vmem, size = 0x1000, scoped, tag = 'input window, operand 25, single buffered']
    #allocation29 [shape = 'u8[4096]{0}', space=vmem, size = 0x1000, scoped, tag = 'input window, operand 26, single buffered']
    #allocation30 [shape = 's32[1]{0}', space=sflag, size = 0x4, scoped, tag = 'scoped memory for forward.1']
    #allocation31 [shape = 'u8[131072]{0}', space=vmem, size = 0x20000, scoped, tag = 'input window, operand 27, single buffered']
    #allocation32 [shape = 'u8[131072]{0}', space=vmem, size = 0x20000, scoped, tag = 'input window, operand 28, single buffered']
    #allocation33 [shape = 's32[1]{0}', space=sflag, size = 0x4, scoped, tag = 'scoped memory for forward.1']
    #allocation34 [shape = 'u8[131072]{0}', space=vmem, size = 0x20000, scoped, tag = 'input window, operand 29, single buffered']
    #allocation35 [shape = 'u8[1024]{0}', space=vmem, size = 0x400, scoped, tag = 'input window, operand 30, single buffered']
    #allocation36 [shape = 's32[1]{0}', space=sflag, size = 0x4, scoped, tag = 'scoped memory for forward.1']
    #allocation37 [shape = 'u8[4096]{0}', space=vmem, size = 0x1000, scoped, tag = 'input window, operand 31, single buffered']
    #allocation38 [shape = 'u8[131072]{0}', space=vmem, size = 0x20000, scoped, tag = 'input window, operand 32, single buffered']
    #allocation39 [shape = 's32[1]{0}', space=sflag, size = 0x4, scoped, tag = 'scoped memory for forward.1']
    #allocation40 [shape = 'u8[2048]{0}', space=vmem, size = 0x800, scoped, tag = 'input window, operand 33, single buffered']
    #allocation41 [shape = 'u8[2048]{0}', space=vmem, size = 0x800, scoped, tag = 'input window, operand 34, single buffered']
    #allocation42 [shape = 's32[1]{0}', space=sflag, size = 0x4, scoped, tag = 'scoped memory for forward.1']
    #allocation43 [shape = 'u8[2048]{0}', space=vmem, size = 0x800, scoped, tag = 'input window, operand 35, single buffered']
    #allocation44 [shape = 'u8[131072]{0}', space=vmem, size = 0x20000, scoped, tag = 'input window, operand 36, single buffered']
    #allocation45 [shape = 's32[1]{0}', space=sflag, size = 0x4, scoped, tag = 'scoped memory for forward.1']
    #allocation46 [shape = 'u8[131072]{0}', space=vmem, size = 0x20000, scoped, tag = 'input window, operand 37, single buffered']
    #allocation47 [shape = 'u8[131072]{0}', space=vmem, size = 0x20000, scoped, tag = 'input window, operand 38, single buffered']
    #allocation48 [shape = 's32[1]{0}', space=sflag, size = 0x4, scoped, tag = 'scoped memory for forward.1']
    #allocation49 [shape = 'u8[1024]{0}', space=vmem, size = 0x400, scoped, tag = 'input window, operand 39, single buffered']
    #allocation50 [shape = 'u8[2048]{0}', space=vmem, size = 0x800, scoped, tag = 'input window, operand 40, single buffered']
    #allocation51 [shape = 's32[1]{0}', space=sflag, size = 0x4, scoped, tag = 'scoped memory for forward.1']
    #allocation52 [shape = 'u8[2048]{0}', space=vmem, size = 0x800, scoped, tag = 'input window, operand 41, single buffered']
    #allocation53 [shape = 'u8[131072]{0}', space=vmem, size = 0x20000, scoped, tag = 'input window, operand 42, single buffered']
    #allocation54 [shape = 's32[1]{0}', space=sflag, size = 0x4, scoped, tag = 'scoped memory for forward.1']
    #allocation55 [shape = 'u8[131072]{0}', space=vmem, size = 0x20000, scoped, tag = 'input window, operand 43, single buffered']
    #allocation56 [shape = 'u8[131072]{0}', space=vmem, size = 0x20000, scoped, tag = 'input window, operand 44, single buffered']
    #allocation57 [shape = 's32[1]{0}', space=sflag, size = 0x4, scoped, tag = 'scoped memory for forward.1']
    #allocation58 [shape = 'u8[1024]{0}', space=vmem, size = 0x400, scoped, tag = 'input window, operand 45, single buffered']
    #allocation59 [shape = 'u8[2048]{0}', space=vmem, size = 0x800, scoped, tag = 'input window, operand 46, single buffered']
    #allocation60 [shape = 's32[1]{0}', space=sflag, size = 0x4, scoped, tag = 'scoped memory for forward.1']
    #allocation61 [shape = 'u8[65536]{0}', space=vmem, size = 0x10000, scoped, tag = 'input window, operand 49, single buffered']
    #allocation62 [shape = 'u8[512]{0}', space=vmem, size = 0x400, scoped, tag = 'input window, operand 50, single buffered']
    #allocation63 [shape = 's32[1]{0}', space=sflag, size = 0x4, scoped, tag = 'scoped memory for forward.1']
    #allocation64 [shape = 'u8[1024]{0}', space=vmem, size = 0x400, scoped, tag = 'output window, operand 0, single buffered']
    %108 = vsyncpa [#allocation3], 0
    %109 = vsyncpa [#allocation6], 0
    %110 = vsyncpa [#allocation9], 0
    %111 = vsyncpa [#allocation12], 0
    %112 = vsyncpa [#allocation15], 0
    %113 = vsyncpa [#allocation18], 0
    %114 = vsyncpa [#allocation21], 0
    %115 = vsyncpa [#allocation24], 0
    %116 = vsyncpa [#allocation27], 0
    %117 = vsyncpa [#allocation30], 0
    %118 = vsyncpa [#allocation33], 0
    %119 = vsyncpa [#allocation36], 0
    %120 = vsyncpa [#allocation39], 0
    %121 = vsyncpa [#allocation42], 0
    %122 = vsyncpa [#allocation45], 0
    %123 = vsyncpa [#allocation48], 0
    %124 = vsyncpa [#allocation51], 0
    %125 = vsyncpa [#allocation54], 0
    %126 = vsyncpa [#allocation57], 0
    %127 = vsyncpa [#allocation60], 0
    %128 = vsyncpa [#allocation63], 0
    %129 = vsyncpa [#allocation4], 0
    // Predicated region
    $region2: #{forward.1} parent=1 // pred_check
      _
    $region3: #{forward.1} parent=1 // pred_check_branch
      %131 = sbr.rel (0) target = $region5
    $region4: #{forward.1} parent=1 // pred_region
      _
    $region5: #{forward.1} parent=1 // pred_fallthru
      _
    // Predicated region
    $region6: #{forward.1} parent=1 // pred_check
      _
    $region7: #{forward.1} parent=1 // pred_check_branch
      %133 = sbr.rel (0) target = $region9
    $region8: #{forward.1} parent=1 // pred_region
      %s135 = ssub.s32 256, 256
      %136 = vsyncadd [#allocation3], %s135
      %s137 = sshll.u32 [#allocation2], 4
      %s138 = int_to_ptr.vmem [resolvable:$true] %s137
      %143 = dma.hbm_to_vmem [thread:$0]  %s3, 256, %s138, [#allocation3], 64, 64, 4
    $region9: #{forward.1} parent=1 // pred_fallthru
      _
    // Predicated region
    $region10: #{forward.1} parent=1 // pred_check
      _
    $region11: #{forward.1} parent=1 // pred_check_branch
      %145 = sbr.rel (0) target = $region13
    $region12: #{forward.1} parent=1 // pred_region
      %s147 = ssub.s32 256, 256
      %148 = vsyncadd [#allocation6], %s147
      %s149 = sshll.u32 [#allocation5], 4
      %s150 = int_to_ptr.vmem [resolvable:$true] %s149
      %155 = dma.hbm_to_vmem [thread:$0]  %s5, 256, %s150, [#allocation6], 64, 64, 4
    $region13: #{forward.1} parent=1 // pred_fallthru
      _
    // Predicated region
    $region14: #{forward.1} parent=1 // pred_check
      _
    $region15: #{forward.1} parent=1 // pred_check_branch
      %157 = sbr.rel (0) target = $region17
    $region16: #{forward.1} parent=1 // pred_region
      _
    $region17: #{forward.1} parent=1 // pred_fallthru
      _
    // Predicated region
    $region18: #{forward.1} parent=1 // pred_check
      _
    $region19: #{forward.1} parent=1 // pred_check_branch
      %159 = sbr.rel (0) target = $region21
    $region20: #{forward.1} parent=1 // pred_region
      _
    $region21: #{forward.1} parent=1 // pred_fallthru
      _
    // Predicated region
    $region22: #{forward.1} parent=1 // pred_check
      _
    $region23: #{forward.1} parent=1 // pred_check_branch
      %161 = sbr.rel (0) target = $region25
    $region24: #{forward.1} parent=1 // pred_region
      _
    $region25: #{forward.1} parent=1 // pred_fallthru
      _
    // Predicated region
    $region26: #{forward.1} parent=1 // pred_check
      _
    $region27: #{forward.1} parent=1 // pred_check_branch
      %163 = sbr.rel (0) target = $region29
    $region28: #{forward.1} parent=1 // pred_region
      %s165 = ssub.s32 256, 256
      %166 = vsyncadd [#allocation6], %s165
      %s167 = sshll.u32 [#allocation7], 4
      %s168 = int_to_ptr.vmem [resolvable:$true] %s167
      %173 = dma.hbm_to_vmem [thread:$0]  %s13, 256, %s168, [#allocation6], 64, 64, 4
    $region29: #{forward.1} parent=1 // pred_fallthru
      _
    // Predicated region
    $region30: #{forward.1} parent=1 // pred_check
      _
    $region31: #{forward.1} parent=1 // pred_check_branch
      %175 = sbr.rel (0) target = $region33
    $region32: #{forward.1} parent=1 // pred_region
      %s177 = ssub.s32 256, 256
      %178 = vsyncadd [#allocation9], %s177
      %s179 = sshll.u32 [#allocation8], 4
      %s180 = int_to_ptr.vmem [resolvable:$true] %s179
      %185 = dma.hbm_to_vmem [thread:$0]  %s15, 256, %s180, [#allocation9], 64, 64, 4
    $region33: #{forward.1} parent=1 // pred_fallthru
      _
    // Predicated region
    $region34: #{forward.1} parent=1 // pred_check
      _
    $region35: #{forward.1} parent=1 // pred_check_branch
      %187 = sbr.rel (0) target = $region37
    $region36: #{forward.1} parent=1 // pred_region
      _
    $region37: #{forward.1} parent=1 // pred_fallthru
      _
    // Predicated region
    $region38: #{forward.1} parent=1 // pred_check
      _
    $region39: #{forward.1} parent=1 // pred_check_branch
      %189 = sbr.rel (0) target = $region41
    $region40: #{forward.1} parent=1 // pred_region
      _
    $region41: #{forward.1} parent=1 // pred_fallthru
      _
    // Predicated region
    $region42: #{forward.1} parent=1 // pred_check
      _
    $region43: #{forward.1} parent=1 // pred_check_branch
      %191 = sbr.rel (0) target = $region45
    $region44: #{forward.1} parent=1 // pred_region
      _
    $region45: #{forward.1} parent=1 // pred_fallthru
      _
    // Predicated region
    $region46: #{forward.1} parent=1 // pred_check
      _
    $region47: #{forward.1} parent=1 // pred_check_branch
      %193 = sbr.rel (0) target = $region49
    $region48: #{forward.1} parent=1 // pred_region
      _
    $region49: #{forward.1} parent=1 // pred_fallthru
      _
    // Predicated region
    $region50: #{forward.1} parent=1 // pred_check
      _
    $region51: #{forward.1} parent=1 // pred_check_branch
      %195 = sbr.rel (0) target = $region53
    $region52: #{forward.1} parent=1 // pred_region
      %s197 = ssub.s32 256, 256
      %198 = vsyncadd [#allocation9], %s197
      %s199 = sshll.u32 [#allocation10], 4
      %s200 = int_to_ptr.vmem [resolvable:$true] %s199
      %205 = dma.hbm_to_vmem [thread:$0]  %s25, 256, %s200, [#allocation9], 64, 64, 4
    $region53: #{forward.1} parent=1 // pred_fallthru
      _
    // Predicated region
    $region54: #{forward.1} parent=1 // pred_check
      _
    $region55: #{forward.1} parent=1 // pred_check_branch
      %207 = sbr.rel (0) target = $region57
    $region56: #{forward.1} parent=1 // pred_region
      %s209 = ssub.s32 256, 256
      %210 = vsyncadd [#allocation12], %s209
      %s211 = sshll.u32 [#allocation11], 4
      %s212 = int_to_ptr.vmem [resolvable:$true] %s211
      %217 = dma.hbm_to_vmem [thread:$0]  %s27, 256, %s212, [#allocation12], 64, 64, 4
    $region57: #{forward.1} parent=1 // pred_fallthru
      _
    // Predicated region
    $region58: #{forward.1} parent=1 // pred_check
      _
    $region59: #{forward.1} parent=1 // pred_check_branch
      %219 = sbr.rel (0) target = $region61
    $region60: #{forward.1} parent=1 // pred_region
      %s221 = ssub.s32 4096, 4096
      %222 = vsyncadd [#allocation12], %s221
      %s223 = sshll.u32 [#allocation13], 4
      %s224 = int_to_ptr.vmem [resolvable:$true] %s223
      %229 = dma.hbm_to_vmem [thread:$0]  %s29, 4096, %s224, [#allocation12], 128, 128, 8
    $region61: #{forward.1} parent=1 // pred_fallthru
      _
    // Predicated region
    $region62: #{forward.1} parent=1 // pred_check
      _
    $region63: #{forward.1} parent=1 // pred_check_branch
      %231 = sbr.rel (0) target = $region65
    $region64: #{forward.1} parent=1 // pred_region
      %s233 = ssub.s32 4096, 4096
      %234 = vsyncadd [#allocation15], %s233
      %s235 = sshll.u32 [#allocation14], 4
      %s236 = int_to_ptr.vmem [resolvable:$true] %s235
      %241 = dma.hbm_to_vmem [thread:$0]  %s31, 4096, %s236, [#allocation15], 128, 128, 8
    $region65: #{forward.1} parent=1 // pred_fallthru
      _
    // Predicated region
    $region66: #{forward.1} parent=1 // pred_check
      _
    $region67: #{forward.1} parent=1 // pred_check_branch
      %243 = sbr.rel (0) target = $region69
    $region68: #{forward.1} parent=1 // pred_region
      %s245 = ssub.s32 4096, 4096
      %246 = vsyncadd [#allocation15], %s245
      %s247 = sshll.u32 [#allocation16], 4
      %s248 = int_to_ptr.vmem [resolvable:$true] %s247
      %253 = dma.hbm_to_vmem [thread:$0]  %s33, 4096, %s248, [#allocation15], 128, 128, 8
    $region69: #{forward.1} parent=1 // pred_fallthru
      _
    // Predicated region
    $region70: #{forward.1} parent=1 // pred_check
      _
    $region71: #{forward.1} parent=1 // pred_check_branch
      %255 = sbr.rel (0) target = $region73
    $region72: #{forward.1} parent=1 // pred_region
      %s257 = ssub.s32 32, 32
      %258 = vsyncadd [#allocation18], %s257
      %s260 = sshll.u32 [#allocation17], 4
      %s261 = int_to_ptr.vmem [resolvable:$true] %s260
      %263 = dma.hbm_to_vmem [thread:$0]  %s35, 32, %s261, [#allocation18]
    $region73: #{forward.1} parent=1 // pred_fallthru
      _
    // Predicated region
    $region74: #{forward.1} parent=1 // pred_check
      _
    $region75: #{forward.1} parent=1 // pred_check_branch
      %265 = sbr.rel (0) target = $region77
    $region76: #{forward.1} parent=1 // pred_region
      _
    $region77: #{forward.1} parent=1 // pred_fallthru
      _
    // Predicated region
    $region78: #{forward.1} parent=1 // pred_check
      _
    $region79: #{forward.1} parent=1 // pred_check_branch
      %267 = sbr.rel (0) target = $region81
    $region80: #{forward.1} parent=1 // pred_region
      %s269 = ssub.s32 128, 128
      %270 = vsyncadd [#allocation18], %s269
      %s271 = sshll.u32 [#allocation19], 4
      %s272 = int_to_ptr.vmem [resolvable:$true] %s271
      %277 = dma.hbm_to_vmem [thread:$0]  %s39, 128, %s272, [#allocation18], 64, 64, 4
    $region81: #{forward.1} parent=1 // pred_fallthru
      _
    // Predicated region
    $region82: #{forward.1} parent=1 // pred_check
      _
    $region83: #{forward.1} parent=1 // pred_check_branch
      %279 = sbr.rel (0) target = $region85
    $region84: #{forward.1} parent=1 // pred_region
      %s281 = ssub.s32 128, 128
      %282 = vsyncadd [#allocation21], %s281
      %s283 = sshll.u32 [#allocation20], 4
      %s284 = int_to_ptr.vmem [resolvable:$true] %s283
      %289 = dma.hbm_to_vmem [thread:$0]  %s41, 128, %s284, [#allocation21], 64, 64, 4
    $region85: #{forward.1} parent=1 // pred_fallthru
      _
    // Predicated region
    $region86: #{forward.1} parent=1 // pred_check
      _
    $region87: #{forward.1} parent=1 // pred_check_branch
      %291 = sbr.rel (0) target = $region89
    $region88: #{forward.1} parent=1 // pred_region
      %s293 = ssub.s32 4096, 4096
      %294 = vsyncadd [#allocation21], %s293
      %s295 = sshll.u32 [#allocation22], 4
      %s296 = int_to_ptr.vmem [resolvable:$true] %s295
      %301 = dma.hbm_to_vmem [thread:$0]  %s43, 4096, %s296, [#allocation21], 128, 128, 8
    $region89: #{forward.1} parent=1 // pred_fallthru
      _
    // Predicated region
    $region90: #{forward.1} parent=1 // pred_check
      _
    $region91: #{forward.1} parent=1 // pred_check_branch
      %303 = sbr.rel (0) target = $region93
    $region92: #{forward.1} parent=1 // pred_region
      %s305 = ssub.s32 4096, 4096
      %306 = vsyncadd [#allocation24], %s305
      %s307 = sshll.u32 [#allocation23], 4
      %s308 = int_to_ptr.vmem [resolvable:$true] %s307
      %313 = dma.hbm_to_vmem [thread:$0]  %s45, 4096, %s308, [#allocation24], 128, 128, 8
    $region93: #{forward.1} parent=1 // pred_fallthru
      _
    // Predicated region
    $region94: #{forward.1} parent=1 // pred_check
      _
    $region95: #{forward.1} parent=1 // pred_check_branch
      %315 = sbr.rel (0) target = $region97
    $region96: #{forward.1} parent=1 // pred_region
      %s317 = ssub.s32 4096, 4096
      %318 = vsyncadd [#allocation24], %s317
      %s319 = sshll.u32 [#allocation25], 4
      %s320 = int_to_ptr.vmem [resolvable:$true] %s319
      %325 = dma.hbm_to_vmem [thread:$0]  %s47, 4096, %s320, [#allocation24], 128, 128, 8
    $region97: #{forward.1} parent=1 // pred_fallthru
      _
    // Predicated region
    $region98: #{forward.1} parent=1 // pred_check
      _
    $region99: #{forward.1} parent=1 // pred_check_branch
      %327 = sbr.rel (0) target = $region101
    $region100: #{forward.1} parent=1 // pred_region
      %s329 = ssub.s32 32, 32
      %330 = vsyncadd [#allocation27], %s329
      %s332 = sshll.u32 [#allocation26], 4
      %s333 = int_to_ptr.vmem [resolvable:$true] %s332
      %335 = dma.hbm_to_vmem [thread:$0]  %s49, 32, %s333, [#allocation27]
    $region101: #{forward.1} parent=1 // pred_fallthru
      _
    // Predicated region
    $region102: #{forward.1} parent=1 // pred_check
      _
    $region103: #{forward.1} parent=1 // pred_check_branch
      %337 = sbr.rel (0) target = $region105
    $region104: #{forward.1} parent=1 // pred_region
      %s339 = ssub.s32 128, 128
      %340 = vsyncadd [#allocation27], %s339
      %s341 = sshll.u32 [#allocation28], 4
      %s342 = int_to_ptr.vmem [resolvable:$true] %s341
      %347 = dma.hbm_to_vmem [thread:$0]  %s51, 128, %s342, [#allocation27], 64, 64, 4
    $region105: #{forward.1} parent=1 // pred_fallthru
      _
    // Predicated region
    $region106: #{forward.1} parent=1 // pred_check
      _
    $region107: #{forward.1} parent=1 // pred_check_branch
      %349 = sbr.rel (0) target = $region109
    $region108: #{forward.1} parent=1 // pred_region
      %s351 = ssub.s32 128, 128
      %352 = vsyncadd [#allocation30], %s351
      %s353 = sshll.u32 [#allocation29], 4
      %s354 = int_to_ptr.vmem [resolvable:$true] %s353
      %359 = dma.hbm_to_vmem [thread:$0]  %s53, 128, %s354, [#allocation30], 64, 64, 4
    $region109: #{forward.1} parent=1 // pred_fallthru
      _
    // Predicated region
    $region110: #{forward.1} parent=1 // pred_check
      _
    $region111: #{forward.1} parent=1 // pred_check_branch
      %361 = sbr.rel (0) target = $region113
    $region112: #{forward.1} parent=1 // pred_region
      %s363 = ssub.s32 4096, 4096
      %364 = vsyncadd [#allocation30], %s363
      %s365 = sshll.u32 [#allocation31], 4
      %s366 = int_to_ptr.vmem [resolvable:$true] %s365
      %371 = dma.hbm_to_vmem [thread:$0]  %s55, 4096, %s366, [#allocation30], 128, 128, 8
    $region113: #{forward.1} parent=1 // pred_fallthru
      _
    // Predicated region
    $region114: #{forward.1} parent=1 // pred_check
      _
    $region115: #{forward.1} parent=1 // pred_check_branch
      %373 = sbr.rel (0) target = $region117
    $region116: #{forward.1} parent=1 // pred_region
      %s375 = ssub.s32 4096, 4096
      %376 = vsyncadd [#allocation33], %s375
      %s377 = sshll.u32 [#allocation32], 4
      %s378 = int_to_ptr.vmem [resolvable:$true] %s377
      %383 = dma.hbm_to_vmem [thread:$0]  %s57, 4096, %s378, [#allocation33], 128, 128, 8
    $region117: #{forward.1} parent=1 // pred_fallthru
      _
    // Predicated region
    $region118: #{forward.1} parent=1 // pred_check
      _
    $region119: #{forward.1} parent=1 // pred_check_branch
      %385 = sbr.rel (0) target = $region121
    $region120: #{forward.1} parent=1 // pred_region
      %s387 = ssub.s32 4096, 4096
      %388 = vsyncadd [#allocation33], %s387
      %s389 = sshll.u32 [#allocation34], 4
      %s390 = int_to_ptr.vmem [resolvable:$true] %s389
      %395 = dma.hbm_to_vmem [thread:$0]  %s59, 4096, %s390, [#allocation33], 128, 128, 8
    $region121: #{forward.1} parent=1 // pred_fallthru
      _
    // Predicated region
    $region122: #{forward.1} parent=1 // pred_check
      _
    $region123: #{forward.1} parent=1 // pred_check_branch
      %397 = sbr.rel (0) target = $region125
    $region124: #{forward.1} parent=1 // pred_region
      %s399 = ssub.s32 32, 32
      %400 = vsyncadd [#allocation36], %s399
      %s402 = sshll.u32 [#allocation35], 4
      %s403 = int_to_ptr.vmem [resolvable:$true] %s402
      %405 = dma.hbm_to_vmem [thread:$0]  %s61, 32, %s403, [#allocation36]
    $region125: #{forward.1} parent=1 // pred_fallthru
      _
    // Predicated region
    $region126: #{forward.1} parent=1 // pred_check
      _
    $region127: #{forward.1} parent=1 // pred_check_branch
      %407 = sbr.rel (0) target = $region129
    $region128: #{forward.1} parent=1 // pred_region
      %s409 = ssub.s32 128, 128
      %410 = vsyncadd [#allocation36], %s409
      %s411 = sshll.u32 [#allocation37], 4
      %s412 = int_to_ptr.vmem [resolvable:$true] %s411
      %417 = dma.hbm_to_vmem [thread:$0]  %s63, 128, %s412, [#allocation36], 64, 64, 4
    $region129: #{forward.1} parent=1 // pred_fallthru
      _
    // Predicated region
    $region130: #{forward.1} parent=1 // pred_check
      _
    $region131: #{forward.1} parent=1 // pred_check_branch
      %419 = sbr.rel (0) target = $region133
    $region132: #{forward.1} parent=1 // pred_region
      %s421 = ssub.s32 4096, 4096
      %422 = vsyncadd [#allocation39], %s421
      %s423 = sshll.u32 [#allocation38], 4
      %s424 = int_to_ptr.vmem [resolvable:$true] %s423
      %429 = dma.hbm_to_vmem [thread:$0]  %s65, 4096, %s424, [#allocation39], 128, 128, 8
    $region133: #{forward.1} parent=1 // pred_fallthru
      _
    // Predicated region
    $region134: #{forward.1} parent=1 // pred_check
      _
    $region135: #{forward.1} parent=1 // pred_check_branch
      %431 = sbr.rel (0) target = $region137
    $region136: #{forward.1} parent=1 // pred_region
      %s433 = ssub.s32 64, 64
      %434 = vsyncadd [#allocation39], %s433
      %s436 = sshll.u32 [#allocation40], 4
      %s437 = int_to_ptr.vmem [resolvable:$true] %s436
      %439 = dma.hbm_to_vmem [thread:$0]  %s67, 64, %s437, [#allocation39]
    $region137: #{forward.1} parent=1 // pred_fallthru
      _
    // Predicated region
    $region138: #{forward.1} parent=1 // pred_check
      _
    $region139: #{forward.1} parent=1 // pred_check_branch
      %441 = sbr.rel (0) target = $region141
    $region140: #{forward.1} parent=1 // pred_region
      %s443 = ssub.s32 64, 64
      %444 = vsyncadd [#allocation42], %s443
      %s446 = sshll.u32 [#allocation41], 4
      %s447 = int_to_ptr.vmem [resolvable:$true] %s446
      %449 = dma.hbm_to_vmem [thread:$0]  %s69, 64, %s447, [#allocation42]
    $region141: #{forward.1} parent=1 // pred_fallthru
      _
    // Predicated region
    $region142: #{forward.1} parent=1 // pred_check
      _
    $region143: #{forward.1} parent=1 // pred_check_branch
      %451 = sbr.rel (0) target = $region145
    $region144: #{forward.1} parent=1 // pred_region
      %s453 = ssub.s32 64, 64
      %454 = vsyncadd [#allocation42], %s453
      %s456 = sshll.u32 [#allocation43], 4
      %s457 = int_to_ptr.vmem [resolvable:$true] %s456
      %459 = dma.hbm_to_vmem [thread:$0]  %s71, 64, %s457, [#allocation42]
    $region145: #{forward.1} parent=1 // pred_fallthru
      _
    // Predicated region
    $region146: #{forward.1} parent=1 // pred_check
      _
    $region147: #{forward.1} parent=1 // pred_check_branch
      %461 = sbr.rel (0) target = $region149
    $region148: #{forward.1} parent=1 // pred_region
      %s463 = ssub.s32 4096, 4096
      %464 = vsyncadd [#allocation45], %s463
      %s465 = sshll.u32 [#allocation44], 4
      %s466 = int_to_ptr.vmem [resolvable:$true] %s465
      %471 = dma.hbm_to_vmem [thread:$0]  %s73, 4096, %s466, [#allocation45], 128, 128, 8
    $region149: #{forward.1} parent=1 // pred_fallthru
      _
    // Predicated region
    $region150: #{forward.1} parent=1 // pred_check
      _
    $region151: #{forward.1} parent=1 // pred_check_branch
      %473 = sbr.rel (0) target = $region153
    $region152: #{forward.1} parent=1 // pred_region
      %s475 = ssub.s32 4096, 4096
      %476 = vsyncadd [#allocation45], %s475
      %s477 = sshll.u32 [#allocation46], 4
      %s478 = int_to_ptr.vmem [resolvable:$true] %s477
      %483 = dma.hbm_to_vmem [thread:$0]  %s75, 4096, %s478, [#allocation45], 128, 128, 8
    $region153: #{forward.1} parent=1 // pred_fallthru
      _
    // Predicated region
    $region154: #{forward.1} parent=1 // pred_check
      _
    $region155: #{forward.1} parent=1 // pred_check_branch
      %485 = sbr.rel (0) target = $region157
    $region156: #{forward.1} parent=1 // pred_region
      %s487 = ssub.s32 4096, 4096
      %488 = vsyncadd [#allocation48], %s487
      %s489 = sshll.u32 [#allocation47], 4
      %s490 = int_to_ptr.vmem [resolvable:$true] %s489
      %495 = dma.hbm_to_vmem [thread:$0]  %s77, 4096, %s490, [#allocation48], 128, 128, 8
    $region157: #{forward.1} parent=1 // pred_fallthru
      _
    // Predicated region
    $region158: #{forward.1} parent=1 // pred_check
      _
    $region159: #{forward.1} parent=1 // pred_check_branch
      %497 = sbr.rel (0) target = $region161
    $region160: #{forward.1} parent=1 // pred_region
      %s499 = ssub.s32 32, 32
      %500 = vsyncadd [#allocation48], %s499
      %s502 = sshll.u32 [#allocation49], 4
      %s503 = int_to_ptr.vmem [resolvable:$true] %s502
      %505 = dma.hbm_to_vmem [thread:$0]  %s79, 32, %s503, [#allocation48]
    $region161: #{forward.1} parent=1 // pred_fallthru
      _
    // Predicated region
    $region162: #{forward.1} parent=1 // pred_check
      _
    $region163: #{forward.1} parent=1 // pred_check_branch
      %507 = sbr.rel (0) target = $region165
    $region164: #{forward.1} parent=1 // pred_region
      %s509 = ssub.s32 64, 64
      %510 = vsyncadd [#allocation51], %s509
      %s512 = sshll.u32 [#allocation50], 4
      %s513 = int_to_ptr.vmem [resolvable:$true] %s512
      %515 = dma.hbm_to_vmem [thread:$0]  %s81, 64, %s513, [#allocation51]
    $region165: #{forward.1} parent=1 // pred_fallthru
      _
    // Predicated region
    $region166: #{forward.1} parent=1 // pred_check
      _
    $region167: #{forward.1} parent=1 // pred_check_branch
      %517 = sbr.rel (0) target = $region169
    $region168: #{forward.1} parent=1 // pred_region
      %s519 = ssub.s32 64, 64
      %520 = vsyncadd [#allocation51], %s519
      %s522 = sshll.u32 [#allocation52], 4
      %s523 = int_to_ptr.vmem [resolvable:$true] %s522
      %525 = dma.hbm_to_vmem [thread:$0]  %s83, 64, %s523, [#allocation51]
    $region169: #{forward.1} parent=1 // pred_fallthru
      _
    // Predicated region
    $region170: #{forward.1} parent=1 // pred_check
      _
    $region171: #{forward.1} parent=1 // pred_check_branch
      %527 = sbr.rel (0) target = $region173
    $region172: #{forward.1} parent=1 // pred_region
      %s529 = ssub.s32 4096, 4096
      %530 = vsyncadd [#allocation54], %s529
      %s531 = sshll.u32 [#allocation53], 4
      %s532 = int_to_ptr.vmem [resolvable:$true] %s531
      %537 = dma.hbm_to_vmem [thread:$0]  %s85, 4096, %s532, [#allocation54], 128, 128, 8
    $region173: #{forward.1} parent=1 // pred_fallthru
      _
    // Predicated region
    $region174: #{forward.1} parent=1 // pred_check
      _
    $region175: #{forward.1} parent=1 // pred_check_branch
      %539 = sbr.rel (0) target = $region177
    $region176: #{forward.1} parent=1 // pred_region
      %s541 = ssub.s32 4096, 4096
      %542 = vsyncadd [#allocation54], %s541
      %s543 = sshll.u32 [#allocation55], 4
      %s544 = int_to_ptr.vmem [resolvable:$true] %s543
      %549 = dma.hbm_to_vmem [thread:$0]  %s87, 4096, %s544, [#allocation54], 128, 128, 8
    $region177: #{forward.1} parent=1 // pred_fallthru
      _
    // Predicated region
    $region178: #{forward.1} parent=1 // pred_check
      _
    $region179: #{forward.1} parent=1 // pred_check_branch
      %551 = sbr.rel (0) target = $region181
    $region180: #{forward.1} parent=1 // pred_region
      %s553 = ssub.s32 4096, 4096
      %554 = vsyncadd [#allocation57], %s553
      %s555 = sshll.u32 [#allocation56], 4
      %s556 = int_to_ptr.vmem [resolvable:$true] %s555
      %561 = dma.hbm_to_vmem [thread:$0]  %s89, 4096, %s556, [#allocation57], 128, 128, 8
    $region181: #{forward.1} parent=1 // pred_fallthru
      _
    // Predicated region
    $region182: #{forward.1} parent=1 // pred_check
      _
    $region183: #{forward.1} parent=1 // pred_check_branch
      %563 = sbr.rel (0) target = $region185
    $region184: #{forward.1} parent=1 // pred_region
      %s565 = ssub.s32 32, 32
      %566 = vsyncadd [#allocation57], %s565
      %s568 = sshll.u32 [#allocation58], 4
      %s569 = int_to_ptr.vmem [resolvable:$true] %s568
      %571 = dma.hbm_to_vmem [thread:$0]  %s91, 32, %s569, [#allocation57]
    $region185: #{forward.1} parent=1 // pred_fallthru
      _
    // Predicated region
    $region186: #{forward.1} parent=1 // pred_check
      _
    $region187: #{forward.1} parent=1 // pred_check_branch
      %573 = sbr.rel (0) target = $region189
    $region188: #{forward.1} parent=1 // pred_region
      %s575 = ssub.s32 64, 64
      %576 = vsyncadd [#allocation60], %s575
      %s578 = sshll.u32 [#allocation59], 4
      %s579 = int_to_ptr.vmem [resolvable:$true] %s578
      %581 = dma.hbm_to_vmem [thread:$0]  %s93, 64, %s579, [#allocation60]
    $region189: #{forward.1} parent=1 // pred_fallthru
      _
    // Predicated region
    $region190: #{forward.1} parent=1 // pred_check
      _
    $region191: #{forward.1} parent=1 // pred_check_branch
      %583 = sbr.rel (0) target = $region193
    $region192: #{forward.1} parent=1 // pred_region
      _
    $region193: #{forward.1} parent=1 // pred_fallthru
      _
    // Predicated region
    $region194: #{forward.1} parent=1 // pred_check
      _
    $region195: #{forward.1} parent=1 // pred_check_branch
      %585 = sbr.rel (0) target = $region197
    $region196: #{forward.1} parent=1 // pred_region
      _
    $region197: #{forward.1} parent=1 // pred_fallthru
      _
    // Predicated region
    $region198: #{forward.1} parent=1 // pred_check
      _
    $region199: #{forward.1} parent=1 // pred_check_branch
      %587 = sbr.rel (0) target = $region201
    $region200: #{forward.1} parent=1 // pred_region
      %s589 = ssub.s32 2048, 2048
      %590 = vsyncadd [#allocation60], %s589
      %s591 = sshll.u32 [#allocation61], 4
      %s592 = int_to_ptr.vmem [resolvable:$true] %s591
      %597 = dma.hbm_to_vmem [thread:$0]  %s99, 2048, %s592, [#allocation60], 64, 64, 4
    $region201: #{forward.1} parent=1 // pred_fallthru
      _
    // Predicated region
    $region202: #{forward.1} parent=1 // pred_check
      _
    $region203: #{forward.1} parent=1 // pred_check_branch
      %599 = sbr.rel (0) target = $region205
    $region204: #{forward.1} parent=1 // pred_region
      %s601 = ssub.s32 16, 16
      %602 = vsyncadd [#allocation63], %s601
      %s604 = sshll.u32 [#allocation62], 4
      %s605 = int_to_ptr.vmem [resolvable:$true] %s604
      %607 = dma.hbm_to_vmem [thread:$0]  %s101, 16, %s605, [#allocation63]
    $region205: #{forward.1} parent=1 // pred_fallthru
      _
    // Predicated region
    $region206: #{forward.1} parent=1 // pred_check
      _
    $region207: #{forward.1} parent=1 // pred_check_branch
      %609 = sbr.rel (0) target = $region209
    $region208: #{forward.1} parent=1 // pred_region
      %610 = dma.done [#allocation3], 256
    $region209: #{forward.1} parent=1 // pred_fallthru
      _
    // Predicated region
    $region210: #{forward.1} parent=1 // pred_check
      _
    $region211: #{forward.1} parent=1 // pred_check_branch
      %612 = sbr.rel (0) target = $region213
    $region212: #{forward.1} parent=1 // pred_region
      %613 = dma.done [#allocation6], 256
    $region213: #{forward.1} parent=1 // pred_fallthru
      _
    // Predicated region
    $region214: #{forward.1} parent=1 // pred_check
      _
    $region215: #{forward.1} parent=1 // pred_check_branch
      %615 = sbr.rel (0) target = $region217
    $region216: #{forward.1} parent=1 // pred_region
      %616 = dma.done [#allocation6], 256
    $region217: #{forward.1} parent=1 // pred_fallthru
      _
    // Predicated region
    $region218: #{forward.1} parent=1 // pred_check
      _
    $region219: #{forward.1} parent=1 // pred_check_branch
      %618 = sbr.rel (0) target = $region221
    $region220: #{forward.1} parent=1 // pred_region
      %619 = dma.done [#allocation9], 256
    $region221: #{forward.1} parent=1 // pred_fallthru
      _
    // Predicated region
    $region222: #{forward.1} parent=1 // pred_check
      _
    $region223: #{forward.1} parent=1 // pred_check_branch
      %621 = sbr.rel (0) target = $region225
    $region224: #{forward.1} parent=1 // pred_region
      %622 = dma.done [#allocation9], 256
    $region225: #{forward.1} parent=1 // pred_fallthru
      _
    // Predicated region
    $region226: #{forward.1} parent=1 // pred_check
      _
    $region227: #{forward.1} parent=1 // pred_check_branch
      %624 = sbr.rel (0) target = $region229
    $region228: #{forward.1} parent=1 // pred_region
      %625 = dma.done [#allocation12], 256
    $region229: #{forward.1} parent=1 // pred_fallthru
      _
    // Predicated region
    $region230: #{forward.1} parent=1 // pred_check
      _
    $region231: #{forward.1} parent=1 // pred_check_branch
      %627 = sbr.rel (0) target = $region233
    $region232: #{forward.1} parent=1 // pred_region
      %628 = dma.done [#allocation12], 4096
    $region233: #{forward.1} parent=1 // pred_fallthru
      _
    // Predicated region
    $region234: #{forward.1} parent=1 // pred_check
      _
    $region235: #{forward.1} parent=1 // pred_check_branch
      %630 = sbr.rel (0) target = $region237
    $region236: #{forward.1} parent=1 // pred_region
      %631 = dma.done [#allocation15], 4096
    $region237: #{forward.1} parent=1 // pred_fallthru
      _
    // Predicated region
    $region238: #{forward.1} parent=1 // pred_check
      _
    $region239: #{forward.1} parent=1 // pred_check_branch
      %633 = sbr.rel (0) target = $region241
    $region240: #{forward.1} parent=1 // pred_region
      %634 = dma.done [#allocation15], 4096
    $region241: #{forward.1} parent=1 // pred_fallthru
      _
    // Predicated region
    $region242: #{forward.1} parent=1 // pred_check
      _
    $region243: #{forward.1} parent=1 // pred_check_branch
      %636 = sbr.rel (0) target = $region245
    $region244: #{forward.1} parent=1 // pred_region
      %637 = dma.done [#allocation18], 32
    $region245: #{forward.1} parent=1 // pred_fallthru
      _
    // Predicated region
    $region246: #{forward.1} parent=1 // pred_check
      _
    $region247: #{forward.1} parent=1 // pred_check_branch
      %639 = sbr.rel (0) target = $region249
    $region248: #{forward.1} parent=1 // pred_region
      %640 = dma.done [#allocation18], 128
    $region249: #{forward.1} parent=1 // pred_fallthru
      _
    // Predicated region
    $region250: #{forward.1} parent=1 // pred_check
      _
    $region251: #{forward.1} parent=1 // pred_check_branch
      %642 = sbr.rel (0) target = $region253
    $region252: #{forward.1} parent=1 // pred_region
      %643 = dma.done [#allocation21], 128
    $region253: #{forward.1} parent=1 // pred_fallthru
      _
    // Predicated region
    $region254: #{forward.1} parent=1 // pred_check
      _
    $region255: #{forward.1} parent=1 // pred_check_branch
      %645 = sbr.rel (0) target = $region257
    $region256: #{forward.1} parent=1 // pred_region
      %646 = dma.done [#allocation21], 4096
    $region257: #{forward.1} parent=1 // pred_fallthru
      _
    // Predicated region
    $region258: #{forward.1} parent=1 // pred_check
      _
    $region259: #{forward.1} parent=1 // pred_check_branch
      %648 = sbr.rel (0) target = $region261
    $region260: #{forward.1} parent=1 // pred_region
      %649 = dma.done [#allocation24], 4096
    $region261: #{forward.1} parent=1 // pred_fallthru
      _
    // Predicated region
    $region262: #{forward.1} parent=1 // pred_check
      _
    $region263: #{forward.1} parent=1 // pred_check_branch
      %651 = sbr.rel (0) target = $region265
    $region264: #{forward.1} parent=1 // pred_region
      %652 = dma.done [#allocation24], 4096
    $region265: #{forward.1} parent=1 // pred_fallthru
      _
    // Predicated region
    $region266: #{forward.1} parent=1 // pred_check
      _
    $region267: #{forward.1} parent=1 // pred_check_branch
      %654 = sbr.rel (0) target = $region269
    $region268: #{forward.1} parent=1 // pred_region
      %655 = dma.done [#allocation27], 32
    $region269: #{forward.1} parent=1 // pred_fallthru
      _
    // Predicated region
    $region270: #{forward.1} parent=1 // pred_check
      _
    $region271: #{forward.1} parent=1 // pred_check_branch
      %657 = sbr.rel (0) target = $region273
    $region272: #{forward.1} parent=1 // pred_region
      %658 = dma.done [#allocation27], 128
    $region273: #{forward.1} parent=1 // pred_fallthru
      _
    // Predicated region
    $region274: #{forward.1} parent=1 // pred_check
      _
    $region275: #{forward.1} parent=1 // pred_check_branch
      %660 = sbr.rel (0) target = $region277
    $region276: #{forward.1} parent=1 // pred_region
      %661 = dma.done [#allocation30], 128
    $region277: #{forward.1} parent=1 // pred_fallthru
      _
    // Predicated region
    $region278: #{forward.1} parent=1 // pred_check
      _
    $region279: #{forward.1} parent=1 // pred_check_branch
      %663 = sbr.rel (0) target = $region281
    $region280: #{forward.1} parent=1 // pred_region
      %664 = dma.done [#allocation30], 4096
    $region281: #{forward.1} parent=1 // pred_fallthru
      _
    // Predicated region
    $region282: #{forward.1} parent=1 // pred_check
      _
    $region283: #{forward.1} parent=1 // pred_check_branch
      %666 = sbr.rel (0) target = $region285
    $region284: #{forward.1} parent=1 // pred_region
      %667 = dma.done [#allocation33], 4096
    $region285: #{forward.1} parent=1 // pred_fallthru
      _
    // Predicated region
    $region286: #{forward.1} parent=1 // pred_check
      _
    $region287: #{forward.1} parent=1 // pred_check_branch
      %669 = sbr.rel (0) target = $region289
    $region288: #{forward.1} parent=1 // pred_region
      %670 = dma.done [#allocation33], 4096
    $region289: #{forward.1} parent=1 // pred_fallthru
      _
    // Predicated region
    $region290: #{forward.1} parent=1 // pred_check
      _
    $region291: #{forward.1} parent=1 // pred_check_branch
      %672 = sbr.rel (0) target = $region293
    $region292: #{forward.1} parent=1 // pred_region
      %673 = dma.done [#allocation36], 32
    $region293: #{forward.1} parent=1 // pred_fallthru
      _
    // Predicated region
    $region294: #{forward.1} parent=1 // pred_check
      _
    $region295: #{forward.1} parent=1 // pred_check_branch
      %675 = sbr.rel (0) target = $region297
    $region296: #{forward.1} parent=1 // pred_region
      %676 = dma.done [#allocation36], 128
    $region297: #{forward.1} parent=1 // pred_fallthru
      _
    // Predicated region
    $region298: #{forward.1} parent=1 // pred_check
      _
    $region299: #{forward.1} parent=1 // pred_check_branch
      %678 = sbr.rel (0) target = $region301
    $region300: #{forward.1} parent=1 // pred_region
      %679 = dma.done [#allocation39], 4096
    $region301: #{forward.1} parent=1 // pred_fallthru
      _
    // Predicated region
    $region302: #{forward.1} parent=1 // pred_check
      _
    $region303: #{forward.1} parent=1 // pred_check_branch
      %681 = sbr.rel (0) target = $region305
    $region304: #{forward.1} parent=1 // pred_region
      %682 = dma.done [#allocation39], 64
    $region305: #{forward.1} parent=1 // pred_fallthru
      _
    // Predicated region
    $region306: #{forward.1} parent=1 // pred_check
      _
    $region307: #{forward.1} parent=1 // pred_check_branch
      %684 = sbr.rel (0) target = $region309
    $region308: #{forward.1} parent=1 // pred_region
      %685 = dma.done [#allocation42], 64
    $region309: #{forward.1} parent=1 // pred_fallthru
      _
    // Predicated region
    $region310: #{forward.1} parent=1 // pred_check
      _
    $region311: #{forward.1} parent=1 // pred_check_branch
      %687 = sbr.rel (0) target = $region313
    $region312: #{forward.1} parent=1 // pred_region
      %688 = dma.done [#allocation42], 64
    $region313: #{forward.1} parent=1 // pred_fallthru
      _
    // Predicated region
    $region314: #{forward.1} parent=1 // pred_check
      _
    $region315: #{forward.1} parent=1 // pred_check_branch
      %690 = sbr.rel (0) target = $region317
    $region316: #{forward.1} parent=1 // pred_region
      %691 = dma.done [#allocation45], 4096
    $region317: #{forward.1} parent=1 // pred_fallthru
      _
    // Predicated region
    $region318: #{forward.1} parent=1 // pred_check
      _
    $region319: #{forward.1} parent=1 // pred_check_branch
      %693 = sbr.rel (0) target = $region321
    $region320: #{forward.1} parent=1 // pred_region
      %694 = dma.done [#allocation45], 4096
    $region321: #{forward.1} parent=1 // pred_fallthru
      _
    // Predicated region
    $region322: #{forward.1} parent=1 // pred_check
      _
    $region323: #{forward.1} parent=1 // pred_check_branch
      %696 = sbr.rel (0) target = $region325
    $region324: #{forward.1} parent=1 // pred_region
      %697 = dma.done [#allocation48], 4096
    $region325: #{forward.1} parent=1 // pred_fallthru
      _
    // Predicated region
    $region326: #{forward.1} parent=1 // pred_check
      _
    $region327: #{forward.1} parent=1 // pred_check_branch
      %699 = sbr.rel (0) target = $region329
    $region328: #{forward.1} parent=1 // pred_region
      %700 = dma.done [#allocation48], 32
    $region329: #{forward.1} parent=1 // pred_fallthru
      _
    // Predicated region
    $region330: #{forward.1} parent=1 // pred_check
      _
    $region331: #{forward.1} parent=1 // pred_check_branch
      %702 = sbr.rel (0) target = $region333
    $region332: #{forward.1} parent=1 // pred_region
      %703 = dma.done [#allocation51], 64
    $region333: #{forward.1} parent=1 // pred_fallthru
      _
    // Predicated region
    $region334: #{forward.1} parent=1 // pred_check
      _
    $region335: #{forward.1} parent=1 // pred_check_branch
      %705 = sbr.rel (0) target = $region337
    $region336: #{forward.1} parent=1 // pred_region
      %706 = dma.done [#allocation51], 64
    $region337: #{forward.1} parent=1 // pred_fallthru
      _
    // Predicated region
    $region338: #{forward.1} parent=1 // pred_check
      _
    $region339: #{forward.1} parent=1 // pred_check_branch
      %708 = sbr.rel (0) target = $region341
    $region340: #{forward.1} parent=1 // pred_region
      %709 = dma.done [#allocation54], 4096
    $region341: #{forward.1} parent=1 // pred_fallthru
      _
    // Predicated region
    $region342: #{forward.1} parent=1 // pred_check
      _
    $region343: #{forward.1} parent=1 // pred_check_branch
      %711 = sbr.rel (0) target = $region345
    $region344: #{forward.1} parent=1 // pred_region
      %712 = dma.done [#allocation54], 4096
    $region345: #{forward.1} parent=1 // pred_fallthru
      _
    // Predicated region
    $region346: #{forward.1} parent=1 // pred_check
      _
    $region347: #{forward.1} parent=1 // pred_check_branch
      %714 = sbr.rel (0) target = $region349
    $region348: #{forward.1} parent=1 // pred_region
      %715 = dma.done [#allocation57], 4096
    $region349: #{forward.1} parent=1 // pred_fallthru
      _
    // Predicated region
    $region350: #{forward.1} parent=1 // pred_check
      _
    $region351: #{forward.1} parent=1 // pred_check_branch
      %717 = sbr.rel (0) target = $region353
    $region352: #{forward.1} parent=1 // pred_region
      %718 = dma.done [#allocation57], 32
    $region353: #{forward.1} parent=1 // pred_fallthru
      _
    // Predicated region
    $region354: #{forward.1} parent=1 // pred_check
      _
    $region355: #{forward.1} parent=1 // pred_check_branch
      %720 = sbr.rel (0) target = $region357
    $region356: #{forward.1} parent=1 // pred_region
      %721 = dma.done [#allocation60], 64
    $region357: #{forward.1} parent=1 // pred_fallthru
      _
    // Predicated region
    $region358: #{forward.1} parent=1 // pred_check
      _
    $region359: #{forward.1} parent=1 // pred_check_branch
      %723 = sbr.rel (0) target = $region361
    $region360: #{forward.1} parent=1 // pred_region
      %724 = dma.done [#allocation60], 2048
    $region361: #{forward.1} parent=1 // pred_fallthru
      _
    // Predicated region
    $region362: #{forward.1} parent=1 // pred_check
      _
    $region363: #{forward.1} parent=1 // pred_check_branch
      %726 = sbr.rel (0) target = $region365
    $region364: #{forward.1} parent=1 // pred_region
      %727 = dma.done [#allocation63], 16
    $region365: #{forward.1} parent=1 // pred_fallthru
      _
    %v729 = vld [vmem:[%s1] sm:$0xff]
    %v730 = vld [vmem:[%s1 + $0x8] sm:$0xff]
    %v731 = vld [vmem:[%s1 + $0x10] sm:$0xff]
    %v732 = vld [vmem:[%s1 + $0x18] sm:$0xff]
    %v733 = vld [vmem:[#allocation2] sm:$0xf]
    %v734 = vld [vmem:[#allocation2 + $0x4] sm:$0xf]
    %v735 = vld [vmem:[#allocation2 + $0x8] sm:$0xf]
    %v736 = vld [vmem:[#allocation2 + $0xc] sm:$0xf]
    %v741 = vunpack.c.l.b16 %v733
    %v742 = vunpack.c.l.b16 %v734
    %v743 = vunpack.c.l.b16 %v735
    %v744 = vunpack.c.l.b16 %v736
    %v745 = vpack.c.b16 %v742, %v741
    %v746 = vpack.c.b16 %v744, %v743
    %v751 = vunpack.c.l.b16 %v729
    %v752 = vunpack.c.h.b16 %v729
    %v753 = vunpack.c.l.b16 %v730
    %v754 = vunpack.c.h.b16 %v730
    %v755 = vunpack.c.l.b16 %v731
    %v756 = vunpack.c.h.b16 %v731
    %v757 = vunpack.c.l.b16 %v732
    %v758 = vunpack.c.h.b16 %v732
    %v759 = vpack.c.b16 %v753, %v751
    %v760 = vpack.c.b16 %v754, %v752
    %v761 = vpack.c.b16 %v757, %v755
    %v762 = vpack.c.b16 %v758, %v756
    %vm767 = vcmask 261120
    %v769 = vsel %vm767, %v745, 0
    %v772 = vsel %vm767, %v746, 0
    %774 = vmatprep.subr.bf16.mxu0 %v760
    %775 = vmatpush1.bf16.msra.mxu0 %v759
    %776 = vmatprep.subr.bf16.mxu0 %v762
    %777 = vmatpush1.bf16.msra.mxu0 %v761
    %778 = vmatprep.subr.bf16.mxu0 0
    %779 = vmatpush1.bf16.msra.mxu0 0
    %780 = vmatprep.subr.bf16.mxu0 0
    %781 = vmatpush1.bf16.msra.mxu0 0
    %782 = vmatprep.subr.bf16.mxu0 0
    %783 = vmatpush1.bf16.msra.mxu0 0
    %784 = vmatprep.subr.bf16.mxu0 0
    %785 = vmatpush1.bf16.msra.mxu0 0
    %786 = vmatprep.subr.bf16.mxu0 0
    %787 = vmatpush1.bf16.msra.mxu0 0
    %788 = vmatprep.subr.bf16.mxu0 0
    %789 = vmatpush1.bf16.msra.mxu0 0
    %790 = vmatprep.subr.bf16.mxu0 0
    %791 = vmatpush1.bf16.msra.mxu0 0
    %792 = vmatprep.subr.bf16.mxu0 0
    %793 = vmatpush1.bf16.msra.mxu0 0
    %794 = vmatprep.subr.bf16.mxu0 0
    %795 = vmatpush1.bf16.msra.mxu0 0
    %796 = vmatprep.subr.bf16.mxu0 0
    %797 = vmatpush1.bf16.msra.mxu0 0
    %798 = vmatprep.subr.bf16.mxu0 0
    %799 = vmatpush1.bf16.msra.mxu0 0
    %800 = vmatprep.subr.bf16.mxu0 0
    %801 = vmatpush1.bf16.msra.mxu0 0
    %802 = vmatprep.subr.bf16.mxu0 0
    %803 = vmatpush1.bf16.msra.mxu0 0
    %804 = vmatprep.subr.bf16.mxu0 0
    %805 = vmatpush1.bf16.msra.mxu0 0
    %806 = vmatprep.mubr.bf16.mxu0 0
    %807 = vmatmul.mubr.bf16.gmra.mrb[0].mxu0 %v769
    %v808 = vpop.f32.mrb[0].mxu0
    %v809 = vadd.f32 0.0, %v808
    %v810 = vpop.f32.mrb[0].mxu0
    %v811 = vadd.f32 0.0, %v810
    %v812 = vpop.f32.mrb[0].mxu0
    %v813 = vadd.f32 0.0, %v812
    %v814 = vpop.f32.mrb[0].mxu0
    %v815 = vadd.f32 0.0, %v814
    %816 = vmatprep.mubr.bf16.mxu0 0
    %817 = vmatmul.mubr.bf16.gmra.mrb[0].mxu0 %v772
    %v818 = vpop.f32.mrb[0].mxu0
    %v819 = vadd.f32 0.0, %v818
    %v820 = vpop.f32.mrb[0].mxu0
    %v821 = vadd.f32 0.0, %v820
    %v822 = vpop.f32.mrb[0].mxu0
    %v823 = vadd.f32 0.0, %v822
    %v824 = vpop.f32.mrb[0].mxu0
    %v825 = vadd.f32 0.0, %v824
    %826 = vdwg.mxu0
    %v827 = vpack.c.bf16 %v813, %v809
    %v828 = vpack.c.bf16 %v815, %v811
    %v829 = vpack.c.bf16 %v823, %v819
    %v830 = vpack.c.bf16 %v825, %v821
    %v831 = vld [vmem:[%s7] sm:$0xff]
    %v832 = vld [vmem:[%s7 + $0x8] sm:$0xff]
    %v833 = vld [vmem:[%s7 + $0x10] sm:$0xff]
    %v834 = vld [vmem:[%s7 + $0x18] sm:$0xff]
    %v835 = vld [vmem:[%s7 + $0x20] sm:$0xff]
    %v836 = vld [vmem:[%s7 + $0x28] sm:$0xff]
    %v837 = vld [vmem:[%s7 + $0x30] sm:$0xff]
    %v838 = vld [vmem:[%s7 + $0x38] sm:$0xff]
    %v839 = vld [vmem:[%s7 + $0x40] sm:$0xff]
    %v840 = vld [vmem:[%s7 + $0x48] sm:$0xff]
    %v841 = vld [vmem:[%s7 + $0x50] sm:$0xff]
    %v842 = vld [vmem:[%s7 + $0x58] sm:$0xff]
    %v843 = vld [vmem:[%s7 + $0x60] sm:$0xff]
    %v844 = vld [vmem:[%s7 + $0x68] sm:$0xff]
    %v845 = vld [vmem:[%s7 + $0x70] sm:$0xff]
    %v846 = vld [vmem:[%s7 + $0x78] sm:$0xff]
    %v847 = vld [vmem:[%s7 + $0x80] sm:$0xff]
    %v848 = vld [vmem:[%s7 + $0x88] sm:$0xff]
    %v849 = vld [vmem:[%s7 + $0x90] sm:$0xff]
    %v850 = vld [vmem:[%s7 + $0x98] sm:$0xff]
    %v851 = vld [vmem:[%s7 + $0xa0] sm:$0xff]
    %v852 = vld [vmem:[%s7 + $0xa8] sm:$0xff]
    %v853 = vld [vmem:[%s7 + $0xb0] sm:$0xff]
    %v854 = vld [vmem:[%s7 + $0xb8] sm:$0xff]
    %v855 = vld [vmem:[%s7 + $0xc0] sm:$0xff]
    %v856 = vld [vmem:[%s7 + $0xc8] sm:$0xff]
    %v857 = vld [vmem:[%s7 + $0xd0] sm:$0xff]
    %v858 = vld [vmem:[%s7 + $0xd8] sm:$0xff]
    %v859 = vld [vmem:[%s7 + $0xe0] sm:$0xff]
    %v860 = vld [vmem:[%s7 + $0xe8] sm:$0xff]
    %v861 = vld [vmem:[%s7 + $0xf0] sm:$0xff]
    %v862 = vld [vmem:[%s7 + $0xf8] sm:$0xff]
    %v863 = vld [vmem:[%s9] sm:$0xff]
    %v864 = vld [vmem:[%s9 + $0x8] sm:$0xff]
    %v865 = vld [vmem:[%s9 + $0x10] sm:$0xff]
    %v866 = vld [vmem:[%s9 + $0x18] sm:$0xff]
    %v867 = vld [vmem:[%s9 + $0x20] sm:$0xff]
    %v868 = vld [vmem:[%s9 + $0x28] sm:$0xff]
    %v869 = vld [vmem:[%s9 + $0x30] sm:$0xff]
    %v870 = vld [vmem:[%s9 + $0x38] sm:$0xff]
    %v871 = vld [vmem:[%s9 + $0x40] sm:$0xff]
    %v872 = vld [vmem:[%s9 + $0x48] sm:$0xff]
    %v873 = vld [vmem:[%s9 + $0x50] sm:$0xff]
    %v874 = vld [vmem:[%s9 + $0x58] sm:$0xff]
    %v875 = vld [vmem:[%s9 + $0x60] sm:$0xff]
    %v876 = vld [vmem:[%s9 + $0x68] sm:$0xff]
    %v877 = vld [vmem:[%s9 + $0x70] sm:$0xff]
    %v878 = vld [vmem:[%s9 + $0x78] sm:$0xff]
    %v879 = vld [vmem:[%s9 + $0x80] sm:$0xff]
    %v880 = vld [vmem:[%s9 + $0x88] sm:$0xff]
    %v881 = vld [vmem:[%s9 + $0x90] sm:$0xff]
    %v882 = vld [vmem:[%s9 + $0x98] sm:$0xff]
    %v883 = vld [vmem:[%s9 + $0xa0] sm:$0xff]
    %v884 = vld [vmem:[%s9 + $0xa8] sm:$0xff]
    %v885 = vld [vmem:[%s9 + $0xb0] sm:$0xff]
    %v886 = vld [vmem:[%s9 + $0xb8] sm:$0xff]
    %v887 = vld [vmem:[%s9 + $0xc0] sm:$0xff]
    %v888 = vld [vmem:[%s9 + $0xc8] sm:$0xff]
    %v889 = vld [vmem:[%s9 + $0xd0] sm:$0xff]
    %v890 = vld [vmem:[%s9 + $0xd8] sm:$0xff]
    %v891 = vld [vmem:[%s9 + $0xe0] sm:$0xff]
    %v892 = vld [vmem:[%s9 + $0xe8] sm:$0xff]
    %v893 = vld [vmem:[%s9 + $0xf0] sm:$0xff]
    %v894 = vld [vmem:[%s9 + $0xf8] sm:$0xff]
    %v927 = vunpack.c.l.b16 %v863
    %v928 = vunpack.c.h.b16 %v863
    %v929 = vunpack.c.l.b16 %v864
    %v930 = vunpack.c.h.b16 %v864
    %v931 = vunpack.c.l.b16 %v865
    %v932 = vunpack.c.h.b16 %v865
    %v933 = vunpack.c.l.b16 %v866
    %v934 = vunpack.c.h.b16 %v866
    %v935 = vunpack.c.l.b16 %v867
    %v936 = vunpack.c.h.b16 %v867
    %v937 = vunpack.c.l.b16 %v868
    %v938 = vunpack.c.h.b16 %v868
    %v939 = vunpack.c.l.b16 %v869
    %v940 = vunpack.c.h.b16 %v869
    %v941 = vunpack.c.l.b16 %v870
    %v942 = vunpack.c.h.b16 %v870
    %v943 = vunpack.c.l.b16 %v871
    %v944 = vunpack.c.h.b16 %v871
    %v945 = vunpack.c.l.b16 %v872
    %v946 = vunpack.c.h.b16 %v872
    %v947 = vunpack.c.l.b16 %v873
    %v948 = vunpack.c.h.b16 %v873
    %v949 = vunpack.c.l.b16 %v874
    %v950 = vunpack.c.h.b16 %v874
    %v951 = vunpack.c.l.b16 %v875
    %v952 = vunpack.c.h.b16 %v875
    %v953 = vunpack.c.l.b16 %v876
    %v954 = vunpack.c.h.b16 %v876
    %v955 = vunpack.c.l.b16 %v877
    %v956 = vunpack.c.h.b16 %v877
    %v957 = vunpack.c.l.b16 %v878
    %v958 = vunpack.c.h.b16 %v878
    %v959 = vunpack.c.l.b16 %v879
    %v960 = vunpack.c.h.b16 %v879
    %v961 = vunpack.c.l.b16 %v880
    %v962 = vunpack.c.h.b16 %v880
    %v963 = vunpack.c.l.b16 %v881
    %v964 = vunpack.c.h.b16 %v881
    %v965 = vunpack.c.l.b16 %v882
    %v966 = vunpack.c.h.b16 %v882
    %v967 = vunpack.c.l.b16 %v883
    %v968 = vunpack.c.h.b16 %v883
    %v969 = vunpack.c.l.b16 %v884
    %v970 = vunpack.c.h.b16 %v884
    %v971 = vunpack.c.l.b16 %v885
    %v972 = vunpack.c.h.b16 %v885
    %v973 = vunpack.c.l.b16 %v886
    %v974 = vunpack.c.h.b16 %v886
    %v975 = vunpack.c.l.b16 %v887
    %v976 = vunpack.c.h.b16 %v887
    %v977 = vunpack.c.l.b16 %v888
    %v978 = vunpack.c.h.b16 %v888
    %v979 = vunpack.c.l.b16 %v889
    %v980 = vunpack.c.h.b16 %v889
    %v981 = vunpack.c.l.b16 %v890
    %v982 = vunpack.c.h.b16 %v890
    %v983 = vunpack.c.l.b16 %v891
    %v984 = vunpack.c.h.b16 %v891
    %v985 = vunpack.c.l.b16 %v892
    %v986 = vunpack.c.h.b16 %v892
    %v987 = vunpack.c.l.b16 %v893
    %v988 = vunpack.c.h.b16 %v893
    %v989 = vunpack.c.l.b16 %v894
    %v990 = vunpack.c.h.b16 %v894
    %v991 = vpack.c.b16 %v929, %v927
    %v992 = vpack.c.b16 %v930, %v928
    %v993 = vpack.c.b16 %v933, %v931
    %v994 = vpack.c.b16 %v934, %v932
    %v995 = vpack.c.b16 %v937, %v935
    %v996 = vpack.c.b16 %v938, %v936
    %v997 = vpack.c.b16 %v941, %v939
    %v998 = vpack.c.b16 %v942, %v940
    %v999 = vpack.c.b16 %v945, %v943
    %v1000 = vpack.c.b16 %v946, %v944
    %v1001 = vpack.c.b16 %v949, %v947
    %v1002 = vpack.c.b16 %v950, %v948
    %v1003 = vpack.c.b16 %v953, %v951
    %v1004 = vpack.c.b16 %v954, %v952
    %v1005 = vpack.c.b16 %v957, %v955
    %v1006 = vpack.c.b16 %v958, %v956
    %v1007 = vpack.c.b16 %v961, %v959
    %v1008 = vpack.c.b16 %v962, %v960
    %v1009 = vpack.c.b16 %v965, %v963
    %v1010 = vpack.c.b16 %v966, %v964
    %v1011 = vpack.c.b16 %v969, %v967
    %v1012 = vpack.c.b16 %v970, %v968
    %v1013 = vpack.c.b16 %v973, %v971
    %v1014 = vpack.c.b16 %v974, %v972
    %v1015 = vpack.c.b16 %v977, %v975
    %v1016 = vpack.c.b16 %v978, %v976
    %v1017 = vpack.c.b16 %v981, %v979
    %v1018 = vpack.c.b16 %v982, %v980
    %v1019 = vpack.c.b16 %v985, %v983
    %v1020 = vpack.c.b16 %v986, %v984
    %v1021 = vpack.c.b16 %v989, %v987
    %v1022 = vpack.c.b16 %v990, %v988
    %1055 = vmatprep.subr.bf16.mxu0 %v992
    %1056 = vmatpush1.bf16.msra.mxu0 %v991
    %1057 = vmatprep.subr.bf16.mxu0 %v994
    %1058 = vmatpush1.bf16.msra.mxu0 %v993
    %1059 = vmatprep.subr.bf16.mxu0 %v996
    %1060 = vmatpush1.bf16.msra.mxu0 %v995
    %1061 = vmatprep.subr.bf16.mxu0 %v998
    %1062 = vmatpush1.bf16.msra.mxu0 %v997
    %1063 = vmatprep.subr.bf16.mxu0 %v1000
    %1064 = vmatpush1.bf16.msra.mxu0 %v999
    %1065 = vmatprep.subr.bf16.mxu0 %v1002
    %1066 = vmatpush1.bf16.msra.mxu0 %v1001
    %1067 = vmatprep.subr.bf16.mxu0 %v1004
    %1068 = vmatpush1.bf16.msra.mxu0 %v1003
    %1069 = vmatprep.subr.bf16.mxu0 %v1006
    %1070 = vmatpush1.bf16.msra.mxu0 %v1005
    %1071 = vmatprep.subr.bf16.mxu0 %v1008
    %1072 = vmatpush1.bf16.msra.mxu0 %v1007
    %1073 = vmatprep.subr.bf16.mxu0 %v1010
    %1074 = vmatpush1.bf16.msra.mxu0 %v1009
    %1075 = vmatprep.subr.bf16.mxu0 %v1012
    %1076 = vmatpush1.bf16.msra.mxu0 %v1011
    %1077 = vmatprep.subr.bf16.mxu0 %v1014
    %1078 = vmatpush1.bf16.msra.mxu0 %v1013
    %1079 = vmatprep.subr.bf16.mxu0 %v1016
    %1080 = vmatpush1.bf16.msra.mxu0 %v1015
    %1081 = vmatprep.subr.bf16.mxu0 %v1018
    %1082 = vmatpush1.bf16.msra.mxu0 %v1017
    %1083 = vmatprep.subr.bf16.mxu0 %v1020
    %1084 = vmatpush1.bf16.msra.mxu0 %v1019
    %1085 = vmatprep.subr.bf16.mxu0 %v1022
    %1086 = vmatpush1.bf16.msra.mxu0 %v1021
    %1087 = vmatprep.mubr.bf16.mxu0 %v760
    %1088 = vmatmul.mubr.bf16.gmra.mrb[0].mxu0 %v759
    %v1089 = vpop.f32.mrb[0].mxu0
    %v1090 = vadd.f32 0.0, %v1089
    %v1091 = vpop.f32.mrb[0].mxu0
    %v1092 = vadd.f32 0.0, %v1091
    %v1093 = vpop.f32.mrb[0].mxu0
    %v1094 = vadd.f32 0.0, %v1093
    %v1095 = vpop.f32.mrb[0].mxu0
    %v1096 = vadd.f32 0.0, %v1095
    %1097 = vmatprep.mubr.bf16.mxu0 %v762
    %1098 = vmatmul.mubr.bf16.gmra.mrb[0].mxu0 %v761
    %v1099 = vpop.f32.mrb[0].mxu0
    %v1100 = vadd.f32 0.0, %v1099
    %v1101 = vpop.f32.mrb[0].mxu0
    %v1102 = vadd.f32 0.0, %v1101
    %v1103 = vpop.f32.mrb[0].mxu0
    %v1104 = vadd.f32 0.0, %v1103
    %v1105 = vpop.f32.mrb[0].mxu0
    %v1106 = vadd.f32 0.0, %v1105
    %1107 = vdwg.mxu0
    %v1140 = vunpack.c.l.b16 %v831
    %v1141 = vunpack.c.h.b16 %v831
    %v1142 = vunpack.c.l.b16 %v832
    %v1143 = vunpack.c.h.b16 %v832
    %v1144 = vunpack.c.l.b16 %v833
    %v1145 = vunpack.c.h.b16 %v833
    %v1146 = vunpack.c.l.b16 %v834
    %v1147 = vunpack.c.h.b16 %v834
    %v1148 = vunpack.c.l.b16 %v835
    %v1149 = vunpack.c.h.b16 %v835
    %v1150 = vunpack.c.l.b16 %v836
    %v1151 = vunpack.c.h.b16 %v836
    %v1152 = vunpack.c.l.b16 %v837
    %v1153 = vunpack.c.h.b16 %v837
    %v1154 = vunpack.c.l.b16 %v838
    %v1155 = vunpack.c.h.b16 %v838
    %v1156 = vunpack.c.l.b16 %v839
    %v1157 = vunpack.c.h.b16 %v839
    %v1158 = vunpack.c.l.b16 %v840
    %v1159 = vunpack.c.h.b16 %v840
    %v1160 = vunpack.c.l.b16 %v841
    %v1161 = vunpack.c.h.b16 %v841
    %v1162 = vunpack.c.l.b16 %v842
    %v1163 = vunpack.c.h.b16 %v842
    %v1164 = vunpack.c.l.b16 %v843
    %v1165 = vunpack.c.h.b16 %v843
    %v1166 = vunpack.c.l.b16 %v844
    %v1167 = vunpack.c.h.b16 %v844
    %v1168 = vunpack.c.l.b16 %v845
    %v1169 = vunpack.c.h.b16 %v845
    %v1170 = vunpack.c.l.b16 %v846
    %v1171 = vunpack.c.h.b16 %v846
    %v1172 = vunpack.c.l.b16 %v847
    %v1173 = vunpack.c.h.b16 %v847
    %v1174 = vunpack.c.l.b16 %v848
    %v1175 = vunpack.c.h.b16 %v848
    %v1176 = vunpack.c.l.b16 %v849
    %v1177 = vunpack.c.h.b16 %v849
    %v1178 = vunpack.c.l.b16 %v850
    %v1179 = vunpack.c.h.b16 %v850
    %v1180 = vunpack.c.l.b16 %v851
    %v1181 = vunpack.c.h.b16 %v851
    %v1182 = vunpack.c.l.b16 %v852
    %v1183 = vunpack.c.h.b16 %v852
    %v1184 = vunpack.c.l.b16 %v853
    %v1185 = vunpack.c.h.b16 %v853
    %v1186 = vunpack.c.l.b16 %v854
    %v1187 = vunpack.c.h.b16 %v854
    %v1188 = vunpack.c.l.b16 %v855
    %v1189 = vunpack.c.h.b16 %v855
    %v1190 = vunpack.c.l.b16 %v856
    %v1191 = vunpack.c.h.b16 %v856
    %v1192 = vunpack.c.l.b16 %v857
    %v1193 = vunpack.c.h.b16 %v857
    %v1194 = vunpack.c.l.b16 %v858
    %v1195 = vunpack.c.h.b16 %v858
    %v1196 = vunpack.c.l.b16 %v859
    %v1197 = vunpack.c.h.b16 %v859
    %v1198 = vunpack.c.l.b16 %v860
    %v1199 = vunpack.c.h.b16 %v860
    %v1200 = vunpack.c.l.b16 %v861
    %v1201 = vunpack.c.h.b16 %v861
    %v1202 = vunpack.c.l.b16 %v862
    %v1203 = vunpack.c.h.b16 %v862
    %v1204 = vpack.c.b16 %v1142, %v1140
    %v1205 = vpack.c.b16 %v1143, %v1141
    %v1206 = vpack.c.b16 %v1146, %v1144
    %v1207 = vpack.c.b16 %v1147, %v1145
    %v1208 = vpack.c.b16 %v1150, %v1148
    %v1209 = vpack.c.b16 %v1151, %v1149
    %v1210 = vpack.c.b16 %v1154, %v1152
    %v1211 = vpack.c.b16 %v1155, %v1153
    %v1212 = vpack.c.b16 %v1158, %v1156
    %v1213 = vpack.c.b16 %v1159, %v1157
    %v1214 = vpack.c.b16 %v1162, %v1160
    %v1215 = vpack.c.b16 %v1163, %v1161
    %v1216 = vpack.c.b16 %v1166, %v1164
    %v1217 = vpack.c.b16 %v1167, %v1165
    %v1218 = vpack.c.b16 %v1170, %v1168
    %v1219 = vpack.c.b16 %v1171, %v1169
    %v1220 = vpack.c.b16 %v1174, %v1172
    %v1221 = vpack.c.b16 %v1175, %v1173
    %v1222 = vpack.c.b16 %v1178, %v1176
    %v1223 = vpack.c.b16 %v1179, %v1177
    %v1224 = vpack.c.b16 %v1182, %v1180
    %v1225 = vpack.c.b16 %v1183, %v1181
    %v1226 = vpack.c.b16 %v1186, %v1184
    %v1227 = vpack.c.b16 %v1187, %v1185
    %v1228 = vpack.c.b16 %v1190, %v1188
    %v1229 = vpack.c.b16 %v1191, %v1189
    %v1230 = vpack.c.b16 %v1194, %v1192
    %v1231 = vpack.c.b16 %v1195, %v1193
    %v1232 = vpack.c.b16 %v1198, %v1196
    %v1233 = vpack.c.b16 %v1199, %v1197
    %v1234 = vpack.c.b16 %v1202, %v1200
    %v1235 = vpack.c.b16 %v1203, %v1201
    %1268 = vmatprep.subr.bf16.mxu0 %v1205
    %1269 = vmatpush1.bf16.msra.mxu0 %v1204
    %1270 = vmatprep.subr.bf16.mxu0 %v1207
    %1271 = vmatpush1.bf16.msra.mxu0 %v1206
    %1272 = vmatprep.subr.bf16.mxu0 %v1209
    %1273 = vmatpush1.bf16.msra.mxu0 %v1208
    %1274 = vmatprep.subr.bf16.mxu0 %v1211
    %1275 = vmatpush1.bf16.msra.mxu0 %v1210
    %1276 = vmatprep.subr.bf16.mxu0 %v1213
    %1277 = vmatpush1.bf16.msra.mxu0 %v1212
    %1278 = vmatprep.subr.bf16.mxu0 %v1215
    %1279 = vmatpush1.bf16.msra.mxu0 %v1214
    %1280 = vmatprep.subr.bf16.mxu0 %v1217
    %1281 = vmatpush1.bf16.msra.mxu0 %v1216
    %1282 = vmatprep.subr.bf16.mxu0 %v1219
    %1283 = vmatpush1.bf16.msra.mxu0 %v1218
    %1284 = vmatprep.subr.bf16.mxu0 %v1221
    %1285 = vmatpush1.bf16.msra.mxu0 %v1220
    %1286 = vmatprep.subr.bf16.mxu0 %v1223
    %1287 = vmatpush1.bf16.msra.mxu0 %v1222
    %1288 = vmatprep.subr.bf16.mxu0 %v1225
    %1289 = vmatpush1.bf16.msra.mxu0 %v1224
    %1290 = vmatprep.subr.bf16.mxu0 %v1227
    %1291 = vmatpush1.bf16.msra.mxu0 %v1226
    %1292 = vmatprep.subr.bf16.mxu0 %v1229
    %1293 = vmatpush1.bf16.msra.mxu0 %v1228
    %1294 = vmatprep.subr.bf16.mxu0 %v1231
    %1295 = vmatpush1.bf16.msra.mxu0 %v1230
    %1296 = vmatprep.subr.bf16.mxu0 %v1233
    %1297 = vmatpush1.bf16.msra.mxu0 %v1232
    %1298 = vmatprep.subr.bf16.mxu0 %v1235
    %1299 = vmatpush1.bf16.msra.mxu0 %v1234
    %1300 = vmatprep.mubr.bf16.mxu0 %v828
    %1301 = vmatmul.mubr.bf16.gmra.mrb[0].mxu0 %v827
    %v1302 = vpop.f32.mrb[0].mxu0
    %v1303 = vadd.f32 %v1090, %v1302
    %v1304 = vpop.f32.mrb[0].mxu0
    %v1305 = vadd.f32 %v1092, %v1304
    %v1306 = vpop.f32.mrb[0].mxu0
    %v1307 = vadd.f32 %v1094, %v1306
    %v1308 = vpop.f32.mrb[0].mxu0
    %v1309 = vadd.f32 %v1096, %v1308
    %1310 = vmatprep.mubr.bf16.mxu0 %v830
    %1311 = vmatmul.mubr.bf16.gmra.mrb[0].mxu0 %v829
    %v1312 = vpop.f32.mrb[0].mxu0
    %v1313 = vadd.f32 %v1100, %v1312
    %v1314 = vpop.f32.mrb[0].mxu0
    %v1315 = vadd.f32 %v1102, %v1314
    %v1316 = vpop.f32.mrb[0].mxu0
    %v1317 = vadd.f32 %v1104, %v1316
    %v1318 = vpop.f32.mrb[0].mxu0
    %v1319 = vadd.f32 %v1106, %v1318
    %1320 = vdwg.mxu0
    %v1321 = vld [vmem:[#allocation5] sm:$0xf]
    %v1322 = vld [vmem:[#allocation5 + $0x4] sm:$0xf]
    %v1323 = vld [vmem:[#allocation5 + $0x8] sm:$0xf]
    %v1324 = vld [vmem:[#allocation5 + $0xc] sm:$0xf]
    %v1329 = vunpack.c.l.b16 %v1321
    %v1330 = vunpack.c.l.b16 %v1322
    %v1331 = vunpack.c.l.b16 %v1323
    %v1332 = vunpack.c.l.b16 %v1324
    %v1333 = vpack.c.b16 %v1330, %v1329
    %v1334 = vpack.c.b16 %v1332, %v1331
    %v1336 = vsel %vm767, %v1333, 0
    %v1339 = vsel %vm767, %v1334, 0
    %1341 = vmatprep.subr.bf16.mxu0 %v760
    %1342 = vmatpush1.bf16.msra.mxu0 %v759
    %1343 = vmatprep.subr.bf16.mxu0 %v762
    %1344 = vmatpush1.bf16.msra.mxu0 %v761
    %1345 = vmatprep.subr.bf16.mxu0 0
    %1346 = vmatpush1.bf16.msra.mxu0 0
    %1347 = vmatprep.subr.bf16.mxu0 0
    %1348 = vmatpush1.bf16.msra.mxu0 0
    %1349 = vmatprep.subr.bf16.mxu0 0
    %1350 = vmatpush1.bf16.msra.mxu0 0
    %1351 = vmatprep.subr.bf16.mxu0 0
    %1352 = vmatpush1.bf16.msra.mxu0 0
    %1353 = vmatprep.subr.bf16.mxu0 0
    %1354 = vmatpush1.bf16.msra.mxu0 0
    %1355 = vmatprep.subr.bf16.mxu0 0
    %1356 = vmatpush1.bf16.msra.mxu0 0
    %1357 = vmatprep.subr.bf16.mxu0 0
    %1358 = vmatpush1.bf16.msra.mxu0 0
    %1359 = vmatprep.subr.bf16.mxu0 0
    %1360 = vmatpush1.bf16.msra.mxu0 0
    %1361 = vmatprep.subr.bf16.mxu0 0
    %1362 = vmatpush1.bf16.msra.mxu0 0
    %1363 = vmatprep.subr.bf16.mxu0 0
    %1364 = vmatpush1.bf16.msra.mxu0 0
    %1365 = vmatprep.subr.bf16.mxu0 0
    %1366 = vmatpush1.bf16.msra.mxu0 0
    %1367 = vmatprep.subr.bf16.mxu0 0
    %1368 = vmatpush1.bf16.msra.mxu0 0
    %1369 = vmatprep.subr.bf16.mxu0 0
    %1370 = vmatpush1.bf16.msra.mxu0 0
    %1371 = vmatprep.subr.bf16.mxu0 0
    %1372 = vmatpush1.bf16.msra.mxu0 0
    %1373 = vmatprep.mubr.bf16.mxu0 0
    %1374 = vmatmul.mubr.bf16.gmra.mrb[0].mxu0 %v1336
    %v1375 = vpop.f32.mrb[0].mxu0
    %v1376 = vadd.f32 0.0, %v1375
    %v1377 = vpop.f32.mrb[0].mxu0
    %v1378 = vadd.f32 0.0, %v1377
    %v1379 = vpop.f32.mrb[0].mxu0
    %v1380 = vadd.f32 0.0, %v1379
    %v1381 = vpop.f32.mrb[0].mxu0
    %v1382 = vadd.f32 0.0, %v1381
    %1383 = vmatprep.mubr.bf16.mxu0 0
    %1384 = vmatmul.mubr.bf16.gmra.mrb[0].mxu0 %v1339
    %v1385 = vpop.f32.mrb[0].mxu0
    %v1386 = vadd.f32 0.0, %v1385
    %v1387 = vpop.f32.mrb[0].mxu0
    %v1388 = vadd.f32 0.0, %v1387
    %v1389 = vpop.f32.mrb[0].mxu0
    %v1390 = vadd.f32 0.0, %v1389
    %v1391 = vpop.f32.mrb[0].mxu0
    %v1392 = vadd.f32 0.0, %v1391
    %1393 = vdwg.mxu0
    %v1394 = vpack.c.bf16 %v1380, %v1376
    %v1395 = vpack.c.bf16 %v1382, %v1378
    %v1396 = vpack.c.bf16 %v1390, %v1386
    %v1397 = vpack.c.bf16 %v1392, %v1388
    %v1398 = vld [vmem:[%s11] sm:$0xff]
    %v1399 = vld [vmem:[%s11 + $0x8] sm:$0xff]
    %v1400 = vld [vmem:[%s11 + $0x10] sm:$0xff]
    %v1401 = vld [vmem:[%s11 + $0x18] sm:$0xff]
    %v1402 = vld [vmem:[%s11 + $0x20] sm:$0xff]
    %v1403 = vld [vmem:[%s11 + $0x28] sm:$0xff]
    %v1404 = vld [vmem:[%s11 + $0x30] sm:$0xff]
    %v1405 = vld [vmem:[%s11 + $0x38] sm:$0xff]
    %v1406 = vld [vmem:[%s11 + $0x40] sm:$0xff]
    %v1407 = vld [vmem:[%s11 + $0x48] sm:$0xff]
    %v1408 = vld [vmem:[%s11 + $0x50] sm:$0xff]
    %v1409 = vld [vmem:[%s11 + $0x58] sm:$0xff]
    %v1410 = vld [vmem:[%s11 + $0x60] sm:$0xff]
    %v1411 = vld [vmem:[%s11 + $0x68] sm:$0xff]
    %v1412 = vld [vmem:[%s11 + $0x70] sm:$0xff]
    %v1413 = vld [vmem:[%s11 + $0x78] sm:$0xff]
    %v1414 = vld [vmem:[%s11 + $0x80] sm:$0xff]
    %v1415 = vld [vmem:[%s11 + $0x88] sm:$0xff]
    %v1416 = vld [vmem:[%s11 + $0x90] sm:$0xff]
    %v1417 = vld [vmem:[%s11 + $0x98] sm:$0xff]
    %v1418 = vld [vmem:[%s11 + $0xa0] sm:$0xff]
    %v1419 = vld [vmem:[%s11 + $0xa8] sm:$0xff]
    %v1420 = vld [vmem:[%s11 + $0xb0] sm:$0xff]
    %v1421 = vld [vmem:[%s11 + $0xb8] sm:$0xff]
    %v1422 = vld [vmem:[%s11 + $0xc0] sm:$0xff]
    %v1423 = vld [vmem:[%s11 + $0xc8] sm:$0xff]
    %v1424 = vld [vmem:[%s11 + $0xd0] sm:$0xff]
    %v1425 = vld [vmem:[%s11 + $0xd8] sm:$0xff]
    %v1426 = vld [vmem:[%s11 + $0xe0] sm:$0xff]
    %v1427 = vld [vmem:[%s11 + $0xe8] sm:$0xff]
    %v1428 = vld [vmem:[%s11 + $0xf0] sm:$0xff]
    %v1429 = vld [vmem:[%s11 + $0xf8] sm:$0xff]
    %v1462 = vunpack.c.l.b16 %v1398
    %v1463 = vunpack.c.h.b16 %v1398
    %v1464 = vunpack.c.l.b16 %v1399
    %v1465 = vunpack.c.h.b16 %v1399
    %v1466 = vunpack.c.l.b16 %v1400
    %v1467 = vunpack.c.h.b16 %v1400
    %v1468 = vunpack.c.l.b16 %v1401
    %v1469 = vunpack.c.h.b16 %v1401
    %v1470 = vunpack.c.l.b16 %v1402
    %v1471 = vunpack.c.h.b16 %v1402
    %v1472 = vunpack.c.l.b16 %v1403
    %v1473 = vunpack.c.h.b16 %v1403
    %v1474 = vunpack.c.l.b16 %v1404
    %v1475 = vunpack.c.h.b16 %v1404
    %v1476 = vunpack.c.l.b16 %v1405
    %v1477 = vunpack.c.h.b16 %v1405
    %v1478 = vunpack.c.l.b16 %v1406
    %v1479 = vunpack.c.h.b16 %v1406
    %v1480 = vunpack.c.l.b16 %v1407
    %v1481 = vunpack.c.h.b16 %v1407
    %v1482 = vunpack.c.l.b16 %v1408
    %v1483 = vunpack.c.h.b16 %v1408
    %v1484 = vunpack.c.l.b16 %v1409
    %v1485 = vunpack.c.h.b16 %v1409
    %v1486 = vunpack.c.l.b16 %v1410
    %v1487 = vunpack.c.h.b16 %v1410
    %v1488 = vunpack.c.l.b16 %v1411
    %v1489 = vunpack.c.h.b16 %v1411
    %v1490 = vunpack.c.l.b16 %v1412
    %v1491 = vunpack.c.h.b16 %v1412
    %v1492 = vunpack.c.l.b16 %v1413
    %v1493 = vunpack.c.h.b16 %v1413
    %v1494 = vunpack.c.l.b16 %v1414
    %v1495 = vunpack.c.h.b16 %v1414
    %v1496 = vunpack.c.l.b16 %v1415
    %v1497 = vunpack.c.h.b16 %v1415
    %v1498 = vunpack.c.l.b16 %v1416
    %v1499 = vunpack.c.h.b16 %v1416
    %v1500 = vunpack.c.l.b16 %v1417
    %v1501 = vunpack.c.h.b16 %v1417
    %v1502 = vunpack.c.l.b16 %v1418
    %v1503 = vunpack.c.h.b16 %v1418
    %v1504 = vunpack.c.l.b16 %v1419
    %v1505 = vunpack.c.h.b16 %v1419
    %v1506 = vunpack.c.l.b16 %v1420
    %v1507 = vunpack.c.h.b16 %v1420
    %v1508 = vunpack.c.l.b16 %v1421
    %v1509 = vunpack.c.h.b16 %v1421
    %v1510 = vunpack.c.l.b16 %v1422
    %v1511 = vunpack.c.h.b16 %v1422
    %v1512 = vunpack.c.l.b16 %v1423
    %v1513 = vunpack.c.h.b16 %v1423
    %v1514 = vunpack.c.l.b16 %v1424
    %v1515 = vunpack.c.h.b16 %v1424
    %v1516 = vunpack.c.l.b16 %v1425
    %v1517 = vunpack.c.h.b16 %v1425
    %v1518 = vunpack.c.l.b16 %v1426
    %v1519 = vunpack.c.h.b16 %v1426
    %v1520 = vunpack.c.l.b16 %v1427
    %v1521 = vunpack.c.h.b16 %v1427
    %v1522 = vunpack.c.l.b16 %v1428
    %v1523 = vunpack.c.h.b16 %v1428
    %v1524 = vunpack.c.l.b16 %v1429
    %v1525 = vunpack.c.h.b16 %v1429
    %v1526 = vpack.c.b16 %v1464, %v1462
    %v1527 = vpack.c.b16 %v1465, %v1463
    %v1528 = vpack.c.b16 %v1468, %v1466
    %v1529 = vpack.c.b16 %v1469, %v1467
    %v1530 = vpack.c.b16 %v1472, %v1470
    %v1531 = vpack.c.b16 %v1473, %v1471
    %v1532 = vpack.c.b16 %v1476, %v1474
    %v1533 = vpack.c.b16 %v1477, %v1475
    %v1534 = vpack.c.b16 %v1480, %v1478
    %v1535 = vpack.c.b16 %v1481, %v1479
    %v1536 = vpack.c.b16 %v1484, %v1482
    %v1537 = vpack.c.b16 %v1485, %v1483
    %v1538 = vpack.c.b16 %v1488, %v1486
    %v1539 = vpack.c.b16 %v1489, %v1487
    %v1540 = vpack.c.b16 %v1492, %v1490
    %v1541 = vpack.c.b16 %v1493, %v1491
    %v1542 = vpack.c.b16 %v1496, %v1494
    %v1543 = vpack.c.b16 %v1497, %v1495
    %v1544 = vpack.c.b16 %v1500, %v1498
    %v1545 = vpack.c.b16 %v1501, %v1499
    %v1546 = vpack.c.b16 %v1504, %v1502
    %v1547 = vpack.c.b16 %v1505, %v1503
    %v1548 = vpack.c.b16 %v1508, %v1506
    %v1549 = vpack.c.b16 %v1509, %v1507
    %v1550 = vpack.c.b16 %v1512, %v1510
    %v1551 = vpack.c.b16 %v1513, %v1511
    %v1552 = vpack.c.b16 %v1516, %v1514
    %v1553 = vpack.c.b16 %v1517, %v1515
    %v1554 = vpack.c.b16 %v1520, %v1518
    %v1555 = vpack.c.b16 %v1521, %v1519
    %v1556 = vpack.c.b16 %v1524, %v1522
    %v1557 = vpack.c.b16 %v1525, %v1523
    %1590 = vmatprep.subr.bf16.mxu0 %v1527
    %1591 = vmatpush1.bf16.msra.mxu0 %v1526
    %1592 = vmatprep.subr.bf16.mxu0 %v1529
    %1593 = vmatpush1.bf16.msra.mxu0 %v1528
    %1594 = vmatprep.subr.bf16.mxu0 %v1531
    %1595 = vmatpush1.bf16.msra.mxu0 %v1530
    %1596 = vmatprep.subr.bf16.mxu0 %v1533
    %1597 = vmatpush1.bf16.msra.mxu0 %v1532
    %1598 = vmatprep.subr.bf16.mxu0 %v1535
    %1599 = vmatpush1.bf16.msra.mxu0 %v1534
    %1600 = vmatprep.subr.bf16.mxu0 %v1537
    %1601 = vmatpush1.bf16.msra.mxu0 %v1536
    %1602 = vmatprep.subr.bf16.mxu0 %v1539
    %1603 = vmatpush1.bf16.msra.mxu0 %v1538
    %1604 = vmatprep.subr.bf16.mxu0 %v1541
    %1605 = vmatpush1.bf16.msra.mxu0 %v1540
    %1606 = vmatprep.subr.bf16.mxu0 %v1543
    %1607 = vmatpush1.bf16.msra.mxu0 %v1542
    %1608 = vmatprep.subr.bf16.mxu0 %v1545
    %1609 = vmatpush1.bf16.msra.mxu0 %v1544
    %1610 = vmatprep.subr.bf16.mxu0 %v1547
    %1611 = vmatpush1.bf16.msra.mxu0 %v1546
    %1612 = vmatprep.subr.bf16.mxu0 %v1549
    %1613 = vmatpush1.bf16.msra.mxu0 %v1548
    %1614 = vmatprep.subr.bf16.mxu0 %v1551
    %1615 = vmatpush1.bf16.msra.mxu0 %v1550
    %1616 = vmatprep.subr.bf16.mxu0 %v1553
    %1617 = vmatpush1.bf16.msra.mxu0 %v1552
    %1618 = vmatprep.subr.bf16.mxu0 %v1555
    %1619 = vmatpush1.bf16.msra.mxu0 %v1554
    %1620 = vmatprep.subr.bf16.mxu0 %v1557
    %1621 = vmatpush1.bf16.msra.mxu0 %v1556
    %1622 = vmatprep.mubr.bf16.mxu0 %v1395
    %1623 = vmatmul.mubr.bf16.gmra.mrb[0].mxu0 %v1394
    %v1624 = vpop.f32.mrb[0].mxu0
    %v1625 = vadd.f32 0.0, %v1624
    %v1626 = vpop.f32.mrb[0].mxu0
    %v1627 = vadd.f32 0.0, %v1626
    %v1628 = vpop.f32.mrb[0].mxu0
    %v1629 = vadd.f32 0.0, %v1628
    %v1630 = vpop.f32.mrb[0].mxu0
    %v1631 = vadd.f32 0.0, %v1630
    %1632 = vmatprep.mubr.bf16.mxu0 %v1397
    %1633 = vmatmul.mubr.bf16.gmra.mrb[0].mxu0 %v1396
    %v1634 = vpop.f32.mrb[0].mxu0
    %v1635 = vadd.f32 0.0, %v1634
    %v1636 = vpop.f32.mrb[0].mxu0
    %v1637 = vadd.f32 0.0, %v1636
    %v1638 = vpop.f32.mrb[0].mxu0
    %v1639 = vadd.f32 0.0, %v1638
    %v1640 = vpop.f32.mrb[0].mxu0
    %v1641 = vadd.f32 0.0, %v1640
    %1642 = vdwg.mxu0
    %v1643 = vadd.f32 %v1303, %v1625
    %v1644 = vadd.f32 %v1305, %v1627
    %v1645 = vadd.f32 %v1307, %v1629
    %v1646 = vadd.f32 %v1309, %v1631
    %v1647 = vadd.f32 %v1313, %v1635
    %v1648 = vadd.f32 %v1315, %v1637
    %v1649 = vadd.f32 %v1317, %v1639
    %v1650 = vadd.f32 %v1319, %v1641
    %v1651 = vmax.f32 %v1643, 0.0
    %v1652 = vmax.f32 %v1644, 0.0
    %v1653 = vmax.f32 %v1645, 0.0
    %v1654 = vmax.f32 %v1646, 0.0
    %v1655 = vmax.f32 %v1647, 0.0
    %v1656 = vmax.f32 %v1648, 0.0
    %v1657 = vmax.f32 %v1649, 0.0
    %v1658 = vmax.f32 %v1650, 0.0
    %v1659 = vpack.c.bf16 %v1653, %v1651
    %v1660 = vpack.c.bf16 %v1654, %v1652
    %v1661 = vpack.c.bf16 %v1657, %v1655
    %v1662 = vpack.c.bf16 %v1658, %v1656
    %v1663 = vld [vmem:[#allocation7] sm:$0xf]
    %v1664 = vld [vmem:[#allocation7 + $0x4] sm:$0xf]
    %v1665 = vld [vmem:[#allocation7 + $0x8] sm:$0xf]
    %v1666 = vld [vmem:[#allocation7 + $0xc] sm:$0xf]
    %v1671 = vunpack.c.l.b16 %v1663
    %v1672 = vunpack.c.l.b16 %v1664
    %v1673 = vunpack.c.l.b16 %v1665
    %v1674 = vunpack.c.l.b16 %v1666
    %v1675 = vpack.c.b16 %v1672, %v1671
    %v1676 = vpack.c.b16 %v1674, %v1673
    %v1678 = vsel %vm767, %v1675, 0
    %v1681 = vsel %vm767, %v1676, 0
    %1683 = vmatprep.subr.bf16.mxu0 %v1660
    %1684 = vmatpush1.bf16.msra.mxu0 %v1659
    %1685 = vmatprep.subr.bf16.mxu0 %v1662
    %1686 = vmatpush1.bf16.msra.mxu0 %v1661
    %1687 = vmatprep.subr.bf16.mxu0 0
    %1688 = vmatpush1.bf16.msra.mxu0 0
    %1689 = vmatprep.subr.bf16.mxu0 0
    %1690 = vmatpush1.bf16.msra.mxu0 0
    %1691 = vmatprep.subr.bf16.mxu0 0
    %1692 = vmatpush1.bf16.msra.mxu0 0
    %1693 = vmatprep.subr.bf16.mxu0 0
    %1694 = vmatpush1.bf16.msra.mxu0 0
    %1695 = vmatprep.subr.bf16.mxu0 0
    %1696 = vmatpush1.bf16.msra.mxu0 0
    %1697 = vmatprep.subr.bf16.mxu0 0
    %1698 = vmatpush1.bf16.msra.mxu0 0
    %1699 = vmatprep.subr.bf16.mxu0 0
    %1700 = vmatpush1.bf16.msra.mxu0 0
    %1701 = vmatprep.subr.bf16.mxu0 0
    %1702 = vmatpush1.bf16.msra.mxu0 0
    %1703 = vmatprep.subr.bf16.mxu0 0
    %1704 = vmatpush1.bf16.msra.mxu0 0
    %1705 = vmatprep.subr.bf16.mxu0 0
    %1706 = vmatpush1.bf16.msra.mxu0 0
    %1707 = vmatprep.subr.bf16.mxu0 0
    %1708 = vmatpush1.bf16.msra.mxu0 0
    %1709 = vmatprep.subr.bf16.mxu0 0
    %1710 = vmatpush1.bf16.msra.mxu0 0
    %1711 = vmatprep.subr.bf16.mxu0 0
    %1712 = vmatpush1.bf16.msra.mxu0 0
    %1713 = vmatprep.subr.bf16.mxu0 0
    %1714 = vmatpush1.bf16.msra.mxu0 0
    %1715 = vmatprep.mubr.bf16.mxu0 0
    %1716 = vmatmul.mubr.bf16.gmra.mrb[0].mxu0 %v1678
    %v1717 = vpop.f32.mrb[0].mxu0
    %v1718 = vadd.f32 0.0, %v1717
    %v1719 = vpop.f32.mrb[0].mxu0
    %v1720 = vadd.f32 0.0, %v1719
    %v1721 = vpop.f32.mrb[0].mxu0
    %v1722 = vadd.f32 0.0, %v1721
    %v1723 = vpop.f32.mrb[0].mxu0
    %v1724 = vadd.f32 0.0, %v1723
    %1725 = vmatprep.mubr.bf16.mxu0 0
    %1726 = vmatmul.mubr.bf16.gmra.mrb[0].mxu0 %v1681
    %v1727 = vpop.f32.mrb[0].mxu0
    %v1728 = vadd.f32 0.0, %v1727
    %v1729 = vpop.f32.mrb[0].mxu0
    %v1730 = vadd.f32 0.0, %v1729
    %v1731 = vpop.f32.mrb[0].mxu0
    %v1732 = vadd.f32 0.0, %v1731
    %v1733 = vpop.f32.mrb[0].mxu0
    %v1734 = vadd.f32 0.0, %v1733
    %1735 = vdwg.mxu0
    %v1736 = vpack.c.bf16 %v1722, %v1718
    %v1737 = vpack.c.bf16 %v1724, %v1720
    %v1738 = vpack.c.bf16 %v1732, %v1728
    %v1739 = vpack.c.bf16 %v1734, %v1730
    %v1740 = vld [vmem:[%s17] sm:$0xff]
    %v1741 = vld [vmem:[%s17 + $0x8] sm:$0xff]
    %v1742 = vld [vmem:[%s17 + $0x10] sm:$0xff]
    %v1743 = vld [vmem:[%s17 + $0x18] sm:$0xff]
    %v1744 = vld [vmem:[%s17 + $0x20] sm:$0xff]
    %v1745 = vld [vmem:[%s17 + $0x28] sm:$0xff]
    %v1746 = vld [vmem:[%s17 + $0x30] sm:$0xff]
    %v1747 = vld [vmem:[%s17 + $0x38] sm:$0xff]
    %v1748 = vld [vmem:[%s17 + $0x40] sm:$0xff]
    %v1749 = vld [vmem:[%s17 + $0x48] sm:$0xff]
    %v1750 = vld [vmem:[%s17 + $0x50] sm:$0xff]
    %v1751 = vld [vmem:[%s17 + $0x58] sm:$0xff]
    %v1752 = vld [vmem:[%s17 + $0x60] sm:$0xff]
    %v1753 = vld [vmem:[%s17 + $0x68] sm:$0xff]
    %v1754 = vld [vmem:[%s17 + $0x70] sm:$0xff]
    %v1755 = vld [vmem:[%s17 + $0x78] sm:$0xff]
    %v1756 = vld [vmem:[%s17 + $0x80] sm:$0xff]
    %v1757 = vld [vmem:[%s17 + $0x88] sm:$0xff]
    %v1758 = vld [vmem:[%s17 + $0x90] sm:$0xff]
    %v1759 = vld [vmem:[%s17 + $0x98] sm:$0xff]
    %v1760 = vld [vmem:[%s17 + $0xa0] sm:$0xff]
    %v1761 = vld [vmem:[%s17 + $0xa8] sm:$0xff]
    %v1762 = vld [vmem:[%s17 + $0xb0] sm:$0xff]
    %v1763 = vld [vmem:[%s17 + $0xb8] sm:$0xff]
    %v1764 = vld [vmem:[%s17 + $0xc0] sm:$0xff]
    %v1765 = vld [vmem:[%s17 + $0xc8] sm:$0xff]
    %v1766 = vld [vmem:[%s17 + $0xd0] sm:$0xff]
    %v1767 = vld [vmem:[%s17 + $0xd8] sm:$0xff]
    %v1768 = vld [vmem:[%s17 + $0xe0] sm:$0xff]
    %v1769 = vld [vmem:[%s17 + $0xe8] sm:$0xff]
    %v1770 = vld [vmem:[%s17 + $0xf0] sm:$0xff]
    %v1771 = vld [vmem:[%s17 + $0xf8] sm:$0xff]
    %v1772 = vld [vmem:[%s19] sm:$0xff]
    %v1773 = vld [vmem:[%s19 + $0x8] sm:$0xff]
    %v1774 = vld [vmem:[%s19 + $0x10] sm:$0xff]
    %v1775 = vld [vmem:[%s19 + $0x18] sm:$0xff]
    %v1776 = vld [vmem:[%s19 + $0x20] sm:$0xff]
    %v1777 = vld [vmem:[%s19 + $0x28] sm:$0xff]
    %v1778 = vld [vmem:[%s19 + $0x30] sm:$0xff]
    %v1779 = vld [vmem:[%s19 + $0x38] sm:$0xff]
    %v1780 = vld [vmem:[%s19 + $0x40] sm:$0xff]
    %v1781 = vld [vmem:[%s19 + $0x48] sm:$0xff]
    %v1782 = vld [vmem:[%s19 + $0x50] sm:$0xff]
    %v1783 = vld [vmem:[%s19 + $0x58] sm:$0xff]
    %v1784 = vld [vmem:[%s19 + $0x60] sm:$0xff]
    %v1785 = vld [vmem:[%s19 + $0x68] sm:$0xff]
    %v1786 = vld [vmem:[%s19 + $0x70] sm:$0xff]
    %v1787 = vld [vmem:[%s19 + $0x78] sm:$0xff]
    %v1788 = vld [vmem:[%s19 + $0x80] sm:$0xff]
    %v1789 = vld [vmem:[%s19 + $0x88] sm:$0xff]
    %v1790 = vld [vmem:[%s19 + $0x90] sm:$0xff]
    %v1791 = vld [vmem:[%s19 + $0x98] sm:$0xff]
    %v1792 = vld [vmem:[%s19 + $0xa0] sm:$0xff]
    %v1793 = vld [vmem:[%s19 + $0xa8] sm:$0xff]
    %v1794 = vld [vmem:[%s19 + $0xb0] sm:$0xff]
    %v1795 = vld [vmem:[%s19 + $0xb8] sm:$0xff]
    %v1796 = vld [vmem:[%s19 + $0xc0] sm:$0xff]
    %v1797 = vld [vmem:[%s19 + $0xc8] sm:$0xff]
    %v1798 = vld [vmem:[%s19 + $0xd0] sm:$0xff]
    %v1799 = vld [vmem:[%s19 + $0xd8] sm:$0xff]
    %v1800 = vld [vmem:[%s19 + $0xe0] sm:$0xff]
    %v1801 = vld [vmem:[%s19 + $0xe8] sm:$0xff]
    %v1802 = vld [vmem:[%s19 + $0xf0] sm:$0xff]
    %v1803 = vld [vmem:[%s19 + $0xf8] sm:$0xff]
    %v1836 = vunpack.c.l.b16 %v1772
    %v1837 = vunpack.c.h.b16 %v1772
    %v1838 = vunpack.c.l.b16 %v1773
    %v1839 = vunpack.c.h.b16 %v1773
    %v1840 = vunpack.c.l.b16 %v1774
    %v1841 = vunpack.c.h.b16 %v1774
    %v1842 = vunpack.c.l.b16 %v1775
    %v1843 = vunpack.c.h.b16 %v1775
    %v1844 = vunpack.c.l.b16 %v1776
    %v1845 = vunpack.c.h.b16 %v1776
    %v1846 = vunpack.c.l.b16 %v1777
    %v1847 = vunpack.c.h.b16 %v1777
    %v1848 = vunpack.c.l.b16 %v1778
    %v1849 = vunpack.c.h.b16 %v1778
    %v1850 = vunpack.c.l.b16 %v1779
    %v1851 = vunpack.c.h.b16 %v1779
    %v1852 = vunpack.c.l.b16 %v1780
    %v1853 = vunpack.c.h.b16 %v1780
    %v1854 = vunpack.c.l.b16 %v1781
    %v1855 = vunpack.c.h.b16 %v1781
    %v1856 = vunpack.c.l.b16 %v1782
    %v1857 = vunpack.c.h.b16 %v1782
    %v1858 = vunpack.c.l.b16 %v1783
    %v1859 = vunpack.c.h.b16 %v1783
    %v1860 = vunpack.c.l.b16 %v1784
    %v1861 = vunpack.c.h.b16 %v1784
    %v1862 = vunpack.c.l.b16 %v1785
    %v1863 = vunpack.c.h.b16 %v1785
    %v1864 = vunpack.c.l.b16 %v1786
    %v1865 = vunpack.c.h.b16 %v1786
    %v1866 = vunpack.c.l.b16 %v1787
    %v1867 = vunpack.c.h.b16 %v1787
    %v1868 = vunpack.c.l.b16 %v1788
    %v1869 = vunpack.c.h.b16 %v1788
    %v1870 = vunpack.c.l.b16 %v1789
    %v1871 = vunpack.c.h.b16 %v1789
    %v1872 = vunpack.c.l.b16 %v1790
    %v1873 = vunpack.c.h.b16 %v1790
    %v1874 = vunpack.c.l.b16 %v1791
    %v1875 = vunpack.c.h.b16 %v1791
    %v1876 = vunpack.c.l.b16 %v1792
    %v1877 = vunpack.c.h.b16 %v1792
    %v1878 = vunpack.c.l.b16 %v1793
    %v1879 = vunpack.c.h.b16 %v1793
    %v1880 = vunpack.c.l.b16 %v1794
    %v1881 = vunpack.c.h.b16 %v1794
    %v1882 = vunpack.c.l.b16 %v1795
    %v1883 = vunpack.c.h.b16 %v1795
    %v1884 = vunpack.c.l.b16 %v1796
    %v1885 = vunpack.c.h.b16 %v1796
    %v1886 = vunpack.c.l.b16 %v1797
    %v1887 = vunpack.c.h.b16 %v1797
    %v1888 = vunpack.c.l.b16 %v1798
    %v1889 = vunpack.c.h.b16 %v1798
    %v1890 = vunpack.c.l.b16 %v1799
    %v1891 = vunpack.c.h.b16 %v1799
    %v1892 = vunpack.c.l.b16 %v1800
    %v1893 = vunpack.c.h.b16 %v1800
    %v1894 = vunpack.c.l.b16 %v1801
    %v1895 = vunpack.c.h.b16 %v1801
    %v1896 = vunpack.c.l.b16 %v1802
    %v1897 = vunpack.c.h.b16 %v1802
    %v1898 = vunpack.c.l.b16 %v1803
    %v1899 = vunpack.c.h.b16 %v1803
    %v1900 = vpack.c.b16 %v1838, %v1836
    %v1901 = vpack.c.b16 %v1839, %v1837
    %v1902 = vpack.c.b16 %v1842, %v1840
    %v1903 = vpack.c.b16 %v1843, %v1841
    %v1904 = vpack.c.b16 %v1846, %v1844
    %v1905 = vpack.c.b16 %v1847, %v1845
    %v1906 = vpack.c.b16 %v1850, %v1848
    %v1907 = vpack.c.b16 %v1851, %v1849
    %v1908 = vpack.c.b16 %v1854, %v1852
    %v1909 = vpack.c.b16 %v1855, %v1853
    %v1910 = vpack.c.b16 %v1858, %v1856
    %v1911 = vpack.c.b16 %v1859, %v1857
    %v1912 = vpack.c.b16 %v1862, %v1860
    %v1913 = vpack.c.b16 %v1863, %v1861
    %v1914 = vpack.c.b16 %v1866, %v1864
    %v1915 = vpack.c.b16 %v1867, %v1865
    %v1916 = vpack.c.b16 %v1870, %v1868
    %v1917 = vpack.c.b16 %v1871, %v1869
    %v1918 = vpack.c.b16 %v1874, %v1872
    %v1919 = vpack.c.b16 %v1875, %v1873
    %v1920 = vpack.c.b16 %v1878, %v1876
    %v1921 = vpack.c.b16 %v1879, %v1877
    %v1922 = vpack.c.b16 %v1882, %v1880
    %v1923 = vpack.c.b16 %v1883, %v1881
    %v1924 = vpack.c.b16 %v1886, %v1884
    %v1925 = vpack.c.b16 %v1887, %v1885
    %v1926 = vpack.c.b16 %v1890, %v1888
    %v1927 = vpack.c.b16 %v1891, %v1889
    %v1928 = vpack.c.b16 %v1894, %v1892
    %v1929 = vpack.c.b16 %v1895, %v1893
    %v1930 = vpack.c.b16 %v1898, %v1896
    %v1931 = vpack.c.b16 %v1899, %v1897
    %1964 = vmatprep.subr.bf16.mxu0 %v1901
    %1965 = vmatpush1.bf16.msra.mxu0 %v1900
    %1966 = vmatprep.subr.bf16.mxu0 %v1903
    %1967 = vmatpush1.bf16.msra.mxu0 %v1902
    %1968 = vmatprep.subr.bf16.mxu0 %v1905
    %1969 = vmatpush1.bf16.msra.mxu0 %v1904
    %1970 = vmatprep.subr.bf16.mxu0 %v1907
    %1971 = vmatpush1.bf16.msra.mxu0 %v1906
    %1972 = vmatprep.subr.bf16.mxu0 %v1909
    %1973 = vmatpush1.bf16.msra.mxu0 %v1908
    %1974 = vmatprep.subr.bf16.mxu0 %v1911
    %1975 = vmatpush1.bf16.msra.mxu0 %v1910
    %1976 = vmatprep.subr.bf16.mxu0 %v1913
    %1977 = vmatpush1.bf16.msra.mxu0 %v1912
    %1978 = vmatprep.subr.bf16.mxu0 %v1915
    %1979 = vmatpush1.bf16.msra.mxu0 %v1914
    %1980 = vmatprep.subr.bf16.mxu0 %v1917
    %1981 = vmatpush1.bf16.msra.mxu0 %v1916
    %1982 = vmatprep.subr.bf16.mxu0 %v1919
    %1983 = vmatpush1.bf16.msra.mxu0 %v1918
    %1984 = vmatprep.subr.bf16.mxu0 %v1921
    %1985 = vmatpush1.bf16.msra.mxu0 %v1920
    %1986 = vmatprep.subr.bf16.mxu0 %v1923
    %1987 = vmatpush1.bf16.msra.mxu0 %v1922
    %1988 = vmatprep.subr.bf16.mxu0 %v1925
    %1989 = vmatpush1.bf16.msra.mxu0 %v1924
    %1990 = vmatprep.subr.bf16.mxu0 %v1927
    %1991 = vmatpush1.bf16.msra.mxu0 %v1926
    %1992 = vmatprep.subr.bf16.mxu0 %v1929
    %1993 = vmatpush1.bf16.msra.mxu0 %v1928
    %1994 = vmatprep.subr.bf16.mxu0 %v1931
    %1995 = vmatpush1.bf16.msra.mxu0 %v1930
    %1996 = vmatprep.mubr.bf16.mxu0 %v1660
    %1997 = vmatmul.mubr.bf16.gmra.mrb[0].mxu0 %v1659
    %v1998 = vpop.f32.mrb[0].mxu0
    %v1999 = vadd.f32 0.0, %v1998
    %v2000 = vpop.f32.mrb[0].mxu0
    %v2001 = vadd.f32 0.0, %v2000
    %v2002 = vpop.f32.mrb[0].mxu0
    %v2003 = vadd.f32 0.0, %v2002
    %v2004 = vpop.f32.mrb[0].mxu0
    %v2005 = vadd.f32 0.0, %v2004
    %2006 = vmatprep.mubr.bf16.mxu0 %v1662
    %2007 = vmatmul.mubr.bf16.gmra.mrb[0].mxu0 %v1661
    %v2008 = vpop.f32.mrb[0].mxu0
    %v2009 = vadd.f32 0.0, %v2008
    %v2010 = vpop.f32.mrb[0].mxu0
    %v2011 = vadd.f32 0.0, %v2010
    %v2012 = vpop.f32.mrb[0].mxu0
    %v2013 = vadd.f32 0.0, %v2012
    %v2014 = vpop.f32.mrb[0].mxu0
    %v2015 = vadd.f32 0.0, %v2014
    %2016 = vdwg.mxu0
    %v2049 = vunpack.c.l.b16 %v1740
    %v2050 = vunpack.c.h.b16 %v1740
    %v2051 = vunpack.c.l.b16 %v1741
    %v2052 = vunpack.c.h.b16 %v1741
    %v2053 = vunpack.c.l.b16 %v1742
    %v2054 = vunpack.c.h.b16 %v1742
    %v2055 = vunpack.c.l.b16 %v1743
    %v2056 = vunpack.c.h.b16 %v1743
    %v2057 = vunpack.c.l.b16 %v1744
    %v2058 = vunpack.c.h.b16 %v1744
    %v2059 = vunpack.c.l.b16 %v1745
    %v2060 = vunpack.c.h.b16 %v1745
    %v2061 = vunpack.c.l.b16 %v1746
    %v2062 = vunpack.c.h.b16 %v1746
    %v2063 = vunpack.c.l.b16 %v1747
    %v2064 = vunpack.c.h.b16 %v1747
    %v2065 = vunpack.c.l.b16 %v1748
    %v2066 = vunpack.c.h.b16 %v1748
    %v2067 = vunpack.c.l.b16 %v1749
    %v2068 = vunpack.c.h.b16 %v1749
    %v2069 = vunpack.c.l.b16 %v1750
    %v2070 = vunpack.c.h.b16 %v1750
    %v2071 = vunpack.c.l.b16 %v1751
    %v2072 = vunpack.c.h.b16 %v1751
    %v2073 = vunpack.c.l.b16 %v1752
    %v2074 = vunpack.c.h.b16 %v1752
    %v2075 = vunpack.c.l.b16 %v1753
    %v2076 = vunpack.c.h.b16 %v1753
    %v2077 = vunpack.c.l.b16 %v1754
    %v2078 = vunpack.c.h.b16 %v1754
    %v2079 = vunpack.c.l.b16 %v1755
    %v2080 = vunpack.c.h.b16 %v1755
    %v2081 = vunpack.c.l.b16 %v1756
    %v2082 = vunpack.c.h.b16 %v1756
    %v2083 = vunpack.c.l.b16 %v1757
    %v2084 = vunpack.c.h.b16 %v1757
    %v2085 = vunpack.c.l.b16 %v1758
    %v2086 = vunpack.c.h.b16 %v1758
    %v2087 = vunpack.c.l.b16 %v1759
    %v2088 = vunpack.c.h.b16 %v1759
    %v2089 = vunpack.c.l.b16 %v1760
    %v2090 = vunpack.c.h.b16 %v1760
    %v2091 = vunpack.c.l.b16 %v1761
    %v2092 = vunpack.c.h.b16 %v1761
    %v2093 = vunpack.c.l.b16 %v1762
    %v2094 = vunpack.c.h.b16 %v1762
    %v2095 = vunpack.c.l.b16 %v1763
    %v2096 = vunpack.c.h.b16 %v1763
    %v2097 = vunpack.c.l.b16 %v1764
    %v2098 = vunpack.c.h.b16 %v1764
    %v2099 = vunpack.c.l.b16 %v1765
    %v2100 = vunpack.c.h.b16 %v1765
    %v2101 = vunpack.c.l.b16 %v1766
    %v2102 = vunpack.c.h.b16 %v1766
    %v2103 = vunpack.c.l.b16 %v1767
    %v2104 = vunpack.c.h.b16 %v1767
    %v2105 = vunpack.c.l.b16 %v1768
    %v2106 = vunpack.c.h.b16 %v1768
    %v2107 = vunpack.c.l.b16 %v1769
    %v2108 = vunpack.c.h.b16 %v1769
    %v2109 = vunpack.c.l.b16 %v1770
    %v2110 = vunpack.c.h.b16 %v1770
    %v2111 = vunpack.c.l.b16 %v1771
    %v2112 = vunpack.c.h.b16 %v1771
    %v2113 = vpack.c.b16 %v2051, %v2049
    %v2114 = vpack.c.b16 %v2052, %v2050
    %v2115 = vpack.c.b16 %v2055, %v2053
    %v2116 = vpack.c.b16 %v2056, %v2054
    %v2117 = vpack.c.b16 %v2059, %v2057
    %v2118 = vpack.c.b16 %v2060, %v2058
    %v2119 = vpack.c.b16 %v2063, %v2061
    %v2120 = vpack.c.b16 %v2064, %v2062
    %v2121 = vpack.c.b16 %v2067, %v2065
    %v2122 = vpack.c.b16 %v2068, %v2066
    %v2123 = vpack.c.b16 %v2071, %v2069
    %v2124 = vpack.c.b16 %v2072, %v2070
    %v2125 = vpack.c.b16 %v2075, %v2073
    %v2126 = vpack.c.b16 %v2076, %v2074
    %v2127 = vpack.c.b16 %v2079, %v2077
    %v2128 = vpack.c.b16 %v2080, %v2078
    %v2129 = vpack.c.b16 %v2083, %v2081
    %v2130 = vpack.c.b16 %v2084, %v2082
    %v2131 = vpack.c.b16 %v2087, %v2085
    %v2132 = vpack.c.b16 %v2088, %v2086
    %v2133 = vpack.c.b16 %v2091, %v2089
    %v2134 = vpack.c.b16 %v2092, %v2090
    %v2135 = vpack.c.b16 %v2095, %v2093
    %v2136 = vpack.c.b16 %v2096, %v2094
    %v2137 = vpack.c.b16 %v2099, %v2097
    %v2138 = vpack.c.b16 %v2100, %v2098
    %v2139 = vpack.c.b16 %v2103, %v2101
    %v2140 = vpack.c.b16 %v2104, %v2102
    %v2141 = vpack.c.b16 %v2107, %v2105
    %v2142 = vpack.c.b16 %v2108, %v2106
    %v2143 = vpack.c.b16 %v2111, %v2109
    %v2144 = vpack.c.b16 %v2112, %v2110
    %2177 = vmatprep.subr.bf16.mxu0 %v2114
    %2178 = vmatpush1.bf16.msra.mxu0 %v2113
    %2179 = vmatprep.subr.bf16.mxu0 %v2116
    %2180 = vmatpush1.bf16.msra.mxu0 %v2115
    %2181 = vmatprep.subr.bf16.mxu0 %v2118
    %2182 = vmatpush1.bf16.msra.mxu0 %v2117
    %2183 = vmatprep.subr.bf16.mxu0 %v2120
    %2184 = vmatpush1.bf16.msra.mxu0 %v2119
    %2185 = vmatprep.subr.bf16.mxu0 %v2122
    %2186 = vmatpush1.bf16.msra.mxu0 %v2121
    %2187 = vmatprep.subr.bf16.mxu0 %v2124
    %2188 = vmatpush1.bf16.msra.mxu0 %v2123
    %2189 = vmatprep.subr.bf16.mxu0 %v2126
    %2190 = vmatpush1.bf16.msra.mxu0 %v2125
    %2191 = vmatprep.subr.bf16.mxu0 %v2128
    %2192 = vmatpush1.bf16.msra.mxu0 %v2127
    %2193 = vmatprep.subr.bf16.mxu0 %v2130
    %2194 = vmatpush1.bf16.msra.mxu0 %v2129
    %2195 = vmatprep.subr.bf16.mxu0 %v2132
    %2196 = vmatpush1.bf16.msra.mxu0 %v2131
    %2197 = vmatprep.subr.bf16.mxu0 %v2134
    %2198 = vmatpush1.bf16.msra.mxu0 %v2133
    %2199 = vmatprep.subr.bf16.mxu0 %v2136
    %2200 = vmatpush1.bf16.msra.mxu0 %v2135
    %2201 = vmatprep.subr.bf16.mxu0 %v2138
    %2202 = vmatpush1.bf16.msra.mxu0 %v2137
    %2203 = vmatprep.subr.bf16.mxu0 %v2140
    %2204 = vmatpush1.bf16.msra.mxu0 %v2139
    %2205 = vmatprep.subr.bf16.mxu0 %v2142
    %2206 = vmatpush1.bf16.msra.mxu0 %v2141
    %2207 = vmatprep.subr.bf16.mxu0 %v2144
    %2208 = vmatpush1.bf16.msra.mxu0 %v2143
    %2209 = vmatprep.mubr.bf16.mxu0 %v1737
    %2210 = vmatmul.mubr.bf16.gmra.mrb[0].mxu0 %v1736
    %v2211 = vpop.f32.mrb[0].mxu0
    %v2212 = vadd.f32 %v1999, %v2211
    %v2213 = vpop.f32.mrb[0].mxu0
    %v2214 = vadd.f32 %v2001, %v2213
    %v2215 = vpop.f32.mrb[0].mxu0
    %v2216 = vadd.f32 %v2003, %v2215
    %v2217 = vpop.f32.mrb[0].mxu0
    %v2218 = vadd.f32 %v2005, %v2217
    %2219 = vmatprep.mubr.bf16.mxu0 %v1739
    %2220 = vmatmul.mubr.bf16.gmra.mrb[0].mxu0 %v1738
    %v2221 = vpop.f32.mrb[0].mxu0
    %v2222 = vadd.f32 %v2009, %v2221
    %v2223 = vpop.f32.mrb[0].mxu0
    %v2224 = vadd.f32 %v2011, %v2223
    %v2225 = vpop.f32.mrb[0].mxu0
    %v2226 = vadd.f32 %v2013, %v2225
    %v2227 = vpop.f32.mrb[0].mxu0
    %v2228 = vadd.f32 %v2015, %v2227
    %2229 = vdwg.mxu0
    %v2230 = vld [vmem:[#allocation8] sm:$0xf]
    %v2231 = vld [vmem:[#allocation8 + $0x4] sm:$0xf]
    %v2232 = vld [vmem:[#allocation8 + $0x8] sm:$0xf]
    %v2233 = vld [vmem:[#allocation8 + $0xc] sm:$0xf]
    %v2238 = vunpack.c.l.b16 %v2230
    %v2239 = vunpack.c.l.b16 %v2231
    %v2240 = vunpack.c.l.b16 %v2232
    %v2241 = vunpack.c.l.b16 %v2233
    %v2242 = vpack.c.b16 %v2239, %v2238
    %v2243 = vpack.c.b16 %v2241, %v2240
    %v2245 = vsel %vm767, %v2242, 0
    %v2248 = vsel %vm767, %v2243, 0
    %2250 = vmatprep.subr.bf16.mxu0 %v1660
    %2251 = vmatpush1.bf16.msra.mxu0 %v1659
    %2252 = vmatprep.subr.bf16.mxu0 %v1662
    %2253 = vmatpush1.bf16.msra.mxu0 %v1661
    %2254 = vmatprep.subr.bf16.mxu0 0
    %2255 = vmatpush1.bf16.msra.mxu0 0
    %2256 = vmatprep.subr.bf16.mxu0 0
    %2257 = vmatpush1.bf16.msra.mxu0 0
    %2258 = vmatprep.subr.bf16.mxu0 0
    %2259 = vmatpush1.bf16.msra.mxu0 0
    %2260 = vmatprep.subr.bf16.mxu0 0
    %2261 = vmatpush1.bf16.msra.mxu0 0
    %2262 = vmatprep.subr.bf16.mxu0 0
    %2263 = vmatpush1.bf16.msra.mxu0 0
    %2264 = vmatprep.subr.bf16.mxu0 0
    %2265 = vmatpush1.bf16.msra.mxu0 0
    %2266 = vmatprep.subr.bf16.mxu0 0
    %2267 = vmatpush1.bf16.msra.mxu0 0
    %2268 = vmatprep.subr.bf16.mxu0 0
    %2269 = vmatpush1.bf16.msra.mxu0 0
    %2270 = vmatprep.subr.bf16.mxu0 0
    %2271 = vmatpush1.bf16.msra.mxu0 0
    %2272 = vmatprep.subr.bf16.mxu0 0
    %2273 = vmatpush1.bf16.msra.mxu0 0
    %2274 = vmatprep.subr.bf16.mxu0 0
    %2275 = vmatpush1.bf16.msra.mxu0 0
    %2276 = vmatprep.subr.bf16.mxu0 0
    %2277 = vmatpush1.bf16.msra.mxu0 0
    %2278 = vmatprep.subr.bf16.mxu0 0
    %2279 = vmatpush1.bf16.msra.mxu0 0
    %2280 = vmatprep.subr.bf16.mxu0 0
    %2281 = vmatpush1.bf16.msra.mxu0 0
    %2282 = vmatprep.mubr.bf16.mxu0 0
    %2283 = vmatmul.mubr.bf16.gmra.mrb[0].mxu0 %v2245
    %v2284 = vpop.f32.mrb[0].mxu0
    %v2285 = vadd.f32 0.0, %v2284
    %v2286 = vpop.f32.mrb[0].mxu0
    %v2287 = vadd.f32 0.0, %v2286
    %v2288 = vpop.f32.mrb[0].mxu0
    %v2289 = vadd.f32 0.0, %v2288
    %v2290 = vpop.f32.mrb[0].mxu0
    %v2291 = vadd.f32 0.0, %v2290
    %2292 = vmatprep.mubr.bf16.mxu0 0
    %2293 = vmatmul.mubr.bf16.gmra.mrb[0].mxu0 %v2248
    %v2294 = vpop.f32.mrb[0].mxu0
    %v2295 = vadd.f32 0.0, %v2294
    %v2296 = vpop.f32.mrb[0].mxu0
    %v2297 = vadd.f32 0.0, %v2296
    %v2298 = vpop.f32.mrb[0].mxu0
    %v2299 = vadd.f32 0.0, %v2298
    %v2300 = vpop.f32.mrb[0].mxu0
    %v2301 = vadd.f32 0.0, %v2300
    %2302 = vdwg.mxu0
    %v2303 = vpack.c.bf16 %v2289, %v2285
    %v2304 = vpack.c.bf16 %v2291, %v2287
    %v2305 = vpack.c.bf16 %v2299, %v2295
    %v2306 = vpack.c.bf16 %v2301, %v2297
    %v2307 = vld [vmem:[%s21] sm:$0xff]
    %v2308 = vld [vmem:[%s21 + $0x8] sm:$0xff]
    %v2309 = vld [vmem:[%s21 + $0x10] sm:$0xff]
    %v2310 = vld [vmem:[%s21 + $0x18] sm:$0xff]
    %v2311 = vld [vmem:[%s21 + $0x20] sm:$0xff]
    %v2312 = vld [vmem:[%s21 + $0x28] sm:$0xff]
    %v2313 = vld [vmem:[%s21 + $0x30] sm:$0xff]
    %v2314 = vld [vmem:[%s21 + $0x38] sm:$0xff]
    %v2315 = vld [vmem:[%s21 + $0x40] sm:$0xff]
    %v2316 = vld [vmem:[%s21 + $0x48] sm:$0xff]
    %v2317 = vld [vmem:[%s21 + $0x50] sm:$0xff]
    %v2318 = vld [vmem:[%s21 + $0x58] sm:$0xff]
    %v2319 = vld [vmem:[%s21 + $0x60] sm:$0xff]
    %v2320 = vld [vmem:[%s21 + $0x68] sm:$0xff]
    %v2321 = vld [vmem:[%s21 + $0x70] sm:$0xff]
    %v2322 = vld [vmem:[%s21 + $0x78] sm:$0xff]
    %v2323 = vld [vmem:[%s21 + $0x80] sm:$0xff]
    %v2324 = vld [vmem:[%s21 + $0x88] sm:$0xff]
    %v2325 = vld [vmem:[%s21 + $0x90] sm:$0xff]
    %v2326 = vld [vmem:[%s21 + $0x98] sm:$0xff]
    %v2327 = vld [vmem:[%s21 + $0xa0] sm:$0xff]
    %v2328 = vld [vmem:[%s21 + $0xa8] sm:$0xff]
    %v2329 = vld [vmem:[%s21 + $0xb0] sm:$0xff]
    %v2330 = vld [vmem:[%s21 + $0xb8] sm:$0xff]
    %v2331 = vld [vmem:[%s21 + $0xc0] sm:$0xff]
    %v2332 = vld [vmem:[%s21 + $0xc8] sm:$0xff]
    %v2333 = vld [vmem:[%s21 + $0xd0] sm:$0xff]
    %v2334 = vld [vmem:[%s21 + $0xd8] sm:$0xff]
    %v2335 = vld [vmem:[%s21 + $0xe0] sm:$0xff]
    %v2336 = vld [vmem:[%s21 + $0xe8] sm:$0xff]
    %v2337 = vld [vmem:[%s21 + $0xf0] sm:$0xff]
    %v2338 = vld [vmem:[%s21 + $0xf8] sm:$0xff]
    %v2371 = vunpack.c.l.b16 %v2307
    %v2372 = vunpack.c.h.b16 %v2307
    %v2373 = vunpack.c.l.b16 %v2308
    %v2374 = vunpack.c.h.b16 %v2308
    %v2375 = vunpack.c.l.b16 %v2309
    %v2376 = vunpack.c.h.b16 %v2309
    %v2377 = vunpack.c.l.b16 %v2310
    %v2378 = vunpack.c.h.b16 %v2310
    %v2379 = vunpack.c.l.b16 %v2311
    %v2380 = vunpack.c.h.b16 %v2311
    %v2381 = vunpack.c.l.b16 %v2312
    %v2382 = vunpack.c.h.b16 %v2312
    %v2383 = vunpack.c.l.b16 %v2313
    %v2384 = vunpack.c.h.b16 %v2313
    %v2385 = vunpack.c.l.b16 %v2314
    %v2386 = vunpack.c.h.b16 %v2314
    %v2387 = vunpack.c.l.b16 %v2315
    %v2388 = vunpack.c.h.b16 %v2315
    %v2389 = vunpack.c.l.b16 %v2316
    %v2390 = vunpack.c.h.b16 %v2316
    %v2391 = vunpack.c.l.b16 %v2317
    %v2392 = vunpack.c.h.b16 %v2317
    %v2393 = vunpack.c.l.b16 %v2318
    %v2394 = vunpack.c.h.b16 %v2318
    %v2395 = vunpack.c.l.b16 %v2319
    %v2396 = vunpack.c.h.b16 %v2319
    %v2397 = vunpack.c.l.b16 %v2320
    %v2398 = vunpack.c.h.b16 %v2320
    %v2399 = vunpack.c.l.b16 %v2321
    %v2400 = vunpack.c.h.b16 %v2321
    %v2401 = vunpack.c.l.b16 %v2322
    %v2402 = vunpack.c.h.b16 %v2322
    %v2403 = vunpack.c.l.b16 %v2323
    %v2404 = vunpack.c.h.b16 %v2323
    %v2405 = vunpack.c.l.b16 %v2324
    %v2406 = vunpack.c.h.b16 %v2324
    %v2407 = vunpack.c.l.b16 %v2325
    %v2408 = vunpack.c.h.b16 %v2325
    %v2409 = vunpack.c.l.b16 %v2326
    %v2410 = vunpack.c.h.b16 %v2326
    %v2411 = vunpack.c.l.b16 %v2327
    %v2412 = vunpack.c.h.b16 %v2327
    %v2413 = vunpack.c.l.b16 %v2328
    %v2414 = vunpack.c.h.b16 %v2328
    %v2415 = vunpack.c.l.b16 %v2329
    %v2416 = vunpack.c.h.b16 %v2329
    %v2417 = vunpack.c.l.b16 %v2330
    %v2418 = vunpack.c.h.b16 %v2330
    %v2419 = vunpack.c.l.b16 %v2331
    %v2420 = vunpack.c.h.b16 %v2331
    %v2421 = vunpack.c.l.b16 %v2332
    %v2422 = vunpack.c.h.b16 %v2332
    %v2423 = vunpack.c.l.b16 %v2333
    %v2424 = vunpack.c.h.b16 %v2333
    %v2425 = vunpack.c.l.b16 %v2334
    %v2426 = vunpack.c.h.b16 %v2334
    %v2427 = vunpack.c.l.b16 %v2335
    %v2428 = vunpack.c.h.b16 %v2335
    %v2429 = vunpack.c.l.b16 %v2336
    %v2430 = vunpack.c.h.b16 %v2336
    %v2431 = vunpack.c.l.b16 %v2337
    %v2432 = vunpack.c.h.b16 %v2337
    %v2433 = vunpack.c.l.b16 %v2338
    %v2434 = vunpack.c.h.b16 %v2338
    %v2435 = vpack.c.b16 %v2373, %v2371
    %v2436 = vpack.c.b16 %v2374, %v2372
    %v2437 = vpack.c.b16 %v2377, %v2375
    %v2438 = vpack.c.b16 %v2378, %v2376
    %v2439 = vpack.c.b16 %v2381, %v2379
    %v2440 = vpack.c.b16 %v2382, %v2380
    %v2441 = vpack.c.b16 %v2385, %v2383
    %v2442 = vpack.c.b16 %v2386, %v2384
    %v2443 = vpack.c.b16 %v2389, %v2387
    %v2444 = vpack.c.b16 %v2390, %v2388
    %v2445 = vpack.c.b16 %v2393, %v2391
    %v2446 = vpack.c.b16 %v2394, %v2392
    %v2447 = vpack.c.b16 %v2397, %v2395
    %v2448 = vpack.c.b16 %v2398, %v2396
    %v2449 = vpack.c.b16 %v2401, %v2399
    %v2450 = vpack.c.b16 %v2402, %v2400
    %v2451 = vpack.c.b16 %v2405, %v2403
    %v2452 = vpack.c.b16 %v2406, %v2404
    %v2453 = vpack.c.b16 %v2409, %v2407
    %v2454 = vpack.c.b16 %v2410, %v2408
    %v2455 = vpack.c.b16 %v2413, %v2411
    %v2456 = vpack.c.b16 %v2414, %v2412
    %v2457 = vpack.c.b16 %v2417, %v2415
    %v2458 = vpack.c.b16 %v2418, %v2416
    %v2459 = vpack.c.b16 %v2421, %v2419
    %v2460 = vpack.c.b16 %v2422, %v2420
    %v2461 = vpack.c.b16 %v2425, %v2423
    %v2462 = vpack.c.b16 %v2426, %v2424
    %v2463 = vpack.c.b16 %v2429, %v2427
    %v2464 = vpack.c.b16 %v2430, %v2428
    %v2465 = vpack.c.b16 %v2433, %v2431
    %v2466 = vpack.c.b16 %v2434, %v2432
    %2499 = vmatprep.subr.bf16.mxu0 %v2436
    %2500 = vmatpush1.bf16.msra.mxu0 %v2435
    %2501 = vmatprep.subr.bf16.mxu0 %v2438
    %2502 = vmatpush1.bf16.msra.mxu0 %v2437
    %2503 = vmatprep.subr.bf16.mxu0 %v2440
    %2504 = vmatpush1.bf16.msra.mxu0 %v2439
    %2505 = vmatprep.subr.bf16.mxu0 %v2442
    %2506 = vmatpush1.bf16.msra.mxu0 %v2441
    %2507 = vmatprep.subr.bf16.mxu0 %v2444
    %2508 = vmatpush1.bf16.msra.mxu0 %v2443
    %2509 = vmatprep.subr.bf16.mxu0 %v2446
    %2510 = vmatpush1.bf16.msra.mxu0 %v2445
    %2511 = vmatprep.subr.bf16.mxu0 %v2448
    %2512 = vmatpush1.bf16.msra.mxu0 %v2447
    %2513 = vmatprep.subr.bf16.mxu0 %v2450
    %2514 = vmatpush1.bf16.msra.mxu0 %v2449
    %2515 = vmatprep.subr.bf16.mxu0 %v2452
    %2516 = vmatpush1.bf16.msra.mxu0 %v2451
    %2517 = vmatprep.subr.bf16.mxu0 %v2454
    %2518 = vmatpush1.bf16.msra.mxu0 %v2453
    %2519 = vmatprep.subr.bf16.mxu0 %v2456
    %2520 = vmatpush1.bf16.msra.mxu0 %v2455
    %2521 = vmatprep.subr.bf16.mxu0 %v2458
    %2522 = vmatpush1.bf16.msra.mxu0 %v2457
    %2523 = vmatprep.subr.bf16.mxu0 %v2460
    %2524 = vmatpush1.bf16.msra.mxu0 %v2459
    %2525 = vmatprep.subr.bf16.mxu0 %v2462
    %2526 = vmatpush1.bf16.msra.mxu0 %v2461
    %2527 = vmatprep.subr.bf16.mxu0 %v2464
    %2528 = vmatpush1.bf16.msra.mxu0 %v2463
    %2529 = vmatprep.subr.bf16.mxu0 %v2466
    %2530 = vmatpush1.bf16.msra.mxu0 %v2465
    %2531 = vmatprep.mubr.bf16.mxu0 %v2304
    %2532 = vmatmul.mubr.bf16.gmra.mrb[0].mxu0 %v2303
    %v2533 = vpop.f32.mrb[0].mxu0
    %v2534 = vadd.f32 0.0, %v2533
    %v2535 = vpop.f32.mrb[0].mxu0
    %v2536 = vadd.f32 0.0, %v2535
    %v2537 = vpop.f32.mrb[0].mxu0
    %v2538 = vadd.f32 0.0, %v2537
    %v2539 = vpop.f32.mrb[0].mxu0
    %v2540 = vadd.f32 0.0, %v2539
    %2541 = vmatprep.mubr.bf16.mxu0 %v2306
    %2542 = vmatmul.mubr.bf16.gmra.mrb[0].mxu0 %v2305
    %v2543 = vpop.f32.mrb[0].mxu0
    %v2544 = vadd.f32 0.0, %v2543
    %v2545 = vpop.f32.mrb[0].mxu0
    %v2546 = vadd.f32 0.0, %v2545
    %v2547 = vpop.f32.mrb[0].mxu0
    %v2548 = vadd.f32 0.0, %v2547
    %v2549 = vpop.f32.mrb[0].mxu0
    %v2550 = vadd.f32 0.0, %v2549
    %2551 = vdwg.mxu0
    %v2552 = vadd.f32 %v2212, %v2534
    %v2553 = vadd.f32 %v2214, %v2536
    %v2554 = vadd.f32 %v2216, %v2538
    %v2555 = vadd.f32 %v2218, %v2540
    %v2556 = vadd.f32 %v2222, %v2544
    %v2557 = vadd.f32 %v2224, %v2546
    %v2558 = vadd.f32 %v2226, %v2548
    %v2559 = vadd.f32 %v2228, %v2550
    %v2560 = vld [vmem:[%s23] sm:$0x3]
    %v2562 = vlaneseq
    %v2563 = vshrl.u32 %v2562, 7
    %v2564 = vsub.s32 0, %v2563
    %v2565 = vrot.slane %v2560, %v2564
    %v2566 = vlaneseq
    %v2567 = vshrl.u32 %v2566, 7
    %v2568 = vsub.s32 1, %v2567
    %v2569 = vrot.slane %v2560, %v2568
    %v2572 = vadd.f32 %v2552, %v2565
    %v2573 = vadd.f32 %v2553, %v2569
    %v2574 = vadd.f32 %v2554, %v2565
    %v2575 = vadd.f32 %v2555, %v2569
    %v2576 = vadd.f32 %v2556, %v2565
    %v2577 = vadd.f32 %v2557, %v2569
    %v2578 = vadd.f32 %v2558, %v2565
    %v2579 = vadd.f32 %v2559, %v2569
    %v2580 = vmax.f32 %v2572, 0.0
    %v2581 = vmax.f32 %v2573, 0.0
    %v2582 = vmax.f32 %v2574, 0.0
    %v2583 = vmax.f32 %v2575, 0.0
    %v2584 = vmax.f32 %v2576, 0.0
    %v2585 = vmax.f32 %v2577, 0.0
    %v2586 = vmax.f32 %v2578, 0.0
    %v2587 = vmax.f32 %v2579, 0.0
    %v2588 = vpack.c.bf16 %v2582, %v2580
    %v2589 = vpack.c.bf16 %v2583, %v2581
    %v2590 = vpack.c.bf16 %v2586, %v2584
    %v2591 = vpack.c.bf16 %v2587, %v2585
    %v2592 = vld [vmem:[#allocation10] sm:$0xf]
    %v2593 = vld [vmem:[#allocation10 + $0x4] sm:$0xf]
    %v2594 = vld [vmem:[#allocation10 + $0x8] sm:$0xf]
    %v2595 = vld [vmem:[#allocation10 + $0xc] sm:$0xf]
    %v2600 = vunpack.c.l.b16 %v2592
    %v2601 = vunpack.c.l.b16 %v2593
    %v2602 = vunpack.c.l.b16 %v2594
    %v2603 = vunpack.c.l.b16 %v2595
    %v2604 = vpack.c.b16 %v2601, %v2600
    %v2605 = vpack.c.b16 %v2603, %v2602
    %v2607 = vsel %vm767, %v2604, 0
    %v2610 = vsel %vm767, %v2605, 0
    %2612 = vmatprep.subr.bf16.mxu0 %v2589
    %2613 = vmatpush1.bf16.msra.mxu0 %v2588
    %2614 = vmatprep.subr.bf16.mxu0 %v2591
    %2615 = vmatpush1.bf16.msra.mxu0 %v2590
    %2616 = vmatprep.subr.bf16.mxu0 0
    %2617 = vmatpush1.bf16.msra.mxu0 0
    %2618 = vmatprep.subr.bf16.mxu0 0
    %2619 = vmatpush1.bf16.msra.mxu0 0
    %2620 = vmatprep.subr.bf16.mxu0 0
    %2621 = vmatpush1.bf16.msra.mxu0 0
    %2622 = vmatprep.subr.bf16.mxu0 0
    %2623 = vmatpush1.bf16.msra.mxu0 0
    %2624 = vmatprep.subr.bf16.mxu0 0
    %2625 = vmatpush1.bf16.msra.mxu0 0
    %2626 = vmatprep.subr.bf16.mxu0 0
    %2627 = vmatpush1.bf16.msra.mxu0 0
    %2628 = vmatprep.subr.bf16.mxu0 0
    %2629 = vmatpush1.bf16.msra.mxu0 0
    %2630 = vmatprep.subr.bf16.mxu0 0
    %2631 = vmatpush1.bf16.msra.mxu0 0
    %2632 = vmatprep.subr.bf16.mxu0 0
    %2633 = vmatpush1.bf16.msra.mxu0 0
    %2634 = vmatprep.subr.bf16.mxu0 0
    %2635 = vmatpush1.bf16.msra.mxu0 0
    %2636 = vmatprep.subr.bf16.mxu0 0
    %2637 = vmatpush1.bf16.msra.mxu0 0
    %2638 = vmatprep.subr.bf16.mxu0 0
    %2639 = vmatpush1.bf16.msra.mxu0 0
    %2640 = vmatprep.subr.bf16.mxu0 0
    %2641 = vmatpush1.bf16.msra.mxu0 0
    %2642 = vmatprep.subr.bf16.mxu0 0
    %2643 = vmatpush1.bf16.msra.mxu0 0
    %2644 = vmatprep.mubr.bf16.mxu0 0
    %2645 = vmatmul.mubr.bf16.gmra.mrb[0].mxu0 %v2607
    %v2646 = vpop.f32.mrb[0].mxu0
    %v2647 = vadd.f32 0.0, %v2646
    %v2648 = vpop.f32.mrb[0].mxu0
    %v2649 = vadd.f32 0.0, %v2648
    %v2650 = vpop.f32.mrb[0].mxu0
    %v2651 = vadd.f32 0.0, %v2650
    %v2652 = vpop.f32.mrb[0].mxu0
    %v2653 = vadd.f32 0.0, %v2652
    %2654 = vmatprep.mubr.bf16.mxu0 0
    %2655 = vmatmul.mubr.bf16.gmra.mrb[0].mxu0 %v2610
    %v2656 = vpop.f32.mrb[0].mxu0
    %v2657 = vadd.f32 0.0, %v2656
    %v2658 = vpop.f32.mrb[0].mxu0
    %v2659 = vadd.f32 0.0, %v2658
    %v2660 = vpop.f32.mrb[0].mxu0
    %v2661 = vadd.f32 0.0, %v2660
    %v2662 = vpop.f32.mrb[0].mxu0
    %v2663 = vadd.f32 0.0, %v2662
    %2664 = vdwg.mxu0
    %v2665 = vpack.c.bf16 %v2651, %v2647
    %v2666 = vpack.c.bf16 %v2653, %v2649
    %v2667 = vpack.c.bf16 %v2661, %v2657
    %v2668 = vpack.c.bf16 %v2663, %v2659
    %v2669 = vld [vmem:[#allocation13] sm:$0xff]
    %v2670 = vld [vmem:[#allocation13 + $0x8] sm:$0xff]
    %v2671 = vld [vmem:[#allocation13 + $0x10] sm:$0xff]
    %v2672 = vld [vmem:[#allocation13 + $0x18] sm:$0xff]
    %v2673 = vld [vmem:[#allocation13 + $0x20] sm:$0xff]
    %v2674 = vld [vmem:[#allocation13 + $0x28] sm:$0xff]
    %v2675 = vld [vmem:[#allocation13 + $0x30] sm:$0xff]
    %v2676 = vld [vmem:[#allocation13 + $0x38] sm:$0xff]
    %v2677 = vld [vmem:[#allocation13 + $0x40] sm:$0xff]
    %v2678 = vld [vmem:[#allocation13 + $0x48] sm:$0xff]
    %v2679 = vld [vmem:[#allocation13 + $0x50] sm:$0xff]
    %v2680 = vld [vmem:[#allocation13 + $0x58] sm:$0xff]
    %v2681 = vld [vmem:[#allocation13 + $0x60] sm:$0xff]
    %v2682 = vld [vmem:[#allocation13 + $0x68] sm:$0xff]
    %v2683 = vld [vmem:[#allocation13 + $0x70] sm:$0xff]
    %v2684 = vld [vmem:[#allocation13 + $0x78] sm:$0xff]
    %v2685 = vld [vmem:[#allocation13 + $0x80] sm:$0xff]
    %v2686 = vld [vmem:[#allocation13 + $0x88] sm:$0xff]
    %v2687 = vld [vmem:[#allocation13 + $0x90] sm:$0xff]
    %v2688 = vld [vmem:[#allocation13 + $0x98] sm:$0xff]
    %v2689 = vld [vmem:[#allocation13 + $0xa0] sm:$0xff]
    %v2690 = vld [vmem:[#allocation13 + $0xa8] sm:$0xff]
    %v2691 = vld [vmem:[#allocation13 + $0xb0] sm:$0xff]
    %v2692 = vld [vmem:[#allocation13 + $0xb8] sm:$0xff]
    %v2693 = vld [vmem:[#allocation13 + $0xc0] sm:$0xff]
    %v2694 = vld [vmem:[#allocation13 + $0xc8] sm:$0xff]
    %v2695 = vld [vmem:[#allocation13 + $0xd0] sm:$0xff]
    %v2696 = vld [vmem:[#allocation13 + $0xd8] sm:$0xff]
    %v2697 = vld [vmem:[#allocation13 + $0xe0] sm:$0xff]
    %v2698 = vld [vmem:[#allocation13 + $0xe8] sm:$0xff]
    %v2699 = vld [vmem:[#allocation13 + $0xf0] sm:$0xff]
    %v2700 = vld [vmem:[#allocation13 + $0xf8] sm:$0xff]
    %v2701 = vld [vmem:[#allocation14] sm:$0xff]
    %v2702 = vld [vmem:[#allocation14 + $0x8] sm:$0xff]
    %v2703 = vld [vmem:[#allocation14 + $0x10] sm:$0xff]
    %v2704 = vld [vmem:[#allocation14 + $0x18] sm:$0xff]
    %v2705 = vld [vmem:[#allocation14 + $0x20] sm:$0xff]
    %v2706 = vld [vmem:[#allocation14 + $0x28] sm:$0xff]
    %v2707 = vld [vmem:[#allocation14 + $0x30] sm:$0xff]
    %v2708 = vld [vmem:[#allocation14 + $0x38] sm:$0xff]
    %v2709 = vld [vmem:[#allocation14 + $0x40] sm:$0xff]
    %v2710 = vld [vmem:[#allocation14 + $0x48] sm:$0xff]
    %v2711 = vld [vmem:[#allocation14 + $0x50] sm:$0xff]
    %v2712 = vld [vmem:[#allocation14 + $0x58] sm:$0xff]
    %v2713 = vld [vmem:[#allocation14 + $0x60] sm:$0xff]
    %v2714 = vld [vmem:[#allocation14 + $0x68] sm:$0xff]
    %v2715 = vld [vmem:[#allocation14 + $0x70] sm:$0xff]
    %v2716 = vld [vmem:[#allocation14 + $0x78] sm:$0xff]
    %v2717 = vld [vmem:[#allocation14 + $0x80] sm:$0xff]
    %v2718 = vld [vmem:[#allocation14 + $0x88] sm:$0xff]
    %v2719 = vld [vmem:[#allocation14 + $0x90] sm:$0xff]
    %v2720 = vld [vmem:[#allocation14 + $0x98] sm:$0xff]
    %v2721 = vld [vmem:[#allocation14 + $0xa0] sm:$0xff]
    %v2722 = vld [vmem:[#allocation14 + $0xa8] sm:$0xff]
    %v2723 = vld [vmem:[#allocation14 + $0xb0] sm:$0xff]
    %v2724 = vld [vmem:[#allocation14 + $0xb8] sm:$0xff]
    %v2725 = vld [vmem:[#allocation14 + $0xc0] sm:$0xff]
    %v2726 = vld [vmem:[#allocation14 + $0xc8] sm:$0xff]
    %v2727 = vld [vmem:[#allocation14 + $0xd0] sm:$0xff]
    %v2728 = vld [vmem:[#allocation14 + $0xd8] sm:$0xff]
    %v2729 = vld [vmem:[#allocation14 + $0xe0] sm:$0xff]
    %v2730 = vld [vmem:[#allocation14 + $0xe8] sm:$0xff]
    %v2731 = vld [vmem:[#allocation14 + $0xf0] sm:$0xff]
    %v2732 = vld [vmem:[#allocation14 + $0xf8] sm:$0xff]
    %v2765 = vunpack.c.l.b16 %v2701
    %v2766 = vunpack.c.h.b16 %v2701
    %v2767 = vunpack.c.l.b16 %v2702
    %v2768 = vunpack.c.h.b16 %v2702
    %v2769 = vunpack.c.l.b16 %v2703
    %v2770 = vunpack.c.h.b16 %v2703
    %v2771 = vunpack.c.l.b16 %v2704
    %v2772 = vunpack.c.h.b16 %v2704
    %v2773 = vunpack.c.l.b16 %v2705
    %v2774 = vunpack.c.h.b16 %v2705
    %v2775 = vunpack.c.l.b16 %v2706
    %v2776 = vunpack.c.h.b16 %v2706
    %v2777 = vunpack.c.l.b16 %v2707
    %v2778 = vunpack.c.h.b16 %v2707
    %v2779 = vunpack.c.l.b16 %v2708
    %v2780 = vunpack.c.h.b16 %v2708
    %v2781 = vunpack.c.l.b16 %v2709
    %v2782 = vunpack.c.h.b16 %v2709
    %v2783 = vunpack.c.l.b16 %v2710
    %v2784 = vunpack.c.h.b16 %v2710
    %v2785 = vunpack.c.l.b16 %v2711
    %v2786 = vunpack.c.h.b16 %v2711
    %v2787 = vunpack.c.l.b16 %v2712
    %v2788 = vunpack.c.h.b16 %v2712
    %v2789 = vunpack.c.l.b16 %v2713
    %v2790 = vunpack.c.h.b16 %v2713
    %v2791 = vunpack.c.l.b16 %v2714
    %v2792 = vunpack.c.h.b16 %v2714
    %v2793 = vunpack.c.l.b16 %v2715
    %v2794 = vunpack.c.h.b16 %v2715
    %v2795 = vunpack.c.l.b16 %v2716
    %v2796 = vunpack.c.h.b16 %v2716
    %v2797 = vunpack.c.l.b16 %v2717
    %v2798 = vunpack.c.h.b16 %v2717
    %v2799 = vunpack.c.l.b16 %v2718
    %v2800 = vunpack.c.h.b16 %v2718
    %v2801 = vunpack.c.l.b16 %v2719
    %v2802 = vunpack.c.h.b16 %v2719
    %v2803 = vunpack.c.l.b16 %v2720
    %v2804 = vunpack.c.h.b16 %v2720
    %v2805 = vunpack.c.l.b16 %v2721
    %v2806 = vunpack.c.h.b16 %v2721
    %v2807 = vunpack.c.l.b16 %v2722
    %v2808 = vunpack.c.h.b16 %v2722
    %v2809 = vunpack.c.l.b16 %v2723
    %v2810 = vunpack.c.h.b16 %v2723
    %v2811 = vunpack.c.l.b16 %v2724
    %v2812 = vunpack.c.h.b16 %v2724
    %v2813 = vunpack.c.l.b16 %v2725
    %v2814 = vunpack.c.h.b16 %v2725
    %v2815 = vunpack.c.l.b16 %v2726
    %v2816 = vunpack.c.h.b16 %v2726
    %v2817 = vunpack.c.l.b16 %v2727
    %v2818 = vunpack.c.h.b16 %v2727
    %v2819 = vunpack.c.l.b16 %v2728
    %v2820 = vunpack.c.h.b16 %v2728
    %v2821 = vunpack.c.l.b16 %v2729
    %v2822 = vunpack.c.h.b16 %v2729
    %v2823 = vunpack.c.l.b16 %v2730
    %v2824 = vunpack.c.h.b16 %v2730
    %v2825 = vunpack.c.l.b16 %v2731
    %v2826 = vunpack.c.h.b16 %v2731
    %v2827 = vunpack.c.l.b16 %v2732
    %v2828 = vunpack.c.h.b16 %v2732
    %v2829 = vpack.c.b16 %v2767, %v2765
    %v2830 = vpack.c.b16 %v2768, %v2766
    %v2831 = vpack.c.b16 %v2771, %v2769
    %v2832 = vpack.c.b16 %v2772, %v2770
    %v2833 = vpack.c.b16 %v2775, %v2773
    %v2834 = vpack.c.b16 %v2776, %v2774
    %v2835 = vpack.c.b16 %v2779, %v2777
    %v2836 = vpack.c.b16 %v2780, %v2778
    %v2837 = vpack.c.b16 %v2783, %v2781
    %v2838 = vpack.c.b16 %v2784, %v2782
    %v2839 = vpack.c.b16 %v2787, %v2785
    %v2840 = vpack.c.b16 %v2788, %v2786
    %v2841 = vpack.c.b16 %v2791, %v2789
    %v2842 = vpack.c.b16 %v2792, %v2790
    %v2843 = vpack.c.b16 %v2795, %v2793
    %v2844 = vpack.c.b16 %v2796, %v2794
    %v2845 = vpack.c.b16 %v2799, %v2797
    %v2846 = vpack.c.b16 %v2800, %v2798
    %v2847 = vpack.c.b16 %v2803, %v2801
    %v2848 = vpack.c.b16 %v2804, %v2802
    %v2849 = vpack.c.b16 %v2807, %v2805
    %v2850 = vpack.c.b16 %v2808, %v2806
    %v2851 = vpack.c.b16 %v2811, %v2809
    %v2852 = vpack.c.b16 %v2812, %v2810
    %v2853 = vpack.c.b16 %v2815, %v2813
    %v2854 = vpack.c.b16 %v2816, %v2814
    %v2855 = vpack.c.b16 %v2819, %v2817
    %v2856 = vpack.c.b16 %v2820, %v2818
    %v2857 = vpack.c.b16 %v2823, %v2821
    %v2858 = vpack.c.b16 %v2824, %v2822
    %v2859 = vpack.c.b16 %v2827, %v2825
    %v2860 = vpack.c.b16 %v2828, %v2826
    %2893 = vmatprep.subr.bf16.mxu0 %v2830
    %2894 = vmatpush1.bf16.msra.mxu0 %v2829
    %2895 = vmatprep.subr.bf16.mxu0 %v2832
    %2896 = vmatpush1.bf16.msra.mxu0 %v2831
    %2897 = vmatprep.subr.bf16.mxu0 %v2834
    %2898 = vmatpush1.bf16.msra.mxu0 %v2833
    %2899 = vmatprep.subr.bf16.mxu0 %v2836
    %2900 = vmatpush1.bf16.msra.mxu0 %v2835
    %2901 = vmatprep.subr.bf16.mxu0 %v2838
    %2902 = vmatpush1.bf16.msra.mxu0 %v2837
    %2903 = vmatprep.subr.bf16.mxu0 %v2840
    %2904 = vmatpush1.bf16.msra.mxu0 %v2839
    %2905 = vmatprep.subr.bf16.mxu0 %v2842
    %2906 = vmatpush1.bf16.msra.mxu0 %v2841
    %2907 = vmatprep.subr.bf16.mxu0 %v2844
    %2908 = vmatpush1.bf16.msra.mxu0 %v2843
    %2909 = vmatprep.subr.bf16.mxu0 %v2846
    %2910 = vmatpush1.bf16.msra.mxu0 %v2845
    %2911 = vmatprep.subr.bf16.mxu0 %v2848
    %2912 = vmatpush1.bf16.msra.mxu0 %v2847
    %2913 = vmatprep.subr.bf16.mxu0 %v2850
    %2914 = vmatpush1.bf16.msra.mxu0 %v2849
    %2915 = vmatprep.subr.bf16.mxu0 %v2852
    %2916 = vmatpush1.bf16.msra.mxu0 %v2851
    %2917 = vmatprep.subr.bf16.mxu0 %v2854
    %2918 = vmatpush1.bf16.msra.mxu0 %v2853
    %2919 = vmatprep.subr.bf16.mxu0 %v2856
    %2920 = vmatpush1.bf16.msra.mxu0 %v2855
    %2921 = vmatprep.subr.bf16.mxu0 %v2858
    %2922 = vmatpush1.bf16.msra.mxu0 %v2857
    %2923 = vmatprep.subr.bf16.mxu0 %v2860
    %2924 = vmatpush1.bf16.msra.mxu0 %v2859
    %2925 = vmatprep.mubr.bf16.mxu0 %v2589
    %2926 = vmatmul.mubr.bf16.gmra.mrb[0].mxu0 %v2588
    %v2927 = vpop.f32.mrb[0].mxu0
    %v2928 = vadd.f32 0.0, %v2927
    %v2929 = vpop.f32.mrb[0].mxu0
    %v2930 = vadd.f32 0.0, %v2929
    %v2931 = vpop.f32.mrb[0].mxu0
    %v2932 = vadd.f32 0.0, %v2931
    %v2933 = vpop.f32.mrb[0].mxu0
    %v2934 = vadd.f32 0.0, %v2933
    %2935 = vmatprep.mubr.bf16.mxu0 %v2591
    %2936 = vmatmul.mubr.bf16.gmra.mrb[0].mxu0 %v2590
    %v2937 = vpop.f32.mrb[0].mxu0
    %v2938 = vadd.f32 0.0, %v2937
    %v2939 = vpop.f32.mrb[0].mxu0
    %v2940 = vadd.f32 0.0, %v2939
    %v2941 = vpop.f32.mrb[0].mxu0
    %v2942 = vadd.f32 0.0, %v2941
    %v2943 = vpop.f32.mrb[0].mxu0
    %v2944 = vadd.f32 0.0, %v2943
    %2945 = vdwg.mxu0
    %v2978 = vunpack.c.l.b16 %v2669
    %v2979 = vunpack.c.h.b16 %v2669
    %v2980 = vunpack.c.l.b16 %v2670
    %v2981 = vunpack.c.h.b16 %v2670
    %v2982 = vunpack.c.l.b16 %v2671
    %v2983 = vunpack.c.h.b16 %v2671
    %v2984 = vunpack.c.l.b16 %v2672
    %v2985 = vunpack.c.h.b16 %v2672
    %v2986 = vunpack.c.l.b16 %v2673
    %v2987 = vunpack.c.h.b16 %v2673
    %v2988 = vunpack.c.l.b16 %v2674
    %v2989 = vunpack.c.h.b16 %v2674
    %v2990 = vunpack.c.l.b16 %v2675
    %v2991 = vunpack.c.h.b16 %v2675
    %v2992 = vunpack.c.l.b16 %v2676
    %v2993 = vunpack.c.h.b16 %v2676
    %v2994 = vunpack.c.l.b16 %v2677
    %v2995 = vunpack.c.h.b16 %v2677
    %v2996 = vunpack.c.l.b16 %v2678
    %v2997 = vunpack.c.h.b16 %v2678
    %v2998 = vunpack.c.l.b16 %v2679
    %v2999 = vunpack.c.h.b16 %v2679
    %v3000 = vunpack.c.l.b16 %v2680
    %v3001 = vunpack.c.h.b16 %v2680
    %v3002 = vunpack.c.l.b16 %v2681
    %v3003 = vunpack.c.h.b16 %v2681
    %v3004 = vunpack.c.l.b16 %v2682
    %v3005 = vunpack.c.h.b16 %v2682
    %v3006 = vunpack.c.l.b16 %v2683
    %v3007 = vunpack.c.h.b16 %v2683
    %v3008 = vunpack.c.l.b16 %v2684
    %v3009 = vunpack.c.h.b16 %v2684
    %v3010 = vunpack.c.l.b16 %v2685
    %v3011 = vunpack.c.h.b16 %v2685
    %v3012 = vunpack.c.l.b16 %v2686
    %v3013 = vunpack.c.h.b16 %v2686
    %v3014 = vunpack.c.l.b16 %v2687
    %v3015 = vunpack.c.h.b16 %v2687
    %v3016 = vunpack.c.l.b16 %v2688
    %v3017 = vunpack.c.h.b16 %v2688
    %v3018 = vunpack.c.l.b16 %v2689
    %v3019 = vunpack.c.h.b16 %v2689
    %v3020 = vunpack.c.l.b16 %v2690
    %v3021 = vunpack.c.h.b16 %v2690
    %v3022 = vunpack.c.l.b16 %v2691
    %v3023 = vunpack.c.h.b16 %v2691
    %v3024 = vunpack.c.l.b16 %v2692
    %v3025 = vunpack.c.h.b16 %v2692
    %v3026 = vunpack.c.l.b16 %v2693
    %v3027 = vunpack.c.h.b16 %v2693
    %v3028 = vunpack.c.l.b16 %v2694
    %v3029 = vunpack.c.h.b16 %v2694
    %v3030 = vunpack.c.l.b16 %v2695
    %v3031 = vunpack.c.h.b16 %v2695
    %v3032 = vunpack.c.l.b16 %v2696
    %v3033 = vunpack.c.h.b16 %v2696
    %v3034 = vunpack.c.l.b16 %v2697
    %v3035 = vunpack.c.h.b16 %v2697
    %v3036 = vunpack.c.l.b16 %v2698
    %v3037 = vunpack.c.h.b16 %v2698
    %v3038 = vunpack.c.l.b16 %v2699
    %v3039 = vunpack.c.h.b16 %v2699
    %v3040 = vunpack.c.l.b16 %v2700
    %v3041 = vunpack.c.h.b16 %v2700
    %v3042 = vpack.c.b16 %v2980, %v2978
    %v3043 = vpack.c.b16 %v2981, %v2979
    %v3044 = vpack.c.b16 %v2984, %v2982
    %v3045 = vpack.c.b16 %v2985, %v2983
    %v3046 = vpack.c.b16 %v2988, %v2986
    %v3047 = vpack.c.b16 %v2989, %v2987
    %v3048 = vpack.c.b16 %v2992, %v2990
    %v3049 = vpack.c.b16 %v2993, %v2991
    %v3050 = vpack.c.b16 %v2996, %v2994
    %v3051 = vpack.c.b16 %v2997, %v2995
    %v3052 = vpack.c.b16 %v3000, %v2998
    %v3053 = vpack.c.b16 %v3001, %v2999
    %v3054 = vpack.c.b16 %v3004, %v3002
    %v3055 = vpack.c.b16 %v3005, %v3003
    %v3056 = vpack.c.b16 %v3008, %v3006
    %v3057 = vpack.c.b16 %v3009, %v3007
    %v3058 = vpack.c.b16 %v3012, %v3010
    %v3059 = vpack.c.b16 %v3013, %v3011
    %v3060 = vpack.c.b16 %v3016, %v3014
    %v3061 = vpack.c.b16 %v3017, %v3015
    %v3062 = vpack.c.b16 %v3020, %v3018
    %v3063 = vpack.c.b16 %v3021, %v3019
    %v3064 = vpack.c.b16 %v3024, %v3022
    %v3065 = vpack.c.b16 %v3025, %v3023
    %v3066 = vpack.c.b16 %v3028, %v3026
    %v3067 = vpack.c.b16 %v3029, %v3027
    %v3068 = vpack.c.b16 %v3032, %v3030
    %v3069 = vpack.c.b16 %v3033, %v3031
    %v3070 = vpack.c.b16 %v3036, %v3034
    %v3071 = vpack.c.b16 %v3037, %v3035
    %v3072 = vpack.c.b16 %v3040, %v3038
    %v3073 = vpack.c.b16 %v3041, %v3039
    %3106 = vmatprep.subr.bf16.mxu0 %v3043
    %3107 = vmatpush1.bf16.msra.mxu0 %v3042
    %3108 = vmatprep.subr.bf16.mxu0 %v3045
    %3109 = vmatpush1.bf16.msra.mxu0 %v3044
    %3110 = vmatprep.subr.bf16.mxu0 %v3047
    %3111 = vmatpush1.bf16.msra.mxu0 %v3046
    %3112 = vmatprep.subr.bf16.mxu0 %v3049
    %3113 = vmatpush1.bf16.msra.mxu0 %v3048
    %3114 = vmatprep.subr.bf16.mxu0 %v3051
    %3115 = vmatpush1.bf16.msra.mxu0 %v3050
    %3116 = vmatprep.subr.bf16.mxu0 %v3053
    %3117 = vmatpush1.bf16.msra.mxu0 %v3052
    %3118 = vmatprep.subr.bf16.mxu0 %v3055
    %3119 = vmatpush1.bf16.msra.mxu0 %v3054
    %3120 = vmatprep.subr.bf16.mxu0 %v3057
    %3121 = vmatpush1.bf16.msra.mxu0 %v3056
    %3122 = vmatprep.subr.bf16.mxu0 %v3059
    %3123 = vmatpush1.bf16.msra.mxu0 %v3058
    %3124 = vmatprep.subr.bf16.mxu0 %v3061
    %3125 = vmatpush1.bf16.msra.mxu0 %v3060
    %3126 = vmatprep.subr.bf16.mxu0 %v3063
    %3127 = vmatpush1.bf16.msra.mxu0 %v3062
    %3128 = vmatprep.subr.bf16.mxu0 %v3065
    %3129 = vmatpush1.bf16.msra.mxu0 %v3064
    %3130 = vmatprep.subr.bf16.mxu0 %v3067
    %3131 = vmatpush1.bf16.msra.mxu0 %v3066
    %3132 = vmatprep.subr.bf16.mxu0 %v3069
    %3133 = vmatpush1.bf16.msra.mxu0 %v3068
    %3134 = vmatprep.subr.bf16.mxu0 %v3071
    %3135 = vmatpush1.bf16.msra.mxu0 %v3070
    %3136 = vmatprep.subr.bf16.mxu0 %v3073
    %3137 = vmatpush1.bf16.msra.mxu0 %v3072
    %3138 = vmatprep.mubr.bf16.mxu0 %v2666
    %3139 = vmatmul.mubr.bf16.gmra.mrb[0].mxu0 %v2665
    %v3140 = vpop.f32.mrb[0].mxu0
    %v3141 = vadd.f32 %v2928, %v3140
    %v3142 = vpop.f32.mrb[0].mxu0
    %v3143 = vadd.f32 %v2930, %v3142
    %v3144 = vpop.f32.mrb[0].mxu0
    %v3145 = vadd.f32 %v2932, %v3144
    %v3146 = vpop.f32.mrb[0].mxu0
    %v3147 = vadd.f32 %v2934, %v3146
    %3148 = vmatprep.mubr.bf16.mxu0 %v2668
    %3149 = vmatmul.mubr.bf16.gmra.mrb[0].mxu0 %v2667
    %v3150 = vpop.f32.mrb[0].mxu0
    %v3151 = vadd.f32 %v2938, %v3150
    %v3152 = vpop.f32.mrb[0].mxu0
    %v3153 = vadd.f32 %v2940, %v3152
    %v3154 = vpop.f32.mrb[0].mxu0
    %v3155 = vadd.f32 %v2942, %v3154
    %v3156 = vpop.f32.mrb[0].mxu0
    %v3157 = vadd.f32 %v2944, %v3156
    %3158 = vdwg.mxu0
    %v3159 = vld [vmem:[#allocation11] sm:$0xf]
    %v3160 = vld [vmem:[#allocation11 + $0x4] sm:$0xf]
    %v3161 = vld [vmem:[#allocation11 + $0x8] sm:$0xf]
    %v3162 = vld [vmem:[#allocation11 + $0xc] sm:$0xf]
    %v3167 = vunpack.c.l.b16 %v3159
    %v3168 = vunpack.c.l.b16 %v3160
    %v3169 = vunpack.c.l.b16 %v3161
    %v3170 = vunpack.c.l.b16 %v3162
    %v3171 = vpack.c.b16 %v3168, %v3167
    %v3172 = vpack.c.b16 %v3170, %v3169
    %v3174 = vsel %vm767, %v3171, 0
    %v3177 = vsel %vm767, %v3172, 0
    %3179 = vmatprep.subr.bf16.mxu0 %v2589
    %3180 = vmatpush1.bf16.msra.mxu0 %v2588
    %3181 = vmatprep.subr.bf16.mxu0 %v2591
    %3182 = vmatpush1.bf16.msra.mxu0 %v2590
    %3183 = vmatprep.subr.bf16.mxu0 0
    %3184 = vmatpush1.bf16.msra.mxu0 0
    %3185 = vmatprep.subr.bf16.mxu0 0
    %3186 = vmatpush1.bf16.msra.mxu0 0
    %3187 = vmatprep.subr.bf16.mxu0 0
    %3188 = vmatpush1.bf16.msra.mxu0 0
    %3189 = vmatprep.subr.bf16.mxu0 0
    %3190 = vmatpush1.bf16.msra.mxu0 0
    %3191 = vmatprep.subr.bf16.mxu0 0
    %3192 = vmatpush1.bf16.msra.mxu0 0
    %3193 = vmatprep.subr.bf16.mxu0 0
    %3194 = vmatpush1.bf16.msra.mxu0 0
    %3195 = vmatprep.subr.bf16.mxu0 0
    %3196 = vmatpush1.bf16.msra.mxu0 0
    %3197 = vmatprep.subr.bf16.mxu0 0
    %3198 = vmatpush1.bf16.msra.mxu0 0
    %3199 = vmatprep.subr.bf16.mxu0 0
    %3200 = vmatpush1.bf16.msra.mxu0 0
    %3201 = vmatprep.subr.bf16.mxu0 0
    %3202 = vmatpush1.bf16.msra.mxu0 0
    %3203 = vmatprep.subr.bf16.mxu0 0
    %3204 = vmatpush1.bf16.msra.mxu0 0
    %3205 = vmatprep.subr.bf16.mxu0 0
    %3206 = vmatpush1.bf16.msra.mxu0 0
    %3207 = vmatprep.subr.bf16.mxu0 0
    %3208 = vmatpush1.bf16.msra.mxu0 0
    %3209 = vmatprep.subr.bf16.mxu0 0
    %3210 = vmatpush1.bf16.msra.mxu0 0
    %3211 = vmatprep.mubr.bf16.mxu0 0
    %3212 = vmatmul.mubr.bf16.gmra.mrb[0].mxu0 %v3174
    %v3213 = vpop.f32.mrb[0].mxu0
    %v3214 = vadd.f32 0.0, %v3213
    %v3215 = vpop.f32.mrb[0].mxu0
    %v3216 = vadd.f32 0.0, %v3215
    %v3217 = vpop.f32.mrb[0].mxu0
    %v3218 = vadd.f32 0.0, %v3217
    %v3219 = vpop.f32.mrb[0].mxu0
    %v3220 = vadd.f32 0.0, %v3219
    %3221 = vmatprep.mubr.bf16.mxu0 0
    %3222 = vmatmul.mubr.bf16.gmra.mrb[0].mxu0 %v3177
    %v3223 = vpop.f32.mrb[0].mxu0
    %v3224 = vadd.f32 0.0, %v3223
    %v3225 = vpop.f32.mrb[0].mxu0
    %v3226 = vadd.f32 0.0, %v3225
    %v3227 = vpop.f32.mrb[0].mxu0
    %v3228 = vadd.f32 0.0, %v3227
    %v3229 = vpop.f32.mrb[0].mxu0
    %v3230 = vadd.f32 0.0, %v3229
    %3231 = vdwg.mxu0
    %v3232 = vpack.c.bf16 %v3218, %v3214
    %v3233 = vpack.c.bf16 %v3220, %v3216
    %v3234 = vpack.c.bf16 %v3228, %v3224
    %v3235 = vpack.c.bf16 %v3230, %v3226
    %v3236 = vld [vmem:[#allocation16] sm:$0xff]
    %v3237 = vld [vmem:[#allocation16 + $0x8] sm:$0xff]
    %v3238 = vld [vmem:[#allocation16 + $0x10] sm:$0xff]
    %v3239 = vld [vmem:[#allocation16 + $0x18] sm:$0xff]
    %v3240 = vld [vmem:[#allocation16 + $0x20] sm:$0xff]
    %v3241 = vld [vmem:[#allocation16 + $0x28] sm:$0xff]
    %v3242 = vld [vmem:[#allocation16 + $0x30] sm:$0xff]
    %v3243 = vld [vmem:[#allocation16 + $0x38] sm:$0xff]
    %v3244 = vld [vmem:[#allocation16 + $0x40] sm:$0xff]
    %v3245 = vld [vmem:[#allocation16 + $0x48] sm:$0xff]
    %v3246 = vld [vmem:[#allocation16 + $0x50] sm:$0xff]
    %v3247 = vld [vmem:[#allocation16 + $0x58] sm:$0xff]
    %v3248 = vld [vmem:[#allocation16 + $0x60] sm:$0xff]
    %v3249 = vld [vmem:[#allocation16 + $0x68] sm:$0xff]
    %v3250 = vld [vmem:[#allocation16 + $0x70] sm:$0xff]
    %v3251 = vld [vmem:[#allocation16 + $0x78] sm:$0xff]
    %v3252 = vld [vmem:[#allocation16 + $0x80] sm:$0xff]
    %v3253 = vld [vmem:[#allocation16 + $0x88] sm:$0xff]
    %v3254 = vld [vmem:[#allocation16 + $0x90] sm:$0xff]
    %v3255 = vld [vmem:[#allocation16 + $0x98] sm:$0xff]
    %v3256 = vld [vmem:[#allocation16 + $0xa0] sm:$0xff]
    %v3257 = vld [vmem:[#allocation16 + $0xa8] sm:$0xff]
    %v3258 = vld [vmem:[#allocation16 + $0xb0] sm:$0xff]
    %v3259 = vld [vmem:[#allocation16 + $0xb8] sm:$0xff]
    %v3260 = vld [vmem:[#allocation16 + $0xc0] sm:$0xff]
    %v3261 = vld [vmem:[#allocation16 + $0xc8] sm:$0xff]
    %v3262 = vld [vmem:[#allocation16 + $0xd0] sm:$0xff]
    %v3263 = vld [vmem:[#allocation16 + $0xd8] sm:$0xff]
    %v3264 = vld [vmem:[#allocation16 + $0xe0] sm:$0xff]
    %v3265 = vld [vmem:[#allocation16 + $0xe8] sm:$0xff]
    %v3266 = vld [vmem:[#allocation16 + $0xf0] sm:$0xff]
    %v3267 = vld [vmem:[#allocation16 + $0xf8] sm:$0xff]
    %v3300 = vunpack.c.l.b16 %v3236
    %v3301 = vunpack.c.h.b16 %v3236
    %v3302 = vunpack.c.l.b16 %v3237
    %v3303 = vunpack.c.h.b16 %v3237
    %v3304 = vunpack.c.l.b16 %v3238
    %v3305 = vunpack.c.h.b16 %v3238
    %v3306 = vunpack.c.l.b16 %v3239
    %v3307 = vunpack.c.h.b16 %v3239
    %v3308 = vunpack.c.l.b16 %v3240
    %v3309 = vunpack.c.h.b16 %v3240
    %v3310 = vunpack.c.l.b16 %v3241
    %v3311 = vunpack.c.h.b16 %v3241
    %v3312 = vunpack.c.l.b16 %v3242
    %v3313 = vunpack.c.h.b16 %v3242
    %v3314 = vunpack.c.l.b16 %v3243
    %v3315 = vunpack.c.h.b16 %v3243
    %v3316 = vunpack.c.l.b16 %v3244
    %v3317 = vunpack.c.h.b16 %v3244
    %v3318 = vunpack.c.l.b16 %v3245
    %v3319 = vunpack.c.h.b16 %v3245
    %v3320 = vunpack.c.l.b16 %v3246
    %v3321 = vunpack.c.h.b16 %v3246
    %v3322 = vunpack.c.l.b16 %v3247
    %v3323 = vunpack.c.h.b16 %v3247
    %v3324 = vunpack.c.l.b16 %v3248
    %v3325 = vunpack.c.h.b16 %v3248
    %v3326 = vunpack.c.l.b16 %v3249
    %v3327 = vunpack.c.h.b16 %v3249
    %v3328 = vunpack.c.l.b16 %v3250
    %v3329 = vunpack.c.h.b16 %v3250
    %v3330 = vunpack.c.l.b16 %v3251
    %v3331 = vunpack.c.h.b16 %v3251
    %v3332 = vunpack.c.l.b16 %v3252
    %v3333 = vunpack.c.h.b16 %v3252
    %v3334 = vunpack.c.l.b16 %v3253
    %v3335 = vunpack.c.h.b16 %v3253
    %v3336 = vunpack.c.l.b16 %v3254
    %v3337 = vunpack.c.h.b16 %v3254
    %v3338 = vunpack.c.l.b16 %v3255
    %v3339 = vunpack.c.h.b16 %v3255
    %v3340 = vunpack.c.l.b16 %v3256
    %v3341 = vunpack.c.h.b16 %v3256
    %v3342 = vunpack.c.l.b16 %v3257
    %v3343 = vunpack.c.h.b16 %v3257
    %v3344 = vunpack.c.l.b16 %v3258
    %v3345 = vunpack.c.h.b16 %v3258
    %v3346 = vunpack.c.l.b16 %v3259
    %v3347 = vunpack.c.h.b16 %v3259
    %v3348 = vunpack.c.l.b16 %v3260
    %v3349 = vunpack.c.h.b16 %v3260
    %v3350 = vunpack.c.l.b16 %v3261
    %v3351 = vunpack.c.h.b16 %v3261
    %v3352 = vunpack.c.l.b16 %v3262
    %v3353 = vunpack.c.h.b16 %v3262
    %v3354 = vunpack.c.l.b16 %v3263
    %v3355 = vunpack.c.h.b16 %v3263
    %v3356 = vunpack.c.l.b16 %v3264
    %v3357 = vunpack.c.h.b16 %v3264
    %v3358 = vunpack.c.l.b16 %v3265
    %v3359 = vunpack.c.h.b16 %v3265
    %v3360 = vunpack.c.l.b16 %v3266
    %v3361 = vunpack.c.h.b16 %v3266
    %v3362 = vunpack.c.l.b16 %v3267
    %v3363 = vunpack.c.h.b16 %v3267
    %v3364 = vpack.c.b16 %v3302, %v3300
    %v3365 = vpack.c.b16 %v3303, %v3301
    %v3366 = vpack.c.b16 %v3306, %v3304
    %v3367 = vpack.c.b16 %v3307, %v3305
    %v3368 = vpack.c.b16 %v3310, %v3308
    %v3369 = vpack.c.b16 %v3311, %v3309
    %v3370 = vpack.c.b16 %v3314, %v3312
    %v3371 = vpack.c.b16 %v3315, %v3313
    %v3372 = vpack.c.b16 %v3318, %v3316
    %v3373 = vpack.c.b16 %v3319, %v3317
    %v3374 = vpack.c.b16 %v3322, %v3320
    %v3375 = vpack.c.b16 %v3323, %v3321
    %v3376 = vpack.c.b16 %v3326, %v3324
    %v3377 = vpack.c.b16 %v3327, %v3325
    %v3378 = vpack.c.b16 %v3330, %v3328
    %v3379 = vpack.c.b16 %v3331, %v3329
    %v3380 = vpack.c.b16 %v3334, %v3332
    %v3381 = vpack.c.b16 %v3335, %v3333
    %v3382 = vpack.c.b16 %v3338, %v3336
    %v3383 = vpack.c.b16 %v3339, %v3337
    %v3384 = vpack.c.b16 %v3342, %v3340
    %v3385 = vpack.c.b16 %v3343, %v3341
    %v3386 = vpack.c.b16 %v3346, %v3344
    %v3387 = vpack.c.b16 %v3347, %v3345
    %v3388 = vpack.c.b16 %v3350, %v3348
    %v3389 = vpack.c.b16 %v3351, %v3349
    %v3390 = vpack.c.b16 %v3354, %v3352
    %v3391 = vpack.c.b16 %v3355, %v3353
    %v3392 = vpack.c.b16 %v3358, %v3356
    %v3393 = vpack.c.b16 %v3359, %v3357
    %v3394 = vpack.c.b16 %v3362, %v3360
    %v3395 = vpack.c.b16 %v3363, %v3361
    %3428 = vmatprep.subr.bf16.mxu0 %v3365
    %3429 = vmatpush1.bf16.msra.mxu0 %v3364
    %3430 = vmatprep.subr.bf16.mxu0 %v3367
    %3431 = vmatpush1.bf16.msra.mxu0 %v3366
    %3432 = vmatprep.subr.bf16.mxu0 %v3369
    %3433 = vmatpush1.bf16.msra.mxu0 %v3368
    %3434 = vmatprep.subr.bf16.mxu0 %v3371
    %3435 = vmatpush1.bf16.msra.mxu0 %v3370
    %3436 = vmatprep.subr.bf16.mxu0 %v3373
    %3437 = vmatpush1.bf16.msra.mxu0 %v3372
    %3438 = vmatprep.subr.bf16.mxu0 %v3375
    %3439 = vmatpush1.bf16.msra.mxu0 %v3374
    %3440 = vmatprep.subr.bf16.mxu0 %v3377
    %3441 = vmatpush1.bf16.msra.mxu0 %v3376
    %3442 = vmatprep.subr.bf16.mxu0 %v3379
    %3443 = vmatpush1.bf16.msra.mxu0 %v3378
    %3444 = vmatprep.subr.bf16.mxu0 %v3381
    %3445 = vmatpush1.bf16.msra.mxu0 %v3380
    %3446 = vmatprep.subr.bf16.mxu0 %v3383
    %3447 = vmatpush1.bf16.msra.mxu0 %v3382
    %3448 = vmatprep.subr.bf16.mxu0 %v3385
    %3449 = vmatpush1.bf16.msra.mxu0 %v3384
    %3450 = vmatprep.subr.bf16.mxu0 %v3387
    %3451 = vmatpush1.bf16.msra.mxu0 %v3386
    %3452 = vmatprep.subr.bf16.mxu0 %v3389
    %3453 = vmatpush1.bf16.msra.mxu0 %v3388
    %3454 = vmatprep.subr.bf16.mxu0 %v3391
    %3455 = vmatpush1.bf16.msra.mxu0 %v3390
    %3456 = vmatprep.subr.bf16.mxu0 %v3393
    %3457 = vmatpush1.bf16.msra.mxu0 %v3392
    %3458 = vmatprep.subr.bf16.mxu0 %v3395
    %3459 = vmatpush1.bf16.msra.mxu0 %v3394
    %3460 = vmatprep.mubr.bf16.mxu0 %v3233
    %3461 = vmatmul.mubr.bf16.gmra.mrb[0].mxu0 %v3232
    %v3462 = vpop.f32.mrb[0].mxu0
    %v3463 = vadd.f32 0.0, %v3462
    %v3464 = vpop.f32.mrb[0].mxu0
    %v3465 = vadd.f32 0.0, %v3464
    %v3466 = vpop.f32.mrb[0].mxu0
    %v3467 = vadd.f32 0.0, %v3466
    %v3468 = vpop.f32.mrb[0].mxu0
    %v3469 = vadd.f32 0.0, %v3468
    %3470 = vmatprep.mubr.bf16.mxu0 %v3235
    %3471 = vmatmul.mubr.bf16.gmra.mrb[0].mxu0 %v3234
    %v3472 = vpop.f32.mrb[0].mxu0
    %v3473 = vadd.f32 0.0, %v3472
    %v3474 = vpop.f32.mrb[0].mxu0
    %v3475 = vadd.f32 0.0, %v3474
    %v3476 = vpop.f32.mrb[0].mxu0
    %v3477 = vadd.f32 0.0, %v3476
    %v3478 = vpop.f32.mrb[0].mxu0
    %v3479 = vadd.f32 0.0, %v3478
    %3480 = vdwg.mxu0
    %v3481 = vadd.f32 %v3141, %v3463
    %v3482 = vadd.f32 %v3143, %v3465
    %v3483 = vadd.f32 %v3145, %v3467
    %v3484 = vadd.f32 %v3147, %v3469
    %v3485 = vadd.f32 %v3151, %v3473
    %v3486 = vadd.f32 %v3153, %v3475
    %v3487 = vadd.f32 %v3155, %v3477
    %v3488 = vadd.f32 %v3157, %v3479
    %v3489 = vld [vmem:[#allocation17] sm:$0x3]
    %v3491 = vlaneseq
    %v3492 = vshrl.u32 %v3491, 7
    %v3493 = vsub.s32 0, %v3492
    %v3494 = vrot.slane %v3489, %v3493
    %v3495 = vlaneseq
    %v3496 = vshrl.u32 %v3495, 7
    %v3497 = vsub.s32 1, %v3496
    %v3498 = vrot.slane %v3489, %v3497
    %v3501 = vadd.f32 %v3481, %v3494
    %v3502 = vadd.f32 %v3482, %v3498
    %v3503 = vadd.f32 %v3483, %v3494
    %v3504 = vadd.f32 %v3484, %v3498
    %v3505 = vadd.f32 %v3485, %v3494
    %v3506 = vadd.f32 %v3486, %v3498
    %v3507 = vadd.f32 %v3487, %v3494
    %v3508 = vadd.f32 %v3488, %v3498
    %v3509 = vadd.f32 %v3501, %v1651
    %v3510 = vadd.f32 %v3502, %v1652
    %v3511 = vadd.f32 %v3503, %v1653
    %v3512 = vadd.f32 %v3504, %v1654
    %v3513 = vadd.f32 %v3505, %v1655
    %v3514 = vadd.f32 %v3506, %v1656
    %v3515 = vadd.f32 %v3507, %v1657
    %v3516 = vadd.f32 %v3508, %v1658
    %v3517 = vmax.f32 %v3509, 0.0
    %v3518 = vmax.f32 %v3510, 0.0
    %v3519 = vmax.f32 %v3511, 0.0
    %v3520 = vmax.f32 %v3512, 0.0
    %v3521 = vmax.f32 %v3513, 0.0
    %v3522 = vmax.f32 %v3514, 0.0
    %v3523 = vmax.f32 %v3515, 0.0
    %v3524 = vmax.f32 %v3516, 0.0
    %v3525 = vpack.c.bf16 %v3519, %v3517
    %v3526 = vpack.c.bf16 %v3520, %v3518
    %v3527 = vpack.c.bf16 %v3523, %v3521
    %v3528 = vpack.c.bf16 %v3524, %v3522
    %v3529 = vld [vmem:[%s37] sm:$0xf]
    %v3530 = vld [vmem:[%s37 + $0x4] sm:$0xf]
    %v3533 = vunpack.c.l.b16 %v3529
    %v3534 = vunpack.c.l.b16 %v3530
    %v3535 = vpack.c.b16 %v3534, %v3533
    %v3537 = vsel %vm767, %v3535, 0
    %3539 = vmatprep.subr.bf16.mxu0 %v3526
    %3540 = vmatpush1.bf16.msra.mxu0 %v3525
    %3541 = vmatprep.subr.bf16.mxu0 %v3528
    %3542 = vmatpush1.bf16.msra.mxu0 %v3527
    %3543 = vmatprep.subr.bf16.mxu0 0
    %3544 = vmatpush1.bf16.msra.mxu0 0
    %3545 = vmatprep.subr.bf16.mxu0 0
    %3546 = vmatpush1.bf16.msra.mxu0 0
    %3547 = vmatprep.subr.bf16.mxu0 0
    %3548 = vmatpush1.bf16.msra.mxu0 0
    %3549 = vmatprep.subr.bf16.mxu0 0
    %3550 = vmatpush1.bf16.msra.mxu0 0
    %3551 = vmatprep.subr.bf16.mxu0 0
    %3552 = vmatpush1.bf16.msra.mxu0 0
    %3553 = vmatprep.subr.bf16.mxu0 0
    %3554 = vmatpush1.bf16.msra.mxu0 0
    %3555 = vmatprep.subr.bf16.mxu0 0
    %3556 = vmatpush1.bf16.msra.mxu0 0
    %3557 = vmatprep.subr.bf16.mxu0 0
    %3558 = vmatpush1.bf16.msra.mxu0 0
    %3559 = vmatprep.subr.bf16.mxu0 0
    %3560 = vmatpush1.bf16.msra.mxu0 0
    %3561 = vmatprep.subr.bf16.mxu0 0
    %3562 = vmatpush1.bf16.msra.mxu0 0
    %3563 = vmatprep.subr.bf16.mxu0 0
    %3564 = vmatpush1.bf16.msra.mxu0 0
    %3565 = vmatprep.subr.bf16.mxu0 0
    %3566 = vmatpush1.bf16.msra.mxu0 0
    %3567 = vmatprep.subr.bf16.mxu0 0
    %3568 = vmatpush1.bf16.msra.mxu0 0
    %3569 = vmatprep.subr.bf16.mxu0 0
    %3570 = vmatpush1.bf16.msra.mxu0 0
    %3571 = vmatprep.mubr.bf16.mxu0 0
    %3572 = vmatmul.mubr.bf16.gmra.mrb[0].mxu0 %v3537
    %v3573 = vpop.f32.mrb[0].mxu0
    %v3574 = vadd.f32 0.0, %v3573
    %v3575 = vpop.f32.mrb[0].mxu0
    %v3576 = vadd.f32 0.0, %v3575
    %v3577 = vpop.f32.mrb[0].mxu0
    %v3578 = vadd.f32 0.0, %v3577
    %v3579 = vpop.f32.mrb[0].mxu0
    %v3580 = vadd.f32 0.0, %v3579
    %3581 = vdwg.mxu0
    %v3582 = vpack.c.bf16 %v3578, %v3574
    %v3583 = vpack.c.bf16 %v3580, %v3576
    %v3584 = vld [vmem:[#allocation22] sm:$0xff]
    %v3585 = vld [vmem:[#allocation22 + $0x8] sm:$0xff]
    %v3586 = vld [vmem:[#allocation22 + $0x10] sm:$0xff]
    %v3587 = vld [vmem:[#allocation22 + $0x18] sm:$0xff]
    %v3588 = vld [vmem:[#allocation22 + $0x20] sm:$0xff]
    %v3589 = vld [vmem:[#allocation22 + $0x28] sm:$0xff]
    %v3590 = vld [vmem:[#allocation22 + $0x30] sm:$0xff]
    %v3591 = vld [vmem:[#allocation22 + $0x38] sm:$0xff]
    %v3592 = vld [vmem:[#allocation22 + $0x40] sm:$0xff]
    %v3593 = vld [vmem:[#allocation22 + $0x48] sm:$0xff]
    %v3594 = vld [vmem:[#allocation22 + $0x50] sm:$0xff]
    %v3595 = vld [vmem:[#allocation22 + $0x58] sm:$0xff]
    %v3596 = vld [vmem:[#allocation22 + $0x60] sm:$0xff]
    %v3597 = vld [vmem:[#allocation22 + $0x68] sm:$0xff]
    %v3598 = vld [vmem:[#allocation22 + $0x70] sm:$0xff]
    %v3599 = vld [vmem:[#allocation22 + $0x78] sm:$0xff]
    %v3600 = vld [vmem:[#allocation22 + $0x80] sm:$0xff]
    %v3601 = vld [vmem:[#allocation22 + $0x88] sm:$0xff]
    %v3602 = vld [vmem:[#allocation22 + $0x90] sm:$0xff]
    %v3603 = vld [vmem:[#allocation22 + $0x98] sm:$0xff]
    %v3604 = vld [vmem:[#allocation22 + $0xa0] sm:$0xff]
    %v3605 = vld [vmem:[#allocation22 + $0xa8] sm:$0xff]
    %v3606 = vld [vmem:[#allocation22 + $0xb0] sm:$0xff]
    %v3607 = vld [vmem:[#allocation22 + $0xb8] sm:$0xff]
    %v3608 = vld [vmem:[#allocation22 + $0xc0] sm:$0xff]
    %v3609 = vld [vmem:[#allocation22 + $0xc8] sm:$0xff]
    %v3610 = vld [vmem:[#allocation22 + $0xd0] sm:$0xff]
    %v3611 = vld [vmem:[#allocation22 + $0xd8] sm:$0xff]
    %v3612 = vld [vmem:[#allocation22 + $0xe0] sm:$0xff]
    %v3613 = vld [vmem:[#allocation22 + $0xe8] sm:$0xff]
    %v3614 = vld [vmem:[#allocation22 + $0xf0] sm:$0xff]
    %v3615 = vld [vmem:[#allocation22 + $0xf8] sm:$0xff]
    %v3616 = vld [vmem:[#allocation19] sm:$0xf]
    %v3617 = vld [vmem:[#allocation19 + $0x4] sm:$0xf]
    %v3620 = vunpack.c.l.b16 %v3616
    %v3621 = vunpack.c.l.b16 %v3617
    %v3622 = vpack.c.b16 %v3621, %v3620
    %v3624 = vsel %vm767, %v3622, 0
    %3626 = vmatprep.subr.bf16.mxu0 %v3526
    %3627 = vmatpush1.bf16.msra.mxu0 %v3525
    %3628 = vmatprep.subr.bf16.mxu0 %v3528
    %3629 = vmatpush1.bf16.msra.mxu0 %v3527
    %3630 = vmatprep.subr.bf16.mxu0 0
    %3631 = vmatpush1.bf16.msra.mxu0 0
    %3632 = vmatprep.subr.bf16.mxu0 0
    %3633 = vmatpush1.bf16.msra.mxu0 0
    %3634 = vmatprep.subr.bf16.mxu0 0
    %3635 = vmatpush1.bf16.msra.mxu0 0
    %3636 = vmatprep.subr.bf16.mxu0 0
    %3637 = vmatpush1.bf16.msra.mxu0 0
    %3638 = vmatprep.subr.bf16.mxu0 0
    %3639 = vmatpush1.bf16.msra.mxu0 0
    %3640 = vmatprep.subr.bf16.mxu0 0
    %3641 = vmatpush1.bf16.msra.mxu0 0
    %3642 = vmatprep.subr.bf16.mxu0 0
    %3643 = vmatpush1.bf16.msra.mxu0 0
    %3644 = vmatprep.subr.bf16.mxu0 0
    %3645 = vmatpush1.bf16.msra.mxu0 0
    %3646 = vmatprep.subr.bf16.mxu0 0
    %3647 = vmatpush1.bf16.msra.mxu0 0
    %3648 = vmatprep.subr.bf16.mxu0 0
    %3649 = vmatpush1.bf16.msra.mxu0 0
    %3650 = vmatprep.subr.bf16.mxu0 0
    %3651 = vmatpush1.bf16.msra.mxu0 0
    %3652 = vmatprep.subr.bf16.mxu0 0
    %3653 = vmatpush1.bf16.msra.mxu0 0
    %3654 = vmatprep.subr.bf16.mxu0 0
    %3655 = vmatpush1.bf16.msra.mxu0 0
    %3656 = vmatprep.subr.bf16.mxu0 0
    %3657 = vmatpush1.bf16.msra.mxu0 0
    %3658 = vmatprep.mubr.bf16.mxu0 0
    %3659 = vmatmul.mubr.bf16.gmra.mrb[0].mxu0 %v3624
    %v3660 = vpop.f32.mrb[0].mxu0
    %v3661 = vadd.f32 0.0, %v3660
    %v3662 = vpop.f32.mrb[0].mxu0
    %v3663 = vadd.f32 0.0, %v3662
    %v3664 = vpop.f32.mrb[0].mxu0
    %v3665 = vadd.f32 0.0, %v3664
    %v3666 = vpop.f32.mrb[0].mxu0
    %v3667 = vadd.f32 0.0, %v3666
    %3668 = vdwg.mxu0
    %v3669 = vpack.c.bf16 %v3665, %v3661
    %v3670 = vpack.c.bf16 %v3667, %v3663
    %v3671 = vld [vmem:[#allocation23] sm:$0xff]
    %v3672 = vld [vmem:[#allocation23 + $0x8] sm:$0xff]
    %v3673 = vld [vmem:[#allocation23 + $0x10] sm:$0xff]
    %v3674 = vld [vmem:[#allocation23 + $0x18] sm:$0xff]
    %v3675 = vld [vmem:[#allocation23 + $0x20] sm:$0xff]
    %v3676 = vld [vmem:[#allocation23 + $0x28] sm:$0xff]
    %v3677 = vld [vmem:[#allocation23 + $0x30] sm:$0xff]
    %v3678 = vld [vmem:[#allocation23 + $0x38] sm:$0xff]
    %v3679 = vld [vmem:[#allocation23 + $0x40] sm:$0xff]
    %v3680 = vld [vmem:[#allocation23 + $0x48] sm:$0xff]
    %v3681 = vld [vmem:[#allocation23 + $0x50] sm:$0xff]
    %v3682 = vld [vmem:[#allocation23 + $0x58] sm:$0xff]
    %v3683 = vld [vmem:[#allocation23 + $0x60] sm:$0xff]
    %v3684 = vld [vmem:[#allocation23 + $0x68] sm:$0xff]
    %v3685 = vld [vmem:[#allocation23 + $0x70] sm:$0xff]
    %v3686 = vld [vmem:[#allocation23 + $0x78] sm:$0xff]
    %v3687 = vld [vmem:[#allocation23 + $0x80] sm:$0xff]
    %v3688 = vld [vmem:[#allocation23 + $0x88] sm:$0xff]
    %v3689 = vld [vmem:[#allocation23 + $0x90] sm:$0xff]
    %v3690 = vld [vmem:[#allocation23 + $0x98] sm:$0xff]
    %v3691 = vld [vmem:[#allocation23 + $0xa0] sm:$0xff]
    %v3692 = vld [vmem:[#allocation23 + $0xa8] sm:$0xff]
    %v3693 = vld [vmem:[#allocation23 + $0xb0] sm:$0xff]
    %v3694 = vld [vmem:[#allocation23 + $0xb8] sm:$0xff]
    %v3695 = vld [vmem:[#allocation23 + $0xc0] sm:$0xff]
    %v3696 = vld [vmem:[#allocation23 + $0xc8] sm:$0xff]
    %v3697 = vld [vmem:[#allocation23 + $0xd0] sm:$0xff]
    %v3698 = vld [vmem:[#allocation23 + $0xd8] sm:$0xff]
    %v3699 = vld [vmem:[#allocation23 + $0xe0] sm:$0xff]
    %v3700 = vld [vmem:[#allocation23 + $0xe8] sm:$0xff]
    %v3701 = vld [vmem:[#allocation23 + $0xf0] sm:$0xff]
    %v3702 = vld [vmem:[#allocation23 + $0xf8] sm:$0xff]
    %v3735 = vunpack.c.l.b16 %v3671
    %v3736 = vunpack.c.h.b16 %v3671
    %v3737 = vunpack.c.l.b16 %v3672
    %v3738 = vunpack.c.h.b16 %v3672
    %v3739 = vunpack.c.l.b16 %v3673
    %v3740 = vunpack.c.h.b16 %v3673
    %v3741 = vunpack.c.l.b16 %v3674
    %v3742 = vunpack.c.h.b16 %v3674
    %v3743 = vunpack.c.l.b16 %v3675
    %v3744 = vunpack.c.h.b16 %v3675
    %v3745 = vunpack.c.l.b16 %v3676
    %v3746 = vunpack.c.h.b16 %v3676
    %v3747 = vunpack.c.l.b16 %v3677
    %v3748 = vunpack.c.h.b16 %v3677
    %v3749 = vunpack.c.l.b16 %v3678
    %v3750 = vunpack.c.h.b16 %v3678
    %v3751 = vunpack.c.l.b16 %v3679
    %v3752 = vunpack.c.h.b16 %v3679
    %v3753 = vunpack.c.l.b16 %v3680
    %v3754 = vunpack.c.h.b16 %v3680
    %v3755 = vunpack.c.l.b16 %v3681
    %v3756 = vunpack.c.h.b16 %v3681
    %v3757 = vunpack.c.l.b16 %v3682
    %v3758 = vunpack.c.h.b16 %v3682
    %v3759 = vunpack.c.l.b16 %v3683
    %v3760 = vunpack.c.h.b16 %v3683
    %v3761 = vunpack.c.l.b16 %v3684
    %v3762 = vunpack.c.h.b16 %v3684
    %v3763 = vunpack.c.l.b16 %v3685
    %v3764 = vunpack.c.h.b16 %v3685
    %v3765 = vunpack.c.l.b16 %v3686
    %v3766 = vunpack.c.h.b16 %v3686
    %v3767 = vunpack.c.l.b16 %v3687
    %v3768 = vunpack.c.h.b16 %v3687
    %v3769 = vunpack.c.l.b16 %v3688
    %v3770 = vunpack.c.h.b16 %v3688
    %v3771 = vunpack.c.l.b16 %v3689
    %v3772 = vunpack.c.h.b16 %v3689
    %v3773 = vunpack.c.l.b16 %v3690
    %v3774 = vunpack.c.h.b16 %v3690
    %v3775 = vunpack.c.l.b16 %v3691
    %v3776 = vunpack.c.h.b16 %v3691
    %v3777 = vunpack.c.l.b16 %v3692
    %v3778 = vunpack.c.h.b16 %v3692
    %v3779 = vunpack.c.l.b16 %v3693
    %v3780 = vunpack.c.h.b16 %v3693
    %v3781 = vunpack.c.l.b16 %v3694
    %v3782 = vunpack.c.h.b16 %v3694
    %v3783 = vunpack.c.l.b16 %v3695
    %v3784 = vunpack.c.h.b16 %v3695
    %v3785 = vunpack.c.l.b16 %v3696
    %v3786 = vunpack.c.h.b16 %v3696
    %v3787 = vunpack.c.l.b16 %v3697
    %v3788 = vunpack.c.h.b16 %v3697
    %v3789 = vunpack.c.l.b16 %v3698
    %v3790 = vunpack.c.h.b16 %v3698
    %v3791 = vunpack.c.l.b16 %v3699
    %v3792 = vunpack.c.h.b16 %v3699
    %v3793 = vunpack.c.l.b16 %v3700
    %v3794 = vunpack.c.h.b16 %v3700
    %v3795 = vunpack.c.l.b16 %v3701
    %v3796 = vunpack.c.h.b16 %v3701
    %v3797 = vunpack.c.l.b16 %v3702
    %v3798 = vunpack.c.h.b16 %v3702
    %v3799 = vpack.c.b16 %v3737, %v3735
    %v3800 = vpack.c.b16 %v3738, %v3736
    %v3801 = vpack.c.b16 %v3741, %v3739
    %v3802 = vpack.c.b16 %v3742, %v3740
    %v3803 = vpack.c.b16 %v3745, %v3743
    %v3804 = vpack.c.b16 %v3746, %v3744
    %v3805 = vpack.c.b16 %v3749, %v3747
    %v3806 = vpack.c.b16 %v3750, %v3748
    %v3807 = vpack.c.b16 %v3753, %v3751
    %v3808 = vpack.c.b16 %v3754, %v3752
    %v3809 = vpack.c.b16 %v3757, %v3755
    %v3810 = vpack.c.b16 %v3758, %v3756
    %v3811 = vpack.c.b16 %v3761, %v3759
    %v3812 = vpack.c.b16 %v3762, %v3760
    %v3813 = vpack.c.b16 %v3765, %v3763
    %v3814 = vpack.c.b16 %v3766, %v3764
    %v3815 = vpack.c.b16 %v3769, %v3767
    %v3816 = vpack.c.b16 %v3770, %v3768
    %v3817 = vpack.c.b16 %v3773, %v3771
    %v3818 = vpack.c.b16 %v3774, %v3772
    %v3819 = vpack.c.b16 %v3777, %v3775
    %v3820 = vpack.c.b16 %v3778, %v3776
    %v3821 = vpack.c.b16 %v3781, %v3779
    %v3822 = vpack.c.b16 %v3782, %v3780
    %v3823 = vpack.c.b16 %v3785, %v3783
    %v3824 = vpack.c.b16 %v3786, %v3784
    %v3825 = vpack.c.b16 %v3789, %v3787
    %v3826 = vpack.c.b16 %v3790, %v3788
    %v3827 = vpack.c.b16 %v3793, %v3791
    %v3828 = vpack.c.b16 %v3794, %v3792
    %v3829 = vpack.c.b16 %v3797, %v3795
    %v3830 = vpack.c.b16 %v3798, %v3796
    %3863 = vmatprep.subr.bf16.mxu0 %v3800
    %3864 = vmatpush1.bf16.msra.mxu0 %v3799
    %3865 = vmatprep.subr.bf16.mxu0 %v3802
    %3866 = vmatpush1.bf16.msra.mxu0 %v3801
    %3867 = vmatprep.subr.bf16.mxu0 %v3804
    %3868 = vmatpush1.bf16.msra.mxu0 %v3803
    %3869 = vmatprep.subr.bf16.mxu0 %v3806
    %3870 = vmatpush1.bf16.msra.mxu0 %v3805
    %3871 = vmatprep.subr.bf16.mxu0 %v3808
    %3872 = vmatpush1.bf16.msra.mxu0 %v3807
    %3873 = vmatprep.subr.bf16.mxu0 %v3810
    %3874 = vmatpush1.bf16.msra.mxu0 %v3809
    %3875 = vmatprep.subr.bf16.mxu0 %v3812
    %3876 = vmatpush1.bf16.msra.mxu0 %v3811
    %3877 = vmatprep.subr.bf16.mxu0 %v3814
    %3878 = vmatpush1.bf16.msra.mxu0 %v3813
    %3879 = vmatprep.subr.bf16.mxu0 %v3816
    %3880 = vmatpush1.bf16.msra.mxu0 %v3815
    %3881 = vmatprep.subr.bf16.mxu0 %v3818
    %3882 = vmatpush1.bf16.msra.mxu0 %v3817
    %3883 = vmatprep.subr.bf16.mxu0 %v3820
    %3884 = vmatpush1.bf16.msra.mxu0 %v3819
    %3885 = vmatprep.subr.bf16.mxu0 %v3822
    %3886 = vmatpush1.bf16.msra.mxu0 %v3821
    %3887 = vmatprep.subr.bf16.mxu0 %v3824
    %3888 = vmatpush1.bf16.msra.mxu0 %v3823
    %3889 = vmatprep.subr.bf16.mxu0 %v3826
    %3890 = vmatpush1.bf16.msra.mxu0 %v3825
    %3891 = vmatprep.subr.bf16.mxu0 %v3828
    %3892 = vmatpush1.bf16.msra.mxu0 %v3827
    %3893 = vmatprep.subr.bf16.mxu0 %v3830
    %3894 = vmatpush1.bf16.msra.mxu0 %v3829
    %3895 = vmatprep.mubr.bf16.mxu0 %v3670
    %3896 = vmatmul.mubr.bf16.gmra.mrb[0].mxu0 %v3669
    %v3897 = vpop.f32.mrb[0].mxu0
    %v3898 = vadd.f32 0.0, %v3897
    %v3899 = vpop.f32.mrb[0].mxu0
    %v3900 = vadd.f32 0.0, %v3899
    %v3901 = vpop.f32.mrb[0].mxu0
    %v3902 = vadd.f32 0.0, %v3901
    %v3903 = vpop.f32.mrb[0].mxu0
    %v3904 = vadd.f32 0.0, %v3903
    %3905 = vdwg.mxu0
    %v3938 = vunpack.c.l.b16 %v3584
    %v3939 = vunpack.c.h.b16 %v3584
    %v3940 = vunpack.c.l.b16 %v3585
    %v3941 = vunpack.c.h.b16 %v3585
    %v3942 = vunpack.c.l.b16 %v3586
    %v3943 = vunpack.c.h.b16 %v3586
    %v3944 = vunpack.c.l.b16 %v3587
    %v3945 = vunpack.c.h.b16 %v3587
    %v3946 = vunpack.c.l.b16 %v3588
    %v3947 = vunpack.c.h.b16 %v3588
    %v3948 = vunpack.c.l.b16 %v3589
    %v3949 = vunpack.c.h.b16 %v3589
    %v3950 = vunpack.c.l.b16 %v3590
    %v3951 = vunpack.c.h.b16 %v3590
    %v3952 = vunpack.c.l.b16 %v3591
    %v3953 = vunpack.c.h.b16 %v3591
    %v3954 = vunpack.c.l.b16 %v3592
    %v3955 = vunpack.c.h.b16 %v3592
    %v3956 = vunpack.c.l.b16 %v3593
    %v3957 = vunpack.c.h.b16 %v3593
    %v3958 = vunpack.c.l.b16 %v3594
    %v3959 = vunpack.c.h.b16 %v3594
    %v3960 = vunpack.c.l.b16 %v3595
    %v3961 = vunpack.c.h.b16 %v3595
    %v3962 = vunpack.c.l.b16 %v3596
    %v3963 = vunpack.c.h.b16 %v3596
    %v3964 = vunpack.c.l.b16 %v3597
    %v3965 = vunpack.c.h.b16 %v3597
    %v3966 = vunpack.c.l.b16 %v3598
    %v3967 = vunpack.c.h.b16 %v3598
    %v3968 = vunpack.c.l.b16 %v3599
    %v3969 = vunpack.c.h.b16 %v3599
    %v3970 = vunpack.c.l.b16 %v3600
    %v3971 = vunpack.c.h.b16 %v3600
    %v3972 = vunpack.c.l.b16 %v3601
    %v3973 = vunpack.c.h.b16 %v3601
    %v3974 = vunpack.c.l.b16 %v3602
    %v3975 = vunpack.c.h.b16 %v3602
    %v3976 = vunpack.c.l.b16 %v3603
    %v3977 = vunpack.c.h.b16 %v3603
    %v3978 = vunpack.c.l.b16 %v3604
    %v3979 = vunpack.c.h.b16 %v3604
    %v3980 = vunpack.c.l.b16 %v3605
    %v3981 = vunpack.c.h.b16 %v3605
    %v3982 = vunpack.c.l.b16 %v3606
    %v3983 = vunpack.c.h.b16 %v3606
    %v3984 = vunpack.c.l.b16 %v3607
    %v3985 = vunpack.c.h.b16 %v3607
    %v3986 = vunpack.c.l.b16 %v3608
    %v3987 = vunpack.c.h.b16 %v3608
    %v3988 = vunpack.c.l.b16 %v3609
    %v3989 = vunpack.c.h.b16 %v3609
    %v3990 = vunpack.c.l.b16 %v3610
    %v3991 = vunpack.c.h.b16 %v3610
    %v3992 = vunpack.c.l.b16 %v3611
    %v3993 = vunpack.c.h.b16 %v3611
    %v3994 = vunpack.c.l.b16 %v3612
    %v3995 = vunpack.c.h.b16 %v3612
    %v3996 = vunpack.c.l.b16 %v3613
    %v3997 = vunpack.c.h.b16 %v3613
    %v3998 = vunpack.c.l.b16 %v3614
    %v3999 = vunpack.c.h.b16 %v3614
    %v4000 = vunpack.c.l.b16 %v3615
    %v4001 = vunpack.c.h.b16 %v3615
    %v4002 = vpack.c.b16 %v3940, %v3938
    %v4003 = vpack.c.b16 %v3941, %v3939
    %v4004 = vpack.c.b16 %v3944, %v3942
    %v4005 = vpack.c.b16 %v3945, %v3943
    %v4006 = vpack.c.b16 %v3948, %v3946
    %v4007 = vpack.c.b16 %v3949, %v3947
    %v4008 = vpack.c.b16 %v3952, %v3950
    %v4009 = vpack.c.b16 %v3953, %v3951
    %v4010 = vpack.c.b16 %v3956, %v3954
    %v4011 = vpack.c.b16 %v3957, %v3955
    %v4012 = vpack.c.b16 %v3960, %v3958
    %v4013 = vpack.c.b16 %v3961, %v3959
    %v4014 = vpack.c.b16 %v3964, %v3962
    %v4015 = vpack.c.b16 %v3965, %v3963
    %v4016 = vpack.c.b16 %v3968, %v3966
    %v4017 = vpack.c.b16 %v3969, %v3967
    %v4018 = vpack.c.b16 %v3972, %v3970
    %v4019 = vpack.c.b16 %v3973, %v3971
    %v4020 = vpack.c.b16 %v3976, %v3974
    %v4021 = vpack.c.b16 %v3977, %v3975
    %v4022 = vpack.c.b16 %v3980, %v3978
    %v4023 = vpack.c.b16 %v3981, %v3979
    %v4024 = vpack.c.b16 %v3984, %v3982
    %v4025 = vpack.c.b16 %v3985, %v3983
    %v4026 = vpack.c.b16 %v3988, %v3986
    %v4027 = vpack.c.b16 %v3989, %v3987
    %v4028 = vpack.c.b16 %v3992, %v3990
    %v4029 = vpack.c.b16 %v3993, %v3991
    %v4030 = vpack.c.b16 %v3996, %v3994
    %v4031 = vpack.c.b16 %v3997, %v3995
    %v4032 = vpack.c.b16 %v4000, %v3998
    %v4033 = vpack.c.b16 %v4001, %v3999
    %4066 = vmatprep.subr.bf16.mxu0 %v4003
    %4067 = vmatpush1.bf16.msra.mxu0 %v4002
    %4068 = vmatprep.subr.bf16.mxu0 %v4005
    %4069 = vmatpush1.bf16.msra.mxu0 %v4004
    %4070 = vmatprep.subr.bf16.mxu0 %v4007
    %4071 = vmatpush1.bf16.msra.mxu0 %v4006
    %4072 = vmatprep.subr.bf16.mxu0 %v4009
    %4073 = vmatpush1.bf16.msra.mxu0 %v4008
    %4074 = vmatprep.subr.bf16.mxu0 %v4011
    %4075 = vmatpush1.bf16.msra.mxu0 %v4010
    %4076 = vmatprep.subr.bf16.mxu0 %v4013
    %4077 = vmatpush1.bf16.msra.mxu0 %v4012
    %4078 = vmatprep.subr.bf16.mxu0 %v4015
    %4079 = vmatpush1.bf16.msra.mxu0 %v4014
    %4080 = vmatprep.subr.bf16.mxu0 %v4017
    %4081 = vmatpush1.bf16.msra.mxu0 %v4016
    %4082 = vmatprep.subr.bf16.mxu0 %v4019
    %4083 = vmatpush1.bf16.msra.mxu0 %v4018
    %4084 = vmatprep.subr.bf16.mxu0 %v4021
    %4085 = vmatpush1.bf16.msra.mxu0 %v4020
    %4086 = vmatprep.subr.bf16.mxu0 %v4023
    %4087 = vmatpush1.bf16.msra.mxu0 %v4022
    %4088 = vmatprep.subr.bf16.mxu0 %v4025
    %4089 = vmatpush1.bf16.msra.mxu0 %v4024
    %4090 = vmatprep.subr.bf16.mxu0 %v4027
    %4091 = vmatpush1.bf16.msra.mxu0 %v4026
    %4092 = vmatprep.subr.bf16.mxu0 %v4029
    %4093 = vmatpush1.bf16.msra.mxu0 %v4028
    %4094 = vmatprep.subr.bf16.mxu0 %v4031
    %4095 = vmatpush1.bf16.msra.mxu0 %v4030
    %4096 = vmatprep.subr.bf16.mxu0 %v4033
    %4097 = vmatpush1.bf16.msra.mxu0 %v4032
    %4098 = vmatprep.mubr.bf16.mxu0 %v3583
    %4099 = vmatmul.mubr.bf16.gmra.mrb[0].mxu0 %v3582
    %v4100 = vpop.f32.mrb[0].mxu0
    %v4101 = vadd.f32 %v3898, %v4100
    %v4102 = vpop.f32.mrb[0].mxu0
    %v4103 = vadd.f32 %v3900, %v4102
    %v4104 = vpop.f32.mrb[0].mxu0
    %v4105 = vadd.f32 %v3902, %v4104
    %v4106 = vpop.f32.mrb[0].mxu0
    %v4107 = vadd.f32 %v3904, %v4106
    %4108 = vdwg.mxu0
    %v4109 = vld [vmem:[#allocation20] sm:$0xf]
    %v4110 = vld [vmem:[#allocation20 + $0x4] sm:$0xf]
    %v4113 = vunpack.c.l.b16 %v4109
    %v4114 = vunpack.c.l.b16 %v4110
    %v4115 = vpack.c.b16 %v4114, %v4113
    %v4117 = vsel %vm767, %v4115, 0
    %4119 = vmatprep.subr.bf16.mxu0 %v3526
    %4120 = vmatpush1.bf16.msra.mxu0 %v3525
    %4121 = vmatprep.subr.bf16.mxu0 %v3528
    %4122 = vmatpush1.bf16.msra.mxu0 %v3527
    %4123 = vmatprep.subr.bf16.mxu0 0
    %4124 = vmatpush1.bf16.msra.mxu0 0
    %4125 = vmatprep.subr.bf16.mxu0 0
    %4126 = vmatpush1.bf16.msra.mxu0 0
    %4127 = vmatprep.subr.bf16.mxu0 0
    %4128 = vmatpush1.bf16.msra.mxu0 0
    %4129 = vmatprep.subr.bf16.mxu0 0
    %4130 = vmatpush1.bf16.msra.mxu0 0
    %4131 = vmatprep.subr.bf16.mxu0 0
    %4132 = vmatpush1.bf16.msra.mxu0 0
    %4133 = vmatprep.subr.bf16.mxu0 0
    %4134 = vmatpush1.bf16.msra.mxu0 0
    %4135 = vmatprep.subr.bf16.mxu0 0
    %4136 = vmatpush1.bf16.msra.mxu0 0
    %4137 = vmatprep.subr.bf16.mxu0 0
    %4138 = vmatpush1.bf16.msra.mxu0 0
    %4139 = vmatprep.subr.bf16.mxu0 0
    %4140 = vmatpush1.bf16.msra.mxu0 0
    %4141 = vmatprep.subr.bf16.mxu0 0
    %4142 = vmatpush1.bf16.msra.mxu0 0
    %4143 = vmatprep.subr.bf16.mxu0 0
    %4144 = vmatpush1.bf16.msra.mxu0 0
    %4145 = vmatprep.subr.bf16.mxu0 0
    %4146 = vmatpush1.bf16.msra.mxu0 0
    %4147 = vmatprep.subr.bf16.mxu0 0
    %4148 = vmatpush1.bf16.msra.mxu0 0
    %4149 = vmatprep.subr.bf16.mxu0 0
    %4150 = vmatpush1.bf16.msra.mxu0 0
    %4151 = vmatprep.mubr.bf16.mxu0 0
    %4152 = vmatmul.mubr.bf16.gmra.mrb[0].mxu0 %v4117
    %v4153 = vpop.f32.mrb[0].mxu0
    %v4154 = vadd.f32 0.0, %v4153
    %v4155 = vpop.f32.mrb[0].mxu0
    %v4156 = vadd.f32 0.0, %v4155
    %v4157 = vpop.f32.mrb[0].mxu0
    %v4158 = vadd.f32 0.0, %v4157
    %v4159 = vpop.f32.mrb[0].mxu0
    %v4160 = vadd.f32 0.0, %v4159
    %4161 = vdwg.mxu0
    %v4162 = vpack.c.bf16 %v4158, %v4154
    %v4163 = vpack.c.bf16 %v4160, %v4156
    %v4164 = vld [vmem:[#allocation25] sm:$0xff]
    %v4165 = vld [vmem:[#allocation25 + $0x8] sm:$0xff]
    %v4166 = vld [vmem:[#allocation25 + $0x10] sm:$0xff]
    %v4167 = vld [vmem:[#allocation25 + $0x18] sm:$0xff]
    %v4168 = vld [vmem:[#allocation25 + $0x20] sm:$0xff]
    %v4169 = vld [vmem:[#allocation25 + $0x28] sm:$0xff]
    %v4170 = vld [vmem:[#allocation25 + $0x30] sm:$0xff]
    %v4171 = vld [vmem:[#allocation25 + $0x38] sm:$0xff]
    %v4172 = vld [vmem:[#allocation25 + $0x40] sm:$0xff]
    %v4173 = vld [vmem:[#allocation25 + $0x48] sm:$0xff]
    %v4174 = vld [vmem:[#allocation25 + $0x50] sm:$0xff]
    %v4175 = vld [vmem:[#allocation25 + $0x58] sm:$0xff]
    %v4176 = vld [vmem:[#allocation25 + $0x60] sm:$0xff]
    %v4177 = vld [vmem:[#allocation25 + $0x68] sm:$0xff]
    %v4178 = vld [vmem:[#allocation25 + $0x70] sm:$0xff]
    %v4179 = vld [vmem:[#allocation25 + $0x78] sm:$0xff]
    %v4180 = vld [vmem:[#allocation25 + $0x80] sm:$0xff]
    %v4181 = vld [vmem:[#allocation25 + $0x88] sm:$0xff]
    %v4182 = vld [vmem:[#allocation25 + $0x90] sm:$0xff]
    %v4183 = vld [vmem:[#allocation25 + $0x98] sm:$0xff]
    %v4184 = vld [vmem:[#allocation25 + $0xa0] sm:$0xff]
    %v4185 = vld [vmem:[#allocation25 + $0xa8] sm:$0xff]
    %v4186 = vld [vmem:[#allocation25 + $0xb0] sm:$0xff]
    %v4187 = vld [vmem:[#allocation25 + $0xb8] sm:$0xff]
    %v4188 = vld [vmem:[#allocation25 + $0xc0] sm:$0xff]
    %v4189 = vld [vmem:[#allocation25 + $0xc8] sm:$0xff]
    %v4190 = vld [vmem:[#allocation25 + $0xd0] sm:$0xff]
    %v4191 = vld [vmem:[#allocation25 + $0xd8] sm:$0xff]
    %v4192 = vld [vmem:[#allocation25 + $0xe0] sm:$0xff]
    %v4193 = vld [vmem:[#allocation25 + $0xe8] sm:$0xff]
    %v4194 = vld [vmem:[#allocation25 + $0xf0] sm:$0xff]
    %v4195 = vld [vmem:[#allocation25 + $0xf8] sm:$0xff]
    %v4228 = vunpack.c.l.b16 %v4164
    %v4229 = vunpack.c.h.b16 %v4164
    %v4230 = vunpack.c.l.b16 %v4165
    %v4231 = vunpack.c.h.b16 %v4165
    %v4232 = vunpack.c.l.b16 %v4166
    %v4233 = vunpack.c.h.b16 %v4166
    %v4234 = vunpack.c.l.b16 %v4167
    %v4235 = vunpack.c.h.b16 %v4167
    %v4236 = vunpack.c.l.b16 %v4168
    %v4237 = vunpack.c.h.b16 %v4168
    %v4238 = vunpack.c.l.b16 %v4169
    %v4239 = vunpack.c.h.b16 %v4169
    %v4240 = vunpack.c.l.b16 %v4170
    %v4241 = vunpack.c.h.b16 %v4170
    %v4242 = vunpack.c.l.b16 %v4171
    %v4243 = vunpack.c.h.b16 %v4171
    %v4244 = vunpack.c.l.b16 %v4172
    %v4245 = vunpack.c.h.b16 %v4172
    %v4246 = vunpack.c.l.b16 %v4173
    %v4247 = vunpack.c.h.b16 %v4173
    %v4248 = vunpack.c.l.b16 %v4174
    %v4249 = vunpack.c.h.b16 %v4174
    %v4250 = vunpack.c.l.b16 %v4175
    %v4251 = vunpack.c.h.b16 %v4175
    %v4252 = vunpack.c.l.b16 %v4176
    %v4253 = vunpack.c.h.b16 %v4176
    %v4254 = vunpack.c.l.b16 %v4177
    %v4255 = vunpack.c.h.b16 %v4177
    %v4256 = vunpack.c.l.b16 %v4178
    %v4257 = vunpack.c.h.b16 %v4178
    %v4258 = vunpack.c.l.b16 %v4179
    %v4259 = vunpack.c.h.b16 %v4179
    %v4260 = vunpack.c.l.b16 %v4180
    %v4261 = vunpack.c.h.b16 %v4180
    %v4262 = vunpack.c.l.b16 %v4181
    %v4263 = vunpack.c.h.b16 %v4181
    %v4264 = vunpack.c.l.b16 %v4182
    %v4265 = vunpack.c.h.b16 %v4182
    %v4266 = vunpack.c.l.b16 %v4183
    %v4267 = vunpack.c.h.b16 %v4183
    %v4268 = vunpack.c.l.b16 %v4184
    %v4269 = vunpack.c.h.b16 %v4184
    %v4270 = vunpack.c.l.b16 %v4185
    %v4271 = vunpack.c.h.b16 %v4185
    %v4272 = vunpack.c.l.b16 %v4186
    %v4273 = vunpack.c.h.b16 %v4186
    %v4274 = vunpack.c.l.b16 %v4187
    %v4275 = vunpack.c.h.b16 %v4187
    %v4276 = vunpack.c.l.b16 %v4188
    %v4277 = vunpack.c.h.b16 %v4188
    %v4278 = vunpack.c.l.b16 %v4189
    %v4279 = vunpack.c.h.b16 %v4189
    %v4280 = vunpack.c.l.b16 %v4190
    %v4281 = vunpack.c.h.b16 %v4190
    %v4282 = vunpack.c.l.b16 %v4191
    %v4283 = vunpack.c.h.b16 %v4191
    %v4284 = vunpack.c.l.b16 %v4192
    %v4285 = vunpack.c.h.b16 %v4192
    %v4286 = vunpack.c.l.b16 %v4193
    %v4287 = vunpack.c.h.b16 %v4193
    %v4288 = vunpack.c.l.b16 %v4194
    %v4289 = vunpack.c.h.b16 %v4194
    %v4290 = vunpack.c.l.b16 %v4195
    %v4291 = vunpack.c.h.b16 %v4195
    %v4292 = vpack.c.b16 %v4230, %v4228
    %v4293 = vpack.c.b16 %v4231, %v4229
    %v4294 = vpack.c.b16 %v4234, %v4232
    %v4295 = vpack.c.b16 %v4235, %v4233
    %v4296 = vpack.c.b16 %v4238, %v4236
    %v4297 = vpack.c.b16 %v4239, %v4237
    %v4298 = vpack.c.b16 %v4242, %v4240
    %v4299 = vpack.c.b16 %v4243, %v4241
    %v4300 = vpack.c.b16 %v4246, %v4244
    %v4301 = vpack.c.b16 %v4247, %v4245
    %v4302 = vpack.c.b16 %v4250, %v4248
    %v4303 = vpack.c.b16 %v4251, %v4249
    %v4304 = vpack.c.b16 %v4254, %v4252
    %v4305 = vpack.c.b16 %v4255, %v4253
    %v4306 = vpack.c.b16 %v4258, %v4256
    %v4307 = vpack.c.b16 %v4259, %v4257
    %v4308 = vpack.c.b16 %v4262, %v4260
    %v4309 = vpack.c.b16 %v4263, %v4261
    %v4310 = vpack.c.b16 %v4266, %v4264
    %v4311 = vpack.c.b16 %v4267, %v4265
    %v4312 = vpack.c.b16 %v4270, %v4268
    %v4313 = vpack.c.b16 %v4271, %v4269
    %v4314 = vpack.c.b16 %v4274, %v4272
    %v4315 = vpack.c.b16 %v4275, %v4273
    %v4316 = vpack.c.b16 %v4278, %v4276
    %v4317 = vpack.c.b16 %v4279, %v4277
    %v4318 = vpack.c.b16 %v4282, %v4280
    %v4319 = vpack.c.b16 %v4283, %v4281
    %v4320 = vpack.c.b16 %v4286, %v4284
    %v4321 = vpack.c.b16 %v4287, %v4285
    %v4322 = vpack.c.b16 %v4290, %v4288
    %v4323 = vpack.c.b16 %v4291, %v4289
    %4356 = vmatprep.subr.bf16.mxu0 %v4293
    %4357 = vmatpush1.bf16.msra.mxu0 %v4292
    %4358 = vmatprep.subr.bf16.mxu0 %v4295
    %4359 = vmatpush1.bf16.msra.mxu0 %v4294
    %4360 = vmatprep.subr.bf16.mxu0 %v4297
    %4361 = vmatpush1.bf16.msra.mxu0 %v4296
    %4362 = vmatprep.subr.bf16.mxu0 %v4299
    %4363 = vmatpush1.bf16.msra.mxu0 %v4298
    %4364 = vmatprep.subr.bf16.mxu0 %v4301
    %4365 = vmatpush1.bf16.msra.mxu0 %v4300
    %4366 = vmatprep.subr.bf16.mxu0 %v4303
    %4367 = vmatpush1.bf16.msra.mxu0 %v4302
    %4368 = vmatprep.subr.bf16.mxu0 %v4305
    %4369 = vmatpush1.bf16.msra.mxu0 %v4304
    %4370 = vmatprep.subr.bf16.mxu0 %v4307
    %4371 = vmatpush1.bf16.msra.mxu0 %v4306
    %4372 = vmatprep.subr.bf16.mxu0 %v4309
    %4373 = vmatpush1.bf16.msra.mxu0 %v4308
    %4374 = vmatprep.subr.bf16.mxu0 %v4311
    %4375 = vmatpush1.bf16.msra.mxu0 %v4310
    %4376 = vmatprep.subr.bf16.mxu0 %v4313
    %4377 = vmatpush1.bf16.msra.mxu0 %v4312
    %4378 = vmatprep.subr.bf16.mxu0 %v4315
    %4379 = vmatpush1.bf16.msra.mxu0 %v4314
    %4380 = vmatprep.subr.bf16.mxu0 %v4317
    %4381 = vmatpush1.bf16.msra.mxu0 %v4316
    %4382 = vmatprep.subr.bf16.mxu0 %v4319
    %4383 = vmatpush1.bf16.msra.mxu0 %v4318
    %4384 = vmatprep.subr.bf16.mxu0 %v4321
    %4385 = vmatpush1.bf16.msra.mxu0 %v4320
    %4386 = vmatprep.subr.bf16.mxu0 %v4323
    %4387 = vmatpush1.bf16.msra.mxu0 %v4322
    %4388 = vmatprep.mubr.bf16.mxu0 %v4163
    %4389 = vmatmul.mubr.bf16.gmra.mrb[0].mxu0 %v4162
    %v4390 = vpop.f32.mrb[0].mxu0
    %v4391 = vadd.f32 0.0, %v4390
    %v4392 = vpop.f32.mrb[0].mxu0
    %v4393 = vadd.f32 0.0, %v4392
    %v4394 = vpop.f32.mrb[0].mxu0
    %v4395 = vadd.f32 0.0, %v4394
    %v4396 = vpop.f32.mrb[0].mxu0
    %v4397 = vadd.f32 0.0, %v4396
    %4398 = vdwg.mxu0
    %v4399 = vadd.f32 %v4101, %v4391
    %v4400 = vadd.f32 %v4103, %v4393
    %v4401 = vadd.f32 %v4105, %v4395
    %v4402 = vadd.f32 %v4107, %v4397
    %v4403 = vld [vmem:[#allocation26] sm:$0x3]
    %v4405 = vlaneseq
    %v4406 = vshrl.u32 %v4405, 7
    %v4407 = vsub.s32 0, %v4406
    %v4408 = vrot.slane %v4403, %v4407
    %v4409 = vlaneseq
    %v4410 = vshrl.u32 %v4409, 7
    %v4411 = vsub.s32 1, %v4410
    %v4412 = vrot.slane %v4403, %v4411
    %v4415 = vadd.f32 %v4399, %v4408
    %v4416 = vadd.f32 %v4400, %v4412
    %v4417 = vadd.f32 %v4401, %v4408
    %v4418 = vadd.f32 %v4402, %v4412
    %v4419 = vmax.f32 %v4415, 0.0
    %v4420 = vmax.f32 %v4416, 0.0
    %v4421 = vmax.f32 %v4417, 0.0
    %v4422 = vmax.f32 %v4418, 0.0
    %v4423 = vpack.c.bf16 %v4421, %v4419
    %v4424 = vpack.c.bf16 %v4422, %v4420
    %v4425 = vld [vmem:[#allocation28] sm:$0xf]
    %v4426 = vld [vmem:[#allocation28 + $0x4] sm:$0xf]
    %v4429 = vunpack.c.l.b16 %v4425
    %v4430 = vunpack.c.l.b16 %v4426
    %v4431 = vpack.c.b16 %v4430, %v4429
    %vm4432 = vcmask 130048
    %v4434 = vsel %vm4432, %v4431, 0
    %4436 = vmatprep.subr.bf16.mxu0 %v4424
    %4437 = vmatpush1.bf16.msra.mxu0 %v4423
    %4438 = vmatprep.subr.bf16.mxu0 0
    %4439 = vmatpush1.bf16.msra.mxu0 0
    %4440 = vmatprep.subr.bf16.mxu0 0
    %4441 = vmatpush1.bf16.msra.mxu0 0
    %4442 = vmatprep.subr.bf16.mxu0 0
    %4443 = vmatpush1.bf16.msra.mxu0 0
    %4444 = vmatprep.subr.bf16.mxu0 0
    %4445 = vmatpush1.bf16.msra.mxu0 0
    %4446 = vmatprep.subr.bf16.mxu0 0
    %4447 = vmatpush1.bf16.msra.mxu0 0
    %4448 = vmatprep.subr.bf16.mxu0 0
    %4449 = vmatpush1.bf16.msra.mxu0 0
    %4450 = vmatprep.subr.bf16.mxu0 0
    %4451 = vmatpush1.bf16.msra.mxu0 0
    %4452 = vmatprep.subr.bf16.mxu0 0
    %4453 = vmatpush1.bf16.msra.mxu0 0
    %4454 = vmatprep.subr.bf16.mxu0 0
    %4455 = vmatpush1.bf16.msra.mxu0 0
    %4456 = vmatprep.subr.bf16.mxu0 0
    %4457 = vmatpush1.bf16.msra.mxu0 0
    %4458 = vmatprep.subr.bf16.mxu0 0
    %4459 = vmatpush1.bf16.msra.mxu0 0
    %4460 = vmatprep.subr.bf16.mxu0 0
    %4461 = vmatpush1.bf16.msra.mxu0 0
    %4462 = vmatprep.subr.bf16.mxu0 0
    %4463 = vmatpush1.bf16.msra.mxu0 0
    %4464 = vmatprep.subr.bf16.mxu0 0
    %4465 = vmatpush1.bf16.msra.mxu0 0
    %4466 = vmatprep.subr.bf16.mxu0 0
    %4467 = vmatpush1.bf16.msra.mxu0 0
    %4468 = vmatprep.mubr.bf16.mxu0 0
    %4469 = vmatmul.mubr.bf16.gmra.mrb[0].mxu0 %v4434
    %v4470 = vpop.f32.mrb[0].mxu0
    %v4471 = vadd.f32 0.0, %v4470
    %v4472 = vpop.f32.mrb[0].mxu0
    %v4473 = vadd.f32 0.0, %v4472
    %v4474 = vpop.f32.mrb[0].mxu0
    %v4475 = vadd.f32 0.0, %v4474
    %v4476 = vpop.f32.mrb[0].mxu0
    %v4477 = vadd.f32 0.0, %v4476
    %4478 = vdwg.mxu0
    %v4479 = vpack.c.bf16 %v4475, %v4471
    %v4480 = vpack.c.bf16 %v4477, %v4473
    %v4481 = vld [vmem:[#allocation31] sm:$0xff]
    %v4482 = vld [vmem:[#allocation31 + $0x8] sm:$0xff]
    %v4483 = vld [vmem:[#allocation31 + $0x10] sm:$0xff]
    %v4484 = vld [vmem:[#allocation31 + $0x18] sm:$0xff]
    %v4485 = vld [vmem:[#allocation31 + $0x20] sm:$0xff]
    %v4486 = vld [vmem:[#allocation31 + $0x28] sm:$0xff]
    %v4487 = vld [vmem:[#allocation31 + $0x30] sm:$0xff]
    %v4488 = vld [vmem:[#allocation31 + $0x38] sm:$0xff]
    %v4489 = vld [vmem:[#allocation31 + $0x40] sm:$0xff]
    %v4490 = vld [vmem:[#allocation31 + $0x48] sm:$0xff]
    %v4491 = vld [vmem:[#allocation31 + $0x50] sm:$0xff]
    %v4492 = vld [vmem:[#allocation31 + $0x58] sm:$0xff]
    %v4493 = vld [vmem:[#allocation31 + $0x60] sm:$0xff]
    %v4494 = vld [vmem:[#allocation31 + $0x68] sm:$0xff]
    %v4495 = vld [vmem:[#allocation31 + $0x70] sm:$0xff]
    %v4496 = vld [vmem:[#allocation31 + $0x78] sm:$0xff]
    %v4497 = vld [vmem:[#allocation31 + $0x80] sm:$0xff]
    %v4498 = vld [vmem:[#allocation31 + $0x88] sm:$0xff]
    %v4499 = vld [vmem:[#allocation31 + $0x90] sm:$0xff]
    %v4500 = vld [vmem:[#allocation31 + $0x98] sm:$0xff]
    %v4501 = vld [vmem:[#allocation31 + $0xa0] sm:$0xff]
    %v4502 = vld [vmem:[#allocation31 + $0xa8] sm:$0xff]
    %v4503 = vld [vmem:[#allocation31 + $0xb0] sm:$0xff]
    %v4504 = vld [vmem:[#allocation31 + $0xb8] sm:$0xff]
    %v4505 = vld [vmem:[#allocation31 + $0xc0] sm:$0xff]
    %v4506 = vld [vmem:[#allocation31 + $0xc8] sm:$0xff]
    %v4507 = vld [vmem:[#allocation31 + $0xd0] sm:$0xff]
    %v4508 = vld [vmem:[#allocation31 + $0xd8] sm:$0xff]
    %v4509 = vld [vmem:[#allocation31 + $0xe0] sm:$0xff]
    %v4510 = vld [vmem:[#allocation31 + $0xe8] sm:$0xff]
    %v4511 = vld [vmem:[#allocation31 + $0xf0] sm:$0xff]
    %v4512 = vld [vmem:[#allocation31 + $0xf8] sm:$0xff]
    %v4513 = vld [vmem:[#allocation32] sm:$0xff]
    %v4514 = vld [vmem:[#allocation32 + $0x8] sm:$0xff]
    %v4515 = vld [vmem:[#allocation32 + $0x10] sm:$0xff]
    %v4516 = vld [vmem:[#allocation32 + $0x18] sm:$0xff]
    %v4517 = vld [vmem:[#allocation32 + $0x20] sm:$0xff]
    %v4518 = vld [vmem:[#allocation32 + $0x28] sm:$0xff]
    %v4519 = vld [vmem:[#allocation32 + $0x30] sm:$0xff]
    %v4520 = vld [vmem:[#allocation32 + $0x38] sm:$0xff]
    %v4521 = vld [vmem:[#allocation32 + $0x40] sm:$0xff]
    %v4522 = vld [vmem:[#allocation32 + $0x48] sm:$0xff]
    %v4523 = vld [vmem:[#allocation32 + $0x50] sm:$0xff]
    %v4524 = vld [vmem:[#allocation32 + $0x58] sm:$0xff]
    %v4525 = vld [vmem:[#allocation32 + $0x60] sm:$0xff]
    %v4526 = vld [vmem:[#allocation32 + $0x68] sm:$0xff]
    %v4527 = vld [vmem:[#allocation32 + $0x70] sm:$0xff]
    %v4528 = vld [vmem:[#allocation32 + $0x78] sm:$0xff]
    %v4529 = vld [vmem:[#allocation32 + $0x80] sm:$0xff]
    %v4530 = vld [vmem:[#allocation32 + $0x88] sm:$0xff]
    %v4531 = vld [vmem:[#allocation32 + $0x90] sm:$0xff]
    %v4532 = vld [vmem:[#allocation32 + $0x98] sm:$0xff]
    %v4533 = vld [vmem:[#allocation32 + $0xa0] sm:$0xff]
    %v4534 = vld [vmem:[#allocation32 + $0xa8] sm:$0xff]
    %v4535 = vld [vmem:[#allocation32 + $0xb0] sm:$0xff]
    %v4536 = vld [vmem:[#allocation32 + $0xb8] sm:$0xff]
    %v4537 = vld [vmem:[#allocation32 + $0xc0] sm:$0xff]
    %v4538 = vld [vmem:[#allocation32 + $0xc8] sm:$0xff]
    %v4539 = vld [vmem:[#allocation32 + $0xd0] sm:$0xff]
    %v4540 = vld [vmem:[#allocation32 + $0xd8] sm:$0xff]
    %v4541 = vld [vmem:[#allocation32 + $0xe0] sm:$0xff]
    %v4542 = vld [vmem:[#allocation32 + $0xe8] sm:$0xff]
    %v4543 = vld [vmem:[#allocation32 + $0xf0] sm:$0xff]
    %v4544 = vld [vmem:[#allocation32 + $0xf8] sm:$0xff]
    %v4577 = vunpack.c.l.b16 %v4513
    %v4578 = vunpack.c.h.b16 %v4513
    %v4579 = vunpack.c.l.b16 %v4514
    %v4580 = vunpack.c.h.b16 %v4514
    %v4581 = vunpack.c.l.b16 %v4515
    %v4582 = vunpack.c.h.b16 %v4515
    %v4583 = vunpack.c.l.b16 %v4516
    %v4584 = vunpack.c.h.b16 %v4516
    %v4585 = vunpack.c.l.b16 %v4517
    %v4586 = vunpack.c.h.b16 %v4517
    %v4587 = vunpack.c.l.b16 %v4518
    %v4588 = vunpack.c.h.b16 %v4518
    %v4589 = vunpack.c.l.b16 %v4519
    %v4590 = vunpack.c.h.b16 %v4519
    %v4591 = vunpack.c.l.b16 %v4520
    %v4592 = vunpack.c.h.b16 %v4520
    %v4593 = vunpack.c.l.b16 %v4521
    %v4594 = vunpack.c.h.b16 %v4521
    %v4595 = vunpack.c.l.b16 %v4522
    %v4596 = vunpack.c.h.b16 %v4522
    %v4597 = vunpack.c.l.b16 %v4523
    %v4598 = vunpack.c.h.b16 %v4523
    %v4599 = vunpack.c.l.b16 %v4524
    %v4600 = vunpack.c.h.b16 %v4524
    %v4601 = vunpack.c.l.b16 %v4525
    %v4602 = vunpack.c.h.b16 %v4525
    %v4603 = vunpack.c.l.b16 %v4526
    %v4604 = vunpack.c.h.b16 %v4526
    %v4605 = vunpack.c.l.b16 %v4527
    %v4606 = vunpack.c.h.b16 %v4527
    %v4607 = vunpack.c.l.b16 %v4528
    %v4608 = vunpack.c.h.b16 %v4528
    %v4609 = vunpack.c.l.b16 %v4529
    %v4610 = vunpack.c.h.b16 %v4529
    %v4611 = vunpack.c.l.b16 %v4530
    %v4612 = vunpack.c.h.b16 %v4530
    %v4613 = vunpack.c.l.b16 %v4531
    %v4614 = vunpack.c.h.b16 %v4531
    %v4615 = vunpack.c.l.b16 %v4532
    %v4616 = vunpack.c.h.b16 %v4532
    %v4617 = vunpack.c.l.b16 %v4533
    %v4618 = vunpack.c.h.b16 %v4533
    %v4619 = vunpack.c.l.b16 %v4534
    %v4620 = vunpack.c.h.b16 %v4534
    %v4621 = vunpack.c.l.b16 %v4535
    %v4622 = vunpack.c.h.b16 %v4535
    %v4623 = vunpack.c.l.b16 %v4536
    %v4624 = vunpack.c.h.b16 %v4536
    %v4625 = vunpack.c.l.b16 %v4537
    %v4626 = vunpack.c.h.b16 %v4537
    %v4627 = vunpack.c.l.b16 %v4538
    %v4628 = vunpack.c.h.b16 %v4538
    %v4629 = vunpack.c.l.b16 %v4539
    %v4630 = vunpack.c.h.b16 %v4539
    %v4631 = vunpack.c.l.b16 %v4540
    %v4632 = vunpack.c.h.b16 %v4540
    %v4633 = vunpack.c.l.b16 %v4541
    %v4634 = vunpack.c.h.b16 %v4541
    %v4635 = vunpack.c.l.b16 %v4542
    %v4636 = vunpack.c.h.b16 %v4542
    %v4637 = vunpack.c.l.b16 %v4543
    %v4638 = vunpack.c.h.b16 %v4543
    %v4639 = vunpack.c.l.b16 %v4544
    %v4640 = vunpack.c.h.b16 %v4544
    %v4641 = vpack.c.b16 %v4579, %v4577
    %v4642 = vpack.c.b16 %v4580, %v4578
    %v4643 = vpack.c.b16 %v4583, %v4581
    %v4644 = vpack.c.b16 %v4584, %v4582
    %v4645 = vpack.c.b16 %v4587, %v4585
    %v4646 = vpack.c.b16 %v4588, %v4586
    %v4647 = vpack.c.b16 %v4591, %v4589
    %v4648 = vpack.c.b16 %v4592, %v4590
    %v4649 = vpack.c.b16 %v4595, %v4593
    %v4650 = vpack.c.b16 %v4596, %v4594
    %v4651 = vpack.c.b16 %v4599, %v4597
    %v4652 = vpack.c.b16 %v4600, %v4598
    %v4653 = vpack.c.b16 %v4603, %v4601
    %v4654 = vpack.c.b16 %v4604, %v4602
    %v4655 = vpack.c.b16 %v4607, %v4605
    %v4656 = vpack.c.b16 %v4608, %v4606
    %v4657 = vpack.c.b16 %v4611, %v4609
    %v4658 = vpack.c.b16 %v4612, %v4610
    %v4659 = vpack.c.b16 %v4615, %v4613
    %v4660 = vpack.c.b16 %v4616, %v4614
    %v4661 = vpack.c.b16 %v4619, %v4617
    %v4662 = vpack.c.b16 %v4620, %v4618
    %v4663 = vpack.c.b16 %v4623, %v4621
    %v4664 = vpack.c.b16 %v4624, %v4622
    %v4665 = vpack.c.b16 %v4627, %v4625
    %v4666 = vpack.c.b16 %v4628, %v4626
    %v4667 = vpack.c.b16 %v4631, %v4629
    %v4668 = vpack.c.b16 %v4632, %v4630
    %v4669 = vpack.c.b16 %v4635, %v4633
    %v4670 = vpack.c.b16 %v4636, %v4634
    %v4671 = vpack.c.b16 %v4639, %v4637
    %v4672 = vpack.c.b16 %v4640, %v4638
    %4705 = vmatprep.subr.bf16.mxu0 %v4642
    %4706 = vmatpush1.bf16.msra.mxu0 %v4641
    %4707 = vmatprep.subr.bf16.mxu0 %v4644
    %4708 = vmatpush1.bf16.msra.mxu0 %v4643
    %4709 = vmatprep.subr.bf16.mxu0 %v4646
    %4710 = vmatpush1.bf16.msra.mxu0 %v4645
    %4711 = vmatprep.subr.bf16.mxu0 %v4648
    %4712 = vmatpush1.bf16.msra.mxu0 %v4647
    %4713 = vmatprep.subr.bf16.mxu0 %v4650
    %4714 = vmatpush1.bf16.msra.mxu0 %v4649
    %4715 = vmatprep.subr.bf16.mxu0 %v4652
    %4716 = vmatpush1.bf16.msra.mxu0 %v4651
    %4717 = vmatprep.subr.bf16.mxu0 %v4654
    %4718 = vmatpush1.bf16.msra.mxu0 %v4653
    %4719 = vmatprep.subr.bf16.mxu0 %v4656
    %4720 = vmatpush1.bf16.msra.mxu0 %v4655
    %4721 = vmatprep.subr.bf16.mxu0 %v4658
    %4722 = vmatpush1.bf16.msra.mxu0 %v4657
    %4723 = vmatprep.subr.bf16.mxu0 %v4660
    %4724 = vmatpush1.bf16.msra.mxu0 %v4659
    %4725 = vmatprep.subr.bf16.mxu0 %v4662
    %4726 = vmatpush1.bf16.msra.mxu0 %v4661
    %4727 = vmatprep.subr.bf16.mxu0 %v4664
    %4728 = vmatpush1.bf16.msra.mxu0 %v4663
    %4729 = vmatprep.subr.bf16.mxu0 %v4666
    %4730 = vmatpush1.bf16.msra.mxu0 %v4665
    %4731 = vmatprep.subr.bf16.mxu0 %v4668
    %4732 = vmatpush1.bf16.msra.mxu0 %v4667
    %4733 = vmatprep.subr.bf16.mxu0 %v4670
    %4734 = vmatpush1.bf16.msra.mxu0 %v4669
    %4735 = vmatprep.subr.bf16.mxu0 %v4672
    %4736 = vmatpush1.bf16.msra.mxu0 %v4671
    %4737 = vmatprep.mubr.bf16.mxu0 %v4424
    %4738 = vmatmul.mubr.bf16.gmra.mrb[0].mxu0 %v4423
    %v4739 = vpop.f32.mrb[0].mxu0
    %v4740 = vadd.f32 0.0, %v4739
    %v4741 = vpop.f32.mrb[0].mxu0
    %v4742 = vadd.f32 0.0, %v4741
    %v4743 = vpop.f32.mrb[0].mxu0
    %v4744 = vadd.f32 0.0, %v4743
    %v4745 = vpop.f32.mrb[0].mxu0
    %v4746 = vadd.f32 0.0, %v4745
    %4747 = vdwg.mxu0
    %v4780 = vunpack.c.l.b16 %v4481
    %v4781 = vunpack.c.h.b16 %v4481
    %v4782 = vunpack.c.l.b16 %v4482
    %v4783 = vunpack.c.h.b16 %v4482
    %v4784 = vunpack.c.l.b16 %v4483
    %v4785 = vunpack.c.h.b16 %v4483
    %v4786 = vunpack.c.l.b16 %v4484
    %v4787 = vunpack.c.h.b16 %v4484
    %v4788 = vunpack.c.l.b16 %v4485
    %v4789 = vunpack.c.h.b16 %v4485
    %v4790 = vunpack.c.l.b16 %v4486
    %v4791 = vunpack.c.h.b16 %v4486
    %v4792 = vunpack.c.l.b16 %v4487
    %v4793 = vunpack.c.h.b16 %v4487
    %v4794 = vunpack.c.l.b16 %v4488
    %v4795 = vunpack.c.h.b16 %v4488
    %v4796 = vunpack.c.l.b16 %v4489
    %v4797 = vunpack.c.h.b16 %v4489
    %v4798 = vunpack.c.l.b16 %v4490
    %v4799 = vunpack.c.h.b16 %v4490
    %v4800 = vunpack.c.l.b16 %v4491
    %v4801 = vunpack.c.h.b16 %v4491
    %v4802 = vunpack.c.l.b16 %v4492
    %v4803 = vunpack.c.h.b16 %v4492
    %v4804 = vunpack.c.l.b16 %v4493
    %v4805 = vunpack.c.h.b16 %v4493
    %v4806 = vunpack.c.l.b16 %v4494
    %v4807 = vunpack.c.h.b16 %v4494
    %v4808 = vunpack.c.l.b16 %v4495
    %v4809 = vunpack.c.h.b16 %v4495
    %v4810 = vunpack.c.l.b16 %v4496
    %v4811 = vunpack.c.h.b16 %v4496
    %v4812 = vunpack.c.l.b16 %v4497
    %v4813 = vunpack.c.h.b16 %v4497
    %v4814 = vunpack.c.l.b16 %v4498
    %v4815 = vunpack.c.h.b16 %v4498
    %v4816 = vunpack.c.l.b16 %v4499
    %v4817 = vunpack.c.h.b16 %v4499
    %v4818 = vunpack.c.l.b16 %v4500
    %v4819 = vunpack.c.h.b16 %v4500
    %v4820 = vunpack.c.l.b16 %v4501
    %v4821 = vunpack.c.h.b16 %v4501
    %v4822 = vunpack.c.l.b16 %v4502
    %v4823 = vunpack.c.h.b16 %v4502
    %v4824 = vunpack.c.l.b16 %v4503
    %v4825 = vunpack.c.h.b16 %v4503
    %v4826 = vunpack.c.l.b16 %v4504
    %v4827 = vunpack.c.h.b16 %v4504
    %v4828 = vunpack.c.l.b16 %v4505
    %v4829 = vunpack.c.h.b16 %v4505
    %v4830 = vunpack.c.l.b16 %v4506
    %v4831 = vunpack.c.h.b16 %v4506
    %v4832 = vunpack.c.l.b16 %v4507
    %v4833 = vunpack.c.h.b16 %v4507
    %v4834 = vunpack.c.l.b16 %v4508
    %v4835 = vunpack.c.h.b16 %v4508
    %v4836 = vunpack.c.l.b16 %v4509
    %v4837 = vunpack.c.h.b16 %v4509
    %v4838 = vunpack.c.l.b16 %v4510
    %v4839 = vunpack.c.h.b16 %v4510
    %v4840 = vunpack.c.l.b16 %v4511
    %v4841 = vunpack.c.h.b16 %v4511
    %v4842 = vunpack.c.l.b16 %v4512
    %v4843 = vunpack.c.h.b16 %v4512
    %v4844 = vpack.c.b16 %v4782, %v4780
    %v4845 = vpack.c.b16 %v4783, %v4781
    %v4846 = vpack.c.b16 %v4786, %v4784
    %v4847 = vpack.c.b16 %v4787, %v4785
    %v4848 = vpack.c.b16 %v4790, %v4788
    %v4849 = vpack.c.b16 %v4791, %v4789
    %v4850 = vpack.c.b16 %v4794, %v4792
    %v4851 = vpack.c.b16 %v4795, %v4793
    %v4852 = vpack.c.b16 %v4798, %v4796
    %v4853 = vpack.c.b16 %v4799, %v4797
    %v4854 = vpack.c.b16 %v4802, %v4800
    %v4855 = vpack.c.b16 %v4803, %v4801
    %v4856 = vpack.c.b16 %v4806, %v4804
    %v4857 = vpack.c.b16 %v4807, %v4805
    %v4858 = vpack.c.b16 %v4810, %v4808
    %v4859 = vpack.c.b16 %v4811, %v4809
    %v4860 = vpack.c.b16 %v4814, %v4812
    %v4861 = vpack.c.b16 %v4815, %v4813
    %v4862 = vpack.c.b16 %v4818, %v4816
    %v4863 = vpack.c.b16 %v4819, %v4817
    %v4864 = vpack.c.b16 %v4822, %v4820
    %v4865 = vpack.c.b16 %v4823, %v4821
    %v4866 = vpack.c.b16 %v4826, %v4824
    %v4867 = vpack.c.b16 %v4827, %v4825
    %v4868 = vpack.c.b16 %v4830, %v4828
    %v4869 = vpack.c.b16 %v4831, %v4829
    %v4870 = vpack.c.b16 %v4834, %v4832
    %v4871 = vpack.c.b16 %v4835, %v4833
    %v4872 = vpack.c.b16 %v4838, %v4836
    %v4873 = vpack.c.b16 %v4839, %v4837
    %v4874 = vpack.c.b16 %v4842, %v4840
    %v4875 = vpack.c.b16 %v4843, %v4841
    %4908 = vmatprep.subr.bf16.mxu0 %v4845
    %4909 = vmatpush1.bf16.msra.mxu0 %v4844
    %4910 = vmatprep.subr.bf16.mxu0 %v4847
    %4911 = vmatpush1.bf16.msra.mxu0 %v4846
    %4912 = vmatprep.subr.bf16.mxu0 %v4849
    %4913 = vmatpush1.bf16.msra.mxu0 %v4848
    %4914 = vmatprep.subr.bf16.mxu0 %v4851
    %4915 = vmatpush1.bf16.msra.mxu0 %v4850
    %4916 = vmatprep.subr.bf16.mxu0 %v4853
    %4917 = vmatpush1.bf16.msra.mxu0 %v4852
    %4918 = vmatprep.subr.bf16.mxu0 %v4855
    %4919 = vmatpush1.bf16.msra.mxu0 %v4854
    %4920 = vmatprep.subr.bf16.mxu0 %v4857
    %4921 = vmatpush1.bf16.msra.mxu0 %v4856
    %4922 = vmatprep.subr.bf16.mxu0 %v4859
    %4923 = vmatpush1.bf16.msra.mxu0 %v4858
    %4924 = vmatprep.subr.bf16.mxu0 %v4861
    %4925 = vmatpush1.bf16.msra.mxu0 %v4860
    %4926 = vmatprep.subr.bf16.mxu0 %v4863
    %4927 = vmatpush1.bf16.msra.mxu0 %v4862
    %4928 = vmatprep.subr.bf16.mxu0 %v4865
    %4929 = vmatpush1.bf16.msra.mxu0 %v4864
    %4930 = vmatprep.subr.bf16.mxu0 %v4867
    %4931 = vmatpush1.bf16.msra.mxu0 %v4866
    %4932 = vmatprep.subr.bf16.mxu0 %v4869
    %4933 = vmatpush1.bf16.msra.mxu0 %v4868
    %4934 = vmatprep.subr.bf16.mxu0 %v4871
    %4935 = vmatpush1.bf16.msra.mxu0 %v4870
    %4936 = vmatprep.subr.bf16.mxu0 %v4873
    %4937 = vmatpush1.bf16.msra.mxu0 %v4872
    %4938 = vmatprep.subr.bf16.mxu0 %v4875
    %4939 = vmatpush1.bf16.msra.mxu0 %v4874
    %4940 = vmatprep.mubr.bf16.mxu0 %v4480
    %4941 = vmatmul.mubr.bf16.gmra.mrb[0].mxu0 %v4479
    %v4942 = vpop.f32.mrb[0].mxu0
    %v4943 = vadd.f32 %v4740, %v4942
    %v4944 = vpop.f32.mrb[0].mxu0
    %v4945 = vadd.f32 %v4742, %v4944
    %v4946 = vpop.f32.mrb[0].mxu0
    %v4947 = vadd.f32 %v4744, %v4946
    %v4948 = vpop.f32.mrb[0].mxu0
    %v4949 = vadd.f32 %v4746, %v4948
    %4950 = vdwg.mxu0
    %v4951 = vld [vmem:[#allocation29] sm:$0xf]
    %v4952 = vld [vmem:[#allocation29 + $0x4] sm:$0xf]
    %v4955 = vunpack.c.l.b16 %v4951
    %v4956 = vunpack.c.l.b16 %v4952
    %v4957 = vpack.c.b16 %v4956, %v4955
    %v4959 = vsel %vm4432, %v4957, 0
    %4961 = vmatprep.subr.bf16.mxu0 %v4424
    %4962 = vmatpush1.bf16.msra.mxu0 %v4423
    %4963 = vmatprep.subr.bf16.mxu0 0
    %4964 = vmatpush1.bf16.msra.mxu0 0
    %4965 = vmatprep.subr.bf16.mxu0 0
    %4966 = vmatpush1.bf16.msra.mxu0 0
    %4967 = vmatprep.subr.bf16.mxu0 0
    %4968 = vmatpush1.bf16.msra.mxu0 0
    %4969 = vmatprep.subr.bf16.mxu0 0
    %4970 = vmatpush1.bf16.msra.mxu0 0
    %4971 = vmatprep.subr.bf16.mxu0 0
    %4972 = vmatpush1.bf16.msra.mxu0 0
    %4973 = vmatprep.subr.bf16.mxu0 0
    %4974 = vmatpush1.bf16.msra.mxu0 0
    %4975 = vmatprep.subr.bf16.mxu0 0
    %4976 = vmatpush1.bf16.msra.mxu0 0
    %4977 = vmatprep.subr.bf16.mxu0 0
    %4978 = vmatpush1.bf16.msra.mxu0 0
    %4979 = vmatprep.subr.bf16.mxu0 0
    %4980 = vmatpush1.bf16.msra.mxu0 0
    %4981 = vmatprep.subr.bf16.mxu0 0
    %4982 = vmatpush1.bf16.msra.mxu0 0
    %4983 = vmatprep.subr.bf16.mxu0 0
    %4984 = vmatpush1.bf16.msra.mxu0 0
    %4985 = vmatprep.subr.bf16.mxu0 0
    %4986 = vmatpush1.bf16.msra.mxu0 0
    %4987 = vmatprep.subr.bf16.mxu0 0
    %4988 = vmatpush1.bf16.msra.mxu0 0
    %4989 = vmatprep.subr.bf16.mxu0 0
    %4990 = vmatpush1.bf16.msra.mxu0 0
    %4991 = vmatprep.subr.bf16.mxu0 0
    %4992 = vmatpush1.bf16.msra.mxu0 0
    %4993 = vmatprep.mubr.bf16.mxu0 0
    %4994 = vmatmul.mubr.bf16.gmra.mrb[0].mxu0 %v4959
    %v4995 = vpop.f32.mrb[0].mxu0
    %v4996 = vadd.f32 0.0, %v4995
    %v4997 = vpop.f32.mrb[0].mxu0
    %v4998 = vadd.f32 0.0, %v4997
    %v4999 = vpop.f32.mrb[0].mxu0
    %v5000 = vadd.f32 0.0, %v4999
    %v5001 = vpop.f32.mrb[0].mxu0
    %v5002 = vadd.f32 0.0, %v5001
    %5003 = vdwg.mxu0
    %v5004 = vpack.c.bf16 %v5000, %v4996
    %v5005 = vpack.c.bf16 %v5002, %v4998
    %v5006 = vld [vmem:[#allocation34] sm:$0xff]
    %v5007 = vld [vmem:[#allocation34 + $0x8] sm:$0xff]
    %v5008 = vld [vmem:[#allocation34 + $0x10] sm:$0xff]
    %v5009 = vld [vmem:[#allocation34 + $0x18] sm:$0xff]
    %v5010 = vld [vmem:[#allocation34 + $0x20] sm:$0xff]
    %v5011 = vld [vmem:[#allocation34 + $0x28] sm:$0xff]
    %v5012 = vld [vmem:[#allocation34 + $0x30] sm:$0xff]
    %v5013 = vld [vmem:[#allocation34 + $0x38] sm:$0xff]
    %v5014 = vld [vmem:[#allocation34 + $0x40] sm:$0xff]
    %v5015 = vld [vmem:[#allocation34 + $0x48] sm:$0xff]
    %v5016 = vld [vmem:[#allocation34 + $0x50] sm:$0xff]
    %v5017 = vld [vmem:[#allocation34 + $0x58] sm:$0xff]
    %v5018 = vld [vmem:[#allocation34 + $0x60] sm:$0xff]
    %v5019 = vld [vmem:[#allocation34 + $0x68] sm:$0xff]
    %v5020 = vld [vmem:[#allocation34 + $0x70] sm:$0xff]
    %v5021 = vld [vmem:[#allocation34 + $0x78] sm:$0xff]
    %v5022 = vld [vmem:[#allocation34 + $0x80] sm:$0xff]
    %v5023 = vld [vmem:[#allocation34 + $0x88] sm:$0xff]
    %v5024 = vld [vmem:[#allocation34 + $0x90] sm:$0xff]
    %v5025 = vld [vmem:[#allocation34 + $0x98] sm:$0xff]
    %v5026 = vld [vmem:[#allocation34 + $0xa0] sm:$0xff]
    %v5027 = vld [vmem:[#allocation34 + $0xa8] sm:$0xff]
    %v5028 = vld [vmem:[#allocation34 + $0xb0] sm:$0xff]
    %v5029 = vld [vmem:[#allocation34 + $0xb8] sm:$0xff]
    %v5030 = vld [vmem:[#allocation34 + $0xc0] sm:$0xff]
    %v5031 = vld [vmem:[#allocation34 + $0xc8] sm:$0xff]
    %v5032 = vld [vmem:[#allocation34 + $0xd0] sm:$0xff]
    %v5033 = vld [vmem:[#allocation34 + $0xd8] sm:$0xff]
    %v5034 = vld [vmem:[#allocation34 + $0xe0] sm:$0xff]
    %v5035 = vld [vmem:[#allocation34 + $0xe8] sm:$0xff]
    %v5036 = vld [vmem:[#allocation34 + $0xf0] sm:$0xff]
    %v5037 = vld [vmem:[#allocation34 + $0xf8] sm:$0xff]
    %v5070 = vunpack.c.l.b16 %v5006
    %v5071 = vunpack.c.h.b16 %v5006
    %v5072 = vunpack.c.l.b16 %v5007
    %v5073 = vunpack.c.h.b16 %v5007
    %v5074 = vunpack.c.l.b16 %v5008
    %v5075 = vunpack.c.h.b16 %v5008
    %v5076 = vunpack.c.l.b16 %v5009
    %v5077 = vunpack.c.h.b16 %v5009
    %v5078 = vunpack.c.l.b16 %v5010
    %v5079 = vunpack.c.h.b16 %v5010
    %v5080 = vunpack.c.l.b16 %v5011
    %v5081 = vunpack.c.h.b16 %v5011
    %v5082 = vunpack.c.l.b16 %v5012
    %v5083 = vunpack.c.h.b16 %v5012
    %v5084 = vunpack.c.l.b16 %v5013
    %v5085 = vunpack.c.h.b16 %v5013
    %v5086 = vunpack.c.l.b16 %v5014
    %v5087 = vunpack.c.h.b16 %v5014
    %v5088 = vunpack.c.l.b16 %v5015
    %v5089 = vunpack.c.h.b16 %v5015
    %v5090 = vunpack.c.l.b16 %v5016
    %v5091 = vunpack.c.h.b16 %v5016
    %v5092 = vunpack.c.l.b16 %v5017
    %v5093 = vunpack.c.h.b16 %v5017
    %v5094 = vunpack.c.l.b16 %v5018
    %v5095 = vunpack.c.h.b16 %v5018
    %v5096 = vunpack.c.l.b16 %v5019
    %v5097 = vunpack.c.h.b16 %v5019
    %v5098 = vunpack.c.l.b16 %v5020
    %v5099 = vunpack.c.h.b16 %v5020
    %v5100 = vunpack.c.l.b16 %v5021
    %v5101 = vunpack.c.h.b16 %v5021
    %v5102 = vunpack.c.l.b16 %v5022
    %v5103 = vunpack.c.h.b16 %v5022
    %v5104 = vunpack.c.l.b16 %v5023
    %v5105 = vunpack.c.h.b16 %v5023
    %v5106 = vunpack.c.l.b16 %v5024
    %v5107 = vunpack.c.h.b16 %v5024
    %v5108 = vunpack.c.l.b16 %v5025
    %v5109 = vunpack.c.h.b16 %v5025
    %v5110 = vunpack.c.l.b16 %v5026
    %v5111 = vunpack.c.h.b16 %v5026
    %v5112 = vunpack.c.l.b16 %v5027
    %v5113 = vunpack.c.h.b16 %v5027
    %v5114 = vunpack.c.l.b16 %v5028
    %v5115 = vunpack.c.h.b16 %v5028
    %v5116 = vunpack.c.l.b16 %v5029
    %v5117 = vunpack.c.h.b16 %v5029
    %v5118 = vunpack.c.l.b16 %v5030
    %v5119 = vunpack.c.h.b16 %v5030
    %v5120 = vunpack.c.l.b16 %v5031
    %v5121 = vunpack.c.h.b16 %v5031
    %v5122 = vunpack.c.l.b16 %v5032
    %v5123 = vunpack.c.h.b16 %v5032
    %v5124 = vunpack.c.l.b16 %v5033
    %v5125 = vunpack.c.h.b16 %v5033
    %v5126 = vunpack.c.l.b16 %v5034
    %v5127 = vunpack.c.h.b16 %v5034
    %v5128 = vunpack.c.l.b16 %v5035
    %v5129 = vunpack.c.h.b16 %v5035
    %v5130 = vunpack.c.l.b16 %v5036
    %v5131 = vunpack.c.h.b16 %v5036
    %v5132 = vunpack.c.l.b16 %v5037
    %v5133 = vunpack.c.h.b16 %v5037
    %v5134 = vpack.c.b16 %v5072, %v5070
    %v5135 = vpack.c.b16 %v5073, %v5071
    %v5136 = vpack.c.b16 %v5076, %v5074
    %v5137 = vpack.c.b16 %v5077, %v5075
    %v5138 = vpack.c.b16 %v5080, %v5078
    %v5139 = vpack.c.b16 %v5081, %v5079
    %v5140 = vpack.c.b16 %v5084, %v5082
    %v5141 = vpack.c.b16 %v5085, %v5083
    %v5142 = vpack.c.b16 %v5088, %v5086
    %v5143 = vpack.c.b16 %v5089, %v5087
    %v5144 = vpack.c.b16 %v5092, %v5090
    %v5145 = vpack.c.b16 %v5093, %v5091
    %v5146 = vpack.c.b16 %v5096, %v5094
    %v5147 = vpack.c.b16 %v5097, %v5095
    %v5148 = vpack.c.b16 %v5100, %v5098
    %v5149 = vpack.c.b16 %v5101, %v5099
    %v5150 = vpack.c.b16 %v5104, %v5102
    %v5151 = vpack.c.b16 %v5105, %v5103
    %v5152 = vpack.c.b16 %v5108, %v5106
    %v5153 = vpack.c.b16 %v5109, %v5107
    %v5154 = vpack.c.b16 %v5112, %v5110
    %v5155 = vpack.c.b16 %v5113, %v5111
    %v5156 = vpack.c.b16 %v5116, %v5114
    %v5157 = vpack.c.b16 %v5117, %v5115
    %v5158 = vpack.c.b16 %v5120, %v5118
    %v5159 = vpack.c.b16 %v5121, %v5119
    %v5160 = vpack.c.b16 %v5124, %v5122
    %v5161 = vpack.c.b16 %v5125, %v5123
    %v5162 = vpack.c.b16 %v5128, %v5126
    %v5163 = vpack.c.b16 %v5129, %v5127
    %v5164 = vpack.c.b16 %v5132, %v5130
    %v5165 = vpack.c.b16 %v5133, %v5131
    %5198 = vmatprep.subr.bf16.mxu0 %v5135
    %5199 = vmatpush1.bf16.msra.mxu0 %v5134
    %5200 = vmatprep.subr.bf16.mxu0 %v5137
    %5201 = vmatpush1.bf16.msra.mxu0 %v5136
    %5202 = vmatprep.subr.bf16.mxu0 %v5139
    %5203 = vmatpush1.bf16.msra.mxu0 %v5138
    %5204 = vmatprep.subr.bf16.mxu0 %v5141
    %5205 = vmatpush1.bf16.msra.mxu0 %v5140
    %5206 = vmatprep.subr.bf16.mxu0 %v5143
    %5207 = vmatpush1.bf16.msra.mxu0 %v5142
    %5208 = vmatprep.subr.bf16.mxu0 %v5145
    %5209 = vmatpush1.bf16.msra.mxu0 %v5144
    %5210 = vmatprep.subr.bf16.mxu0 %v5147
    %5211 = vmatpush1.bf16.msra.mxu0 %v5146
    %5212 = vmatprep.subr.bf16.mxu0 %v5149
    %5213 = vmatpush1.bf16.msra.mxu0 %v5148
    %5214 = vmatprep.subr.bf16.mxu0 %v5151
    %5215 = vmatpush1.bf16.msra.mxu0 %v5150
    %5216 = vmatprep.subr.bf16.mxu0 %v5153
    %5217 = vmatpush1.bf16.msra.mxu0 %v5152
    %5218 = vmatprep.subr.bf16.mxu0 %v5155
    %5219 = vmatpush1.bf16.msra.mxu0 %v5154
    %5220 = vmatprep.subr.bf16.mxu0 %v5157
    %5221 = vmatpush1.bf16.msra.mxu0 %v5156
    %5222 = vmatprep.subr.bf16.mxu0 %v5159
    %5223 = vmatpush1.bf16.msra.mxu0 %v5158
    %5224 = vmatprep.subr.bf16.mxu0 %v5161
    %5225 = vmatpush1.bf16.msra.mxu0 %v5160
    %5226 = vmatprep.subr.bf16.mxu0 %v5163
    %5227 = vmatpush1.bf16.msra.mxu0 %v5162
    %5228 = vmatprep.subr.bf16.mxu0 %v5165
    %5229 = vmatpush1.bf16.msra.mxu0 %v5164
    %5230 = vmatprep.mubr.bf16.mxu0 %v5005
    %5231 = vmatmul.mubr.bf16.gmra.mrb[0].mxu0 %v5004
    %v5232 = vpop.f32.mrb[0].mxu0
    %v5233 = vadd.f32 0.0, %v5232
    %v5234 = vpop.f32.mrb[0].mxu0
    %v5235 = vadd.f32 0.0, %v5234
    %v5236 = vpop.f32.mrb[0].mxu0
    %v5237 = vadd.f32 0.0, %v5236
    %v5238 = vpop.f32.mrb[0].mxu0
    %v5239 = vadd.f32 0.0, %v5238
    %5240 = vdwg.mxu0
    %v5241 = vadd.f32 %v4943, %v5233
    %v5242 = vadd.f32 %v4945, %v5235
    %v5243 = vadd.f32 %v4947, %v5237
    %v5244 = vadd.f32 %v4949, %v5239
    %v5245 = vld [vmem:[#allocation35] sm:$0x3]
    %v5247 = vlaneseq
    %v5248 = vshrl.u32 %v5247, 7
    %v5249 = vsub.s32 0, %v5248
    %v5250 = vrot.slane %v5245, %v5249
    %v5251 = vlaneseq
    %v5252 = vshrl.u32 %v5251, 7
    %v5253 = vsub.s32 1, %v5252
    %v5254 = vrot.slane %v5245, %v5253
    %v5257 = vadd.f32 %v5241, %v5250
    %v5258 = vadd.f32 %v5242, %v5254
    %v5259 = vadd.f32 %v5243, %v5250
    %v5260 = vadd.f32 %v5244, %v5254
    %v5261 = vld [vmem:[#allocation37] sm:$0xf]
    %v5262 = vld [vmem:[#allocation37 + $0x4] sm:$0xf]
    %v5265 = vunpack.c.l.b16 %v5261
    %v5266 = vunpack.c.l.b16 %v5262
    %v5267 = vpack.c.b16 %v5266, %v5265
    %v5269 = vsel %vm767, %v5267, 0
    %5271 = vmatprep.subr.bf16.mxu0 %v3526
    %5272 = vmatpush1.bf16.msra.mxu0 %v3525
    %5273 = vmatprep.subr.bf16.mxu0 %v3528
    %5274 = vmatpush1.bf16.msra.mxu0 %v3527
    %5275 = vmatprep.subr.bf16.mxu0 0
    %5276 = vmatpush1.bf16.msra.mxu0 0
    %5277 = vmatprep.subr.bf16.mxu0 0
    %5278 = vmatpush1.bf16.msra.mxu0 0
    %5279 = vmatprep.subr.bf16.mxu0 0
    %5280 = vmatpush1.bf16.msra.mxu0 0
    %5281 = vmatprep.subr.bf16.mxu0 0
    %5282 = vmatpush1.bf16.msra.mxu0 0
    %5283 = vmatprep.subr.bf16.mxu0 0
    %5284 = vmatpush1.bf16.msra.mxu0 0
    %5285 = vmatprep.subr.bf16.mxu0 0
    %5286 = vmatpush1.bf16.msra.mxu0 0
    %5287 = vmatprep.subr.bf16.mxu0 0
    %5288 = vmatpush1.bf16.msra.mxu0 0
    %5289 = vmatprep.subr.bf16.mxu0 0
    %5290 = vmatpush1.bf16.msra.mxu0 0
    %5291 = vmatprep.subr.bf16.mxu0 0
    %5292 = vmatpush1.bf16.msra.mxu0 0
    %5293 = vmatprep.subr.bf16.mxu0 0
    %5294 = vmatpush1.bf16.msra.mxu0 0
    %5295 = vmatprep.subr.bf16.mxu0 0
    %5296 = vmatpush1.bf16.msra.mxu0 0
    %5297 = vmatprep.subr.bf16.mxu0 0
    %5298 = vmatpush1.bf16.msra.mxu0 0
    %5299 = vmatprep.subr.bf16.mxu0 0
    %5300 = vmatpush1.bf16.msra.mxu0 0
    %5301 = vmatprep.subr.bf16.mxu0 0
    %5302 = vmatpush1.bf16.msra.mxu0 0
    %5303 = vmatprep.mubr.bf16.mxu0 0
    %5304 = vmatmul.mubr.bf16.gmra.mrb[0].mxu0 %v5269
    %v5305 = vpop.f32.mrb[0].mxu0
    %v5306 = vadd.f32 0.0, %v5305
    %v5307 = vpop.f32.mrb[0].mxu0
    %v5308 = vadd.f32 0.0, %v5307
    %v5309 = vpop.f32.mrb[0].mxu0
    %v5310 = vadd.f32 0.0, %v5309
    %v5311 = vpop.f32.mrb[0].mxu0
    %v5312 = vadd.f32 0.0, %v5311
    %5313 = vdwg.mxu0
    %v5314 = vpack.c.bf16 %v5310, %v5306
    %v5315 = vpack.c.bf16 %v5312, %v5308
    %v5316 = vld [vmem:[#allocation38] sm:$0xff]
    %v5317 = vld [vmem:[#allocation38 + $0x8] sm:$0xff]
    %v5318 = vld [vmem:[#allocation38 + $0x10] sm:$0xff]
    %v5319 = vld [vmem:[#allocation38 + $0x18] sm:$0xff]
    %v5320 = vld [vmem:[#allocation38 + $0x20] sm:$0xff]
    %v5321 = vld [vmem:[#allocation38 + $0x28] sm:$0xff]
    %v5322 = vld [vmem:[#allocation38 + $0x30] sm:$0xff]
    %v5323 = vld [vmem:[#allocation38 + $0x38] sm:$0xff]
    %v5324 = vld [vmem:[#allocation38 + $0x40] sm:$0xff]
    %v5325 = vld [vmem:[#allocation38 + $0x48] sm:$0xff]
    %v5326 = vld [vmem:[#allocation38 + $0x50] sm:$0xff]
    %v5327 = vld [vmem:[#allocation38 + $0x58] sm:$0xff]
    %v5328 = vld [vmem:[#allocation38 + $0x60] sm:$0xff]
    %v5329 = vld [vmem:[#allocation38 + $0x68] sm:$0xff]
    %v5330 = vld [vmem:[#allocation38 + $0x70] sm:$0xff]
    %v5331 = vld [vmem:[#allocation38 + $0x78] sm:$0xff]
    %v5332 = vld [vmem:[#allocation38 + $0x80] sm:$0xff]
    %v5333 = vld [vmem:[#allocation38 + $0x88] sm:$0xff]
    %v5334 = vld [vmem:[#allocation38 + $0x90] sm:$0xff]
    %v5335 = vld [vmem:[#allocation38 + $0x98] sm:$0xff]
    %v5336 = vld [vmem:[#allocation38 + $0xa0] sm:$0xff]
    %v5337 = vld [vmem:[#allocation38 + $0xa8] sm:$0xff]
    %v5338 = vld [vmem:[#allocation38 + $0xb0] sm:$0xff]
    %v5339 = vld [vmem:[#allocation38 + $0xb8] sm:$0xff]
    %v5340 = vld [vmem:[#allocation38 + $0xc0] sm:$0xff]
    %v5341 = vld [vmem:[#allocation38 + $0xc8] sm:$0xff]
    %v5342 = vld [vmem:[#allocation38 + $0xd0] sm:$0xff]
    %v5343 = vld [vmem:[#allocation38 + $0xd8] sm:$0xff]
    %v5344 = vld [vmem:[#allocation38 + $0xe0] sm:$0xff]
    %v5345 = vld [vmem:[#allocation38 + $0xe8] sm:$0xff]
    %v5346 = vld [vmem:[#allocation38 + $0xf0] sm:$0xff]
    %v5347 = vld [vmem:[#allocation38 + $0xf8] sm:$0xff]
    %v5380 = vunpack.c.l.b16 %v5316
    %v5381 = vunpack.c.h.b16 %v5316
    %v5382 = vunpack.c.l.b16 %v5317
    %v5383 = vunpack.c.h.b16 %v5317
    %v5384 = vunpack.c.l.b16 %v5318
    %v5385 = vunpack.c.h.b16 %v5318
    %v5386 = vunpack.c.l.b16 %v5319
    %v5387 = vunpack.c.h.b16 %v5319
    %v5388 = vunpack.c.l.b16 %v5320
    %v5389 = vunpack.c.h.b16 %v5320
    %v5390 = vunpack.c.l.b16 %v5321
    %v5391 = vunpack.c.h.b16 %v5321
    %v5392 = vunpack.c.l.b16 %v5322
    %v5393 = vunpack.c.h.b16 %v5322
    %v5394 = vunpack.c.l.b16 %v5323
    %v5395 = vunpack.c.h.b16 %v5323
    %v5396 = vunpack.c.l.b16 %v5324
    %v5397 = vunpack.c.h.b16 %v5324
    %v5398 = vunpack.c.l.b16 %v5325
    %v5399 = vunpack.c.h.b16 %v5325
    %v5400 = vunpack.c.l.b16 %v5326
    %v5401 = vunpack.c.h.b16 %v5326
    %v5402 = vunpack.c.l.b16 %v5327
    %v5403 = vunpack.c.h.b16 %v5327
    %v5404 = vunpack.c.l.b16 %v5328
    %v5405 = vunpack.c.h.b16 %v5328
    %v5406 = vunpack.c.l.b16 %v5329
    %v5407 = vunpack.c.h.b16 %v5329
    %v5408 = vunpack.c.l.b16 %v5330
    %v5409 = vunpack.c.h.b16 %v5330
    %v5410 = vunpack.c.l.b16 %v5331
    %v5411 = vunpack.c.h.b16 %v5331
    %v5412 = vunpack.c.l.b16 %v5332
    %v5413 = vunpack.c.h.b16 %v5332
    %v5414 = vunpack.c.l.b16 %v5333
    %v5415 = vunpack.c.h.b16 %v5333
    %v5416 = vunpack.c.l.b16 %v5334
    %v5417 = vunpack.c.h.b16 %v5334
    %v5418 = vunpack.c.l.b16 %v5335
    %v5419 = vunpack.c.h.b16 %v5335
    %v5420 = vunpack.c.l.b16 %v5336
    %v5421 = vunpack.c.h.b16 %v5336
    %v5422 = vunpack.c.l.b16 %v5337
    %v5423 = vunpack.c.h.b16 %v5337
    %v5424 = vunpack.c.l.b16 %v5338
    %v5425 = vunpack.c.h.b16 %v5338
    %v5426 = vunpack.c.l.b16 %v5339
    %v5427 = vunpack.c.h.b16 %v5339
    %v5428 = vunpack.c.l.b16 %v5340
    %v5429 = vunpack.c.h.b16 %v5340
    %v5430 = vunpack.c.l.b16 %v5341
    %v5431 = vunpack.c.h.b16 %v5341
    %v5432 = vunpack.c.l.b16 %v5342
    %v5433 = vunpack.c.h.b16 %v5342
    %v5434 = vunpack.c.l.b16 %v5343
    %v5435 = vunpack.c.h.b16 %v5343
    %v5436 = vunpack.c.l.b16 %v5344
    %v5437 = vunpack.c.h.b16 %v5344
    %v5438 = vunpack.c.l.b16 %v5345
    %v5439 = vunpack.c.h.b16 %v5345
    %v5440 = vunpack.c.l.b16 %v5346
    %v5441 = vunpack.c.h.b16 %v5346
    %v5442 = vunpack.c.l.b16 %v5347
    %v5443 = vunpack.c.h.b16 %v5347
    %v5444 = vpack.c.b16 %v5382, %v5380
    %v5445 = vpack.c.b16 %v5383, %v5381
    %v5446 = vpack.c.b16 %v5386, %v5384
    %v5447 = vpack.c.b16 %v5387, %v5385
    %v5448 = vpack.c.b16 %v5390, %v5388
    %v5449 = vpack.c.b16 %v5391, %v5389
    %v5450 = vpack.c.b16 %v5394, %v5392
    %v5451 = vpack.c.b16 %v5395, %v5393
    %v5452 = vpack.c.b16 %v5398, %v5396
    %v5453 = vpack.c.b16 %v5399, %v5397
    %v5454 = vpack.c.b16 %v5402, %v5400
    %v5455 = vpack.c.b16 %v5403, %v5401
    %v5456 = vpack.c.b16 %v5406, %v5404
    %v5457 = vpack.c.b16 %v5407, %v5405
    %v5458 = vpack.c.b16 %v5410, %v5408
    %v5459 = vpack.c.b16 %v5411, %v5409
    %v5460 = vpack.c.b16 %v5414, %v5412
    %v5461 = vpack.c.b16 %v5415, %v5413
    %v5462 = vpack.c.b16 %v5418, %v5416
    %v5463 = vpack.c.b16 %v5419, %v5417
    %v5464 = vpack.c.b16 %v5422, %v5420
    %v5465 = vpack.c.b16 %v5423, %v5421
    %v5466 = vpack.c.b16 %v5426, %v5424
    %v5467 = vpack.c.b16 %v5427, %v5425
    %v5468 = vpack.c.b16 %v5430, %v5428
    %v5469 = vpack.c.b16 %v5431, %v5429
    %v5470 = vpack.c.b16 %v5434, %v5432
    %v5471 = vpack.c.b16 %v5435, %v5433
    %v5472 = vpack.c.b16 %v5438, %v5436
    %v5473 = vpack.c.b16 %v5439, %v5437
    %v5474 = vpack.c.b16 %v5442, %v5440
    %v5475 = vpack.c.b16 %v5443, %v5441
    %5508 = vmatprep.subr.bf16.mxu0 %v5445
    %5509 = vmatpush1.bf16.msra.mxu0 %v5444
    %5510 = vmatprep.subr.bf16.mxu0 %v5447
    %5511 = vmatpush1.bf16.msra.mxu0 %v5446
    %5512 = vmatprep.subr.bf16.mxu0 %v5449
    %5513 = vmatpush1.bf16.msra.mxu0 %v5448
    %5514 = vmatprep.subr.bf16.mxu0 %v5451
    %5515 = vmatpush1.bf16.msra.mxu0 %v5450
    %5516 = vmatprep.subr.bf16.mxu0 %v5453
    %5517 = vmatpush1.bf16.msra.mxu0 %v5452
    %5518 = vmatprep.subr.bf16.mxu0 %v5455
    %5519 = vmatpush1.bf16.msra.mxu0 %v5454
    %5520 = vmatprep.subr.bf16.mxu0 %v5457
    %5521 = vmatpush1.bf16.msra.mxu0 %v5456
    %5522 = vmatprep.subr.bf16.mxu0 %v5459
    %5523 = vmatpush1.bf16.msra.mxu0 %v5458
    %5524 = vmatprep.subr.bf16.mxu0 %v5461
    %5525 = vmatpush1.bf16.msra.mxu0 %v5460
    %5526 = vmatprep.subr.bf16.mxu0 %v5463
    %5527 = vmatpush1.bf16.msra.mxu0 %v5462
    %5528 = vmatprep.subr.bf16.mxu0 %v5465
    %5529 = vmatpush1.bf16.msra.mxu0 %v5464
    %5530 = vmatprep.subr.bf16.mxu0 %v5467
    %5531 = vmatpush1.bf16.msra.mxu0 %v5466
    %5532 = vmatprep.subr.bf16.mxu0 %v5469
    %5533 = vmatpush1.bf16.msra.mxu0 %v5468
    %5534 = vmatprep.subr.bf16.mxu0 %v5471
    %5535 = vmatpush1.bf16.msra.mxu0 %v5470
    %5536 = vmatprep.subr.bf16.mxu0 %v5473
    %5537 = vmatpush1.bf16.msra.mxu0 %v5472
    %5538 = vmatprep.subr.bf16.mxu0 %v5475
    %5539 = vmatpush1.bf16.msra.mxu0 %v5474
    %5540 = vmatprep.mubr.bf16.mxu0 %v5315
    %5541 = vmatmul.mubr.bf16.gmra.mrb[0].mxu0 %v5314
    %v5542 = vpop.f32.mrb[0].mxu0
    %v5543 = vadd.f32 0.0, %v5542
    %v5544 = vpop.f32.mrb[0].mxu0
    %v5545 = vadd.f32 0.0, %v5544
    %v5546 = vpop.f32.mrb[0].mxu0
    %v5547 = vadd.f32 0.0, %v5546
    %v5548 = vpop.f32.mrb[0].mxu0
    %v5549 = vadd.f32 0.0, %v5548
    %5550 = vdwg.mxu0
    %v5551 = vadd.f32 %v5257, %v5543
    %v5552 = vadd.f32 %v5258, %v5545
    %v5553 = vadd.f32 %v5259, %v5547
    %v5554 = vadd.f32 %v5260, %v5549
    %v5555 = vmax.f32 %v5551, 0.0
    %v5556 = vmax.f32 %v5552, 0.0
    %v5557 = vmax.f32 %v5553, 0.0
    %v5558 = vmax.f32 %v5554, 0.0
    %v5559 = vpack.c.bf16 %v5557, %v5555
    %v5560 = vpack.c.bf16 %v5558, %v5556
    %v5561 = vld [vmem:[#allocation40] sm:$0xf]
    %v5563 = vsel %vm4432, %v5561, 0
    %5565 = vmatprep.subr.bf16.mxu0 %v5560
    %5566 = vmatpush1.bf16.msra.mxu0 %v5559
    %5567 = vmatprep.subr.bf16.mxu0 0
    %5568 = vmatpush1.bf16.msra.mxu0 0
    %5569 = vmatprep.subr.bf16.mxu0 0
    %5570 = vmatpush1.bf16.msra.mxu0 0
    %5571 = vmatprep.subr.bf16.mxu0 0
    %5572 = vmatpush1.bf16.msra.mxu0 0
    %5573 = vmatprep.subr.bf16.mxu0 0
    %5574 = vmatpush1.bf16.msra.mxu0 0
    %5575 = vmatprep.subr.bf16.mxu0 0
    %5576 = vmatpush1.bf16.msra.mxu0 0
    %5577 = vmatprep.subr.bf16.mxu0 0
    %5578 = vmatpush1.bf16.msra.mxu0 0
    %5579 = vmatprep.subr.bf16.mxu0 0
    %5580 = vmatpush1.bf16.msra.mxu0 0
    %5581 = vmatprep.subr.bf16.mxu0 0
    %5582 = vmatpush1.bf16.msra.mxu0 0
    %5583 = vmatprep.subr.bf16.mxu0 0
    %5584 = vmatpush1.bf16.msra.mxu0 0
    %5585 = vmatprep.subr.bf16.mxu0 0
    %5586 = vmatpush1.bf16.msra.mxu0 0
    %5587 = vmatprep.subr.bf16.mxu0 0
    %5588 = vmatpush1.bf16.msra.mxu0 0
    %5589 = vmatprep.subr.bf16.mxu0 0
    %5590 = vmatpush1.bf16.msra.mxu0 0
    %5591 = vmatprep.subr.bf16.mxu0 0
    %5592 = vmatpush1.bf16.msra.mxu0 0
    %5593 = vmatprep.subr.bf16.mxu0 0
    %5594 = vmatpush1.bf16.msra.mxu0 0
    %5595 = vmatprep.subr.bf16.mxu0 0
    %5596 = vmatpush1.bf16.msra.mxu0 0
    %5597 = vmatprep.mubr.bf16.mxu0 0
    %5598 = vmatmul.mubr.bf16.gmra.mrb[0].mxu0 %v5563
    %v5599 = vpop.f32.mrb[0].mxu0
    %v5600 = vadd.f32 0.0, %v5599
    %v5601 = vpop.f32.mrb[0].mxu0
    %v5602 = vadd.f32 0.0, %v5601
    %v5603 = vpop.f32.mrb[0].mxu0
    %v5604 = vpop.f32.mrb[0].mxu0
    %5605 = vdwg.mxu0
    %v5606 = vpack.c.bf16 %v5600, %v5600
    %v5607 = vpack.c.bf16 %v5602, %v5602
    %v5608 = vld [vmem:[#allocation44] sm:$0xff]
    %v5609 = vld [vmem:[#allocation44 + $0x8] sm:$0xff]
    %v5610 = vld [vmem:[#allocation44 + $0x10] sm:$0xff]
    %v5611 = vld [vmem:[#allocation44 + $0x18] sm:$0xff]
    %v5612 = vld [vmem:[#allocation44 + $0x20] sm:$0xff]
    %v5613 = vld [vmem:[#allocation44 + $0x28] sm:$0xff]
    %v5614 = vld [vmem:[#allocation44 + $0x30] sm:$0xff]
    %v5615 = vld [vmem:[#allocation44 + $0x38] sm:$0xff]
    %v5616 = vld [vmem:[#allocation44 + $0x40] sm:$0xff]
    %v5617 = vld [vmem:[#allocation44 + $0x48] sm:$0xff]
    %v5618 = vld [vmem:[#allocation44 + $0x50] sm:$0xff]
    %v5619 = vld [vmem:[#allocation44 + $0x58] sm:$0xff]
    %v5620 = vld [vmem:[#allocation44 + $0x60] sm:$0xff]
    %v5621 = vld [vmem:[#allocation44 + $0x68] sm:$0xff]
    %v5622 = vld [vmem:[#allocation44 + $0x70] sm:$0xff]
    %v5623 = vld [vmem:[#allocation44 + $0x78] sm:$0xff]
    %v5624 = vld [vmem:[#allocation44 + $0x80] sm:$0xff]
    %v5625 = vld [vmem:[#allocation44 + $0x88] sm:$0xff]
    %v5626 = vld [vmem:[#allocation44 + $0x90] sm:$0xff]
    %v5627 = vld [vmem:[#allocation44 + $0x98] sm:$0xff]
    %v5628 = vld [vmem:[#allocation44 + $0xa0] sm:$0xff]
    %v5629 = vld [vmem:[#allocation44 + $0xa8] sm:$0xff]
    %v5630 = vld [vmem:[#allocation44 + $0xb0] sm:$0xff]
    %v5631 = vld [vmem:[#allocation44 + $0xb8] sm:$0xff]
    %v5632 = vld [vmem:[#allocation44 + $0xc0] sm:$0xff]
    %v5633 = vld [vmem:[#allocation44 + $0xc8] sm:$0xff]
    %v5634 = vld [vmem:[#allocation44 + $0xd0] sm:$0xff]
    %v5635 = vld [vmem:[#allocation44 + $0xd8] sm:$0xff]
    %v5636 = vld [vmem:[#allocation44 + $0xe0] sm:$0xff]
    %v5637 = vld [vmem:[#allocation44 + $0xe8] sm:$0xff]
    %v5638 = vld [vmem:[#allocation44 + $0xf0] sm:$0xff]
    %v5639 = vld [vmem:[#allocation44 + $0xf8] sm:$0xff]
    %v5640 = vld [vmem:[#allocation41] sm:$0xf]
    %v5642 = vsel %vm4432, %v5640, 0
    %5644 = vmatprep.subr.bf16.mxu0 %v5560
    %5645 = vmatpush1.bf16.msra.mxu0 %v5559
    %5646 = vmatprep.subr.bf16.mxu0 0
    %5647 = vmatpush1.bf16.msra.mxu0 0
    %5648 = vmatprep.subr.bf16.mxu0 0
    %5649 = vmatpush1.bf16.msra.mxu0 0
    %5650 = vmatprep.subr.bf16.mxu0 0
    %5651 = vmatpush1.bf16.msra.mxu0 0
    %5652 = vmatprep.subr.bf16.mxu0 0
    %5653 = vmatpush1.bf16.msra.mxu0 0
    %5654 = vmatprep.subr.bf16.mxu0 0
    %5655 = vmatpush1.bf16.msra.mxu0 0
    %5656 = vmatprep.subr.bf16.mxu0 0
    %5657 = vmatpush1.bf16.msra.mxu0 0
    %5658 = vmatprep.subr.bf16.mxu0 0
    %5659 = vmatpush1.bf16.msra.mxu0 0
    %5660 = vmatprep.subr.bf16.mxu0 0
    %5661 = vmatpush1.bf16.msra.mxu0 0
    %5662 = vmatprep.subr.bf16.mxu0 0
    %5663 = vmatpush1.bf16.msra.mxu0 0
    %5664 = vmatprep.subr.bf16.mxu0 0
    %5665 = vmatpush1.bf16.msra.mxu0 0
    %5666 = vmatprep.subr.bf16.mxu0 0
    %5667 = vmatpush1.bf16.msra.mxu0 0
    %5668 = vmatprep.subr.bf16.mxu0 0
    %5669 = vmatpush1.bf16.msra.mxu0 0
    %5670 = vmatprep.subr.bf16.mxu0 0
    %5671 = vmatpush1.bf16.msra.mxu0 0
    %5672 = vmatprep.subr.bf16.mxu0 0
    %5673 = vmatpush1.bf16.msra.mxu0 0
    %5674 = vmatprep.subr.bf16.mxu0 0
    %5675 = vmatpush1.bf16.msra.mxu0 0
    %5676 = vmatprep.mubr.bf16.mxu0 0
    %5677 = vmatmul.mubr.bf16.gmra.mrb[0].mxu0 %v5642
    %v5678 = vpop.f32.mrb[0].mxu0
    %v5679 = vadd.f32 0.0, %v5678
    %v5680 = vpop.f32.mrb[0].mxu0
    %v5681 = vadd.f32 0.0, %v5680
    %v5682 = vpop.f32.mrb[0].mxu0
    %v5683 = vpop.f32.mrb[0].mxu0
    %5684 = vdwg.mxu0
    %v5685 = vpack.c.bf16 %v5679, %v5679
    %v5686 = vpack.c.bf16 %v5681, %v5681
    %v5687 = vld [vmem:[#allocation46] sm:$0xff]
    %v5688 = vld [vmem:[#allocation46 + $0x8] sm:$0xff]
    %v5689 = vld [vmem:[#allocation46 + $0x10] sm:$0xff]
    %v5690 = vld [vmem:[#allocation46 + $0x18] sm:$0xff]
    %v5691 = vld [vmem:[#allocation46 + $0x20] sm:$0xff]
    %v5692 = vld [vmem:[#allocation46 + $0x28] sm:$0xff]
    %v5693 = vld [vmem:[#allocation46 + $0x30] sm:$0xff]
    %v5694 = vld [vmem:[#allocation46 + $0x38] sm:$0xff]
    %v5695 = vld [vmem:[#allocation46 + $0x40] sm:$0xff]
    %v5696 = vld [vmem:[#allocation46 + $0x48] sm:$0xff]
    %v5697 = vld [vmem:[#allocation46 + $0x50] sm:$0xff]
    %v5698 = vld [vmem:[#allocation46 + $0x58] sm:$0xff]
    %v5699 = vld [vmem:[#allocation46 + $0x60] sm:$0xff]
    %v5700 = vld [vmem:[#allocation46 + $0x68] sm:$0xff]
    %v5701 = vld [vmem:[#allocation46 + $0x70] sm:$0xff]
    %v5702 = vld [vmem:[#allocation46 + $0x78] sm:$0xff]
    %v5703 = vld [vmem:[#allocation46 + $0x80] sm:$0xff]
    %v5704 = vld [vmem:[#allocation46 + $0x88] sm:$0xff]
    %v5705 = vld [vmem:[#allocation46 + $0x90] sm:$0xff]
    %v5706 = vld [vmem:[#allocation46 + $0x98] sm:$0xff]
    %v5707 = vld [vmem:[#allocation46 + $0xa0] sm:$0xff]
    %v5708 = vld [vmem:[#allocation46 + $0xa8] sm:$0xff]
    %v5709 = vld [vmem:[#allocation46 + $0xb0] sm:$0xff]
    %v5710 = vld [vmem:[#allocation46 + $0xb8] sm:$0xff]
    %v5711 = vld [vmem:[#allocation46 + $0xc0] sm:$0xff]
    %v5712 = vld [vmem:[#allocation46 + $0xc8] sm:$0xff]
    %v5713 = vld [vmem:[#allocation46 + $0xd0] sm:$0xff]
    %v5714 = vld [vmem:[#allocation46 + $0xd8] sm:$0xff]
    %v5715 = vld [vmem:[#allocation46 + $0xe0] sm:$0xff]
    %v5716 = vld [vmem:[#allocation46 + $0xe8] sm:$0xff]
    %v5717 = vld [vmem:[#allocation46 + $0xf0] sm:$0xff]
    %v5718 = vld [vmem:[#allocation46 + $0xf8] sm:$0xff]
    %v5751 = vunpack.c.l.b16 %v5687
    %v5752 = vunpack.c.h.b16 %v5687
    %v5753 = vunpack.c.l.b16 %v5688
    %v5754 = vunpack.c.h.b16 %v5688
    %v5755 = vunpack.c.l.b16 %v5689
    %v5756 = vunpack.c.h.b16 %v5689
    %v5757 = vunpack.c.l.b16 %v5690
    %v5758 = vunpack.c.h.b16 %v5690
    %v5759 = vunpack.c.l.b16 %v5691
    %v5760 = vunpack.c.h.b16 %v5691
    %v5761 = vunpack.c.l.b16 %v5692
    %v5762 = vunpack.c.h.b16 %v5692
    %v5763 = vunpack.c.l.b16 %v5693
    %v5764 = vunpack.c.h.b16 %v5693
    %v5765 = vunpack.c.l.b16 %v5694
    %v5766 = vunpack.c.h.b16 %v5694
    %v5767 = vunpack.c.l.b16 %v5695
    %v5768 = vunpack.c.h.b16 %v5695
    %v5769 = vunpack.c.l.b16 %v5696
    %v5770 = vunpack.c.h.b16 %v5696
    %v5771 = vunpack.c.l.b16 %v5697
    %v5772 = vunpack.c.h.b16 %v5697
    %v5773 = vunpack.c.l.b16 %v5698
    %v5774 = vunpack.c.h.b16 %v5698
    %v5775 = vunpack.c.l.b16 %v5699
    %v5776 = vunpack.c.h.b16 %v5699
    %v5777 = vunpack.c.l.b16 %v5700
    %v5778 = vunpack.c.h.b16 %v5700
    %v5779 = vunpack.c.l.b16 %v5701
    %v5780 = vunpack.c.h.b16 %v5701
    %v5781 = vunpack.c.l.b16 %v5702
    %v5782 = vunpack.c.h.b16 %v5702
    %v5783 = vunpack.c.l.b16 %v5703
    %v5784 = vunpack.c.h.b16 %v5703
    %v5785 = vunpack.c.l.b16 %v5704
    %v5786 = vunpack.c.h.b16 %v5704
    %v5787 = vunpack.c.l.b16 %v5705
    %v5788 = vunpack.c.h.b16 %v5705
    %v5789 = vunpack.c.l.b16 %v5706
    %v5790 = vunpack.c.h.b16 %v5706
    %v5791 = vunpack.c.l.b16 %v5707
    %v5792 = vunpack.c.h.b16 %v5707
    %v5793 = vunpack.c.l.b16 %v5708
    %v5794 = vunpack.c.h.b16 %v5708
    %v5795 = vunpack.c.l.b16 %v5709
    %v5796 = vunpack.c.h.b16 %v5709
    %v5797 = vunpack.c.l.b16 %v5710
    %v5798 = vunpack.c.h.b16 %v5710
    %v5799 = vunpack.c.l.b16 %v5711
    %v5800 = vunpack.c.h.b16 %v5711
    %v5801 = vunpack.c.l.b16 %v5712
    %v5802 = vunpack.c.h.b16 %v5712
    %v5803 = vunpack.c.l.b16 %v5713
    %v5804 = vunpack.c.h.b16 %v5713
    %v5805 = vunpack.c.l.b16 %v5714
    %v5806 = vunpack.c.h.b16 %v5714
    %v5807 = vunpack.c.l.b16 %v5715
    %v5808 = vunpack.c.h.b16 %v5715
    %v5809 = vunpack.c.l.b16 %v5716
    %v5810 = vunpack.c.h.b16 %v5716
    %v5811 = vunpack.c.l.b16 %v5717
    %v5812 = vunpack.c.h.b16 %v5717
    %v5813 = vunpack.c.l.b16 %v5718
    %v5814 = vunpack.c.h.b16 %v5718
    %v5815 = vpack.c.b16 %v5753, %v5751
    %v5816 = vpack.c.b16 %v5754, %v5752
    %v5817 = vpack.c.b16 %v5757, %v5755
    %v5818 = vpack.c.b16 %v5758, %v5756
    %v5819 = vpack.c.b16 %v5761, %v5759
    %v5820 = vpack.c.b16 %v5762, %v5760
    %v5821 = vpack.c.b16 %v5765, %v5763
    %v5822 = vpack.c.b16 %v5766, %v5764
    %v5823 = vpack.c.b16 %v5769, %v5767
    %v5824 = vpack.c.b16 %v5770, %v5768
    %v5825 = vpack.c.b16 %v5773, %v5771
    %v5826 = vpack.c.b16 %v5774, %v5772
    %v5827 = vpack.c.b16 %v5777, %v5775
    %v5828 = vpack.c.b16 %v5778, %v5776
    %v5829 = vpack.c.b16 %v5781, %v5779
    %v5830 = vpack.c.b16 %v5782, %v5780
    %v5831 = vpack.c.b16 %v5785, %v5783
    %v5832 = vpack.c.b16 %v5786, %v5784
    %v5833 = vpack.c.b16 %v5789, %v5787
    %v5834 = vpack.c.b16 %v5790, %v5788
    %v5835 = vpack.c.b16 %v5793, %v5791
    %v5836 = vpack.c.b16 %v5794, %v5792
    %v5837 = vpack.c.b16 %v5797, %v5795
    %v5838 = vpack.c.b16 %v5798, %v5796
    %v5839 = vpack.c.b16 %v5801, %v5799
    %v5840 = vpack.c.b16 %v5802, %v5800
    %v5841 = vpack.c.b16 %v5805, %v5803
    %v5842 = vpack.c.b16 %v5806, %v5804
    %v5843 = vpack.c.b16 %v5809, %v5807
    %v5844 = vpack.c.b16 %v5810, %v5808
    %v5845 = vpack.c.b16 %v5813, %v5811
    %v5846 = vpack.c.b16 %v5814, %v5812
    %5879 = vmatprep.subr.bf16.mxu0 %v5816
    %5880 = vmatpush1.bf16.msra.mxu0 %v5815
    %5881 = vmatprep.subr.bf16.mxu0 %v5818
    %5882 = vmatpush1.bf16.msra.mxu0 %v5817
    %5883 = vmatprep.subr.bf16.mxu0 %v5820
    %5884 = vmatpush1.bf16.msra.mxu0 %v5819
    %5885 = vmatprep.subr.bf16.mxu0 %v5822
    %5886 = vmatpush1.bf16.msra.mxu0 %v5821
    %5887 = vmatprep.subr.bf16.mxu0 %v5824
    %5888 = vmatpush1.bf16.msra.mxu0 %v5823
    %5889 = vmatprep.subr.bf16.mxu0 %v5826
    %5890 = vmatpush1.bf16.msra.mxu0 %v5825
    %5891 = vmatprep.subr.bf16.mxu0 %v5828
    %5892 = vmatpush1.bf16.msra.mxu0 %v5827
    %5893 = vmatprep.subr.bf16.mxu0 %v5830
    %5894 = vmatpush1.bf16.msra.mxu0 %v5829
    %5895 = vmatprep.subr.bf16.mxu0 %v5832
    %5896 = vmatpush1.bf16.msra.mxu0 %v5831
    %5897 = vmatprep.subr.bf16.mxu0 %v5834
    %5898 = vmatpush1.bf16.msra.mxu0 %v5833
    %5899 = vmatprep.subr.bf16.mxu0 %v5836
    %5900 = vmatpush1.bf16.msra.mxu0 %v5835
    %5901 = vmatprep.subr.bf16.mxu0 %v5838
    %5902 = vmatpush1.bf16.msra.mxu0 %v5837
    %5903 = vmatprep.subr.bf16.mxu0 %v5840
    %5904 = vmatpush1.bf16.msra.mxu0 %v5839
    %5905 = vmatprep.subr.bf16.mxu0 %v5842
    %5906 = vmatpush1.bf16.msra.mxu0 %v5841
    %5907 = vmatprep.subr.bf16.mxu0 %v5844
    %5908 = vmatpush1.bf16.msra.mxu0 %v5843
    %5909 = vmatprep.subr.bf16.mxu0 %v5846
    %5910 = vmatpush1.bf16.msra.mxu0 %v5845
    %5911 = vmatprep.mubr.bf16.mxu0 %v5686
    %5912 = vmatmul.mubr.bf16.gmra.mrb[0].mxu0 %v5685
    %v5913 = vpop.f32.mrb[0].mxu0
    %v5914 = vadd.f32 0.0, %v5913
    %v5915 = vpop.f32.mrb[0].mxu0
    %v5916 = vadd.f32 0.0, %v5915
    %v5917 = vpop.f32.mrb[0].mxu0
    %v5918 = vpop.f32.mrb[0].mxu0
    %5919 = vdwg.mxu0
    %v5952 = vunpack.c.l.b16 %v5608
    %v5953 = vunpack.c.h.b16 %v5608
    %v5954 = vunpack.c.l.b16 %v5609
    %v5955 = vunpack.c.h.b16 %v5609
    %v5956 = vunpack.c.l.b16 %v5610
    %v5957 = vunpack.c.h.b16 %v5610
    %v5958 = vunpack.c.l.b16 %v5611
    %v5959 = vunpack.c.h.b16 %v5611
    %v5960 = vunpack.c.l.b16 %v5612
    %v5961 = vunpack.c.h.b16 %v5612
    %v5962 = vunpack.c.l.b16 %v5613
    %v5963 = vunpack.c.h.b16 %v5613
    %v5964 = vunpack.c.l.b16 %v5614
    %v5965 = vunpack.c.h.b16 %v5614
    %v5966 = vunpack.c.l.b16 %v5615
    %v5967 = vunpack.c.h.b16 %v5615
    %v5968 = vunpack.c.l.b16 %v5616
    %v5969 = vunpack.c.h.b16 %v5616
    %v5970 = vunpack.c.l.b16 %v5617
    %v5971 = vunpack.c.h.b16 %v5617
    %v5972 = vunpack.c.l.b16 %v5618
    %v5973 = vunpack.c.h.b16 %v5618
    %v5974 = vunpack.c.l.b16 %v5619
    %v5975 = vunpack.c.h.b16 %v5619
    %v5976 = vunpack.c.l.b16 %v5620
    %v5977 = vunpack.c.h.b16 %v5620
    %v5978 = vunpack.c.l.b16 %v5621
    %v5979 = vunpack.c.h.b16 %v5621
    %v5980 = vunpack.c.l.b16 %v5622
    %v5981 = vunpack.c.h.b16 %v5622
    %v5982 = vunpack.c.l.b16 %v5623
    %v5983 = vunpack.c.h.b16 %v5623
    %v5984 = vunpack.c.l.b16 %v5624
    %v5985 = vunpack.c.h.b16 %v5624
    %v5986 = vunpack.c.l.b16 %v5625
    %v5987 = vunpack.c.h.b16 %v5625
    %v5988 = vunpack.c.l.b16 %v5626
    %v5989 = vunpack.c.h.b16 %v5626
    %v5990 = vunpack.c.l.b16 %v5627
    %v5991 = vunpack.c.h.b16 %v5627
    %v5992 = vunpack.c.l.b16 %v5628
    %v5993 = vunpack.c.h.b16 %v5628
    %v5994 = vunpack.c.l.b16 %v5629
    %v5995 = vunpack.c.h.b16 %v5629
    %v5996 = vunpack.c.l.b16 %v5630
    %v5997 = vunpack.c.h.b16 %v5630
    %v5998 = vunpack.c.l.b16 %v5631
    %v5999 = vunpack.c.h.b16 %v5631
    %v6000 = vunpack.c.l.b16 %v5632
    %v6001 = vunpack.c.h.b16 %v5632
    %v6002 = vunpack.c.l.b16 %v5633
    %v6003 = vunpack.c.h.b16 %v5633
    %v6004 = vunpack.c.l.b16 %v5634
    %v6005 = vunpack.c.h.b16 %v5634
    %v6006 = vunpack.c.l.b16 %v5635
    %v6007 = vunpack.c.h.b16 %v5635
    %v6008 = vunpack.c.l.b16 %v5636
    %v6009 = vunpack.c.h.b16 %v5636
    %v6010 = vunpack.c.l.b16 %v5637
    %v6011 = vunpack.c.h.b16 %v5637
    %v6012 = vunpack.c.l.b16 %v5638
    %v6013 = vunpack.c.h.b16 %v5638
    %v6014 = vunpack.c.l.b16 %v5639
    %v6015 = vunpack.c.h.b16 %v5639
    %v6016 = vpack.c.b16 %v5954, %v5952
    %v6017 = vpack.c.b16 %v5955, %v5953
    %v6018 = vpack.c.b16 %v5958, %v5956
    %v6019 = vpack.c.b16 %v5959, %v5957
    %v6020 = vpack.c.b16 %v5962, %v5960
    %v6021 = vpack.c.b16 %v5963, %v5961
    %v6022 = vpack.c.b16 %v5966, %v5964
    %v6023 = vpack.c.b16 %v5967, %v5965
    %v6024 = vpack.c.b16 %v5970, %v5968
    %v6025 = vpack.c.b16 %v5971, %v5969
    %v6026 = vpack.c.b16 %v5974, %v5972
    %v6027 = vpack.c.b16 %v5975, %v5973
    %v6028 = vpack.c.b16 %v5978, %v5976
    %v6029 = vpack.c.b16 %v5979, %v5977
    %v6030 = vpack.c.b16 %v5982, %v5980
    %v6031 = vpack.c.b16 %v5983, %v5981
    %v6032 = vpack.c.b16 %v5986, %v5984
    %v6033 = vpack.c.b16 %v5987, %v5985
    %v6034 = vpack.c.b16 %v5990, %v5988
    %v6035 = vpack.c.b16 %v5991, %v5989
    %v6036 = vpack.c.b16 %v5994, %v5992
    %v6037 = vpack.c.b16 %v5995, %v5993
    %v6038 = vpack.c.b16 %v5998, %v5996
    %v6039 = vpack.c.b16 %v5999, %v5997
    %v6040 = vpack.c.b16 %v6002, %v6000
    %v6041 = vpack.c.b16 %v6003, %v6001
    %v6042 = vpack.c.b16 %v6006, %v6004
    %v6043 = vpack.c.b16 %v6007, %v6005
    %v6044 = vpack.c.b16 %v6010, %v6008
    %v6045 = vpack.c.b16 %v6011, %v6009
    %v6046 = vpack.c.b16 %v6014, %v6012
    %v6047 = vpack.c.b16 %v6015, %v6013
    %6080 = vmatprep.subr.bf16.mxu0 %v6017
    %6081 = vmatpush1.bf16.msra.mxu0 %v6016
    %6082 = vmatprep.subr.bf16.mxu0 %v6019
    %6083 = vmatpush1.bf16.msra.mxu0 %v6018
    %6084 = vmatprep.subr.bf16.mxu0 %v6021
    %6085 = vmatpush1.bf16.msra.mxu0 %v6020
    %6086 = vmatprep.subr.bf16.mxu0 %v6023
    %6087 = vmatpush1.bf16.msra.mxu0 %v6022
    %6088 = vmatprep.subr.bf16.mxu0 %v6025
    %6089 = vmatpush1.bf16.msra.mxu0 %v6024
    %6090 = vmatprep.subr.bf16.mxu0 %v6027
    %6091 = vmatpush1.bf16.msra.mxu0 %v6026
    %6092 = vmatprep.subr.bf16.mxu0 %v6029
    %6093 = vmatpush1.bf16.msra.mxu0 %v6028
    %6094 = vmatprep.subr.bf16.mxu0 %v6031
    %6095 = vmatpush1.bf16.msra.mxu0 %v6030
    %6096 = vmatprep.subr.bf16.mxu0 %v6033
    %6097 = vmatpush1.bf16.msra.mxu0 %v6032
    %6098 = vmatprep.subr.bf16.mxu0 %v6035
    %6099 = vmatpush1.bf16.msra.mxu0 %v6034
    %6100 = vmatprep.subr.bf16.mxu0 %v6037
    %6101 = vmatpush1.bf16.msra.mxu0 %v6036
    %6102 = vmatprep.subr.bf16.mxu0 %v6039
    %6103 = vmatpush1.bf16.msra.mxu0 %v6038
    %6104 = vmatprep.subr.bf16.mxu0 %v6041
    %6105 = vmatpush1.bf16.msra.mxu0 %v6040
    %6106 = vmatprep.subr.bf16.mxu0 %v6043
    %6107 = vmatpush1.bf16.msra.mxu0 %v6042
    %6108 = vmatprep.subr.bf16.mxu0 %v6045
    %6109 = vmatpush1.bf16.msra.mxu0 %v6044
    %6110 = vmatprep.subr.bf16.mxu0 %v6047
    %6111 = vmatpush1.bf16.msra.mxu0 %v6046
    %6112 = vmatprep.mubr.bf16.mxu0 %v5607
    %6113 = vmatmul.mubr.bf16.gmra.mrb[0].mxu0 %v5606
    %v6114 = vpop.f32.mrb[0].mxu0
    %v6115 = vadd.f32 %v5914, %v6114
    %v6116 = vpop.f32.mrb[0].mxu0
    %v6117 = vadd.f32 %v5916, %v6116
    %v6118 = vpop.f32.mrb[0].mxu0
    %v6119 = vpop.f32.mrb[0].mxu0
    %6120 = vdwg.mxu0
    %v6121 = vld [vmem:[#allocation43] sm:$0xf]
    %v6123 = vsel %vm4432, %v6121, 0
    %6125 = vmatprep.subr.bf16.mxu0 %v5560
    %6126 = vmatpush1.bf16.msra.mxu0 %v5559
    %6127 = vmatprep.subr.bf16.mxu0 0
    %6128 = vmatpush1.bf16.msra.mxu0 0
    %6129 = vmatprep.subr.bf16.mxu0 0
    %6130 = vmatpush1.bf16.msra.mxu0 0
    %6131 = vmatprep.subr.bf16.mxu0 0
    %6132 = vmatpush1.bf16.msra.mxu0 0
    %6133 = vmatprep.subr.bf16.mxu0 0
    %6134 = vmatpush1.bf16.msra.mxu0 0
    %6135 = vmatprep.subr.bf16.mxu0 0
    %6136 = vmatpush1.bf16.msra.mxu0 0
    %6137 = vmatprep.subr.bf16.mxu0 0
    %6138 = vmatpush1.bf16.msra.mxu0 0
    %6139 = vmatprep.subr.bf16.mxu0 0
    %6140 = vmatpush1.bf16.msra.mxu0 0
    %6141 = vmatprep.subr.bf16.mxu0 0
    %6142 = vmatpush1.bf16.msra.mxu0 0
    %6143 = vmatprep.subr.bf16.mxu0 0
    %6144 = vmatpush1.bf16.msra.mxu0 0
    %6145 = vmatprep.subr.bf16.mxu0 0
    %6146 = vmatpush1.bf16.msra.mxu0 0
    %6147 = vmatprep.subr.bf16.mxu0 0
    %6148 = vmatpush1.bf16.msra.mxu0 0
    %6149 = vmatprep.subr.bf16.mxu0 0
    %6150 = vmatpush1.bf16.msra.mxu0 0
    %6151 = vmatprep.subr.bf16.mxu0 0
    %6152 = vmatpush1.bf16.msra.mxu0 0
    %6153 = vmatprep.subr.bf16.mxu0 0
    %6154 = vmatpush1.bf16.msra.mxu0 0
    %6155 = vmatprep.subr.bf16.mxu0 0
    %6156 = vmatpush1.bf16.msra.mxu0 0
    %6157 = vmatprep.mubr.bf16.mxu0 0
    %6158 = vmatmul.mubr.bf16.gmra.mrb[0].mxu0 %v6123
    %v6159 = vpop.f32.mrb[0].mxu0
    %v6160 = vadd.f32 0.0, %v6159
    %v6161 = vpop.f32.mrb[0].mxu0
    %v6162 = vadd.f32 0.0, %v6161
    %v6163 = vpop.f32.mrb[0].mxu0
    %v6164 = vpop.f32.mrb[0].mxu0
    %6165 = vdwg.mxu0
    %v6166 = vpack.c.bf16 %v6160, %v6160
    %v6167 = vpack.c.bf16 %v6162, %v6162
    %v6168 = vld [vmem:[#allocation47] sm:$0xff]
    %v6169 = vld [vmem:[#allocation47 + $0x8] sm:$0xff]
    %v6170 = vld [vmem:[#allocation47 + $0x10] sm:$0xff]
    %v6171 = vld [vmem:[#allocation47 + $0x18] sm:$0xff]
    %v6172 = vld [vmem:[#allocation47 + $0x20] sm:$0xff]
    %v6173 = vld [vmem:[#allocation47 + $0x28] sm:$0xff]
    %v6174 = vld [vmem:[#allocation47 + $0x30] sm:$0xff]
    %v6175 = vld [vmem:[#allocation47 + $0x38] sm:$0xff]
    %v6176 = vld [vmem:[#allocation47 + $0x40] sm:$0xff]
    %v6177 = vld [vmem:[#allocation47 + $0x48] sm:$0xff]
    %v6178 = vld [vmem:[#allocation47 + $0x50] sm:$0xff]
    %v6179 = vld [vmem:[#allocation47 + $0x58] sm:$0xff]
    %v6180 = vld [vmem:[#allocation47 + $0x60] sm:$0xff]
    %v6181 = vld [vmem:[#allocation47 + $0x68] sm:$0xff]
    %v6182 = vld [vmem:[#allocation47 + $0x70] sm:$0xff]
    %v6183 = vld [vmem:[#allocation47 + $0x78] sm:$0xff]
    %v6184 = vld [vmem:[#allocation47 + $0x80] sm:$0xff]
    %v6185 = vld [vmem:[#allocation47 + $0x88] sm:$0xff]
    %v6186 = vld [vmem:[#allocation47 + $0x90] sm:$0xff]
    %v6187 = vld [vmem:[#allocation47 + $0x98] sm:$0xff]
    %v6188 = vld [vmem:[#allocation47 + $0xa0] sm:$0xff]
    %v6189 = vld [vmem:[#allocation47 + $0xa8] sm:$0xff]
    %v6190 = vld [vmem:[#allocation47 + $0xb0] sm:$0xff]
    %v6191 = vld [vmem:[#allocation47 + $0xb8] sm:$0xff]
    %v6192 = vld [vmem:[#allocation47 + $0xc0] sm:$0xff]
    %v6193 = vld [vmem:[#allocation47 + $0xc8] sm:$0xff]
    %v6194 = vld [vmem:[#allocation47 + $0xd0] sm:$0xff]
    %v6195 = vld [vmem:[#allocation47 + $0xd8] sm:$0xff]
    %v6196 = vld [vmem:[#allocation47 + $0xe0] sm:$0xff]
    %v6197 = vld [vmem:[#allocation47 + $0xe8] sm:$0xff]
    %v6198 = vld [vmem:[#allocation47 + $0xf0] sm:$0xff]
    %v6199 = vld [vmem:[#allocation47 + $0xf8] sm:$0xff]
    %v6232 = vunpack.c.l.b16 %v6168
    %v6233 = vunpack.c.h.b16 %v6168
    %v6234 = vunpack.c.l.b16 %v6169
    %v6235 = vunpack.c.h.b16 %v6169
    %v6236 = vunpack.c.l.b16 %v6170
    %v6237 = vunpack.c.h.b16 %v6170
    %v6238 = vunpack.c.l.b16 %v6171
    %v6239 = vunpack.c.h.b16 %v6171
    %v6240 = vunpack.c.l.b16 %v6172
    %v6241 = vunpack.c.h.b16 %v6172
    %v6242 = vunpack.c.l.b16 %v6173
    %v6243 = vunpack.c.h.b16 %v6173
    %v6244 = vunpack.c.l.b16 %v6174
    %v6245 = vunpack.c.h.b16 %v6174
    %v6246 = vunpack.c.l.b16 %v6175
    %v6247 = vunpack.c.h.b16 %v6175
    %v6248 = vunpack.c.l.b16 %v6176
    %v6249 = vunpack.c.h.b16 %v6176
    %v6250 = vunpack.c.l.b16 %v6177
    %v6251 = vunpack.c.h.b16 %v6177
    %v6252 = vunpack.c.l.b16 %v6178
    %v6253 = vunpack.c.h.b16 %v6178
    %v6254 = vunpack.c.l.b16 %v6179
    %v6255 = vunpack.c.h.b16 %v6179
    %v6256 = vunpack.c.l.b16 %v6180
    %v6257 = vunpack.c.h.b16 %v6180
    %v6258 = vunpack.c.l.b16 %v6181
    %v6259 = vunpack.c.h.b16 %v6181
    %v6260 = vunpack.c.l.b16 %v6182
    %v6261 = vunpack.c.h.b16 %v6182
    %v6262 = vunpack.c.l.b16 %v6183
    %v6263 = vunpack.c.h.b16 %v6183
    %v6264 = vunpack.c.l.b16 %v6184
    %v6265 = vunpack.c.h.b16 %v6184
    %v6266 = vunpack.c.l.b16 %v6185
    %v6267 = vunpack.c.h.b16 %v6185
    %v6268 = vunpack.c.l.b16 %v6186
    %v6269 = vunpack.c.h.b16 %v6186
    %v6270 = vunpack.c.l.b16 %v6187
    %v6271 = vunpack.c.h.b16 %v6187
    %v6272 = vunpack.c.l.b16 %v6188
    %v6273 = vunpack.c.h.b16 %v6188
    %v6274 = vunpack.c.l.b16 %v6189
    %v6275 = vunpack.c.h.b16 %v6189
    %v6276 = vunpack.c.l.b16 %v6190
    %v6277 = vunpack.c.h.b16 %v6190
    %v6278 = vunpack.c.l.b16 %v6191
    %v6279 = vunpack.c.h.b16 %v6191
    %v6280 = vunpack.c.l.b16 %v6192
    %v6281 = vunpack.c.h.b16 %v6192
    %v6282 = vunpack.c.l.b16 %v6193
    %v6283 = vunpack.c.h.b16 %v6193
    %v6284 = vunpack.c.l.b16 %v6194
    %v6285 = vunpack.c.h.b16 %v6194
    %v6286 = vunpack.c.l.b16 %v6195
    %v6287 = vunpack.c.h.b16 %v6195
    %v6288 = vunpack.c.l.b16 %v6196
    %v6289 = vunpack.c.h.b16 %v6196
    %v6290 = vunpack.c.l.b16 %v6197
    %v6291 = vunpack.c.h.b16 %v6197
    %v6292 = vunpack.c.l.b16 %v6198
    %v6293 = vunpack.c.h.b16 %v6198
    %v6294 = vunpack.c.l.b16 %v6199
    %v6295 = vunpack.c.h.b16 %v6199
    %v6296 = vpack.c.b16 %v6234, %v6232
    %v6297 = vpack.c.b16 %v6235, %v6233
    %v6298 = vpack.c.b16 %v6238, %v6236
    %v6299 = vpack.c.b16 %v6239, %v6237
    %v6300 = vpack.c.b16 %v6242, %v6240
    %v6301 = vpack.c.b16 %v6243, %v6241
    %v6302 = vpack.c.b16 %v6246, %v6244
    %v6303 = vpack.c.b16 %v6247, %v6245
    %v6304 = vpack.c.b16 %v6250, %v6248
    %v6305 = vpack.c.b16 %v6251, %v6249
    %v6306 = vpack.c.b16 %v6254, %v6252
    %v6307 = vpack.c.b16 %v6255, %v6253
    %v6308 = vpack.c.b16 %v6258, %v6256
    %v6309 = vpack.c.b16 %v6259, %v6257
    %v6310 = vpack.c.b16 %v6262, %v6260
    %v6311 = vpack.c.b16 %v6263, %v6261
    %v6312 = vpack.c.b16 %v6266, %v6264
    %v6313 = vpack.c.b16 %v6267, %v6265
    %v6314 = vpack.c.b16 %v6270, %v6268
    %v6315 = vpack.c.b16 %v6271, %v6269
    %v6316 = vpack.c.b16 %v6274, %v6272
    %v6317 = vpack.c.b16 %v6275, %v6273
    %v6318 = vpack.c.b16 %v6278, %v6276
    %v6319 = vpack.c.b16 %v6279, %v6277
    %v6320 = vpack.c.b16 %v6282, %v6280
    %v6321 = vpack.c.b16 %v6283, %v6281
    %v6322 = vpack.c.b16 %v6286, %v6284
    %v6323 = vpack.c.b16 %v6287, %v6285
    %v6324 = vpack.c.b16 %v6290, %v6288
    %v6325 = vpack.c.b16 %v6291, %v6289
    %v6326 = vpack.c.b16 %v6294, %v6292
    %v6327 = vpack.c.b16 %v6295, %v6293
    %6360 = vmatprep.subr.bf16.mxu0 %v6297
    %6361 = vmatpush1.bf16.msra.mxu0 %v6296
    %6362 = vmatprep.subr.bf16.mxu0 %v6299
    %6363 = vmatpush1.bf16.msra.mxu0 %v6298
    %6364 = vmatprep.subr.bf16.mxu0 %v6301
    %6365 = vmatpush1.bf16.msra.mxu0 %v6300
    %6366 = vmatprep.subr.bf16.mxu0 %v6303
    %6367 = vmatpush1.bf16.msra.mxu0 %v6302
    %6368 = vmatprep.subr.bf16.mxu0 %v6305
    %6369 = vmatpush1.bf16.msra.mxu0 %v6304
    %6370 = vmatprep.subr.bf16.mxu0 %v6307
    %6371 = vmatpush1.bf16.msra.mxu0 %v6306
    %6372 = vmatprep.subr.bf16.mxu0 %v6309
    %6373 = vmatpush1.bf16.msra.mxu0 %v6308
    %6374 = vmatprep.subr.bf16.mxu0 %v6311
    %6375 = vmatpush1.bf16.msra.mxu0 %v6310
    %6376 = vmatprep.subr.bf16.mxu0 %v6313
    %6377 = vmatpush1.bf16.msra.mxu0 %v6312
    %6378 = vmatprep.subr.bf16.mxu0 %v6315
    %6379 = vmatpush1.bf16.msra.mxu0 %v6314
    %6380 = vmatprep.subr.bf16.mxu0 %v6317
    %6381 = vmatpush1.bf16.msra.mxu0 %v6316
    %6382 = vmatprep.subr.bf16.mxu0 %v6319
    %6383 = vmatpush1.bf16.msra.mxu0 %v6318
    %6384 = vmatprep.subr.bf16.mxu0 %v6321
    %6385 = vmatpush1.bf16.msra.mxu0 %v6320
    %6386 = vmatprep.subr.bf16.mxu0 %v6323
    %6387 = vmatpush1.bf16.msra.mxu0 %v6322
    %6388 = vmatprep.subr.bf16.mxu0 %v6325
    %6389 = vmatpush1.bf16.msra.mxu0 %v6324
    %6390 = vmatprep.subr.bf16.mxu0 %v6327
    %6391 = vmatpush1.bf16.msra.mxu0 %v6326
    %6392 = vmatprep.mubr.bf16.mxu0 %v6167
    %6393 = vmatmul.mubr.bf16.gmra.mrb[0].mxu0 %v6166
    %v6394 = vpop.f32.mrb[0].mxu0
    %v6395 = vadd.f32 0.0, %v6394
    %v6396 = vpop.f32.mrb[0].mxu0
    %v6397 = vadd.f32 0.0, %v6396
    %v6398 = vpop.f32.mrb[0].mxu0
    %v6399 = vpop.f32.mrb[0].mxu0
    %6400 = vdwg.mxu0
    %v6401 = vadd.f32 %v6115, %v6395
    %v6402 = vadd.f32 %v6117, %v6397
    %v6403 = vld [vmem:[#allocation49] sm:$0x3]
    %v6405 = vlaneseq
    %v6406 = vshrl.u32 %v6405, 7
    %v6407 = vsub.s32 0, %v6406
    %v6408 = vrot.slane %v6403, %v6407
    %v6409 = vlaneseq
    %v6410 = vshrl.u32 %v6409, 7
    %v6411 = vsub.s32 1, %v6410
    %v6412 = vrot.slane %v6403, %v6411
    %v6415 = vadd.f32 %v6401, %v6408
    %v6416 = vadd.f32 %v6402, %v6412
    %v6417 = vmax.f32 %v6415, 0.0
    %v6418 = vmax.f32 %v6416, 0.0
    %v6419 = vpack.c.bf16 %v6417, %v6417
    %v6420 = vpack.c.bf16 %v6418, %v6418
    %v6421 = vld [vmem:[#allocation50] sm:$0xf]
    %vm6422 = vcmask 64512
    %v6424 = vsel %vm6422, %v6421, 0
    %vm6426 = vcmask 1043456
    %v6428 = vsel %vm6426, %v6419, 0
    %v6431 = vsel %vm6426, %v6420, 0
    %6433 = vmatprep.subr.bf16.mxu0 %v6431
    %6434 = vmatpush1.bf16.msra.mxu0 %v6428
    %6435 = vmatprep.subr.bf16.mxu0 0
    %6436 = vmatpush1.bf16.msra.mxu0 0
    %6437 = vmatprep.subr.bf16.mxu0 0
    %6438 = vmatpush1.bf16.msra.mxu0 0
    %6439 = vmatprep.subr.bf16.mxu0 0
    %6440 = vmatpush1.bf16.msra.mxu0 0
    %6441 = vmatprep.subr.bf16.mxu0 0
    %6442 = vmatpush1.bf16.msra.mxu0 0
    %6443 = vmatprep.subr.bf16.mxu0 0
    %6444 = vmatpush1.bf16.msra.mxu0 0
    %6445 = vmatprep.subr.bf16.mxu0 0
    %6446 = vmatpush1.bf16.msra.mxu0 0
    %6447 = vmatprep.subr.bf16.mxu0 0
    %6448 = vmatpush1.bf16.msra.mxu0 0
    %6449 = vmatprep.subr.bf16.mxu0 0
    %6450 = vmatpush1.bf16.msra.mxu0 0
    %6451 = vmatprep.subr.bf16.mxu0 0
    %6452 = vmatpush1.bf16.msra.mxu0 0
    %6453 = vmatprep.subr.bf16.mxu0 0
    %6454 = vmatpush1.bf16.msra.mxu0 0
    %6455 = vmatprep.subr.bf16.mxu0 0
    %6456 = vmatpush1.bf16.msra.mxu0 0
    %6457 = vmatprep.subr.bf16.mxu0 0
    %6458 = vmatpush1.bf16.msra.mxu0 0
    %6459 = vmatprep.subr.bf16.mxu0 0
    %6460 = vmatpush1.bf16.msra.mxu0 0
    %6461 = vmatprep.subr.bf16.mxu0 0
    %6462 = vmatpush1.bf16.msra.mxu0 0
    %6463 = vmatprep.subr.bf16.mxu0 0
    %6464 = vmatpush1.bf16.msra.mxu0 0
    %6465 = vmatprep.mubr.bf16.mxu0 0
    %6466 = vmatmul.mubr.bf16.gmra.mrb[0].mxu0 %v6424
    %v6467 = vpop.f32.mrb[0].mxu0
    %v6468 = vadd.f32 0.0, %v6467
    %v6469 = vpop.f32.mrb[0].mxu0
    %v6470 = vadd.f32 0.0, %v6469
    %v6471 = vpop.f32.mrb[0].mxu0
    %v6472 = vpop.f32.mrb[0].mxu0
    %6473 = vdwg.mxu0
    %v6474 = vpack.c.bf16 %v6468, %v6468
    %v6475 = vpack.c.bf16 %v6470, %v6470
    %v6476 = vld [vmem:[#allocation53] sm:$0xff]
    %v6477 = vld [vmem:[#allocation53 + $0x8] sm:$0xff]
    %v6478 = vld [vmem:[#allocation53 + $0x10] sm:$0xff]
    %v6479 = vld [vmem:[#allocation53 + $0x18] sm:$0xff]
    %v6480 = vld [vmem:[#allocation53 + $0x20] sm:$0xff]
    %v6481 = vld [vmem:[#allocation53 + $0x28] sm:$0xff]
    %v6482 = vld [vmem:[#allocation53 + $0x30] sm:$0xff]
    %v6483 = vld [vmem:[#allocation53 + $0x38] sm:$0xff]
    %v6484 = vld [vmem:[#allocation53 + $0x40] sm:$0xff]
    %v6485 = vld [vmem:[#allocation53 + $0x48] sm:$0xff]
    %v6486 = vld [vmem:[#allocation53 + $0x50] sm:$0xff]
    %v6487 = vld [vmem:[#allocation53 + $0x58] sm:$0xff]
    %v6488 = vld [vmem:[#allocation53 + $0x60] sm:$0xff]
    %v6489 = vld [vmem:[#allocation53 + $0x68] sm:$0xff]
    %v6490 = vld [vmem:[#allocation53 + $0x70] sm:$0xff]
    %v6491 = vld [vmem:[#allocation53 + $0x78] sm:$0xff]
    %v6492 = vld [vmem:[#allocation53 + $0x80] sm:$0xff]
    %v6493 = vld [vmem:[#allocation53 + $0x88] sm:$0xff]
    %v6494 = vld [vmem:[#allocation53 + $0x90] sm:$0xff]
    %v6495 = vld [vmem:[#allocation53 + $0x98] sm:$0xff]
    %v6496 = vld [vmem:[#allocation53 + $0xa0] sm:$0xff]
    %v6497 = vld [vmem:[#allocation53 + $0xa8] sm:$0xff]
    %v6498 = vld [vmem:[#allocation53 + $0xb0] sm:$0xff]
    %v6499 = vld [vmem:[#allocation53 + $0xb8] sm:$0xff]
    %v6500 = vld [vmem:[#allocation53 + $0xc0] sm:$0xff]
    %v6501 = vld [vmem:[#allocation53 + $0xc8] sm:$0xff]
    %v6502 = vld [vmem:[#allocation53 + $0xd0] sm:$0xff]
    %v6503 = vld [vmem:[#allocation53 + $0xd8] sm:$0xff]
    %v6504 = vld [vmem:[#allocation53 + $0xe0] sm:$0xff]
    %v6505 = vld [vmem:[#allocation53 + $0xe8] sm:$0xff]
    %v6506 = vld [vmem:[#allocation53 + $0xf0] sm:$0xff]
    %v6507 = vld [vmem:[#allocation53 + $0xf8] sm:$0xff]
    %v6508 = vld [vmem:[#allocation55] sm:$0xff]
    %v6509 = vld [vmem:[#allocation55 + $0x8] sm:$0xff]
    %v6510 = vld [vmem:[#allocation55 + $0x10] sm:$0xff]
    %v6511 = vld [vmem:[#allocation55 + $0x18] sm:$0xff]
    %v6512 = vld [vmem:[#allocation55 + $0x20] sm:$0xff]
    %v6513 = vld [vmem:[#allocation55 + $0x28] sm:$0xff]
    %v6514 = vld [vmem:[#allocation55 + $0x30] sm:$0xff]
    %v6515 = vld [vmem:[#allocation55 + $0x38] sm:$0xff]
    %v6516 = vld [vmem:[#allocation55 + $0x40] sm:$0xff]
    %v6517 = vld [vmem:[#allocation55 + $0x48] sm:$0xff]
    %v6518 = vld [vmem:[#allocation55 + $0x50] sm:$0xff]
    %v6519 = vld [vmem:[#allocation55 + $0x58] sm:$0xff]
    %v6520 = vld [vmem:[#allocation55 + $0x60] sm:$0xff]
    %v6521 = vld [vmem:[#allocation55 + $0x68] sm:$0xff]
    %v6522 = vld [vmem:[#allocation55 + $0x70] sm:$0xff]
    %v6523 = vld [vmem:[#allocation55 + $0x78] sm:$0xff]
    %v6524 = vld [vmem:[#allocation55 + $0x80] sm:$0xff]
    %v6525 = vld [vmem:[#allocation55 + $0x88] sm:$0xff]
    %v6526 = vld [vmem:[#allocation55 + $0x90] sm:$0xff]
    %v6527 = vld [vmem:[#allocation55 + $0x98] sm:$0xff]
    %v6528 = vld [vmem:[#allocation55 + $0xa0] sm:$0xff]
    %v6529 = vld [vmem:[#allocation55 + $0xa8] sm:$0xff]
    %v6530 = vld [vmem:[#allocation55 + $0xb0] sm:$0xff]
    %v6531 = vld [vmem:[#allocation55 + $0xb8] sm:$0xff]
    %v6532 = vld [vmem:[#allocation55 + $0xc0] sm:$0xff]
    %v6533 = vld [vmem:[#allocation55 + $0xc8] sm:$0xff]
    %v6534 = vld [vmem:[#allocation55 + $0xd0] sm:$0xff]
    %v6535 = vld [vmem:[#allocation55 + $0xd8] sm:$0xff]
    %v6536 = vld [vmem:[#allocation55 + $0xe0] sm:$0xff]
    %v6537 = vld [vmem:[#allocation55 + $0xe8] sm:$0xff]
    %v6538 = vld [vmem:[#allocation55 + $0xf0] sm:$0xff]
    %v6539 = vld [vmem:[#allocation55 + $0xf8] sm:$0xff]
    %v6572 = vunpack.c.l.b16 %v6508
    %v6573 = vunpack.c.h.b16 %v6508
    %v6574 = vunpack.c.l.b16 %v6509
    %v6575 = vunpack.c.h.b16 %v6509
    %v6576 = vunpack.c.l.b16 %v6510
    %v6577 = vunpack.c.h.b16 %v6510
    %v6578 = vunpack.c.l.b16 %v6511
    %v6579 = vunpack.c.h.b16 %v6511
    %v6580 = vunpack.c.l.b16 %v6512
    %v6581 = vunpack.c.h.b16 %v6512
    %v6582 = vunpack.c.l.b16 %v6513
    %v6583 = vunpack.c.h.b16 %v6513
    %v6584 = vunpack.c.l.b16 %v6514
    %v6585 = vunpack.c.h.b16 %v6514
    %v6586 = vunpack.c.l.b16 %v6515
    %v6587 = vunpack.c.h.b16 %v6515
    %v6588 = vunpack.c.l.b16 %v6516
    %v6589 = vunpack.c.h.b16 %v6516
    %v6590 = vunpack.c.l.b16 %v6517
    %v6591 = vunpack.c.h.b16 %v6517
    %v6592 = vunpack.c.l.b16 %v6518
    %v6593 = vunpack.c.h.b16 %v6518
    %v6594 = vunpack.c.l.b16 %v6519
    %v6595 = vunpack.c.h.b16 %v6519
    %v6596 = vunpack.c.l.b16 %v6520
    %v6597 = vunpack.c.h.b16 %v6520
    %v6598 = vunpack.c.l.b16 %v6521
    %v6599 = vunpack.c.h.b16 %v6521
    %v6600 = vunpack.c.l.b16 %v6522
    %v6601 = vunpack.c.h.b16 %v6522
    %v6602 = vunpack.c.l.b16 %v6523
    %v6603 = vunpack.c.h.b16 %v6523
    %v6604 = vunpack.c.l.b16 %v6524
    %v6605 = vunpack.c.h.b16 %v6524
    %v6606 = vunpack.c.l.b16 %v6525
    %v6607 = vunpack.c.h.b16 %v6525
    %v6608 = vunpack.c.l.b16 %v6526
    %v6609 = vunpack.c.h.b16 %v6526
    %v6610 = vunpack.c.l.b16 %v6527
    %v6611 = vunpack.c.h.b16 %v6527
    %v6612 = vunpack.c.l.b16 %v6528
    %v6613 = vunpack.c.h.b16 %v6528
    %v6614 = vunpack.c.l.b16 %v6529
    %v6615 = vunpack.c.h.b16 %v6529
    %v6616 = vunpack.c.l.b16 %v6530
    %v6617 = vunpack.c.h.b16 %v6530
    %v6618 = vunpack.c.l.b16 %v6531
    %v6619 = vunpack.c.h.b16 %v6531
    %v6620 = vunpack.c.l.b16 %v6532
    %v6621 = vunpack.c.h.b16 %v6532
    %v6622 = vunpack.c.l.b16 %v6533
    %v6623 = vunpack.c.h.b16 %v6533
    %v6624 = vunpack.c.l.b16 %v6534
    %v6625 = vunpack.c.h.b16 %v6534
    %v6626 = vunpack.c.l.b16 %v6535
    %v6627 = vunpack.c.h.b16 %v6535
    %v6628 = vunpack.c.l.b16 %v6536
    %v6629 = vunpack.c.h.b16 %v6536
    %v6630 = vunpack.c.l.b16 %v6537
    %v6631 = vunpack.c.h.b16 %v6537
    %v6632 = vunpack.c.l.b16 %v6538
    %v6633 = vunpack.c.h.b16 %v6538
    %v6634 = vunpack.c.l.b16 %v6539
    %v6635 = vunpack.c.h.b16 %v6539
    %v6636 = vpack.c.b16 %v6574, %v6572
    %v6637 = vpack.c.b16 %v6575, %v6573
    %v6638 = vpack.c.b16 %v6578, %v6576
    %v6639 = vpack.c.b16 %v6579, %v6577
    %v6640 = vpack.c.b16 %v6582, %v6580
    %v6641 = vpack.c.b16 %v6583, %v6581
    %v6642 = vpack.c.b16 %v6586, %v6584
    %v6643 = vpack.c.b16 %v6587, %v6585
    %v6644 = vpack.c.b16 %v6590, %v6588
    %v6645 = vpack.c.b16 %v6591, %v6589
    %v6646 = vpack.c.b16 %v6594, %v6592
    %v6647 = vpack.c.b16 %v6595, %v6593
    %v6648 = vpack.c.b16 %v6598, %v6596
    %v6649 = vpack.c.b16 %v6599, %v6597
    %v6650 = vpack.c.b16 %v6602, %v6600
    %v6651 = vpack.c.b16 %v6603, %v6601
    %v6652 = vpack.c.b16 %v6606, %v6604
    %v6653 = vpack.c.b16 %v6607, %v6605
    %v6654 = vpack.c.b16 %v6610, %v6608
    %v6655 = vpack.c.b16 %v6611, %v6609
    %v6656 = vpack.c.b16 %v6614, %v6612
    %v6657 = vpack.c.b16 %v6615, %v6613
    %v6658 = vpack.c.b16 %v6618, %v6616
    %v6659 = vpack.c.b16 %v6619, %v6617
    %v6660 = vpack.c.b16 %v6622, %v6620
    %v6661 = vpack.c.b16 %v6623, %v6621
    %v6662 = vpack.c.b16 %v6626, %v6624
    %v6663 = vpack.c.b16 %v6627, %v6625
    %v6664 = vpack.c.b16 %v6630, %v6628
    %v6665 = vpack.c.b16 %v6631, %v6629
    %v6666 = vpack.c.b16 %v6634, %v6632
    %v6667 = vpack.c.b16 %v6635, %v6633
    %6700 = vmatprep.subr.bf16.mxu0 %v6637
    %6701 = vmatpush1.bf16.msra.mxu0 %v6636
    %6702 = vmatprep.subr.bf16.mxu0 %v6639
    %6703 = vmatpush1.bf16.msra.mxu0 %v6638
    %6704 = vmatprep.subr.bf16.mxu0 %v6641
    %6705 = vmatpush1.bf16.msra.mxu0 %v6640
    %6706 = vmatprep.subr.bf16.mxu0 %v6643
    %6707 = vmatpush1.bf16.msra.mxu0 %v6642
    %6708 = vmatprep.subr.bf16.mxu0 %v6645
    %6709 = vmatpush1.bf16.msra.mxu0 %v6644
    %6710 = vmatprep.subr.bf16.mxu0 %v6647
    %6711 = vmatpush1.bf16.msra.mxu0 %v6646
    %6712 = vmatprep.subr.bf16.mxu0 %v6649
    %6713 = vmatpush1.bf16.msra.mxu0 %v6648
    %6714 = vmatprep.subr.bf16.mxu0 %v6651
    %6715 = vmatpush1.bf16.msra.mxu0 %v6650
    %6716 = vmatprep.subr.bf16.mxu0 %v6653
    %6717 = vmatpush1.bf16.msra.mxu0 %v6652
    %6718 = vmatprep.subr.bf16.mxu0 %v6655
    %6719 = vmatpush1.bf16.msra.mxu0 %v6654
    %6720 = vmatprep.subr.bf16.mxu0 %v6657
    %6721 = vmatpush1.bf16.msra.mxu0 %v6656
    %6722 = vmatprep.subr.bf16.mxu0 %v6659
    %6723 = vmatpush1.bf16.msra.mxu0 %v6658
    %6724 = vmatprep.subr.bf16.mxu0 %v6661
    %6725 = vmatpush1.bf16.msra.mxu0 %v6660
    %6726 = vmatprep.subr.bf16.mxu0 %v6663
    %6727 = vmatpush1.bf16.msra.mxu0 %v6662
    %6728 = vmatprep.subr.bf16.mxu0 %v6665
    %6729 = vmatpush1.bf16.msra.mxu0 %v6664
    %6730 = vmatprep.subr.bf16.mxu0 %v6667
    %6731 = vmatpush1.bf16.msra.mxu0 %v6666
    %6732 = vmatprep.mubr.bf16.mxu0 %v6420
    %6733 = vmatmul.mubr.bf16.gmra.mrb[0].mxu0 %v6419
    %v6734 = vpop.f32.mrb[0].mxu0
    %v6735 = vadd.f32 0.0, %v6734
    %v6736 = vpop.f32.mrb[0].mxu0
    %v6737 = vadd.f32 0.0, %v6736
    %v6738 = vpop.f32.mrb[0].mxu0
    %v6739 = vpop.f32.mrb[0].mxu0
    %6740 = vdwg.mxu0
    %v6773 = vunpack.c.l.b16 %v6476
    %v6774 = vunpack.c.h.b16 %v6476
    %v6775 = vunpack.c.l.b16 %v6477
    %v6776 = vunpack.c.h.b16 %v6477
    %v6777 = vunpack.c.l.b16 %v6478
    %v6778 = vunpack.c.h.b16 %v6478
    %v6779 = vunpack.c.l.b16 %v6479
    %v6780 = vunpack.c.h.b16 %v6479
    %v6781 = vunpack.c.l.b16 %v6480
    %v6782 = vunpack.c.h.b16 %v6480
    %v6783 = vunpack.c.l.b16 %v6481
    %v6784 = vunpack.c.h.b16 %v6481
    %v6785 = vunpack.c.l.b16 %v6482
    %v6786 = vunpack.c.h.b16 %v6482
    %v6787 = vunpack.c.l.b16 %v6483
    %v6788 = vunpack.c.h.b16 %v6483
    %v6789 = vunpack.c.l.b16 %v6484
    %v6790 = vunpack.c.h.b16 %v6484
    %v6791 = vunpack.c.l.b16 %v6485
    %v6792 = vunpack.c.h.b16 %v6485
    %v6793 = vunpack.c.l.b16 %v6486
    %v6794 = vunpack.c.h.b16 %v6486
    %v6795 = vunpack.c.l.b16 %v6487
    %v6796 = vunpack.c.h.b16 %v6487
    %v6797 = vunpack.c.l.b16 %v6488
    %v6798 = vunpack.c.h.b16 %v6488
    %v6799 = vunpack.c.l.b16 %v6489
    %v6800 = vunpack.c.h.b16 %v6489
    %v6801 = vunpack.c.l.b16 %v6490
    %v6802 = vunpack.c.h.b16 %v6490
    %v6803 = vunpack.c.l.b16 %v6491
    %v6804 = vunpack.c.h.b16 %v6491
    %v6805 = vunpack.c.l.b16 %v6492
    %v6806 = vunpack.c.h.b16 %v6492
    %v6807 = vunpack.c.l.b16 %v6493
    %v6808 = vunpack.c.h.b16 %v6493
    %v6809 = vunpack.c.l.b16 %v6494
    %v6810 = vunpack.c.h.b16 %v6494
    %v6811 = vunpack.c.l.b16 %v6495
    %v6812 = vunpack.c.h.b16 %v6495
    %v6813 = vunpack.c.l.b16 %v6496
    %v6814 = vunpack.c.h.b16 %v6496
    %v6815 = vunpack.c.l.b16 %v6497
    %v6816 = vunpack.c.h.b16 %v6497
    %v6817 = vunpack.c.l.b16 %v6498
    %v6818 = vunpack.c.h.b16 %v6498
    %v6819 = vunpack.c.l.b16 %v6499
    %v6820 = vunpack.c.h.b16 %v6499
    %v6821 = vunpack.c.l.b16 %v6500
    %v6822 = vunpack.c.h.b16 %v6500
    %v6823 = vunpack.c.l.b16 %v6501
    %v6824 = vunpack.c.h.b16 %v6501
    %v6825 = vunpack.c.l.b16 %v6502
    %v6826 = vunpack.c.h.b16 %v6502
    %v6827 = vunpack.c.l.b16 %v6503
    %v6828 = vunpack.c.h.b16 %v6503
    %v6829 = vunpack.c.l.b16 %v6504
    %v6830 = vunpack.c.h.b16 %v6504
    %v6831 = vunpack.c.l.b16 %v6505
    %v6832 = vunpack.c.h.b16 %v6505
    %v6833 = vunpack.c.l.b16 %v6506
    %v6834 = vunpack.c.h.b16 %v6506
    %v6835 = vunpack.c.l.b16 %v6507
    %v6836 = vunpack.c.h.b16 %v6507
    %v6837 = vpack.c.b16 %v6775, %v6773
    %v6838 = vpack.c.b16 %v6776, %v6774
    %v6839 = vpack.c.b16 %v6779, %v6777
    %v6840 = vpack.c.b16 %v6780, %v6778
    %v6841 = vpack.c.b16 %v6783, %v6781
    %v6842 = vpack.c.b16 %v6784, %v6782
    %v6843 = vpack.c.b16 %v6787, %v6785
    %v6844 = vpack.c.b16 %v6788, %v6786
    %v6845 = vpack.c.b16 %v6791, %v6789
    %v6846 = vpack.c.b16 %v6792, %v6790
    %v6847 = vpack.c.b16 %v6795, %v6793
    %v6848 = vpack.c.b16 %v6796, %v6794
    %v6849 = vpack.c.b16 %v6799, %v6797
    %v6850 = vpack.c.b16 %v6800, %v6798
    %v6851 = vpack.c.b16 %v6803, %v6801
    %v6852 = vpack.c.b16 %v6804, %v6802
    %v6853 = vpack.c.b16 %v6807, %v6805
    %v6854 = vpack.c.b16 %v6808, %v6806
    %v6855 = vpack.c.b16 %v6811, %v6809
    %v6856 = vpack.c.b16 %v6812, %v6810
    %v6857 = vpack.c.b16 %v6815, %v6813
    %v6858 = vpack.c.b16 %v6816, %v6814
    %v6859 = vpack.c.b16 %v6819, %v6817
    %v6860 = vpack.c.b16 %v6820, %v6818
    %v6861 = vpack.c.b16 %v6823, %v6821
    %v6862 = vpack.c.b16 %v6824, %v6822
    %v6863 = vpack.c.b16 %v6827, %v6825
    %v6864 = vpack.c.b16 %v6828, %v6826
    %v6865 = vpack.c.b16 %v6831, %v6829
    %v6866 = vpack.c.b16 %v6832, %v6830
    %v6867 = vpack.c.b16 %v6835, %v6833
    %v6868 = vpack.c.b16 %v6836, %v6834
    %6901 = vmatprep.subr.bf16.mxu0 %v6838
    %6902 = vmatpush1.bf16.msra.mxu0 %v6837
    %6903 = vmatprep.subr.bf16.mxu0 %v6840
    %6904 = vmatpush1.bf16.msra.mxu0 %v6839
    %6905 = vmatprep.subr.bf16.mxu0 %v6842
    %6906 = vmatpush1.bf16.msra.mxu0 %v6841
    %6907 = vmatprep.subr.bf16.mxu0 %v6844
    %6908 = vmatpush1.bf16.msra.mxu0 %v6843
    %6909 = vmatprep.subr.bf16.mxu0 %v6846
    %6910 = vmatpush1.bf16.msra.mxu0 %v6845
    %6911 = vmatprep.subr.bf16.mxu0 %v6848
    %6912 = vmatpush1.bf16.msra.mxu0 %v6847
    %6913 = vmatprep.subr.bf16.mxu0 %v6850
    %6914 = vmatpush1.bf16.msra.mxu0 %v6849
    %6915 = vmatprep.subr.bf16.mxu0 %v6852
    %6916 = vmatpush1.bf16.msra.mxu0 %v6851
    %6917 = vmatprep.subr.bf16.mxu0 %v6854
    %6918 = vmatpush1.bf16.msra.mxu0 %v6853
    %6919 = vmatprep.subr.bf16.mxu0 %v6856
    %6920 = vmatpush1.bf16.msra.mxu0 %v6855
    %6921 = vmatprep.subr.bf16.mxu0 %v6858
    %6922 = vmatpush1.bf16.msra.mxu0 %v6857
    %6923 = vmatprep.subr.bf16.mxu0 %v6860
    %6924 = vmatpush1.bf16.msra.mxu0 %v6859
    %6925 = vmatprep.subr.bf16.mxu0 %v6862
    %6926 = vmatpush1.bf16.msra.mxu0 %v6861
    %6927 = vmatprep.subr.bf16.mxu0 %v6864
    %6928 = vmatpush1.bf16.msra.mxu0 %v6863
    %6929 = vmatprep.subr.bf16.mxu0 %v6866
    %6930 = vmatpush1.bf16.msra.mxu0 %v6865
    %6931 = vmatprep.subr.bf16.mxu0 %v6868
    %6932 = vmatpush1.bf16.msra.mxu0 %v6867
    %6933 = vmatprep.mubr.bf16.mxu0 %v6475
    %6934 = vmatmul.mubr.bf16.gmra.mrb[0].mxu0 %v6474
    %v6935 = vpop.f32.mrb[0].mxu0
    %v6936 = vadd.f32 %v6735, %v6935
    %v6937 = vpop.f32.mrb[0].mxu0
    %v6938 = vadd.f32 %v6737, %v6937
    %v6939 = vpop.f32.mrb[0].mxu0
    %v6940 = vpop.f32.mrb[0].mxu0
    %6941 = vdwg.mxu0
    %v6942 = vld [vmem:[#allocation52] sm:$0xf]
    %v6944 = vsel %vm6422, %v6942, 0
    %6946 = vmatprep.subr.bf16.mxu0 %v6431
    %6947 = vmatpush1.bf16.msra.mxu0 %v6428
    %6948 = vmatprep.subr.bf16.mxu0 0
    %6949 = vmatpush1.bf16.msra.mxu0 0
    %6950 = vmatprep.subr.bf16.mxu0 0
    %6951 = vmatpush1.bf16.msra.mxu0 0
    %6952 = vmatprep.subr.bf16.mxu0 0
    %6953 = vmatpush1.bf16.msra.mxu0 0
    %6954 = vmatprep.subr.bf16.mxu0 0
    %6955 = vmatpush1.bf16.msra.mxu0 0
    %6956 = vmatprep.subr.bf16.mxu0 0
    %6957 = vmatpush1.bf16.msra.mxu0 0
    %6958 = vmatprep.subr.bf16.mxu0 0
    %6959 = vmatpush1.bf16.msra.mxu0 0
    %6960 = vmatprep.subr.bf16.mxu0 0
    %6961 = vmatpush1.bf16.msra.mxu0 0
    %6962 = vmatprep.subr.bf16.mxu0 0
    %6963 = vmatpush1.bf16.msra.mxu0 0
    %6964 = vmatprep.subr.bf16.mxu0 0
    %6965 = vmatpush1.bf16.msra.mxu0 0
    %6966 = vmatprep.subr.bf16.mxu0 0
    %6967 = vmatpush1.bf16.msra.mxu0 0
    %6968 = vmatprep.subr.bf16.mxu0 0
    %6969 = vmatpush1.bf16.msra.mxu0 0
    %6970 = vmatprep.subr.bf16.mxu0 0
    %6971 = vmatpush1.bf16.msra.mxu0 0
    %6972 = vmatprep.subr.bf16.mxu0 0
    %6973 = vmatpush1.bf16.msra.mxu0 0
    %6974 = vmatprep.subr.bf16.mxu0 0
    %6975 = vmatpush1.bf16.msra.mxu0 0
    %6976 = vmatprep.subr.bf16.mxu0 0
    %6977 = vmatpush1.bf16.msra.mxu0 0
    %6978 = vmatprep.mubr.bf16.mxu0 0
    %6979 = vmatmul.mubr.bf16.gmra.mrb[0].mxu0 %v6944
    %v6980 = vpop.f32.mrb[0].mxu0
    %v6981 = vadd.f32 0.0, %v6980
    %v6982 = vpop.f32.mrb[0].mxu0
    %v6983 = vadd.f32 0.0, %v6982
    %v6984 = vpop.f32.mrb[0].mxu0
    %v6985 = vpop.f32.mrb[0].mxu0
    %6986 = vdwg.mxu0
    %v6987 = vpack.c.bf16 %v6981, %v6981
    %v6988 = vpack.c.bf16 %v6983, %v6983
    %v6989 = vld [vmem:[#allocation56] sm:$0xff]
    %v6990 = vld [vmem:[#allocation56 + $0x8] sm:$0xff]
    %v6991 = vld [vmem:[#allocation56 + $0x10] sm:$0xff]
    %v6992 = vld [vmem:[#allocation56 + $0x18] sm:$0xff]
    %v6993 = vld [vmem:[#allocation56 + $0x20] sm:$0xff]
    %v6994 = vld [vmem:[#allocation56 + $0x28] sm:$0xff]
    %v6995 = vld [vmem:[#allocation56 + $0x30] sm:$0xff]
    %v6996 = vld [vmem:[#allocation56 + $0x38] sm:$0xff]
    %v6997 = vld [vmem:[#allocation56 + $0x40] sm:$0xff]
    %v6998 = vld [vmem:[#allocation56 + $0x48] sm:$0xff]
    %v6999 = vld [vmem:[#allocation56 + $0x50] sm:$0xff]
    %v7000 = vld [vmem:[#allocation56 + $0x58] sm:$0xff]
    %v7001 = vld [vmem:[#allocation56 + $0x60] sm:$0xff]
    %v7002 = vld [vmem:[#allocation56 + $0x68] sm:$0xff]
    %v7003 = vld [vmem:[#allocation56 + $0x70] sm:$0xff]
    %v7004 = vld [vmem:[#allocation56 + $0x78] sm:$0xff]
    %v7005 = vld [vmem:[#allocation56 + $0x80] sm:$0xff]
    %v7006 = vld [vmem:[#allocation56 + $0x88] sm:$0xff]
    %v7007 = vld [vmem:[#allocation56 + $0x90] sm:$0xff]
    %v7008 = vld [vmem:[#allocation56 + $0x98] sm:$0xff]
    %v7009 = vld [vmem:[#allocation56 + $0xa0] sm:$0xff]
    %v7010 = vld [vmem:[#allocation56 + $0xa8] sm:$0xff]
    %v7011 = vld [vmem:[#allocation56 + $0xb0] sm:$0xff]
    %v7012 = vld [vmem:[#allocation56 + $0xb8] sm:$0xff]
    %v7013 = vld [vmem:[#allocation56 + $0xc0] sm:$0xff]
    %v7014 = vld [vmem:[#allocation56 + $0xc8] sm:$0xff]
    %v7015 = vld [vmem:[#allocation56 + $0xd0] sm:$0xff]
    %v7016 = vld [vmem:[#allocation56 + $0xd8] sm:$0xff]
    %v7017 = vld [vmem:[#allocation56 + $0xe0] sm:$0xff]
    %v7018 = vld [vmem:[#allocation56 + $0xe8] sm:$0xff]
    %v7019 = vld [vmem:[#allocation56 + $0xf0] sm:$0xff]
    %v7020 = vld [vmem:[#allocation56 + $0xf8] sm:$0xff]
    %v7053 = vunpack.c.l.b16 %v6989
    %v7054 = vunpack.c.h.b16 %v6989
    %v7055 = vunpack.c.l.b16 %v6990
    %v7056 = vunpack.c.h.b16 %v6990
    %v7057 = vunpack.c.l.b16 %v6991
    %v7058 = vunpack.c.h.b16 %v6991
    %v7059 = vunpack.c.l.b16 %v6992
    %v7060 = vunpack.c.h.b16 %v6992
    %v7061 = vunpack.c.l.b16 %v6993
    %v7062 = vunpack.c.h.b16 %v6993
    %v7063 = vunpack.c.l.b16 %v6994
    %v7064 = vunpack.c.h.b16 %v6994
    %v7065 = vunpack.c.l.b16 %v6995
    %v7066 = vunpack.c.h.b16 %v6995
    %v7067 = vunpack.c.l.b16 %v6996
    %v7068 = vunpack.c.h.b16 %v6996
    %v7069 = vunpack.c.l.b16 %v6997
    %v7070 = vunpack.c.h.b16 %v6997
    %v7071 = vunpack.c.l.b16 %v6998
    %v7072 = vunpack.c.h.b16 %v6998
    %v7073 = vunpack.c.l.b16 %v6999
    %v7074 = vunpack.c.h.b16 %v6999
    %v7075 = vunpack.c.l.b16 %v7000
    %v7076 = vunpack.c.h.b16 %v7000
    %v7077 = vunpack.c.l.b16 %v7001
    %v7078 = vunpack.c.h.b16 %v7001
    %v7079 = vunpack.c.l.b16 %v7002
    %v7080 = vunpack.c.h.b16 %v7002
    %v7081 = vunpack.c.l.b16 %v7003
    %v7082 = vunpack.c.h.b16 %v7003
    %v7083 = vunpack.c.l.b16 %v7004
    %v7084 = vunpack.c.h.b16 %v7004
    %v7085 = vunpack.c.l.b16 %v7005
    %v7086 = vunpack.c.h.b16 %v7005
    %v7087 = vunpack.c.l.b16 %v7006
    %v7088 = vunpack.c.h.b16 %v7006
    %v7089 = vunpack.c.l.b16 %v7007
    %v7090 = vunpack.c.h.b16 %v7007
    %v7091 = vunpack.c.l.b16 %v7008
    %v7092 = vunpack.c.h.b16 %v7008
    %v7093 = vunpack.c.l.b16 %v7009
    %v7094 = vunpack.c.h.b16 %v7009
    %v7095 = vunpack.c.l.b16 %v7010
    %v7096 = vunpack.c.h.b16 %v7010
    %v7097 = vunpack.c.l.b16 %v7011
    %v7098 = vunpack.c.h.b16 %v7011
    %v7099 = vunpack.c.l.b16 %v7012
    %v7100 = vunpack.c.h.b16 %v7012
    %v7101 = vunpack.c.l.b16 %v7013
    %v7102 = vunpack.c.h.b16 %v7013
    %v7103 = vunpack.c.l.b16 %v7014
    %v7104 = vunpack.c.h.b16 %v7014
    %v7105 = vunpack.c.l.b16 %v7015
    %v7106 = vunpack.c.h.b16 %v7015
    %v7107 = vunpack.c.l.b16 %v7016
    %v7108 = vunpack.c.h.b16 %v7016
    %v7109 = vunpack.c.l.b16 %v7017
    %v7110 = vunpack.c.h.b16 %v7017
    %v7111 = vunpack.c.l.b16 %v7018
    %v7112 = vunpack.c.h.b16 %v7018
    %v7113 = vunpack.c.l.b16 %v7019
    %v7114 = vunpack.c.h.b16 %v7019
    %v7115 = vunpack.c.l.b16 %v7020
    %v7116 = vunpack.c.h.b16 %v7020
    %v7117 = vpack.c.b16 %v7055, %v7053
    %v7118 = vpack.c.b16 %v7056, %v7054
    %v7119 = vpack.c.b16 %v7059, %v7057
    %v7120 = vpack.c.b16 %v7060, %v7058
    %v7121 = vpack.c.b16 %v7063, %v7061
    %v7122 = vpack.c.b16 %v7064, %v7062
    %v7123 = vpack.c.b16 %v7067, %v7065
    %v7124 = vpack.c.b16 %v7068, %v7066
    %v7125 = vpack.c.b16 %v7071, %v7069
    %v7126 = vpack.c.b16 %v7072, %v7070
    %v7127 = vpack.c.b16 %v7075, %v7073
    %v7128 = vpack.c.b16 %v7076, %v7074
    %v7129 = vpack.c.b16 %v7079, %v7077
    %v7130 = vpack.c.b16 %v7080, %v7078
    %v7131 = vpack.c.b16 %v7083, %v7081
    %v7132 = vpack.c.b16 %v7084, %v7082
    %v7133 = vpack.c.b16 %v7087, %v7085
    %v7134 = vpack.c.b16 %v7088, %v7086
    %v7135 = vpack.c.b16 %v7091, %v7089
    %v7136 = vpack.c.b16 %v7092, %v7090
    %v7137 = vpack.c.b16 %v7095, %v7093
    %v7138 = vpack.c.b16 %v7096, %v7094
    %v7139 = vpack.c.b16 %v7099, %v7097
    %v7140 = vpack.c.b16 %v7100, %v7098
    %v7141 = vpack.c.b16 %v7103, %v7101
    %v7142 = vpack.c.b16 %v7104, %v7102
    %v7143 = vpack.c.b16 %v7107, %v7105
    %v7144 = vpack.c.b16 %v7108, %v7106
    %v7145 = vpack.c.b16 %v7111, %v7109
    %v7146 = vpack.c.b16 %v7112, %v7110
    %v7147 = vpack.c.b16 %v7115, %v7113
    %v7148 = vpack.c.b16 %v7116, %v7114
    %7181 = vmatprep.subr.bf16.mxu0 %v7118
    %7182 = vmatpush1.bf16.msra.mxu0 %v7117
    %7183 = vmatprep.subr.bf16.mxu0 %v7120
    %7184 = vmatpush1.bf16.msra.mxu0 %v7119
    %7185 = vmatprep.subr.bf16.mxu0 %v7122
    %7186 = vmatpush1.bf16.msra.mxu0 %v7121
    %7187 = vmatprep.subr.bf16.mxu0 %v7124
    %7188 = vmatpush1.bf16.msra.mxu0 %v7123
    %7189 = vmatprep.subr.bf16.mxu0 %v7126
    %7190 = vmatpush1.bf16.msra.mxu0 %v7125
    %7191 = vmatprep.subr.bf16.mxu0 %v7128
    %7192 = vmatpush1.bf16.msra.mxu0 %v7127
    %7193 = vmatprep.subr.bf16.mxu0 %v7130
    %7194 = vmatpush1.bf16.msra.mxu0 %v7129
    %7195 = vmatprep.subr.bf16.mxu0 %v7132
    %7196 = vmatpush1.bf16.msra.mxu0 %v7131
    %7197 = vmatprep.subr.bf16.mxu0 %v7134
    %7198 = vmatpush1.bf16.msra.mxu0 %v7133
    %7199 = vmatprep.subr.bf16.mxu0 %v7136
    %7200 = vmatpush1.bf16.msra.mxu0 %v7135
    %7201 = vmatprep.subr.bf16.mxu0 %v7138
    %7202 = vmatpush1.bf16.msra.mxu0 %v7137
    %7203 = vmatprep.subr.bf16.mxu0 %v7140
    %7204 = vmatpush1.bf16.msra.mxu0 %v7139
    %7205 = vmatprep.subr.bf16.mxu0 %v7142
    %7206 = vmatpush1.bf16.msra.mxu0 %v7141
    %7207 = vmatprep.subr.bf16.mxu0 %v7144
    %7208 = vmatpush1.bf16.msra.mxu0 %v7143
    %7209 = vmatprep.subr.bf16.mxu0 %v7146
    %7210 = vmatpush1.bf16.msra.mxu0 %v7145
    %7211 = vmatprep.subr.bf16.mxu0 %v7148
    %7212 = vmatpush1.bf16.msra.mxu0 %v7147
    %7213 = vmatprep.mubr.bf16.mxu0 %v6988
    %7214 = vmatmul.mubr.bf16.gmra.mrb[0].mxu0 %v6987
    %v7215 = vpop.f32.mrb[0].mxu0
    %v7216 = vadd.f32 0.0, %v7215
    %v7217 = vpop.f32.mrb[0].mxu0
    %v7218 = vadd.f32 0.0, %v7217
    %v7219 = vpop.f32.mrb[0].mxu0
    %v7220 = vpop.f32.mrb[0].mxu0
    %7221 = vdwg.mxu0
    %v7222 = vadd.f32 %v6936, %v7216
    %v7223 = vadd.f32 %v6938, %v7218
    %v7224 = vld [vmem:[#allocation58] sm:$0x3]
    %v7226 = vlaneseq
    %v7227 = vshrl.u32 %v7226, 7
    %v7228 = vsub.s32 0, %v7227
    %v7229 = vrot.slane %v7224, %v7228
    %v7230 = vlaneseq
    %v7231 = vshrl.u32 %v7230, 7
    %v7232 = vsub.s32 1, %v7231
    %v7233 = vrot.slane %v7224, %v7232
    %v7236 = vadd.f32 %v7222, %v7229
    %v7237 = vadd.f32 %v7223, %v7233
    %v7238 = vld [vmem:[#allocation59] sm:$0xf]
    %v7240 = vsel %vm4432, %v7238, 0
    %7242 = vmatprep.subr.bf16.mxu0 %v5560
    %7243 = vmatpush1.bf16.msra.mxu0 %v5559
    %7244 = vmatprep.subr.bf16.mxu0 0
    %7245 = vmatpush1.bf16.msra.mxu0 0
    %7246 = vmatprep.subr.bf16.mxu0 0
    %7247 = vmatpush1.bf16.msra.mxu0 0
    %7248 = vmatprep.subr.bf16.mxu0 0
    %7249 = vmatpush1.bf16.msra.mxu0 0
    %7250 = vmatprep.subr.bf16.mxu0 0
    %7251 = vmatpush1.bf16.msra.mxu0 0
    %7252 = vmatprep.subr.bf16.mxu0 0
    %7253 = vmatpush1.bf16.msra.mxu0 0
    %7254 = vmatprep.subr.bf16.mxu0 0
    %7255 = vmatpush1.bf16.msra.mxu0 0
    %7256 = vmatprep.subr.bf16.mxu0 0
    %7257 = vmatpush1.bf16.msra.mxu0 0
    %7258 = vmatprep.subr.bf16.mxu0 0
    %7259 = vmatpush1.bf16.msra.mxu0 0
    %7260 = vmatprep.subr.bf16.mxu0 0
    %7261 = vmatpush1.bf16.msra.mxu0 0
    %7262 = vmatprep.subr.bf16.mxu0 0
    %7263 = vmatpush1.bf16.msra.mxu0 0
    %7264 = vmatprep.subr.bf16.mxu0 0
    %7265 = vmatpush1.bf16.msra.mxu0 0
    %7266 = vmatprep.subr.bf16.mxu0 0
    %7267 = vmatpush1.bf16.msra.mxu0 0
    %7268 = vmatprep.subr.bf16.mxu0 0
    %7269 = vmatpush1.bf16.msra.mxu0 0
    %7270 = vmatprep.subr.bf16.mxu0 0
    %7271 = vmatpush1.bf16.msra.mxu0 0
    %7272 = vmatprep.subr.bf16.mxu0 0
    %7273 = vmatpush1.bf16.msra.mxu0 0
    %7274 = vmatprep.mubr.bf16.mxu0 0
    %7275 = vmatmul.mubr.bf16.gmra.mrb[0].mxu0 %v7240
    %v7276 = vpop.f32.mrb[0].mxu0
    %v7277 = vadd.f32 0.0, %v7276
    %v7278 = vpop.f32.mrb[0].mxu0
    %v7279 = vadd.f32 0.0, %v7278
    %v7280 = vpop.f32.mrb[0].mxu0
    %v7281 = vpop.f32.mrb[0].mxu0
    %7282 = vdwg.mxu0
    %v7283 = vpack.c.bf16 %v7277, %v7277
    %v7284 = vpack.c.bf16 %v7279, %v7279
    %v7285 = vld [vmem:[%s95] sm:$0xff]
    %v7286 = vld [vmem:[%s95 + $0x8] sm:$0xff]
    %v7287 = vld [vmem:[%s95 + $0x10] sm:$0xff]
    %v7288 = vld [vmem:[%s95 + $0x18] sm:$0xff]
    %v7289 = vld [vmem:[%s95 + $0x20] sm:$0xff]
    %v7290 = vld [vmem:[%s95 + $0x28] sm:$0xff]
    %v7291 = vld [vmem:[%s95 + $0x30] sm:$0xff]
    %v7292 = vld [vmem:[%s95 + $0x38] sm:$0xff]
    %v7293 = vld [vmem:[%s95 + $0x40] sm:$0xff]
    %v7294 = vld [vmem:[%s95 + $0x48] sm:$0xff]
    %v7295 = vld [vmem:[%s95 + $0x50] sm:$0xff]
    %v7296 = vld [vmem:[%s95 + $0x58] sm:$0xff]
    %v7297 = vld [vmem:[%s95 + $0x60] sm:$0xff]
    %v7298 = vld [vmem:[%s95 + $0x68] sm:$0xff]
    %v7299 = vld [vmem:[%s95 + $0x70] sm:$0xff]
    %v7300 = vld [vmem:[%s95 + $0x78] sm:$0xff]
    %v7301 = vld [vmem:[%s95 + $0x80] sm:$0xff]
    %v7302 = vld [vmem:[%s95 + $0x88] sm:$0xff]
    %v7303 = vld [vmem:[%s95 + $0x90] sm:$0xff]
    %v7304 = vld [vmem:[%s95 + $0x98] sm:$0xff]
    %v7305 = vld [vmem:[%s95 + $0xa0] sm:$0xff]
    %v7306 = vld [vmem:[%s95 + $0xa8] sm:$0xff]
    %v7307 = vld [vmem:[%s95 + $0xb0] sm:$0xff]
    %v7308 = vld [vmem:[%s95 + $0xb8] sm:$0xff]
    %v7309 = vld [vmem:[%s95 + $0xc0] sm:$0xff]
    %v7310 = vld [vmem:[%s95 + $0xc8] sm:$0xff]
    %v7311 = vld [vmem:[%s95 + $0xd0] sm:$0xff]
    %v7312 = vld [vmem:[%s95 + $0xd8] sm:$0xff]
    %v7313 = vld [vmem:[%s95 + $0xe0] sm:$0xff]
    %v7314 = vld [vmem:[%s95 + $0xe8] sm:$0xff]
    %v7315 = vld [vmem:[%s95 + $0xf0] sm:$0xff]
    %v7316 = vld [vmem:[%s95 + $0xf8] sm:$0xff]
    %v7349 = vunpack.c.l.b16 %v7285
    %v7350 = vunpack.c.h.b16 %v7285
    %v7351 = vunpack.c.l.b16 %v7286
    %v7352 = vunpack.c.h.b16 %v7286
    %v7353 = vunpack.c.l.b16 %v7287
    %v7354 = vunpack.c.h.b16 %v7287
    %v7355 = vunpack.c.l.b16 %v7288
    %v7356 = vunpack.c.h.b16 %v7288
    %v7357 = vunpack.c.l.b16 %v7289
    %v7358 = vunpack.c.h.b16 %v7289
    %v7359 = vunpack.c.l.b16 %v7290
    %v7360 = vunpack.c.h.b16 %v7290
    %v7361 = vunpack.c.l.b16 %v7291
    %v7362 = vunpack.c.h.b16 %v7291
    %v7363 = vunpack.c.l.b16 %v7292
    %v7364 = vunpack.c.h.b16 %v7292
    %v7365 = vunpack.c.l.b16 %v7293
    %v7366 = vunpack.c.h.b16 %v7293
    %v7367 = vunpack.c.l.b16 %v7294
    %v7368 = vunpack.c.h.b16 %v7294
    %v7369 = vunpack.c.l.b16 %v7295
    %v7370 = vunpack.c.h.b16 %v7295
    %v7371 = vunpack.c.l.b16 %v7296
    %v7372 = vunpack.c.h.b16 %v7296
    %v7373 = vunpack.c.l.b16 %v7297
    %v7374 = vunpack.c.h.b16 %v7297
    %v7375 = vunpack.c.l.b16 %v7298
    %v7376 = vunpack.c.h.b16 %v7298
    %v7377 = vunpack.c.l.b16 %v7299
    %v7378 = vunpack.c.h.b16 %v7299
    %v7379 = vunpack.c.l.b16 %v7300
    %v7380 = vunpack.c.h.b16 %v7300
    %v7381 = vunpack.c.l.b16 %v7301
    %v7382 = vunpack.c.h.b16 %v7301
    %v7383 = vunpack.c.l.b16 %v7302
    %v7384 = vunpack.c.h.b16 %v7302
    %v7385 = vunpack.c.l.b16 %v7303
    %v7386 = vunpack.c.h.b16 %v7303
    %v7387 = vunpack.c.l.b16 %v7304
    %v7388 = vunpack.c.h.b16 %v7304
    %v7389 = vunpack.c.l.b16 %v7305
    %v7390 = vunpack.c.h.b16 %v7305
    %v7391 = vunpack.c.l.b16 %v7306
    %v7392 = vunpack.c.h.b16 %v7306
    %v7393 = vunpack.c.l.b16 %v7307
    %v7394 = vunpack.c.h.b16 %v7307
    %v7395 = vunpack.c.l.b16 %v7308
    %v7396 = vunpack.c.h.b16 %v7308
    %v7397 = vunpack.c.l.b16 %v7309
    %v7398 = vunpack.c.h.b16 %v7309
    %v7399 = vunpack.c.l.b16 %v7310
    %v7400 = vunpack.c.h.b16 %v7310
    %v7401 = vunpack.c.l.b16 %v7311
    %v7402 = vunpack.c.h.b16 %v7311
    %v7403 = vunpack.c.l.b16 %v7312
    %v7404 = vunpack.c.h.b16 %v7312
    %v7405 = vunpack.c.l.b16 %v7313
    %v7406 = vunpack.c.h.b16 %v7313
    %v7407 = vunpack.c.l.b16 %v7314
    %v7408 = vunpack.c.h.b16 %v7314
    %v7409 = vunpack.c.l.b16 %v7315
    %v7410 = vunpack.c.h.b16 %v7315
    %v7411 = vunpack.c.l.b16 %v7316
    %v7412 = vunpack.c.h.b16 %v7316
    %v7413 = vpack.c.b16 %v7351, %v7349
    %v7414 = vpack.c.b16 %v7352, %v7350
    %v7415 = vpack.c.b16 %v7355, %v7353
    %v7416 = vpack.c.b16 %v7356, %v7354
    %v7417 = vpack.c.b16 %v7359, %v7357
    %v7418 = vpack.c.b16 %v7360, %v7358
    %v7419 = vpack.c.b16 %v7363, %v7361
    %v7420 = vpack.c.b16 %v7364, %v7362
    %v7421 = vpack.c.b16 %v7367, %v7365
    %v7422 = vpack.c.b16 %v7368, %v7366
    %v7423 = vpack.c.b16 %v7371, %v7369
    %v7424 = vpack.c.b16 %v7372, %v7370
    %v7425 = vpack.c.b16 %v7375, %v7373
    %v7426 = vpack.c.b16 %v7376, %v7374
    %v7427 = vpack.c.b16 %v7379, %v7377
    %v7428 = vpack.c.b16 %v7380, %v7378
    %v7429 = vpack.c.b16 %v7383, %v7381
    %v7430 = vpack.c.b16 %v7384, %v7382
    %v7431 = vpack.c.b16 %v7387, %v7385
    %v7432 = vpack.c.b16 %v7388, %v7386
    %v7433 = vpack.c.b16 %v7391, %v7389
    %v7434 = vpack.c.b16 %v7392, %v7390
    %v7435 = vpack.c.b16 %v7395, %v7393
    %v7436 = vpack.c.b16 %v7396, %v7394
    %v7437 = vpack.c.b16 %v7399, %v7397
    %v7438 = vpack.c.b16 %v7400, %v7398
    %v7439 = vpack.c.b16 %v7403, %v7401
    %v7440 = vpack.c.b16 %v7404, %v7402
    %v7441 = vpack.c.b16 %v7407, %v7405
    %v7442 = vpack.c.b16 %v7408, %v7406
    %v7443 = vpack.c.b16 %v7411, %v7409
    %v7444 = vpack.c.b16 %v7412, %v7410
    %7477 = vmatprep.subr.bf16.mxu0 %v7414
    %7478 = vmatpush1.bf16.msra.mxu0 %v7413
    %7479 = vmatprep.subr.bf16.mxu0 %v7416
    %7480 = vmatpush1.bf16.msra.mxu0 %v7415
    %7481 = vmatprep.subr.bf16.mxu0 %v7418
    %7482 = vmatpush1.bf16.msra.mxu0 %v7417
    %7483 = vmatprep.subr.bf16.mxu0 %v7420
    %7484 = vmatpush1.bf16.msra.mxu0 %v7419
    %7485 = vmatprep.subr.bf16.mxu0 %v7422
    %7486 = vmatpush1.bf16.msra.mxu0 %v7421
    %7487 = vmatprep.subr.bf16.mxu0 %v7424
    %7488 = vmatpush1.bf16.msra.mxu0 %v7423
    %7489 = vmatprep.subr.bf16.mxu0 %v7426
    %7490 = vmatpush1.bf16.msra.mxu0 %v7425
    %7491 = vmatprep.subr.bf16.mxu0 %v7428
    %7492 = vmatpush1.bf16.msra.mxu0 %v7427
    %7493 = vmatprep.subr.bf16.mxu0 %v7430
    %7494 = vmatpush1.bf16.msra.mxu0 %v7429
    %7495 = vmatprep.subr.bf16.mxu0 %v7432
    %7496 = vmatpush1.bf16.msra.mxu0 %v7431
    %7497 = vmatprep.subr.bf16.mxu0 %v7434
    %7498 = vmatpush1.bf16.msra.mxu0 %v7433
    %7499 = vmatprep.subr.bf16.mxu0 %v7436
    %7500 = vmatpush1.bf16.msra.mxu0 %v7435
    %7501 = vmatprep.subr.bf16.mxu0 %v7438
    %7502 = vmatpush1.bf16.msra.mxu0 %v7437
    %7503 = vmatprep.subr.bf16.mxu0 %v7440
    %7504 = vmatpush1.bf16.msra.mxu0 %v7439
    %7505 = vmatprep.subr.bf16.mxu0 %v7442
    %7506 = vmatpush1.bf16.msra.mxu0 %v7441
    %7507 = vmatprep.subr.bf16.mxu0 %v7444
    %7508 = vmatpush1.bf16.msra.mxu0 %v7443
    %7509 = vmatprep.mubr.bf16.mxu0 %v7284
    %7510 = vmatmul.mubr.bf16.gmra.mrb[0].mxu0 %v7283
    %v7511 = vpop.f32.mrb[0].mxu0
    %v7512 = vadd.f32 0.0, %v7511
    %v7513 = vpop.f32.mrb[0].mxu0
    %v7514 = vadd.f32 0.0, %v7513
    %v7515 = vpop.f32.mrb[0].mxu0
    %v7516 = vpop.f32.mrb[0].mxu0
    %7517 = vdwg.mxu0
    %v7518 = vadd.f32 %v7236, %v7512
    %v7519 = vadd.f32 %v7237, %v7514
    %v7520 = vmax.f32 %v7518, 0.0
    %v7521 = vmax.f32 %v7519, 0.0
    %v7522 = vld [vmem:[%s97] sm:$0x1]
    %v7523 = vpack.c.bf16 %v7520, %v7520
    %v7524 = vpack.c.bf16 %v7521, %v7521
    %v7526 = vsel %vm6422, %v7522, 0
    %v7529 = vsel %vm6426, %v7523, 0
    %v7532 = vsel %vm6426, %v7524, 0
    %7534 = vmatprep.subr.bf16.mxu0 %v7532
    %7535 = vmatpush1.bf16.msra.mxu0 %v7529
    %7536 = vmatprep.subr.bf16.mxu0 0
    %7537 = vmatpush1.bf16.msra.mxu0 0
    %7538 = vmatprep.subr.bf16.mxu0 0
    %7539 = vmatpush1.bf16.msra.mxu0 0
    %7540 = vmatprep.subr.bf16.mxu0 0
    %7541 = vmatpush1.bf16.msra.mxu0 0
    %7542 = vmatprep.subr.bf16.mxu0 0
    %7543 = vmatpush1.bf16.msra.mxu0 0
    %7544 = vmatprep.subr.bf16.mxu0 0
    %7545 = vmatpush1.bf16.msra.mxu0 0
    %7546 = vmatprep.subr.bf16.mxu0 0
    %7547 = vmatpush1.bf16.msra.mxu0 0
    %7548 = vmatprep.subr.bf16.mxu0 0
    %7549 = vmatpush1.bf16.msra.mxu0 0
    %7550 = vmatprep.subr.bf16.mxu0 0
    %7551 = vmatpush1.bf16.msra.mxu0 0
    %7552 = vmatprep.subr.bf16.mxu0 0
    %7553 = vmatpush1.bf16.msra.mxu0 0
    %7554 = vmatprep.subr.bf16.mxu0 0
    %7555 = vmatpush1.bf16.msra.mxu0 0
    %7556 = vmatprep.subr.bf16.mxu0 0
    %7557 = vmatpush1.bf16.msra.mxu0 0
    %7558 = vmatprep.subr.bf16.mxu0 0
    %7559 = vmatpush1.bf16.msra.mxu0 0
    %7560 = vmatprep.subr.bf16.mxu0 0
    %7561 = vmatpush1.bf16.msra.mxu0 0
    %7562 = vmatprep.subr.bf16.mxu0 0
    %7563 = vmatpush1.bf16.msra.mxu0 0
    %7564 = vmatprep.subr.bf16.mxu0 0
    %7565 = vmatpush1.bf16.msra.mxu0 0
    %7566 = vmatprep.mubr.bf16.mxu0 0
    %7567 = vmatmul.mubr.bf16.gmra.mrb[0].mxu0 %v7526
    %v7568 = vpop.f32.mrb[0].mxu0
    %v7569 = vadd.f32 0.0, %v7568
    %v7570 = vpop.f32.mrb[0].mxu0
    %v7571 = vadd.f32 0.0, %v7570
    %v7572 = vpop.f32.mrb[0].mxu0
    %v7573 = vpop.f32.mrb[0].mxu0
    %7574 = vdwg.mxu0
    %v7575 = vpack.c.bf16 %v7569, %v7569
    %v7576 = vpack.c.bf16 %v7571, %v7571
    %v7577 = vld [vmem:[#allocation61] sm:$0xf]
    %v7578 = vld [vmem:[#allocation61 + $0x4] sm:$0xf]
    %v7579 = vld [vmem:[#allocation61 + $0x8] sm:$0xf]
    %v7580 = vld [vmem:[#allocation61 + $0xc] sm:$0xf]
    %v7581 = vld [vmem:[#allocation61 + $0x10] sm:$0xf]
    %v7582 = vld [vmem:[#allocation61 + $0x14] sm:$0xf]
    %v7583 = vld [vmem:[#allocation61 + $0x18] sm:$0xf]
    %v7584 = vld [vmem:[#allocation61 + $0x1c] sm:$0xf]
    %v7585 = vld [vmem:[#allocation61 + $0x20] sm:$0xf]
    %v7586 = vld [vmem:[#allocation61 + $0x24] sm:$0xf]
    %v7587 = vld [vmem:[#allocation61 + $0x28] sm:$0xf]
    %v7588 = vld [vmem:[#allocation61 + $0x2c] sm:$0xf]
    %v7589 = vld [vmem:[#allocation61 + $0x30] sm:$0xf]
    %v7590 = vld [vmem:[#allocation61 + $0x34] sm:$0xf]
    %v7591 = vld [vmem:[#allocation61 + $0x38] sm:$0xf]
    %v7592 = vld [vmem:[#allocation61 + $0x3c] sm:$0xf]
    %v7593 = vld [vmem:[#allocation61 + $0x40] sm:$0xf]
    %v7594 = vld [vmem:[#allocation61 + $0x44] sm:$0xf]
    %v7595 = vld [vmem:[#allocation61 + $0x48] sm:$0xf]
    %v7596 = vld [vmem:[#allocation61 + $0x4c] sm:$0xf]
    %v7597 = vld [vmem:[#allocation61 + $0x50] sm:$0xf]
    %v7598 = vld [vmem:[#allocation61 + $0x54] sm:$0xf]
    %v7599 = vld [vmem:[#allocation61 + $0x58] sm:$0xf]
    %v7600 = vld [vmem:[#allocation61 + $0x5c] sm:$0xf]
    %v7601 = vld [vmem:[#allocation61 + $0x60] sm:$0xf]
    %v7602 = vld [vmem:[#allocation61 + $0x64] sm:$0xf]
    %v7603 = vld [vmem:[#allocation61 + $0x68] sm:$0xf]
    %v7604 = vld [vmem:[#allocation61 + $0x6c] sm:$0xf]
    %v7605 = vld [vmem:[#allocation61 + $0x70] sm:$0xf]
    %v7606 = vld [vmem:[#allocation61 + $0x74] sm:$0xf]
    %v7607 = vld [vmem:[#allocation61 + $0x78] sm:$0xf]
    %v7608 = vld [vmem:[#allocation61 + $0x7c] sm:$0xf]
    %v7609 = vld [vmem:[#allocation62] sm:$0x1]
    %v7611 = vlaneseq
    %v7612 = vshrl.u32 %v7611, 7
    %v7613 = vsub.s32 0, %v7612
    %v7614 = vrot.slane %v7609, %v7613
    %v7648 = vunpack.c.l.b16 %v7577
    %v7649 = vunpack.c.l.b16 %v7578
    %v7650 = vunpack.c.l.b16 %v7579
    %v7651 = vunpack.c.l.b16 %v7580
    %v7652 = vunpack.c.l.b16 %v7581
    %v7653 = vunpack.c.l.b16 %v7582
    %v7654 = vunpack.c.l.b16 %v7583
    %v7655 = vunpack.c.l.b16 %v7584
    %v7656 = vunpack.c.l.b16 %v7585
    %v7657 = vunpack.c.l.b16 %v7586
    %v7658 = vunpack.c.l.b16 %v7587
    %v7659 = vunpack.c.l.b16 %v7588
    %v7660 = vunpack.c.l.b16 %v7589
    %v7661 = vunpack.c.l.b16 %v7590
    %v7662 = vunpack.c.l.b16 %v7591
    %v7663 = vunpack.c.l.b16 %v7592
    %v7664 = vunpack.c.l.b16 %v7593
    %v7665 = vunpack.c.l.b16 %v7594
    %v7666 = vunpack.c.l.b16 %v7595
    %v7667 = vunpack.c.l.b16 %v7596
    %v7668 = vunpack.c.l.b16 %v7597
    %v7669 = vunpack.c.l.b16 %v7598
    %v7670 = vunpack.c.l.b16 %v7599
    %v7671 = vunpack.c.l.b16 %v7600
    %v7672 = vunpack.c.l.b16 %v7601
    %v7673 = vunpack.c.l.b16 %v7602
    %v7674 = vunpack.c.l.b16 %v7603
    %v7675 = vunpack.c.l.b16 %v7604
    %v7676 = vunpack.c.l.b16 %v7605
    %v7677 = vunpack.c.l.b16 %v7606
    %v7678 = vunpack.c.l.b16 %v7607
    %v7679 = vunpack.c.l.b16 %v7608
    %v7680 = vpack.c.b16 %v7649, %v7648
    %v7681 = vpack.c.b16 %v7651, %v7650
    %v7682 = vpack.c.b16 %v7653, %v7652
    %v7683 = vpack.c.b16 %v7655, %v7654
    %v7684 = vpack.c.b16 %v7657, %v7656
    %v7685 = vpack.c.b16 %v7659, %v7658
    %v7686 = vpack.c.b16 %v7661, %v7660
    %v7687 = vpack.c.b16 %v7663, %v7662
    %v7688 = vpack.c.b16 %v7665, %v7664
    %v7689 = vpack.c.b16 %v7667, %v7666
    %v7690 = vpack.c.b16 %v7669, %v7668
    %v7691 = vpack.c.b16 %v7671, %v7670
    %v7692 = vpack.c.b16 %v7673, %v7672
    %v7693 = vpack.c.b16 %v7675, %v7674
    %v7694 = vpack.c.b16 %v7677, %v7676
    %v7695 = vpack.c.b16 %v7679, %v7678
    %7712 = vmatprep.subr.bf16.mxu0 0
    %7713 = vmatpush1.bf16.msra.mxu0 %v7680
    %7714 = vmatprep.subr.bf16.mxu0 0
    %7715 = vmatpush1.bf16.msra.mxu0 %v7681
    %7716 = vmatprep.subr.bf16.mxu0 0
    %7717 = vmatpush1.bf16.msra.mxu0 %v7682
    %7718 = vmatprep.subr.bf16.mxu0 0
    %7719 = vmatpush1.bf16.msra.mxu0 %v7683
    %7720 = vmatprep.subr.bf16.mxu0 0
    %7721 = vmatpush1.bf16.msra.mxu0 %v7684
    %7722 = vmatprep.subr.bf16.mxu0 0
    %7723 = vmatpush1.bf16.msra.mxu0 %v7685
    %7724 = vmatprep.subr.bf16.mxu0 0
    %7725 = vmatpush1.bf16.msra.mxu0 %v7686
    %7726 = vmatprep.subr.bf16.mxu0 0
    %7727 = vmatpush1.bf16.msra.mxu0 %v7687
    %7728 = vmatprep.subr.bf16.mxu0 0
    %7729 = vmatpush1.bf16.msra.mxu0 %v7688
    %7730 = vmatprep.subr.bf16.mxu0 0
    %7731 = vmatpush1.bf16.msra.mxu0 %v7689
    %7732 = vmatprep.subr.bf16.mxu0 0
    %7733 = vmatpush1.bf16.msra.mxu0 %v7690
    %7734 = vmatprep.subr.bf16.mxu0 0
    %7735 = vmatpush1.bf16.msra.mxu0 %v7691
    %7736 = vmatprep.subr.bf16.mxu0 0
    %7737 = vmatpush1.bf16.msra.mxu0 %v7692
    %7738 = vmatprep.subr.bf16.mxu0 0
    %7739 = vmatpush1.bf16.msra.mxu0 %v7693
    %7740 = vmatprep.subr.bf16.mxu0 0
    %7741 = vmatpush1.bf16.msra.mxu0 %v7694
    %7742 = vmatprep.subr.bf16.mxu0 0
    %7743 = vmatpush1.bf16.msra.mxu0 %v7695
    %7744 = vmatprep.mubr.bf16.mxu0 %v7576
    %7745 = vmatmul.mubr.bf16.gmra.mrb[0].mxu0 %v7575
    %v7746 = vpop.f32.mrb[0].mxu0
    %v7747 = vadd.f32 %v7614, %v7746
    %v7748 = vpop.f32.mrb[0].mxu0
    %v7749 = vpop.f32.mrb[0].mxu0
    %v7750 = vpop.f32.mrb[0].mxu0
    %7751 = vdwg.mxu0
    %7752 = vst [vmem:[#allocation64] sm:$0x3] %v7747
    // Predicated region
    $region366: #{forward.1} parent=1 // pred_check
      _
    $region367: #{forward.1} parent=1 // pred_check_branch
      %7754 = sbr.rel (0) target = $region369
    $region368: #{forward.1} parent=1 // pred_region
      %s7756 = ssub.s32 32, 32
      %7757 = vsyncadd [#allocation4], %s7756
      %s7759 = sshll.u32 [#allocation64], 4
      %s7760 = int_to_ptr.vmem [resolvable:$true] %s7759
      %7762 = dma.vmem_to_hbm [thread:$0]  %s7760, 32, %s103, [#allocation4]
    $region369: #{forward.1} parent=1 // pred_fallthru
      _
    // Predicated region
    $region370: #{forward.1} parent=1 // pred_check
      _
    $region371: #{forward.1} parent=1 // pred_check_branch
      %7764 = sbr.rel (0) target = $region373
    $region372: #{forward.1} parent=1 // pred_region
      %7765 = dma.done [#allocation4], 32
    $region373: #{forward.1} parent=1 // pred_fallthru
      _
    %7766 = vsyncpa [#allocation3], 1
    %7767 = vsyncpa [#allocation6], 1
    %7768 = vsyncpa [#allocation9], 1
    %7769 = vsyncpa [#allocation12], 1
    %7770 = vsyncpa [#allocation15], 1
    %7771 = vsyncpa [#allocation18], 1
    %7772 = vsyncpa [#allocation21], 1
    %7773 = vsyncpa [#allocation24], 1
    %7774 = vsyncpa [#allocation27], 1
    %7775 = vsyncpa [#allocation30], 1
    %7776 = vsyncpa [#allocation33], 1
    %7777 = vsyncpa [#allocation36], 1
    %7778 = vsyncpa [#allocation39], 1
    %7779 = vsyncpa [#allocation42], 1
    %7780 = vsyncpa [#allocation45], 1
    %7781 = vsyncpa [#allocation48], 1
    %7782 = vsyncpa [#allocation51], 1
    %7783 = vsyncpa [#allocation54], 1
    %7784 = vsyncpa [#allocation57], 1
    %7785 = vsyncpa [#allocation60], 1
    %7786 = vsyncpa [#allocation63], 1
    %7787 = vsyncpa [#allocation4], 1

</llo_original>
